<compile_context>
chip_gen: v7x
topology: tpu7x:2x2x1
jax: 0.10.0
libtpu: 0.0.40
codegen_flags: <defaults>
</compile_context>

<pallas_src>
import numpy as np
import jax
import jax.numpy as jnp
from jax import lax
from jax.experimental import pallas as pl
from jax.experimental.pallas import tpu as pltpu

D = 256  # hidden size hard-coded by the PyTorch module

_VMEM_LIMIT = 48 * 1024 * 1024          # explicit scoped-VMEM limit (all chips)
_GRU_BLOCK_BUDGET = 24 * 1024 * 1024    # budget for GRU blocks + weights
_BATCH_BLOCK_BUDGET = 20 * 1024 * 1024  # budget for GAT/cross per-graph blocks


def _round_up(a, m):
    return ((a + m - 1) // m) * m


def _largest_divisor_leq(n, cap):
    for d_ in range(min(cap, n), 0, -1):
        if n % d_ == 0:
            return d_
    return 1


def _cparams(sem):
    return pltpu.CompilerParams(dimension_semantics=sem,
                                vmem_limit_bytes=_VMEM_LIMIT)


def _pick_bb(b, rows_per_graph, bytes_per_graph, row_target=256):
    """Batch block for GAT/cross: keep >=2 grid steps when b allows it (v7x
    megacore), stay inside the per-block VMEM budget, and prefer the smallest
    block that already reaches `row_target` MXU rows."""
    divisors = [d_ for d_ in range(1, b + 1) if b % d_ == 0]
    cands = [d_ for d_ in divisors if d_ <= max(1, b // 2)] or [1]
    fitting = [d_ for d_ in cands if d_ * bytes_per_graph <= _BATCH_BLOCK_BUDGET]
    cands = fitting or [cands[0]]
    for d_ in cands:
        if d_ * rows_per_graph >= row_target:
            return d_
    return cands[-1]


# ---------------------------------------------------------------------------
# GRU kernel (PyTorch gate order r|z|n, h0 = 0, batch_first handled by wrapper).
# Grid = (batch blocks [parallel], time chunks [arbitrary]); the hidden state is
# carried across time chunks in a (tb, H) VMEM scratch.
#   x_ref   : (Tc, tb, Din)  time-major tile of the current chunk
#   wih_ref : (Din, 3H) bf16   whh_ref : (H, 3H) bf16   (pre-transposed)
#   o_ref   : (Tc, tb, H)
#   h_scr   : (tb, H) f32      hidden-state carry
# ---------------------------------------------------------------------------
def _gru_kernel(x_ref, wih_ref, bih_ref, whh_ref, bhh_ref, o_ref, h_scr):
    Tc, tb, Din = x_ref.shape
    H = h_scr.shape[1]

    @pl.when(pl.program_id(1) == 0)
    def _():
        h_scr[...] = jnp.zeros_like(h_scr)

    # Fused input projection for the whole chunk: one tall bf16 MXU matmul.
    xp = jnp.dot(x_ref[...].reshape(Tc * tb, Din).astype(jnp.bfloat16),
                 wih_ref[...], preferred_element_type=jnp.float32) + bih_ref[...]
    xp = xp.reshape(Tc, tb, 3 * H)

    whh = whh_ref[...]
    bhh = bhh_ref[...]
    h = h_scr[...]
    for tl in range(Tc):  # static unroll: scheduler can overlap MXU/EUP/VPU
        xg = xp[tl]
        hg = jnp.dot(h.astype(jnp.bfloat16), whh,
                     preferred_element_type=jnp.float32) + bhh
        r = jax.nn.sigmoid(xg[:, :H] + hg[:, :H])
        z = jax.nn.sigmoid(xg[:, H:2 * H] + hg[:, H:2 * H])
        n = jnp.tanh(xg[:, 2 * H:] + r * hg[:, 2 * H:])
        h = (1.0 - z) * n + z * h
        o_ref[tl] = h.astype(o_ref.dtype)
    h_scr[...] = h


def gru_pallas(x, wih_bf, bih, whh_bf, bhh):
    """x: (B, T, Din) batch-first -> (B, T, H) full output sequence (h0 = 0)."""
    B, T, Din = x.shape
    H = whh_bf.shape[0]
    # Time-major blocking keeps every in-kernel access a clean leading-axis slice.
    # TODO(synk): a batch-first blocked variant would drop these two HBM relayout
    # passes but needs sublane-strided per-step stores; kept time-major for safety.
    xt = jnp.transpose(x, (1, 0, 2))                       # (T, B, Din)

    Tc = _largest_divisor_leq(T, 32)                       # time chunk per grid step
    weight_bytes = 2 * 2 * 3 * H * (Din + H)               # bf16, double-buffered
    per_row = 4 * Tc * (2 * Din + 2 * H + 3 * H)           # x/out blocks + xp value
    tb = min(256, _round_up(B, 8))
    while tb > 8 and weight_bytes + tb * per_row > _GRU_BLOCK_BUDGET:
        tb -= 8
    Bp = _round_up(B, tb)
    if Bp != B:
        xt = jnp.pad(xt, ((0, 0), (0, Bp - B), (0, 0)))

    out = pl.pallas_call(
        _gru_kernel,
        out_shape=jax.ShapeDtypeStruct((T, Bp, H), x.dtype),
        grid=(Bp // tb, T // Tc),
        in_specs=[
            pl.BlockSpec((Tc, tb, Din), lambda i, t: (t, i, 0)),
            pl.BlockSpec((Din, 3 * H), lambda i, t: (0, 0)),
            pl.BlockSpec((1, 3 * H), lambda i, t: (0, 0)),
            pl.BlockSpec((H, 3 * H), lambda i, t: (0, 0)),
            pl.BlockSpec((1, 3 * H), lambda i, t: (0, 0)),
        ],
        out_specs=pl.BlockSpec((Tc, tb, H), lambda i, t: (t, i, 0)),
        scratch_shapes=[pltpu.VMEM((tb, H), jnp.float32)],
        compiler_params=_cparams(("parallel", "arbitrary")),
    )(xt, wih_bf, bih, whh_bf, bhh)
    return jnp.transpose(out[:, :B, :], (1, 0, 2))


# ---------------------------------------------------------------------------
# Fused GAT: all 7 layers + final linear in one kernel, activations on-chip.
# Weights arrive pre-stacked, pre-transposed and pre-cast to bf16: (7,D,D)/(7,1,D).
# adj-diagonal=1 and the 1e-5*I term are built in-kernel from broadcasted_iota,
# so (sig + 1e-5*I)*adj == sig*adj_diag1 + 1e-5*I holds exactly per the module.
# ---------------------------------------------------------------------------
def _gat_fused_kernel(x_ref, adj_ref, wat_ref, bat_ref, w0_ref, b0_ref,
                      w1_ref, b1_ref, wf_ref, bf_ref, o_ref):
    bb, N, d = x_ref.shape
    row = lax.broadcasted_iota(jnp.int32, (N, N), 0)
    col = lax.broadcasted_iota(jnp.int32, (N, N), 1)
    diag = row == col
    adj = jnp.where(diag[None], jnp.float32(1.0), adj_ref[...].astype(jnp.float32))
    eps_eye = jnp.where(diag, jnp.float32(1e-5), jnp.float32(0.0))

    def layer(l, x):
        x_bf = x.astype(jnp.bfloat16)
        wx = (jnp.dot(x_bf.reshape(bb * N, d), wat_ref[l],
                      preferred_element_type=jnp.float32)
              + bat_ref[l]).reshape(bb, N, d)
        scores = jnp.einsum('bij,bkj->bik', wx.astype(jnp.bfloat16), x_bf,
                            preferred_element_type=jnp.float32)
        attn = jax.nn.sigmoid(scores) * adj + eps_eye
        attn = attn / jnp.sum(attn, axis=2, keepdims=True)      # exact divide
        xa = jnp.einsum('bij,bjd->bid', attn.astype(jnp.bfloat16), x_bf,
                        preferred_element_type=jnp.float32)
        h0 = jnp.maximum(
            jnp.dot(xa.reshape(bb * N, d).astype(jnp.bfloat16), w0_ref[l],
                    preferred_element_type=jnp.float32) + b0_ref[l], 0.0)
        h1 = jnp.maximum(
            jnp.dot(h0.astype(jnp.bfloat16), w1_ref[l],
                    preferred_element_type=jnp.float32) + b1_ref[l], 0.0)
        return h1.reshape(bb, N, d) + x

    x = lax.fori_loop(0, 7, layer, x_ref[...].astype(jnp.float32))
    out = jnp.dot(x.reshape(bb * N, d).astype(jnp.bfloat16), wf_ref[...],
                  preferred_element_type=jnp.float32) + bf_ref[...]
    o_ref[...] = out.reshape(bb, N, d).astype(o_ref.dtype)


def gat_pallas(x, adj, p):
    b, N, d = x.shape
    bytes_per_graph = 4 * (4 * N * N + 6 * N * d)   # adj/attn temporaries + x blocks
    bb = _pick_bb(b, N, bytes_per_graph)
    wspec3 = lambda shp: pl.BlockSpec(shp, lambda i: (0, 0, 0))
    wspec2 = lambda shp: pl.BlockSpec(shp, lambda i: (0, 0))
    return pl.pallas_call(
        _gat_fused_kernel,
        out_shape=jax.ShapeDtypeStruct((b, N, d), x.dtype),
        grid=(b // bb,),
        in_specs=[
            pl.BlockSpec((bb, N, d), lambda i: (i, 0, 0)),
            pl.BlockSpec((bb, N, N), lambda i: (i, 0, 0)),
            wspec3((7, d, d)), wspec3((7, 1, d)),
            wspec3((7, d, d)), wspec3((7, 1, d)),
            wspec3((7, d, d)), wspec3((7, 1, d)),
            wspec2((d, d)), wspec2((1, d)),
        ],
        out_specs=pl.BlockSpec((bb, N, d), lambda i: (i, 0, 0)),
        compiler_params=_cparams(("parallel",)),
    )(x, adj,
      p['gat_wattn_Wt'], p['gat_wattn_b'],
      p['gat_lin0_Wt'], p['gat_lin0_b'],
      p['gat_lin1_Wt'], p['gat_lin1_b'],
      p['gat_final_Wt'], p['gat_final_b'])


# ---------------------------------------------------------------------------
# crossInteraction (CI=True path); bb graphs per grid step, per-node linears
# flattened to (bb*N, D) so the MXU sees tall LHS matrices; bf16 operands.
# ---------------------------------------------------------------------------
def _cross_kernel(xs_ref, xg_ref, w0a, b0a, w0b, b0b, w1a, b1a, w1b, b1b,
                  wla, wlb, bl, o_ref):
    bb, N, d = xs_ref.shape
    xs = xs_ref[...].astype(jnp.float32)
    xg = xg_ref[...].astype(jnp.float32)
    xs_bf = xs.astype(jnp.bfloat16).reshape(bb * N, d)
    xg_bf = xg.astype(jnp.bfloat16).reshape(bb * N, d)
    h0 = jnp.maximum(jnp.dot(xg_bf, w0a[...], preferred_element_type=jnp.float32)
                     + b0a[...], 0.0)
    g0 = jnp.dot(h0.astype(jnp.bfloat16), w0b[...],
                 preferred_element_type=jnp.float32) + b0b[...]
    ci0 = jnp.tanh(jnp.sum(g0.reshape(bb, N, d) * xs, axis=2, keepdims=True)) + 1.0
    h1 = jnp.maximum(jnp.dot(xs_bf, w1a[...], preferred_element_type=jnp.float32)
                     + b1a[...], 0.0)
    g1 = jnp.dot(h1.astype(jnp.bfloat16), w1b[...],
                 preferred_element_type=jnp.float32) + b1b[...]
    ci1 = jnp.tanh(jnp.sum(g1.reshape(bb, N, d) * xg, axis=2, keepdims=True)) + 1.0
    xs2 = (xs * ci0).reshape(bb * N, d).astype(jnp.bfloat16)
    xg2 = (xg * ci1).reshape(bb * N, d).astype(jnp.bfloat16)
    # concat([xs2, xg2], -1) @ Wl.T == xs2 @ Wl.T[:d] + xg2 @ Wl.T[d:]
    out = (jnp.dot(xs2, wla[...], preferred_element_type=jnp.float32)
           + jnp.dot(xg2, wlb[...], preferred_element_type=jnp.float32)
           + bl[...])
    o_ref[...] = out.reshape(bb, N, d).astype(o_ref.dtype)


def cross_interaction_pallas(xs, xg, p):
    b, N, d = xs.shape
    bytes_per_graph = 4 * (8 * N * d)
    bb = _pick_bb(b, N, bytes_per_graph)
    wspec = lambda shp: pl.BlockSpec(shp, lambda i: (0, 0))
    return pl.pallas_call(
        _cross_kernel,
        out_shape=jax.ShapeDtypeStruct((b, N, d), xs.dtype),
        grid=(b // bb,),
        in_specs=[
            pl.BlockSpec((bb, N, d), lambda i: (i, 0, 0)),
            pl.BlockSpec((bb, N, d), lambda i: (i, 0, 0)),
            wspec((d, d)), wspec((1, d)),
            wspec((d, d)), wspec((1, d)),
            wspec((d, d)), wspec((1, d)),
            wspec((d, d)), wspec((1, d)),
            wspec((d, d)), wspec((d, d)), wspec((1, d)),
        ],
        out_specs=pl.BlockSpec((bb, N, d), lambda i: (i, 0, 0)),
        compiler_params=_cparams(("parallel",)),
    )(xs, xg,
      p['ci0_Wt0'], p['ci0_b0'], p['ci0_Wt1'], p['ci0_b1'],
      p['ci1_Wt0'], p['ci1_b0'], p['ci1_Wt1'], p['ci1_b1'],
      p['ci_lin_Wt_a'], p['ci_lin_Wt_b'], p['ci_lin_b'])


# ---------------------------------------------------------------------------
# forward_supervised + supervised loss (fully jittable)
# ---------------------------------------------------------------------------
def forward_supervised(p, prot_data, prot_contacts):
    emb = p['emb'][prot_data]                      # (b, i, j, D) embedding gather
    b, i, j, d = emb.shape
    N = i * j
    # sequence branch: two stacked GRUs; the intermediate reshape is a raw
    # row-major view, matching the PyTorch .reshape on contiguous GRU output.
    xs = emb.reshape(b * i, j, d)
    xs = gru_pallas(xs, p['gru0_Wih_t'], p['gru0_bih'], p['gru0_Whh_t'], p['gru0_bhh'])
    xs = xs.reshape(b * j, i, d)
    xs = gru_pallas(xs, p['gru1_Wih_t'], p['gru1_bih'], p['gru1_Whh_t'], p['gru1_bhh'])
    xs = xs.reshape(b, N, d)
    # graph branch: fused 7-layer GAT over prot_contacts
    xg = emb.reshape(b, N, d)
    xg = gat_pallas(xg, prot_contacts, p)
    # cross interaction (CI=True)
    return cross_interaction_pallas(xs, xg, p)


def forward_pretrain_supervised(p, fc_arr, prot_data, prot_contacts, prot_len,
                                label_clan, label_family):
    del prot_len  # unused by forward_supervised, mirrors the PyTorch signature
    output = forward_supervised(p, prot_data, prot_contacts)          # (b, N, D)
    b = output.shape[0]
    out_mean = jnp.mean(output, axis=1)                               # (b, D)

    # clan head: tiny (b, n_clan) matmul -> plain XLA
    logits_clan = out_mean @ p['clan_Wt'] + p['clan_b']
    lse = jax.nn.logsumexp(logits_clan, axis=1)
    loss_clan = jnp.sum(lse - logits_clan[jnp.arange(b), label_clan])

    # family head: padded, batched per-clan classifier (no host loop -> jittable)
    Wt_sel = p['fam_Wt'][label_clan]                                   # (b, D, Fmax)
    b_sel = p['fam_b'][label_clan]                                     # (b, Fmax)
    valid = p['fam_valid'][label_clan]                                 # (b, Fmax)
    logits_fam = jnp.einsum('bd,bdf->bf', out_mean, Wt_sel) + b_sel
    logits_fam = jnp.where(valid, logits_fam, -1e30)
    lse_f = jax.nn.logsumexp(logits_fam, axis=1)
    ll = logits_fam[jnp.arange(b), label_family]
    use = fc_arr[label_clan] > 1
    loss_family = jnp.sum(jnp.where(use, lse_f - ll, 0.0))
    count = jnp.sum(use.astype(jnp.float32))
    # matches reference: (sum-CE clan + sum-CE family) / (b + count)
    return (loss_clan + loss_family) / (jnp.float32(b) + count)


forward_pretrain_supervised_jit = jax.jit(forward_pretrain_supervised)


# ---------------------------------------------------------------------------
# Deterministic parameter init (synthetic; shapes follow the module __init__).
# MXU weights are pre-transposed / pre-stacked and pre-cast to bf16 once here.
# ---------------------------------------------------------------------------
def init_params(key, fc, vocab=29):
    fc = np.asarray(fc, dtype=np.int32)
    n_clan, Fmax = int(fc.shape[0]), int(fc.max())
    keys = jax.random.split(key, 64)
    kit = iter(keys)
    BF16 = jnp.bfloat16

    def linear_init(out_dim, in_dim):
        kw, kb = jax.random.split(next(kit))
        bound = 1.0 / np.sqrt(in_dim)
        W = jax.random.uniform(kw, (out_dim, in_dim), jnp.float32, -bound, bound)
        b = jax.random.uniform(kb, (out_dim,), jnp.float32, -bound, bound)
        return W, b

    p = {}
    p['emb'] = jax.random.normal(next(kit), (vocab, D), jnp.float32) * 0.1
    for g in ('gru0', 'gru1'):
        Wih, bih = linear_init(3 * D, D)
        Whh, bhh = linear_init(3 * D, D)
        p[g + '_Wih_t'] = Wih.T.astype(BF16)
        p[g + '_bih'] = bih.reshape(1, 3 * D)
        p[g + '_Whh_t'] = Whh.T.astype(BF16)
        p[g + '_bhh'] = bhh.reshape(1, 3 * D)
    for nm in ('wattn', 'lin0', 'lin1'):
        Wts, bs = [], []
        for _ in range(7):
            W, bias = linear_init(D, D)
            Wts.append(W.T.astype(BF16))
            bs.append(bias.reshape(1, D))
        p[f'gat_{nm}_Wt'] = jnp.stack(Wts)        # (7, D, D) bf16
        p[f'gat_{nm}_b'] = jnp.stack(bs)          # (7, 1, D) f32
    Wf, bfin = linear_init(D, D)
    p['gat_final_Wt'], p['gat_final_b'] = Wf.T.astype(BF16), bfin.reshape(1, D)
    for ci in ('ci0', 'ci1'):
        W0, b0 = linear_init(D, D)
        W1, b1 = linear_init(D, D)
        p[ci + '_Wt0'], p[ci + '_b0'] = W0.T.astype(BF16), b0.reshape(1, D)
        p[ci + '_Wt1'], p[ci + '_b1'] = W1.T.astype(BF16), b1.reshape(1, D)
    Wl, bl = linear_init(D, 2 * D)                # Linear(512, 256)
    Wlt = Wl.T                                    # (512, 256)
    p['ci_lin_Wt_a'] = Wlt[:D].astype(BF16)
    p['ci_lin_Wt_b'] = Wlt[D:].astype(BF16)
    p['ci_lin_b'] = bl.reshape(1, D)
    # TODO(synk): original code loads fc from graph_fc.npy; synthesized here.
    Wc, bc = linear_init(n_clan, D)
    p['clan_Wt'], p['clan_b'] = Wc.T, bc
    fam_Wt = np.zeros((n_clan, D, Fmax), np.float32)
    fam_b = np.zeros((n_clan, Fmax), np.float32)
    fam_valid = np.zeros((n_clan, Fmax), bool)
    for c in range(n_clan):
        f = int(fc[c])
        W, b = linear_init(f, D)
        fam_Wt[c, :, :f] = np.asarray(W.T)
        fam_b[c, :f] = np.asarray(b)
        fam_valid[c, :f] = True
    p['fam_Wt'] = jnp.asarray(fam_Wt)
    p['fam_b'] = jnp.asarray(fam_b)
    p['fam_valid'] = jnp.asarray(fam_valid)
    return p


if __name__ == "__main__":
    b, i, j = 2, 4, 4                      # small shapes; N = i*j nodes, D = 256
    N = i * j
    fc = np.array([3, 1, 4], dtype=np.int32)   # synthetic clan -> #families

    params = init_params(jax.random.PRNGKey(0), fc)

    k1, k2 = jax.random.split(jax.random.PRNGKey(0), 2)
    prot_data = jax.random.randint(k1, (b, i, j), 0, 29)              # token ids
    contacts = (jax.random.uniform(k2, (b, N, N)) < 0.3).astype(jnp.float32)
    contacts = jnp.maximum(contacts, jnp.transpose(contacts, (0, 2, 1)))
    prot_len = jnp.array([N, N], dtype=jnp.int32)                     # unused
    label_clan = jnp.array([0, 1], dtype=jnp.int32)
    label_family = jnp.array([1, 0], dtype=jnp.int32)
    fc_arr = jnp.asarray(fc)

    loss = forward_pretrain_supervised_jit(params, fc_arr, prot_data, contacts,
                                           prot_len, label_clan, label_family)
    loss = jax.block_until_ready(loss)
    assert np.isfinite(float(loss))
    print("KERNEL_OK")
</pallas_src>

<mosaic_0001>
module attributes {stable_mosaic.version = 11 : i64} {
  func.func @_gru_kernel(%arg0: i32, %arg1: i32, %arg2: memref<4x8x256xf32, #tpu.memory_space<vmem>>, %arg3: memref<256x768xbf16, #tpu.memory_space<vmem>>, %arg4: memref<1x768xf32, #tpu.memory_space<vmem>>, %arg5: memref<256x768xbf16, #tpu.memory_space<vmem>>, %arg6: memref<1x768xf32, #tpu.memory_space<vmem>>, %arg7: memref<4x8x256xf32, #tpu.memory_space<vmem>>, %arg8: memref<8x256xf32, #tpu.memory_space<vmem>>) attributes {dimension_semantics = [#tpu.dimension_semantics<parallel>, #tpu.dimension_semantics<arbitrary>], iteration_bounds = array<i64: 1, 1>, scalar_prefetch = 0 : i64, scratch_operands = 1 : i64, tpu.core_type = #tpu.core_type<tc>, window_params = [{transform_indices = @transform_0, window_bounds = array<i64: 4, 8, 256>}, {pipeline_mode = #tpu.pipeline_mode<synchronous>, transform_indices = @transform_1, window_bounds = array<i64: 256, 768>}, {pipeline_mode = #tpu.pipeline_mode<synchronous>, transform_indices = @transform_2, window_bounds = array<i64: 1, 768>}, {pipeline_mode = #tpu.pipeline_mode<synchronous>, transform_indices = @transform_3, window_bounds = array<i64: 256, 768>}, {pipeline_mode = #tpu.pipeline_mode<synchronous>, transform_indices = @transform_4, window_bounds = array<i64: 1, 768>}, {transform_indices = @transform_5, window_bounds = array<i64: 4, 8, 256>}]} {
    %c0_i32 = arith.constant 0 : i32
    %0 = arith.cmpi eq, %arg1, %c0_i32 : i32
    %1 = arith.extui %0 : i1 to i32
    %c0_i32_0 = arith.constant 0 : i32
    %2 = arith.cmpi ne, %1, %c0_i32_0 : i32
    scf.if %2 {
      %cst_40 = arith.constant 0.000000e+00 : f32
      %156 = vector.broadcast %cst_40 : f32 to vector<8x256xf32>
      %c0_41 = arith.constant 0 : index
      %c0_42 = arith.constant 0 : index
      %157 = vector.load %arg8[%c0_41, %c0_42] : memref<8x256xf32, #tpu.memory_space<vmem>>, vector<8x256xf32>
      tpu.vector_store %arg8[%c0_41, %c0_42], %156 {strides = array<i32>} : memref<8x256xf32, #tpu.memory_space<vmem>>, vector<8x256xf32>,
    } else {
    }
    %c0 = arith.constant 0 : index
    %c0_1 = arith.constant 0 : index
    %c0_2 = arith.constant 0 : index
    %3 = vector.load %arg2[%c0, %c0_1, %c0_2] : memref<4x8x256xf32, #tpu.memory_space<vmem>>, vector<4x8x256xf32>
    %4 = vector.shape_cast %3 : vector<4x8x256xf32> to vector<32x256xf32>
    %5 = arith.truncf %4 : vector<32x256xf32> to vector<32x256xbf16>
    %c0_3 = arith.constant 0 : index
    %c0_4 = arith.constant 0 : index
    %6 = vector.load %arg3[%c0_3, %c0_4] : memref<256x768xbf16, #tpu.memory_space<vmem>>, vector<256x768xbf16>
    %cst = arith.constant dense<0.000000e+00> : vector<32x768xf32>
    %7 = tpu.matmul %5, %6, %cst {dimension_numbers = #tpu.dot_dimension_numbers<[1], [0], [0], [1], [0, 0, 1, 1], [], []>} : vector<32x256xbf16>, vector<256x768xbf16>, vector<32x768xf32> -> vector<32x768xf32>
    %c0_5 = arith.constant 0 : index
    %c0_6 = arith.constant 0 : index
    %8 = vector.load %arg4[%c0_5, %c0_6] : memref<1x768xf32, #tpu.memory_space<vmem>>, vector<1x768xf32>
    %9 = vector.broadcast %8 : vector<1x768xf32> to vector<32x768xf32>
    %10 = arith.addf %7, %9 : vector<32x768xf32>
    %11 = vector.shape_cast %10 : vector<32x768xf32> to vector<4x8x768xf32>
    %c0_7 = arith.constant 0 : index
    %c0_8 = arith.constant 0 : index
    %12 = vector.load %arg5[%c0_7, %c0_8] : memref<256x768xbf16, #tpu.memory_space<vmem>>, vector<256x768xbf16>
    %c0_9 = arith.constant 0 : index
    %c0_10 = arith.constant 0 : index
    %13 = vector.load %arg6[%c0_9, %c0_10] : memref<1x768xf32, #tpu.memory_space<vmem>>, vector<1x768xf32>
    %c0_11 = arith.constant 0 : index
    %c0_12 = arith.constant 0 : index
    %14 = vector.load %arg8[%c0_11, %c0_12] : memref<8x256xf32, #tpu.memory_space<vmem>>, vector<8x256xf32>
    %15 = vector.extract_strided_slice %11 {offsets = [0, 0, 0], sizes = [1, 8, 768], strides = [1, 1, 1]} : vector<4x8x768xf32> to vector<1x8x768xf32>
    %16 = vector.shape_cast %15 : vector<1x8x768xf32> to vector<8x768xf32>
    %17 = arith.truncf %14 : vector<8x256xf32> to vector<8x256xbf16>
    %cst_13 = arith.constant dense<0.000000e+00> : vector<8x768xf32>
    %18 = tpu.matmul %17, %12, %cst_13 {dimension_numbers = #tpu.dot_dimension_numbers<[1], [0], [0], [1], [0, 0, 1, 1], [], []>} : vector<8x256xbf16>, vector<256x768xbf16>, vector<8x768xf32> -> vector<8x768xf32>
    %19 = vector.broadcast %13 : vector<1x768xf32> to vector<8x768xf32>
    %20 = arith.addf %18, %19 : vector<8x768xf32>
    %21 = vector.extract_strided_slice %16 {offsets = [0, 0], sizes = [8, 256], strides = [1, 1]} : vector<8x768xf32> to vector<8x256xf32>
    %22 = vector.extract_strided_slice %20 {offsets = [0, 0], sizes = [8, 256], strides = [1, 1]} : vector<8x768xf32> to vector<8x256xf32>
    %23 = arith.addf %21, %22 : vector<8x256xf32>
    %24 = arith.negf %23 : vector<8x256xf32>
    %25 = math.exp %24 : vector<8x256xf32>
    %cst_14 = arith.constant 1.000000e+00 : f32
    %26 = vector.broadcast %cst_14 : f32 to vector<8x256xf32>
    %27 = arith.addf %26, %25 : vector<8x256xf32>
    %28 = arith.divf %26, %27 : vector<8x256xf32>
    %29 = vector.extract_strided_slice %16 {offsets = [0, 256], sizes = [8, 256], strides = [1, 1]} : vector<8x768xf32> to vector<8x256xf32>
    %30 = vector.extract_strided_slice %20 {offsets = [0, 256], sizes = [8, 256], strides = [1, 1]} : vector<8x768xf32> to vector<8x256xf32>
    %31 = arith.addf %29, %30 : vector<8x256xf32>
    %32 = arith.negf %31 : vector<8x256xf32>
    %33 = math.exp %32 : vector<8x256xf32>
    %cst_15 = arith.constant 1.000000e+00 : f32
    %34 = vector.broadcast %cst_15 : f32 to vector<8x256xf32>
    %35 = arith.addf %34, %33 : vector<8x256xf32>
    %36 = arith.divf %34, %35 : vector<8x256xf32>
    %37 = vector.extract_strided_slice %16 {offsets = [0, 512], sizes = [8, 256], strides = [1, 1]} : vector<8x768xf32> to vector<8x256xf32>
    %38 = vector.extract_strided_slice %20 {offsets = [0, 512], sizes = [8, 256], strides = [1, 1]} : vector<8x768xf32> to vector<8x256xf32>
    %39 = arith.mulf %28, %38 : vector<8x256xf32>
    %40 = arith.addf %37, %39 : vector<8x256xf32>
    %41 = math.tanh %40 : vector<8x256xf32>
    %cst_16 = arith.constant 1.000000e+00 : f32
    %42 = vector.broadcast %cst_16 : f32 to vector<8x256xf32>
    %43 = arith.subf %42, %36 : vector<8x256xf32>
    %44 = arith.mulf %43, %41 : vector<8x256xf32>
    %45 = arith.mulf %36, %14 : vector<8x256xf32>
    %46 = arith.addf %44, %45 : vector<8x256xf32>
    %c0_17 = arith.constant 0 : index
    %c0_18 = arith.constant 0 : index
    %c0_19 = arith.constant 0 : index
    %47 = vector.load %arg7[%c0_17, %c0_18, %c0_19] : memref<4x8x256xf32, #tpu.memory_space<vmem>>, vector<1x8x256xf32>
    %48 = vector.shape_cast %47 : vector<1x8x256xf32> to vector<8x256xf32>
    %49 = vector.shape_cast %46 : vector<8x256xf32> to vector<1x8x256xf32>
    tpu.vector_store %arg7[%c0_17, %c0_18, %c0_19], %49 {strides = array<i32>} : memref<4x8x256xf32, #tpu.memory_space<vmem>>, vector<1x8x256xf32>,
    %50 = vector.extract_strided_slice %11 {offsets = [1, 0, 0], sizes = [1, 8, 768], strides = [1, 1, 1]} : vector<4x8x768xf32> to vector<1x8x768xf32>
    %51 = vector.shape_cast %50 : vector<1x8x768xf32> to vector<8x768xf32>
    %52 = arith.truncf %46 : vector<8x256xf32> to vector<8x256xbf16>
    %cst_20 = arith.constant dense<0.000000e+00> : vector<8x768xf32>
    %53 = tpu.matmul %52, %12, %cst_20 {dimension_numbers = #tpu.dot_dimension_numbers<[1], [0], [0], [1], [0, 0, 1, 1], [], []>} : vector<8x256xbf16>, vector<256x768xbf16>, vector<8x768xf32> -> vector<8x768xf32>
    %54 = vector.broadcast %13 : vector<1x768xf32> to vector<8x768xf32>
    %55 = arith.addf %53, %54 : vector<8x768xf32>
    %56 = vector.extract_strided_slice %51 {offsets = [0, 0], sizes = [8, 256], strides = [1, 1]} : vector<8x768xf32> to vector<8x256xf32>
    %57 = vector.extract_strided_slice %55 {offsets = [0, 0], sizes = [8, 256], strides = [1, 1]} : vector<8x768xf32> to vector<8x256xf32>
    %58 = arith.addf %56, %57 : vector<8x256xf32>
    %59 = arith.negf %58 : vector<8x256xf32>
    %60 = math.exp %59 : vector<8x256xf32>
    %cst_21 = arith.constant 1.000000e+00 : f32
    %61 = vector.broadcast %cst_21 : f32 to vector<8x256xf32>
    %62 = arith.addf %61, %60 : vector<8x256xf32>
    %63 = arith.divf %61, %62 : vector<8x256xf32>
    %64 = vector.extract_strided_slice %51 {offsets = [0, 256], sizes = [8, 256], strides = [1, 1]} : vector<8x768xf32> to vector<8x256xf32>
    %65 = vector.extract_strided_slice %55 {offsets = [0, 256], sizes = [8, 256], strides = [1, 1]} : vector<8x768xf32> to vector<8x256xf32>
    %66 = arith.addf %64, %65 : vector<8x256xf32>
    %67 = arith.negf %66 : vector<8x256xf32>
    %68 = math.exp %67 : vector<8x256xf32>
    %cst_22 = arith.constant 1.000000e+00 : f32
    %69 = vector.broadcast %cst_22 : f32 to vector<8x256xf32>
    %70 = arith.addf %69, %68 : vector<8x256xf32>
    %71 = arith.divf %69, %70 : vector<8x256xf32>
    %72 = vector.extract_strided_slice %51 {offsets = [0, 512], sizes = [8, 256], strides = [1, 1]} : vector<8x768xf32> to vector<8x256xf32>
    %73 = vector.extract_strided_slice %55 {offsets = [0, 512], sizes = [8, 256], strides = [1, 1]} : vector<8x768xf32> to vector<8x256xf32>
    %74 = arith.mulf %63, %73 : vector<8x256xf32>
    %75 = arith.addf %72, %74 : vector<8x256xf32>
    %76 = math.tanh %75 : vector<8x256xf32>
    %cst_23 = arith.constant 1.000000e+00 : f32
    %77 = vector.broadcast %cst_23 : f32 to vector<8x256xf32>
    %78 = arith.subf %77, %71 : vector<8x256xf32>
    %79 = arith.mulf %78, %76 : vector<8x256xf32>
    %80 = arith.mulf %71, %46 : vector<8x256xf32>
    %81 = arith.addf %79, %80 : vector<8x256xf32>
    %c1 = arith.constant 1 : index
    %c0_24 = arith.constant 0 : index
    %c0_25 = arith.constant 0 : index
    %82 = vector.load %arg7[%c1, %c0_24, %c0_25] : memref<4x8x256xf32, #tpu.memory_space<vmem>>, vector<1x8x256xf32>
    %83 = vector.shape_cast %82 : vector<1x8x256xf32> to vector<8x256xf32>
    %84 = vector.shape_cast %81 : vector<8x256xf32> to vector<1x8x256xf32>
    tpu.vector_store %arg7[%c1, %c0_24, %c0_25], %84 {strides = array<i32>} : memref<4x8x256xf32, #tpu.memory_space<vmem>>, vector<1x8x256xf32>,
    %85 = vector.extract_strided_slice %11 {offsets = [2, 0, 0], sizes = [1, 8, 768], strides = [1, 1, 1]} : vector<4x8x768xf32> to vector<1x8x768xf32>
    %86 = vector.shape_cast %85 : vector<1x8x768xf32> to vector<8x768xf32>
    %87 = arith.truncf %81 : vector<8x256xf32> to vector<8x256xbf16>
    %cst_26 = arith.constant dense<0.000000e+00> : vector<8x768xf32>
    %88 = tpu.matmul %87, %12, %cst_26 {dimension_numbers = #tpu.dot_dimension_numbers<[1], [0], [0], [1], [0, 0, 1, 1], [], []>} : vector<8x256xbf16>, vector<256x768xbf16>, vector<8x768xf32> -> vector<8x768xf32>
    %89 = vector.broadcast %13 : vector<1x768xf32> to vector<8x768xf32>
    %90 = arith.addf %88, %89 : vector<8x768xf32>
    %91 = vector.extract_strided_slice %86 {offsets = [0, 0], sizes = [8, 256], strides = [1, 1]} : vector<8x768xf32> to vector<8x256xf32>
    %92 = vector.extract_strided_slice %90 {offsets = [0, 0], sizes = [8, 256], strides = [1, 1]} : vector<8x768xf32> to vector<8x256xf32>
    %93 = arith.addf %91, %92 : vector<8x256xf32>
    %94 = arith.negf %93 : vector<8x256xf32>
    %95 = math.exp %94 : vector<8x256xf32>
    %cst_27 = arith.constant 1.000000e+00 : f32
    %96 = vector.broadcast %cst_27 : f32 to vector<8x256xf32>
    %97 = arith.addf %96, %95 : vector<8x256xf32>
    %98 = arith.divf %96, %97 : vector<8x256xf32>
    %99 = vector.extract_strided_slice %86 {offsets = [0, 256], sizes = [8, 256], strides = [1, 1]} : vector<8x768xf32> to vector<8x256xf32>
    %100 = vector.extract_strided_slice %90 {offsets = [0, 256], sizes = [8, 256], strides = [1, 1]} : vector<8x768xf32> to vector<8x256xf32>
    %101 = arith.addf %99, %100 : vector<8x256xf32>
    %102 = arith.negf %101 : vector<8x256xf32>
    %103 = math.exp %102 : vector<8x256xf32>
    %cst_28 = arith.constant 1.000000e+00 : f32
    %104 = vector.broadcast %cst_28 : f32 to vector<8x256xf32>
    %105 = arith.addf %104, %103 : vector<8x256xf32>
    %106 = arith.divf %104, %105 : vector<8x256xf32>
    %107 = vector.extract_strided_slice %86 {offsets = [0, 512], sizes = [8, 256], strides = [1, 1]} : vector<8x768xf32> to vector<8x256xf32>
    %108 = vector.extract_strided_slice %90 {offsets = [0, 512], sizes = [8, 256], strides = [1, 1]} : vector<8x768xf32> to vector<8x256xf32>
    %109 = arith.mulf %98, %108 : vector<8x256xf32>
    %110 = arith.addf %107, %109 : vector<8x256xf32>
    %111 = math.tanh %110 : vector<8x256xf32>
    %cst_29 = arith.constant 1.000000e+00 : f32
    %112 = vector.broadcast %cst_29 : f32 to vector<8x256xf32>
    %113 = arith.subf %112, %106 : vector<8x256xf32>
    %114 = arith.mulf %113, %111 : vector<8x256xf32>
    %115 = arith.mulf %106, %81 : vector<8x256xf32>
    %116 = arith.addf %114, %115 : vector<8x256xf32>
    %c2 = arith.constant 2 : index
    %c0_30 = arith.constant 0 : index
    %c0_31 = arith.constant 0 : index
    %117 = vector.load %arg7[%c2, %c0_30, %c0_31] : memref<4x8x256xf32, #tpu.memory_space<vmem>>, vector<1x8x256xf32>
    %118 = vector.shape_cast %117 : vector<1x8x256xf32> to vector<8x256xf32>
    %119 = vector.shape_cast %116 : vector<8x256xf32> to vector<1x8x256xf32>
    tpu.vector_store %arg7[%c2, %c0_30, %c0_31], %119 {strides = array<i32>} : memref<4x8x256xf32, #tpu.memory_space<vmem>>, vector<1x8x256xf32>,
    %120 = vector.extract_strided_slice %11 {offsets = [3, 0, 0], sizes = [1, 8, 768], strides = [1, 1, 1]} : vector<4x8x768xf32> to vector<1x8x768xf32>
    %121 = vector.shape_cast %120 : vector<1x8x768xf32> to vector<8x768xf32>
    %122 = arith.truncf %116 : vector<8x256xf32> to vector<8x256xbf16>
    %cst_32 = arith.constant dense<0.000000e+00> : vector<8x768xf32>
    %123 = tpu.matmul %122, %12, %cst_32 {dimension_numbers = #tpu.dot_dimension_numbers<[1], [0], [0], [1], [0, 0, 1, 1], [], []>} : vector<8x256xbf16>, vector<256x768xbf16>, vector<8x768xf32> -> vector<8x768xf32>
    %124 = vector.broadcast %13 : vector<1x768xf32> to vector<8x768xf32>
    %125 = arith.addf %123, %124 : vector<8x768xf32>
    %126 = vector.extract_strided_slice %121 {offsets = [0, 0], sizes = [8, 256], strides = [1, 1]} : vector<8x768xf32> to vector<8x256xf32>
    %127 = vector.extract_strided_slice %125 {offsets = [0, 0], sizes = [8, 256], strides = [1, 1]} : vector<8x768xf32> to vector<8x256xf32>
    %128 = arith.addf %126, %127 : vector<8x256xf32>
    %129 = arith.negf %128 : vector<8x256xf32>
    %130 = math.exp %129 : vector<8x256xf32>
    %cst_33 = arith.constant 1.000000e+00 : f32
    %131 = vector.broadcast %cst_33 : f32 to vector<8x256xf32>
    %132 = arith.addf %131, %130 : vector<8x256xf32>
    %133 = arith.divf %131, %132 : vector<8x256xf32>
    %134 = vector.extract_strided_slice %121 {offsets = [0, 256], sizes = [8, 256], strides = [1, 1]} : vector<8x768xf32> to vector<8x256xf32>
    %135 = vector.extract_strided_slice %125 {offsets = [0, 256], sizes = [8, 256], strides = [1, 1]} : vector<8x768xf32> to vector<8x256xf32>
    %136 = arith.addf %134, %135 : vector<8x256xf32>
    %137 = arith.negf %136 : vector<8x256xf32>
    %138 = math.exp %137 : vector<8x256xf32>
    %cst_34 = arith.constant 1.000000e+00 : f32
    %139 = vector.broadcast %cst_34 : f32 to vector<8x256xf32>
    %140 = arith.addf %139, %138 : vector<8x256xf32>
    %141 = arith.divf %139, %140 : vector<8x256xf32>
    %142 = vector.extract_strided_slice %121 {offsets = [0, 512], sizes = [8, 256], strides = [1, 1]} : vector<8x768xf32> to vector<8x256xf32>
    %143 = vector.extract_strided_slice %125 {offsets = [0, 512], sizes = [8, 256], strides = [1, 1]} : vector<8x768xf32> to vector<8x256xf32>
    %144 = arith.mulf %133, %143 : vector<8x256xf32>
    %145 = arith.addf %142, %144 : vector<8x256xf32>
    %146 = math.tanh %145 : vector<8x256xf32>
    %cst_35 = arith.constant 1.000000e+00 : f32
    %147 = vector.broadcast %cst_35 : f32 to vector<8x256xf32>
    %148 = arith.subf %147, %141 : vector<8x256xf32>
    %149 = arith.mulf %148, %146 : vector<8x256xf32>
    %150 = arith.mulf %141, %116 : vector<8x256xf32>
    %151 = arith.addf %149, %150 : vector<8x256xf32>
    %c3 = arith.constant 3 : index
    %c0_36 = arith.constant 0 : index
    %c0_37 = arith.constant 0 : index
    %152 = vector.load %arg7[%c3, %c0_36, %c0_37] : memref<4x8x256xf32, #tpu.memory_space<vmem>>, vector<1x8x256xf32>
    %153 = vector.shape_cast %152 : vector<1x8x256xf32> to vector<8x256xf32>
    %154 = vector.shape_cast %151 : vector<8x256xf32> to vector<1x8x256xf32>
    tpu.vector_store %arg7[%c3, %c0_36, %c0_37], %154 {strides = array<i32>} : memref<4x8x256xf32, #tpu.memory_space<vmem>>, vector<1x8x256xf32>,
    %c0_38 = arith.constant 0 : index
    %c0_39 = arith.constant 0 : index
    %155 = vector.load %arg8[%c0_38, %c0_39] : memref<8x256xf32, #tpu.memory_space<vmem>>, vector<8x256xf32>
    tpu.vector_store %arg8[%c0_38, %c0_39], %151 {strides = array<i32>} : memref<8x256xf32, #tpu.memory_space<vmem>>, vector<8x256xf32>,
    return
  }
  func.func @transform_0(%arg0: i32, %arg1: i32) -> (i32, i32, i32) {
    %c0_i32 = arith.constant 0 : i32
    %c0_i32_0 = arith.constant 0 : i32
    return %arg1, %arg0, %c0_i32 : i32, i32, i32
  }
  func.func @transform_1(%arg0: i32, %arg1: i32) -> (i32, i32) {
    %c0_i32 = arith.constant 0 : i32
    %c0_i32_0 = arith.constant 0 : i32
    %c0_i32_1 = arith.constant 0 : i32
    return %c0_i32, %c0_i32_0 : i32, i32
  }
  func.func @transform_2(%arg0: i32, %arg1: i32) -> (i32, i32) {
    %c0_i32 = arith.constant 0 : i32
    %c0_i32_0 = arith.constant 0 : i32
    %c0_i32_1 = arith.constant 0 : i32
    return %c0_i32, %c0_i32_0 : i32, i32
  }
  func.func @transform_3(%arg0: i32, %arg1: i32) -> (i32, i32) {
    %c0_i32 = arith.constant 0 : i32
    %c0_i32_0 = arith.constant 0 : i32
    %c0_i32_1 = arith.constant 0 : i32
    return %c0_i32, %c0_i32_0 : i32, i32
  }
  func.func @transform_4(%arg0: i32, %arg1: i32) -> (i32, i32) {
    %c0_i32 = arith.constant 0 : i32
    %c0_i32_0 = arith.constant 0 : i32
    %c0_i32_1 = arith.constant 0 : i32
    return %c0_i32, %c0_i32_0 : i32, i32
  }
  func.func @transform_5(%arg0: i32, %arg1: i32) -> (i32, i32, i32) {
    %c0_i32 = arith.constant 0 : i32
    %c0_i32_0 = arith.constant 0 : i32
    return %arg1, %arg0, %c0_i32 : i32, i32, i32
  }
}

module attributes {stable_mosaic.version = 11 : i64} {
  func.func @_gru_kernel(%arg0: i32, %arg1: i32, %arg2: memref<4x8x256xf32, #tpu.memory_space<vmem>>, %arg3: memref<256x768xbf16, #tpu.memory_space<vmem>>, %arg4: memref<1x768xf32, #tpu.memory_space<vmem>>, %arg5: memref<256x768xbf16, #tpu.memory_space<vmem>>, %arg6: memref<1x768xf32, #tpu.memory_space<vmem>>, %arg7: memref<4x8x256xf32, #tpu.memory_space<vmem>>, %arg8: memref<8x256xf32, #tpu.memory_space<vmem>>) attributes {dimension_semantics = [#tpu.dimension_semantics<parallel>, #tpu.dimension_semantics<arbitrary>], iteration_bounds = array<i64: 1, 1>, scalar_prefetch = 0 : i64, scratch_operands = 1 : i64, tpu.core_type = #tpu.core_type<tc>, window_params = [{transform_indices = @transform_0, window_bounds = array<i64: 4, 8, 256>}, {pipeline_mode = #tpu.pipeline_mode<synchronous>, transform_indices = @transform_1, window_bounds = array<i64: 256, 768>}, {pipeline_mode = #tpu.pipeline_mode<synchronous>, transform_indices = @transform_2, window_bounds = array<i64: 1, 768>}, {pipeline_mode = #tpu.pipeline_mode<synchronous>, transform_indices = @transform_3, window_bounds = array<i64: 256, 768>}, {pipeline_mode = #tpu.pipeline_mode<synchronous>, transform_indices = @transform_4, window_bounds = array<i64: 1, 768>}, {transform_indices = @transform_5, window_bounds = array<i64: 4, 8, 256>}]} {
    %c0_i32 = arith.constant 0 : i32
    %0 = arith.cmpi eq, %arg1, %c0_i32 : i32
    %1 = arith.extui %0 : i1 to i32
    %c0_i32_0 = arith.constant 0 : i32
    %2 = arith.cmpi ne, %1, %c0_i32_0 : i32
    scf.if %2 {
      %cst_40 = arith.constant 0.000000e+00 : f32
      %156 = vector.broadcast %cst_40 : f32 to vector<8x256xf32>
      %c0_41 = arith.constant 0 : index
      %c0_42 = arith.constant 0 : index
      %157 = vector.load %arg8[%c0_41, %c0_42] : memref<8x256xf32, #tpu.memory_space<vmem>>, vector<8x256xf32>
      tpu.vector_store %arg8[%c0_41, %c0_42], %156 {strides = array<i32>} : memref<8x256xf32, #tpu.memory_space<vmem>>, vector<8x256xf32>,
    } else {
    }
    %c0 = arith.constant 0 : index
    %c0_1 = arith.constant 0 : index
    %c0_2 = arith.constant 0 : index
    %3 = vector.load %arg2[%c0, %c0_1, %c0_2] : memref<4x8x256xf32, #tpu.memory_space<vmem>>, vector<4x8x256xf32>
    %4 = vector.shape_cast %3 : vector<4x8x256xf32> to vector<32x256xf32>
    %5 = arith.truncf %4 : vector<32x256xf32> to vector<32x256xbf16>
    %c0_3 = arith.constant 0 : index
    %c0_4 = arith.constant 0 : index
    %6 = vector.load %arg3[%c0_3, %c0_4] : memref<256x768xbf16, #tpu.memory_space<vmem>>, vector<256x768xbf16>
    %cst = arith.constant dense<0.000000e+00> : vector<32x768xf32>
    %7 = tpu.matmul %5, %6, %cst {dimension_numbers = #tpu.dot_dimension_numbers<[1], [0], [0], [1], [0, 0, 1, 1], [], []>} : vector<32x256xbf16>, vector<256x768xbf16>, vector<32x768xf32> -> vector<32x768xf32>
    %c0_5 = arith.constant 0 : index
    %c0_6 = arith.constant 0 : index
    %8 = vector.load %arg4[%c0_5, %c0_6] : memref<1x768xf32, #tpu.memory_space<vmem>>, vector<1x768xf32>
    %9 = vector.broadcast %8 : vector<1x768xf32> to vector<32x768xf32>
    %10 = arith.addf %7, %9 : vector<32x768xf32>
    %11 = vector.shape_cast %10 : vector<32x768xf32> to vector<4x8x768xf32>
    %c0_7 = arith.constant 0 : index
    %c0_8 = arith.constant 0 : index
    %12 = vector.load %arg5[%c0_7, %c0_8] : memref<256x768xbf16, #tpu.memory_space<vmem>>, vector<256x768xbf16>
    %c0_9 = arith.constant 0 : index
    %c0_10 = arith.constant 0 : index
    %13 = vector.load %arg6[%c0_9, %c0_10] : memref<1x768xf32, #tpu.memory_space<vmem>>, vector<1x768xf32>
    %c0_11 = arith.constant 0 : index
    %c0_12 = arith.constant 0 : index
    %14 = vector.load %arg8[%c0_11, %c0_12] : memref<8x256xf32, #tpu.memory_space<vmem>>, vector<8x256xf32>
    %15 = vector.extract_strided_slice %11 {offsets = [0, 0, 0], sizes = [1, 8, 768], strides = [1, 1, 1]} : vector<4x8x768xf32> to vector<1x8x768xf32>
    %16 = vector.shape_cast %15 : vector<1x8x768xf32> to vector<8x768xf32>
    %17 = arith.truncf %14 : vector<8x256xf32> to vector<8x256xbf16>
    %cst_13 = arith.constant dense<0.000000e+00> : vector<8x768xf32>
    %18 = tpu.matmul %17, %12, %cst_13 {dimension_numbers = #tpu.dot_dimension_numbers<[1], [0], [0], [1], [0, 0, 1, 1], [], []>} : vector<8x256xbf16>, vector<256x768xbf16>, vector<8x768xf32> -> vector<8x768xf32>
    %19 = vector.broadcast %13 : vector<1x768xf32> to vector<8x768xf32>
    %20 = arith.addf %18, %19 : vector<8x768xf32>
    %21 = vector.extract_strided_slice %16 {offsets = [0, 0], sizes = [8, 256], strides = [1, 1]} : vector<8x768xf32> to vector<8x256xf32>
    %22 = vector.extract_strided_slice %20 {offsets = [0, 0], sizes = [8, 256], strides = [1, 1]} : vector<8x768xf32> to vector<8x256xf32>
    %23 = arith.addf %21, %22 : vector<8x256xf32>
    %24 = arith.negf %23 : vector<8x256xf32>
    %25 = math.exp %24 : vector<8x256xf32>
    %cst_14 = arith.constant 1.000000e+00 : f32
    %26 = vector.broadcast %cst_14 : f32 to vector<8x256xf32>
    %27 = arith.addf %26, %25 : vector<8x256xf32>
    %28 = arith.divf %26, %27 : vector<8x256xf32>
    %29 = vector.extract_strided_slice %16 {offsets = [0, 256], sizes = [8, 256], strides = [1, 1]} : vector<8x768xf32> to vector<8x256xf32>
    %30 = vector.extract_strided_slice %20 {offsets = [0, 256], sizes = [8, 256], strides = [1, 1]} : vector<8x768xf32> to vector<8x256xf32>
    %31 = arith.addf %29, %30 : vector<8x256xf32>
    %32 = arith.negf %31 : vector<8x256xf32>
    %33 = math.exp %32 : vector<8x256xf32>
    %cst_15 = arith.constant 1.000000e+00 : f32
    %34 = vector.broadcast %cst_15 : f32 to vector<8x256xf32>
    %35 = arith.addf %34, %33 : vector<8x256xf32>
    %36 = arith.divf %34, %35 : vector<8x256xf32>
    %37 = vector.extract_strided_slice %16 {offsets = [0, 512], sizes = [8, 256], strides = [1, 1]} : vector<8x768xf32> to vector<8x256xf32>
    %38 = vector.extract_strided_slice %20 {offsets = [0, 512], sizes = [8, 256], strides = [1, 1]} : vector<8x768xf32> to vector<8x256xf32>
    %39 = arith.mulf %28, %38 : vector<8x256xf32>
    %40 = arith.addf %37, %39 : vector<8x256xf32>
    %41 = math.tanh %40 : vector<8x256xf32>
    %cst_16 = arith.constant 1.000000e+00 : f32
    %42 = vector.broadcast %cst_16 : f32 to vector<8x256xf32>
    %43 = arith.subf %42, %36 : vector<8x256xf32>
    %44 = arith.mulf %43, %41 : vector<8x256xf32>
    %45 = arith.mulf %36, %14 : vector<8x256xf32>
    %46 = arith.addf %44, %45 : vector<8x256xf32>
    %c0_17 = arith.constant 0 : index
    %c0_18 = arith.constant 0 : index
    %c0_19 = arith.constant 0 : index
    %47 = vector.load %arg7[%c0_17, %c0_18, %c0_19] : memref<4x8x256xf32, #tpu.memory_space<vmem>>, vector<1x8x256xf32>
    %48 = vector.shape_cast %47 : vector<1x8x256xf32> to vector<8x256xf32>
    %49 = vector.shape_cast %46 : vector<8x256xf32> to vector<1x8x256xf32>
    tpu.vector_store %arg7[%c0_17, %c0_18, %c0_19], %49 {strides = array<i32>} : memref<4x8x256xf32, #tpu.memory_space<vmem>>, vector<1x8x256xf32>,
    %50 = vector.extract_strided_slice %11 {offsets = [1, 0, 0], sizes = [1, 8, 768], strides = [1, 1, 1]} : vector<4x8x768xf32> to vector<1x8x768xf32>
    %51 = vector.shape_cast %50 : vector<1x8x768xf32> to vector<8x768xf32>
    %52 = arith.truncf %46 : vector<8x256xf32> to vector<8x256xbf16>
    %cst_20 = arith.constant dense<0.000000e+00> : vector<8x768xf32>
    %53 = tpu.matmul %52, %12, %cst_20 {dimension_numbers = #tpu.dot_dimension_numbers<[1], [0], [0], [1], [0, 0, 1, 1], [], []>} : vector<8x256xbf16>, vector<256x768xbf16>, vector<8x768xf32> -> vector<8x768xf32>
    %54 = vector.broadcast %13 : vector<1x768xf32> to vector<8x768xf32>
    %55 = arith.addf %53, %54 : vector<8x768xf32>
    %56 = vector.extract_strided_slice %51 {offsets = [0, 0], sizes = [8, 256], strides = [1, 1]} : vector<8x768xf32> to vector<8x256xf32>
    %57 = vector.extract_strided_slice %55 {offsets = [0, 0], sizes = [8, 256], strides = [1, 1]} : vector<8x768xf32> to vector<8x256xf32>
    %58 = arith.addf %56, %57 : vector<8x256xf32>
    %59 = arith.negf %58 : vector<8x256xf32>
    %60 = math.exp %59 : vector<8x256xf32>
    %cst_21 = arith.constant 1.000000e+00 : f32
    %61 = vector.broadcast %cst_21 : f32 to vector<8x256xf32>
    %62 = arith.addf %61, %60 : vector<8x256xf32>
    %63 = arith.divf %61, %62 : vector<8x256xf32>
    %64 = vector.extract_strided_slice %51 {offsets = [0, 256], sizes = [8, 256], strides = [1, 1]} : vector<8x768xf32> to vector<8x256xf32>
    %65 = vector.extract_strided_slice %55 {offsets = [0, 256], sizes = [8, 256], strides = [1, 1]} : vector<8x768xf32> to vector<8x256xf32>
    %66 = arith.addf %64, %65 : vector<8x256xf32>
    %67 = arith.negf %66 : vector<8x256xf32>
    %68 = math.exp %67 : vector<8x256xf32>
    %cst_22 = arith.constant 1.000000e+00 : f32
    %69 = vector.broadcast %cst_22 : f32 to vector<8x256xf32>
    %70 = arith.addf %69, %68 : vector<8x256xf32>
    %71 = arith.divf %69, %70 : vector<8x256xf32>
    %72 = vector.extract_strided_slice %51 {offsets = [0, 512], sizes = [8, 256], strides = [1, 1]} : vector<8x768xf32> to vector<8x256xf32>
    %73 = vector.extract_strided_slice %55 {offsets = [0, 512], sizes = [8, 256], strides = [1, 1]} : vector<8x768xf32> to vector<8x256xf32>
    %74 = arith.mulf %63, %73 : vector<8x256xf32>
    %75 = arith.addf %72, %74 : vector<8x256xf32>
    %76 = math.tanh %75 : vector<8x256xf32>
    %cst_23 = arith.constant 1.000000e+00 : f32
    %77 = vector.broadcast %cst_23 : f32 to vector<8x256xf32>
    %78 = arith.subf %77, %71 : vector<8x256xf32>
    %79 = arith.mulf %78, %76 : vector<8x256xf32>
    %80 = arith.mulf %71, %46 : vector<8x256xf32>
    %81 = arith.addf %79, %80 : vector<8x256xf32>
    %c1 = arith.constant 1 : index
    %c0_24 = arith.constant 0 : index
    %c0_25 = arith.constant 0 : index
    %82 = vector.load %arg7[%c1, %c0_24, %c0_25] : memref<4x8x256xf32, #tpu.memory_space<vmem>>, vector<1x8x256xf32>
    %83 = vector.shape_cast %82 : vector<1x8x256xf32> to vector<8x256xf32>
    %84 = vector.shape_cast %81 : vector<8x256xf32> to vector<1x8x256xf32>
    tpu.vector_store %arg7[%c1, %c0_24, %c0_25], %84 {strides = array<i32>} : memref<4x8x256xf32, #tpu.memory_space<vmem>>, vector<1x8x256xf32>,
    %85 = vector.extract_strided_slice %11 {offsets = [2, 0, 0], sizes = [1, 8, 768], strides = [1, 1, 1]} : vector<4x8x768xf32> to vector<1x8x768xf32>
    %86 = vector.shape_cast %85 : vector<1x8x768xf32> to vector<8x768xf32>
    %87 = arith.truncf %81 : vector<8x256xf32> to vector<8x256xbf16>
    %cst_26 = arith.constant dense<0.000000e+00> : vector<8x768xf32>
    %88 = tpu.matmul %87, %12, %cst_26 {dimension_numbers = #tpu.dot_dimension_numbers<[1], [0], [0], [1], [0, 0, 1, 1], [], []>} : vector<8x256xbf16>, vector<256x768xbf16>, vector<8x768xf32> -> vector<8x768xf32>
    %89 = vector.broadcast %13 : vector<1x768xf32> to vector<8x768xf32>
    %90 = arith.addf %88, %89 : vector<8x768xf32>
    %91 = vector.extract_strided_slice %86 {offsets = [0, 0], sizes = [8, 256], strides = [1, 1]} : vector<8x768xf32> to vector<8x256xf32>
    %92 = vector.extract_strided_slice %90 {offsets = [0, 0], sizes = [8, 256], strides = [1, 1]} : vector<8x768xf32> to vector<8x256xf32>
    %93 = arith.addf %91, %92 : vector<8x256xf32>
    %94 = arith.negf %93 : vector<8x256xf32>
    %95 = math.exp %94 : vector<8x256xf32>
    %cst_27 = arith.constant 1.000000e+00 : f32
    %96 = vector.broadcast %cst_27 : f32 to vector<8x256xf32>
    %97 = arith.addf %96, %95 : vector<8x256xf32>
    %98 = arith.divf %96, %97 : vector<8x256xf32>
    %99 = vector.extract_strided_slice %86 {offsets = [0, 256], sizes = [8, 256], strides = [1, 1]} : vector<8x768xf32> to vector<8x256xf32>
    %100 = vector.extract_strided_slice %90 {offsets = [0, 256], sizes = [8, 256], strides = [1, 1]} : vector<8x768xf32> to vector<8x256xf32>
    %101 = arith.addf %99, %100 : vector<8x256xf32>
    %102 = arith.negf %101 : vector<8x256xf32>
    %103 = math.exp %102 : vector<8x256xf32>
    %cst_28 = arith.constant 1.000000e+00 : f32
    %104 = vector.broadcast %cst_28 : f32 to vector<8x256xf32>
    %105 = arith.addf %104, %103 : vector<8x256xf32>
    %106 = arith.divf %104, %105 : vector<8x256xf32>
    %107 = vector.extract_strided_slice %86 {offsets = [0, 512], sizes = [8, 256], strides = [1, 1]} : vector<8x768xf32> to vector<8x256xf32>
    %108 = vector.extract_strided_slice %90 {offsets = [0, 512], sizes = [8, 256], strides = [1, 1]} : vector<8x768xf32> to vector<8x256xf32>
    %109 = arith.mulf %98, %108 : vector<8x256xf32>
    %110 = arith.addf %107, %109 : vector<8x256xf32>
    %111 = math.tanh %110 : vector<8x256xf32>
    %cst_29 = arith.constant 1.000000e+00 : f32
    %112 = vector.broadcast %cst_29 : f32 to vector<8x256xf32>
    %113 = arith.subf %112, %106 : vector<8x256xf32>
    %114 = arith.mulf %113, %111 : vector<8x256xf32>
    %115 = arith.mulf %106, %81 : vector<8x256xf32>
    %116 = arith.addf %114, %115 : vector<8x256xf32>
    %c2 = arith.constant 2 : index
    %c0_30 = arith.constant 0 : index
    %c0_31 = arith.constant 0 : index
    %117 = vector.load %arg7[%c2, %c0_30, %c0_31] : memref<4x8x256xf32, #tpu.memory_space<vmem>>, vector<1x8x256xf32>
    %118 = vector.shape_cast %117 : vector<1x8x256xf32> to vector<8x256xf32>
    %119 = vector.shape_cast %116 : vector<8x256xf32> to vector<1x8x256xf32>
    tpu.vector_store %arg7[%c2, %c0_30, %c0_31], %119 {strides = array<i32>} : memref<4x8x256xf32, #tpu.memory_space<vmem>>, vector<1x8x256xf32>,
    %120 = vector.extract_strided_slice %11 {offsets = [3, 0, 0], sizes = [1, 8, 768], strides = [1, 1, 1]} : vector<4x8x768xf32> to vector<1x8x768xf32>
    %121 = vector.shape_cast %120 : vector<1x8x768xf32> to vector<8x768xf32>
    %122 = arith.truncf %116 : vector<8x256xf32> to vector<8x256xbf16>
    %cst_32 = arith.constant dense<0.000000e+00> : vector<8x768xf32>
    %123 = tpu.matmul %122, %12, %cst_32 {dimension_numbers = #tpu.dot_dimension_numbers<[1], [0], [0], [1], [0, 0, 1, 1], [], []>} : vector<8x256xbf16>, vector<256x768xbf16>, vector<8x768xf32> -> vector<8x768xf32>
    %124 = vector.broadcast %13 : vector<1x768xf32> to vector<8x768xf32>
    %125 = arith.addf %123, %124 : vector<8x768xf32>
    %126 = vector.extract_strided_slice %121 {offsets = [0, 0], sizes = [8, 256], strides = [1, 1]} : vector<8x768xf32> to vector<8x256xf32>
    %127 = vector.extract_strided_slice %125 {offsets = [0, 0], sizes = [8, 256], strides = [1, 1]} : vector<8x768xf32> to vector<8x256xf32>
    %128 = arith.addf %126, %127 : vector<8x256xf32>
    %129 = arith.negf %128 : vector<8x256xf32>
    %130 = math.exp %129 : vector<8x256xf32>
    %cst_33 = arith.constant 1.000000e+00 : f32
    %131 = vector.broadcast %cst_33 : f32 to vector<8x256xf32>
    %132 = arith.addf %131, %130 : vector<8x256xf32>
    %133 = arith.divf %131, %132 : vector<8x256xf32>
    %134 = vector.extract_strided_slice %121 {offsets = [0, 256], sizes = [8, 256], strides = [1, 1]} : vector<8x768xf32> to vector<8x256xf32>
    %135 = vector.extract_strided_slice %125 {offsets = [0, 256], sizes = [8, 256], strides = [1, 1]} : vector<8x768xf32> to vector<8x256xf32>
    %136 = arith.addf %134, %135 : vector<8x256xf32>
    %137 = arith.negf %136 : vector<8x256xf32>
    %138 = math.exp %137 : vector<8x256xf32>
    %cst_34 = arith.constant 1.000000e+00 : f32
    %139 = vector.broadcast %cst_34 : f32 to vector<8x256xf32>
    %140 = arith.addf %139, %138 : vector<8x256xf32>
    %141 = arith.divf %139, %140 : vector<8x256xf32>
    %142 = vector.extract_strided_slice %121 {offsets = [0, 512], sizes = [8, 256], strides = [1, 1]} : vector<8x768xf32> to vector<8x256xf32>
    %143 = vector.extract_strided_slice %125 {offsets = [0, 512], sizes = [8, 256], strides = [1, 1]} : vector<8x768xf32> to vector<8x256xf32>
    %144 = arith.mulf %133, %143 : vector<8x256xf32>
    %145 = arith.addf %142, %144 : vector<8x256xf32>
    %146 = math.tanh %145 : vector<8x256xf32>
    %cst_35 = arith.constant 1.000000e+00 : f32
    %147 = vector.broadcast %cst_35 : f32 to vector<8x256xf32>
    %148 = arith.subf %147, %141 : vector<8x256xf32>
    %149 = arith.mulf %148, %146 : vector<8x256xf32>
    %150 = arith.mulf %141, %116 : vector<8x256xf32>
    %151 = arith.addf %149, %150 : vector<8x256xf32>
    %c3 = arith.constant 3 : index
    %c0_36 = arith.constant 0 : index
    %c0_37 = arith.constant 0 : index
    %152 = vector.load %arg7[%c3, %c0_36, %c0_37] : memref<4x8x256xf32, #tpu.memory_space<vmem>>, vector<1x8x256xf32>
    %153 = vector.shape_cast %152 : vector<1x8x256xf32> to vector<8x256xf32>
    %154 = vector.shape_cast %151 : vector<8x256xf32> to vector<1x8x256xf32>
    tpu.vector_store %arg7[%c3, %c0_36, %c0_37], %154 {strides = array<i32>} : memref<4x8x256xf32, #tpu.memory_space<vmem>>, vector<1x8x256xf32>,
    %c0_38 = arith.constant 0 : index
    %c0_39 = arith.constant 0 : index
    %155 = vector.load %arg8[%c0_38, %c0_39] : memref<8x256xf32, #tpu.memory_space<vmem>>, vector<8x256xf32>
    tpu.vector_store %arg8[%c0_38, %c0_39], %151 {strides = array<i32>} : memref<8x256xf32, #tpu.memory_space<vmem>>, vector<8x256xf32>,
    return
  }
  func.func @transform_0(%arg0: i32, %arg1: i32) -> (i32, i32, i32) {
    %c0_i32 = arith.constant 0 : i32
    %c0_i32_0 = arith.constant 0 : i32
    return %arg1, %arg0, %c0_i32 : i32, i32, i32
  }
  func.func @transform_1(%arg0: i32, %arg1: i32) -> (i32, i32) {
    %c0_i32 = arith.constant 0 : i32
    %c0_i32_0 = arith.constant 0 : i32
    %c0_i32_1 = arith.constant 0 : i32
    return %c0_i32, %c0_i32_0 : i32, i32
  }
  func.func @transform_2(%arg0: i32, %arg1: i32) -> (i32, i32) {
    %c0_i32 = arith.constant 0 : i32
    %c0_i32_0 = arith.constant 0 : i32
    %c0_i32_1 = arith.constant 0 : i32
    return %c0_i32, %c0_i32_0 : i32, i32
  }
  func.func @transform_3(%arg0: i32, %arg1: i32) -> (i32, i32) {
    %c0_i32 = arith.constant 0 : i32
    %c0_i32_0 = arith.constant 0 : i32
    %c0_i32_1 = arith.constant 0 : i32
    return %c0_i32, %c0_i32_0 : i32, i32
  }
  func.func @transform_4(%arg0: i32, %arg1: i32) -> (i32, i32) {
    %c0_i32 = arith.constant 0 : i32
    %c0_i32_0 = arith.constant 0 : i32
    %c0_i32_1 = arith.constant 0 : i32
    return %c0_i32, %c0_i32_0 : i32, i32
  }
  func.func @transform_5(%arg0: i32, %arg1: i32) -> (i32, i32, i32) {
    %c0_i32 = arith.constant 0 : i32
    %c0_i32_0 = arith.constant 0 : i32
    return %arg1, %arg0, %c0_i32 : i32, i32, i32
  }
}

module attributes {stable_mosaic.version = 11 : i64} {
  func.func @_gat_fused_kernel(%arg0: i32, %arg1: memref<1x16x256xf32, #tpu.memory_space<vmem>>, %arg2: memref<1x16x16xf32, #tpu.memory_space<vmem>>, %arg3: memref<7x256x256xbf16, #tpu.memory_space<vmem>>, %arg4: memref<7x1x256xf32, #tpu.memory_space<vmem>>, %arg5: memref<7x256x256xbf16, #tpu.memory_space<vmem>>, %arg6: memref<7x1x256xf32, #tpu.memory_space<vmem>>, %arg7: memref<7x256x256xbf16, #tpu.memory_space<vmem>>, %arg8: memref<7x1x256xf32, #tpu.memory_space<vmem>>, %arg9: memref<256x256xbf16, #tpu.memory_space<vmem>>, %arg10: memref<1x256xf32, #tpu.memory_space<vmem>>, %arg11: memref<1x16x256xf32, #tpu.memory_space<vmem>>) attributes {dimension_semantics = [#tpu.dimension_semantics<parallel>], iteration_bounds = array<i64: 2>, scalar_prefetch = 0 : i64, scratch_operands = 0 : i64, tpu.core_type = #tpu.core_type<tc>, window_params = [{transform_indices = @transform_0, window_bounds = array<i64: 1, 16, 256>}, {transform_indices = @transform_1, window_bounds = array<i64: 1, 16, 16>}, {pipeline_mode = #tpu.pipeline_mode<synchronous>, transform_indices = @transform_2, window_bounds = array<i64: 7, 256, 256>}, {pipeline_mode = #tpu.pipeline_mode<synchronous>, transform_indices = @transform_3, window_bounds = array<i64: 7, 1, 256>}, {pipeline_mode = #tpu.pipeline_mode<synchronous>, transform_indices = @transform_4, window_bounds = array<i64: 7, 256, 256>}, {pipeline_mode = #tpu.pipeline_mode<synchronous>, transform_indices = @transform_5, window_bounds = array<i64: 7, 1, 256>}, {pipeline_mode = #tpu.pipeline_mode<synchronous>, transform_indices = @transform_6, window_bounds = array<i64: 7, 256, 256>}, {pipeline_mode = #tpu.pipeline_mode<synchronous>, transform_indices = @transform_7, window_bounds = array<i64: 7, 1, 256>}, {pipeline_mode = #tpu.pipeline_mode<synchronous>, transform_indices = @transform_8, window_bounds = array<i64: 256, 256>}, {pipeline_mode = #tpu.pipeline_mode<synchronous>, transform_indices = @transform_9, window_bounds = array<i64: 1, 256>}, {transform_indices = @transform_10, window_bounds = array<i64: 1, 16, 256>}]} {
    %0 = tpu.iota {dimensions = array<i32: 0>} : vector<16x16xi32>
    %1 = tpu.iota {dimensions = array<i32: 1>} : vector<16x16xi32>
    %2 = arith.cmpi eq, %0, %1 : vector<16x16xi32>
    %3 = vector.shape_cast %2 : vector<16x16xi1> to vector<1x16x16xi1>
    %c0 = arith.constant 0 : index
    %c0_0 = arith.constant 0 : index
    %c0_1 = arith.constant 0 : index
    %4 = vector.load %arg2[%c0, %c0_0, %c0_1] : memref<1x16x16xf32, #tpu.memory_space<vmem>>, vector<1x16x16xf32>
    %cst = arith.constant 1.000000e+00 : f32
    %5 = vector.broadcast %cst : f32 to vector<1x16x16xf32>
    %6 = arith.select %3, %5, %4 : vector<1x16x16xi1>, vector<1x16x16xf32>
    %cst_2 = arith.constant 9.99999974E-6 : f32
    %cst_3 = arith.constant 0.000000e+00 : f32
    %7 = vector.broadcast %cst_2 : f32 to vector<16x16xf32>
    %8 = vector.broadcast %cst_3 : f32 to vector<16x16xf32>
    %9 = arith.select %2, %7, %8 : vector<16x16xi1>, vector<16x16xf32>
    %c0_4 = arith.constant 0 : index
    %c0_5 = arith.constant 0 : index
    %c0_6 = arith.constant 0 : index
    %10 = vector.load %arg1[%c0_4, %c0_5, %c0_6] : memref<1x16x256xf32, #tpu.memory_space<vmem>>, vector<1x16x256xf32>
    %c0_i32 = arith.constant 0 : i32
    %c7_i32 = arith.constant 7 : i32
    %11 = arith.addi %c0_i32, %c7_i32 : i32
    %c1_i32 = arith.constant 1 : i32
    %12 = scf.for %arg12 = %c0_i32 to %11 step %c1_i32 iter_args(%arg13 = %10) -> (vector<1x16x256xf32>)  : i32 {
      %22 = arith.truncf %arg13 : vector<1x16x256xf32> to vector<1x16x256xbf16>
      %23 = vector.shape_cast %22 : vector<1x16x256xbf16> to vector<16x256xbf16>
      %24 = arith.index_cast %arg12 : i32 to index
      %c0_16 = arith.constant 0 : index
      %c0_17 = arith.constant 0 : index
      %25 = vector.load %arg3[%24, %c0_16, %c0_17] : memref<7x256x256xbf16, #tpu.memory_space<vmem>>, vector<1x256x256xbf16>
      %26 = vector.shape_cast %25 : vector<1x256x256xbf16> to vector<256x256xbf16>
      %cst_18 = arith.constant dense<0.000000e+00> : vector<16x256xf32>
      %27 = tpu.matmul %23, %26, %cst_18 {dimension_numbers = #tpu.dot_dimension_numbers<[1], [0], [0], [1], [0, 0, 1, 1], [], []>} : vector<16x256xbf16>, vector<256x256xbf16>, vector<16x256xf32> -> vector<16x256xf32>
      %28 = arith.index_cast %arg12 : i32 to index
      %c0_19 = arith.constant 0 : index
      %c0_20 = arith.constant 0 : index
      %29 = vector.load %arg4[%28, %c0_19, %c0_20] : memref<7x1x256xf32, #tpu.memory_space<vmem>>, vector<1x1x256xf32>
      %30 = vector.shape_cast %29 : vector<1x1x256xf32> to vector<1x256xf32>
      %31 = vector.broadcast %30 : vector<1x256xf32> to vector<16x256xf32>
      %32 = arith.addf %27, %31 : vector<16x256xf32>
      %33 = vector.shape_cast %32 : vector<16x256xf32> to vector<1x16x256xf32>
      %34 = arith.truncf %33 : vector<1x16x256xf32> to vector<1x16x256xbf16>
      "tpu.trace_start"() <{level = 10 : i32, message = "bij,bkj->bik"}> : () -> ()
      %cst_21 = arith.constant dense<0.000000e+00> : vector<1x16x16xf32>
      %35 = tpu.matmul %34, %22, %cst_21 {dimension_numbers = #tpu.dot_dimension_numbers<[2], [2], [1], [1], [0, 0, 0, 1, 1, 1], [0], [0]>} : vector<1x16x256xbf16>, vector<1x16x256xbf16>, vector<1x16x16xf32> -> vector<1x16x16xf32>
      "tpu.trace_stop"() : () -> ()
      %36 = arith.negf %35 : vector<1x16x16xf32>
      %37 = math.exp %36 : vector<1x16x16xf32>
      %cst_22 = arith.constant 1.000000e+00 : f32
      %38 = vector.broadcast %cst_22 : f32 to vector<1x16x16xf32>
      %39 = arith.addf %38, %37 : vector<1x16x16xf32>
      %40 = arith.divf %38, %39 : vector<1x16x16xf32>
      %41 = arith.mulf %40, %6 : vector<1x16x16xf32>
      %42 = vector.shape_cast %9 : vector<16x16xf32> to vector<1x16x16xf32>
      %43 = arith.addf %41, %42 : vector<1x16x16xf32>
      %cst_23 = arith.constant dense<0.000000e+00> : vector<1x16xf32>
      %44 = vector.multi_reduction <add>, %43, %cst_23 [2] : vector<1x16x16xf32> to vector<1x16xf32>
      %45 = vector.shape_cast %44 : vector<1x16xf32> to vector<1x16x1xf32>
      %46 = vector.broadcast %45 : vector<1x16x1xf32> to vector<1x16x16xf32>
      %47 = arith.divf %43, %46 : vector<1x16x16xf32>
      %48 = arith.truncf %47 : vector<1x16x16xf32> to vector<1x16x16xbf16>
      "tpu.trace_start"() <{level = 10 : i32, message = "bij,bjd->bid"}> : () -> ()
      %cst_24 = arith.constant dense<0.000000e+00> : vector<1x16x256xf32>
      %49 = tpu.matmul %48, %22, %cst_24 {dimension_numbers = #tpu.dot_dimension_numbers<[2], [1], [1], [2], [0, 0, 0, 1, 1, 2], [0], [0]>} : vector<1x16x16xbf16>, vector<1x16x256xbf16>, vector<1x16x256xf32> -> vector<1x16x256xf32>
      "tpu.trace_stop"() : () -> ()
      %50 = vector.shape_cast %49 : vector<1x16x256xf32> to vector<16x256xf32>
      %51 = arith.truncf %50 : vector<16x256xf32> to vector<16x256xbf16>
      %52 = arith.index_cast %arg12 : i32 to index
      %c0_25 = arith.constant 0 : index
      %c0_26 = arith.constant 0 : index
      %53 = vector.load %arg5[%52, %c0_25, %c0_26] : memref<7x256x256xbf16, #tpu.memory_space<vmem>>, vector<1x256x256xbf16>
      %54 = vector.shape_cast %53 : vector<1x256x256xbf16> to vector<256x256xbf16>
      %cst_27 = arith.constant dense<0.000000e+00> : vector<16x256xf32>
      %55 = tpu.matmul %51, %54, %cst_27 {dimension_numbers = #tpu.dot_dimension_numbers<[1], [0], [0], [1], [0, 0, 1, 1], [], []>} : vector<16x256xbf16>, vector<256x256xbf16>, vector<16x256xf32> -> vector<16x256xf32>
      %56 = arith.index_cast %arg12 : i32 to index
      %c0_28 = arith.constant 0 : index
      %c0_29 = arith.constant 0 : index
      %57 = vector.load %arg6[%56, %c0_28, %c0_29] : memref<7x1x256xf32, #tpu.memory_space<vmem>>, vector<1x1x256xf32>
      %58 = vector.shape_cast %57 : vector<1x1x256xf32> to vector<1x256xf32>
      %59 = vector.broadcast %58 : vector<1x256xf32> to vector<16x256xf32>
      %60 = arith.addf %55, %59 : vector<16x256xf32>
      %cst_30 = arith.constant 0.000000e+00 : f32
      %61 = vector.broadcast %cst_30 : f32 to vector<16x256xf32>
      %62 = arith.maximumf %60, %61 : vector<16x256xf32>
      %63 = arith.truncf %62 : vector<16x256xf32> to vector<16x256xbf16>
      %64 = arith.index_cast %arg12 : i32 to index
      %c0_31 = arith.constant 0 : index
      %c0_32 = arith.constant 0 : index
      %65 = vector.load %arg7[%64, %c0_31, %c0_32] : memref<7x256x256xbf16, #tpu.memory_space<vmem>>, vector<1x256x256xbf16>
      %66 = vector.shape_cast %65 : vector<1x256x256xbf16> to vector<256x256xbf16>
      %cst_33 = arith.constant dense<0.000000e+00> : vector<16x256xf32>
      %67 = tpu.matmul %63, %66, %cst_33 {dimension_numbers = #tpu.dot_dimension_numbers<[1], [0], [0], [1], [0, 0, 1, 1], [], []>} : vector<16x256xbf16>, vector<256x256xbf16>, vector<16x256xf32> -> vector<16x256xf32>
      %68 = arith.index_cast %arg12 : i32 to index
      %c0_34 = arith.constant 0 : index
      %c0_35 = arith.constant 0 : index
      %69 = vector.load %arg8[%68, %c0_34, %c0_35] : memref<7x1x256xf32, #tpu.memory_space<vmem>>, vector<1x1x256xf32>
      %70 = vector.shape_cast %69 : vector<1x1x256xf32> to vector<1x256xf32>
      %71 = vector.broadcast %70 : vector<1x256xf32> to vector<16x256xf32>
      %72 = arith.addf %67, %71 : vector<16x256xf32>
      %cst_36 = arith.constant 0.000000e+00 : f32
      %73 = vector.broadcast %cst_36 : f32 to vector<16x256xf32>
      %74 = arith.maximumf %72, %73 : vector<16x256xf32>
      %75 = vector.shape_cast %74 : vector<16x256xf32> to vector<1x16x256xf32>
      %76 = arith.addf %75, %arg13 : vector<1x16x256xf32>
      scf.yield %76 : vector<1x16x256xf32>
    }
    %c7_i32_7 = arith.constant 7 : i32
    %13 = vector.shape_cast %12 : vector<1x16x256xf32> to vector<16x256xf32>
    %14 = arith.truncf %13 : vector<16x256xf32> to vector<16x256xbf16>
    %c0_8 = arith.constant 0 : index
    %c0_9 = arith.constant 0 : index
    %15 = vector.load %arg9[%c0_8, %c0_9] : memref<256x256xbf16, #tpu.memory_space<vmem>>, vector<256x256xbf16>
    %cst_10 = arith.constant dense<0.000000e+00> : vector<16x256xf32>
    %16 = tpu.matmul %14, %15, %cst_10 {dimension_numbers = #tpu.dot_dimension_numbers<[1], [0], [0], [1], [0, 0, 1, 1], [], []>} : vector<16x256xbf16>, vector<256x256xbf16>, vector<16x256xf32> -> vector<16x256xf32>
    %c0_11 = arith.constant 0 : index
    %c0_12 = arith.constant 0 : index
    %17 = vector.load %arg10[%c0_11, %c0_12] : memref<1x256xf32, #tpu.memory_space<vmem>>, vector<1x256xf32>
    %18 = vector.broadcast %17 : vector<1x256xf32> to vector<16x256xf32>
    %19 = arith.addf %16, %18 : vector<16x256xf32>
    %20 = vector.shape_cast %19 : vector<16x256xf32> to vector<1x16x256xf32>
    %c0_13 = arith.constant 0 : index
    %c0_14 = arith.constant 0 : index
    %c0_15 = arith.constant 0 : index
    %21 = vector.load %arg11[%c0_13, %c0_14, %c0_15] : memref<1x16x256xf32, #tpu.memory_space<vmem>>, vector<1x16x256xf32>
    tpu.vector_store %arg11[%c0_13, %c0_14, %c0_15], %20 {strides = array<i32>} : memref<1x16x256xf32, #tpu.memory_space<vmem>>, vector<1x16x256xf32>,
    return
  }
  func.func @transform_0(%arg0: i32) -> (i32, i32, i32) {
    %c0_i32 = arith.constant 0 : i32
    %c0_i32_0 = arith.constant 0 : i32
    %c0_i32_1 = arith.constant 0 : i32
    return %arg0, %c0_i32, %c0_i32_0 : i32, i32, i32
  }
  func.func @transform_1(%arg0: i32) -> (i32, i32, i32) {
    %c0_i32 = arith.constant 0 : i32
    %c0_i32_0 = arith.constant 0 : i32
    %c0_i32_1 = arith.constant 0 : i32
    return %arg0, %c0_i32, %c0_i32_0 : i32, i32, i32
  }
  func.func @transform_2(%arg0: i32) -> (i32, i32, i32) {
    %c0_i32 = arith.constant 0 : i32
    %c0_i32_0 = arith.constant 0 : i32
    %c0_i32_1 = arith.constant 0 : i32
    %c0_i32_2 = arith.constant 0 : i32
    return %c0_i32, %c0_i32_0, %c0_i32_1 : i32, i32, i32
  }
  func.func @transform_3(%arg0: i32) -> (i32, i32, i32) {
    %c0_i32 = arith.constant 0 : i32
    %c0_i32_0 = arith.constant 0 : i32
    %c0_i32_1 = arith.constant 0 : i32
    %c0_i32_2 = arith.constant 0 : i32
    return %c0_i32, %c0_i32_0, %c0_i32_1 : i32, i32, i32
  }
  func.func @transform_4(%arg0: i32) -> (i32, i32, i32) {
    %c0_i32 = arith.constant 0 : i32
    %c0_i32_0 = arith.constant 0 : i32
    %c0_i32_1 = arith.constant 0 : i32
    %c0_i32_2 = arith.constant 0 : i32
    return %c0_i32, %c0_i32_0, %c0_i32_1 : i32, i32, i32
  }
  func.func @transform_5(%arg0: i32) -> (i32, i32, i32) {
    %c0_i32 = arith.constant 0 : i32
    %c0_i32_0 = arith.constant 0 : i32
    %c0_i32_1 = arith.constant 0 : i32
    %c0_i32_2 = arith.constant 0 : i32
    return %c0_i32, %c0_i32_0, %c0_i32_1 : i32, i32, i32
  }
  func.func @transform_6(%arg0: i32) -> (i32, i32, i32) {
    %c0_i32 = arith.constant 0 : i32
    %c0_i32_0 = arith.constant 0 : i32
    %c0_i32_1 = arith.constant 0 : i32
    %c0_i32_2 = arith.constant 0 : i32
    return %c0_i32, %c0_i32_0, %c0_i32_1 : i32, i32, i32
  }
  func.func @transform_7(%arg0: i32) -> (i32, i32, i32) {
    %c0_i32 = arith.constant 0 : i32
    %c0_i32_0 = arith.constant 0 : i32
    %c0_i32_1 = arith.constant 0 : i32
    %c0_i32_2 = arith.constant 0 : i32
    return %c0_i32, %c0_i32_0, %c0_i32_1 : i32, i32, i32
  }
  func.func @transform_8(%arg0: i32) -> (i32, i32) {
    %c0_i32 = arith.constant 0 : i32
    %c0_i32_0 = arith.constant 0 : i32
    %c0_i32_1 = arith.constant 0 : i32
    return %c0_i32, %c0_i32_0 : i32, i32
  }
  func.func @transform_9(%arg0: i32) -> (i32, i32) {
    %c0_i32 = arith.constant 0 : i32
    %c0_i32_0 = arith.constant 0 : i32
    %c0_i32_1 = arith.constant 0 : i32
    return %c0_i32, %c0_i32_0 : i32, i32
  }
  func.func @transform_10(%arg0: i32) -> (i32, i32, i32) {
    %c0_i32 = arith.constant 0 : i32
    %c0_i32_0 = arith.constant 0 : i32
    %c0_i32_1 = arith.constant 0 : i32
    return %arg0, %c0_i32, %c0_i32_0 : i32, i32, i32
  }
}

module attributes {stable_mosaic.version = 11 : i64} {
  func.func @_cross_kernel(%arg0: i32, %arg1: memref<1x16x256xf32, #tpu.memory_space<vmem>>, %arg2: memref<1x16x256xf32, #tpu.memory_space<vmem>>, %arg3: memref<256x256xbf16, #tpu.memory_space<vmem>>, %arg4: memref<1x256xf32, #tpu.memory_space<vmem>>, %arg5: memref<256x256xbf16, #tpu.memory_space<vmem>>, %arg6: memref<1x256xf32, #tpu.memory_space<vmem>>, %arg7: memref<256x256xbf16, #tpu.memory_space<vmem>>, %arg8: memref<1x256xf32, #tpu.memory_space<vmem>>, %arg9: memref<256x256xbf16, #tpu.memory_space<vmem>>, %arg10: memref<1x256xf32, #tpu.memory_space<vmem>>, %arg11: memref<256x256xbf16, #tpu.memory_space<vmem>>, %arg12: memref<256x256xbf16, #tpu.memory_space<vmem>>, %arg13: memref<1x256xf32, #tpu.memory_space<vmem>>, %arg14: memref<1x16x256xf32, #tpu.memory_space<vmem>>) attributes {dimension_semantics = [#tpu.dimension_semantics<parallel>], iteration_bounds = array<i64: 2>, scalar_prefetch = 0 : i64, scratch_operands = 0 : i64, tpu.core_type = #tpu.core_type<tc>, window_params = [{transform_indices = @transform_0, window_bounds = array<i64: 1, 16, 256>}, {transform_indices = @transform_1, window_bounds = array<i64: 1, 16, 256>}, {pipeline_mode = #tpu.pipeline_mode<synchronous>, transform_indices = @transform_2, window_bounds = array<i64: 256, 256>}, {pipeline_mode = #tpu.pipeline_mode<synchronous>, transform_indices = @transform_3, window_bounds = array<i64: 1, 256>}, {pipeline_mode = #tpu.pipeline_mode<synchronous>, transform_indices = @transform_4, window_bounds = array<i64: 256, 256>}, {pipeline_mode = #tpu.pipeline_mode<synchronous>, transform_indices = @transform_5, window_bounds = array<i64: 1, 256>}, {pipeline_mode = #tpu.pipeline_mode<synchronous>, transform_indices = @transform_6, window_bounds = array<i64: 256, 256>}, {pipeline_mode = #tpu.pipeline_mode<synchronous>, transform_indices = @transform_7, window_bounds = array<i64: 1, 256>}, {pipeline_mode = #tpu.pipeline_mode<synchronous>, transform_indices = @transform_8, window_bounds = array<i64: 256, 256>}, {pipeline_mode = #tpu.pipeline_mode<synchronous>, transform_indices = @transform_9, window_bounds = array<i64: 1, 256>}, {pipeline_mode = #tpu.pipeline_mode<synchronous>, transform_indices = @transform_10, window_bounds = array<i64: 256, 256>}, {pipeline_mode = #tpu.pipeline_mode<synchronous>, transform_indices = @transform_11, window_bounds = array<i64: 256, 256>}, {pipeline_mode = #tpu.pipeline_mode<synchronous>, transform_indices = @transform_12, window_bounds = array<i64: 1, 256>}, {transform_indices = @transform_13, window_bounds = array<i64: 1, 16, 256>}]} {
    %c0 = arith.constant 0 : index
    %c0_0 = arith.constant 0 : index
    %c0_1 = arith.constant 0 : index
    %0 = vector.load %arg1[%c0, %c0_0, %c0_1] : memref<1x16x256xf32, #tpu.memory_space<vmem>>, vector<1x16x256xf32>
    %c0_2 = arith.constant 0 : index
    %c0_3 = arith.constant 0 : index
    %c0_4 = arith.constant 0 : index
    %1 = vector.load %arg2[%c0_2, %c0_3, %c0_4] : memref<1x16x256xf32, #tpu.memory_space<vmem>>, vector<1x16x256xf32>
    %2 = arith.truncf %0 : vector<1x16x256xf32> to vector<1x16x256xbf16>
    %3 = vector.shape_cast %2 : vector<1x16x256xbf16> to vector<16x256xbf16>
    %4 = arith.truncf %1 : vector<1x16x256xf32> to vector<1x16x256xbf16>
    %5 = vector.shape_cast %4 : vector<1x16x256xbf16> to vector<16x256xbf16>
    %c0_5 = arith.constant 0 : index
    %c0_6 = arith.constant 0 : index
    %6 = vector.load %arg3[%c0_5, %c0_6] : memref<256x256xbf16, #tpu.memory_space<vmem>>, vector<256x256xbf16>
    %cst = arith.constant dense<0.000000e+00> : vector<16x256xf32>
    %7 = tpu.matmul %5, %6, %cst {dimension_numbers = #tpu.dot_dimension_numbers<[1], [0], [0], [1], [0, 0, 1, 1], [], []>} : vector<16x256xbf16>, vector<256x256xbf16>, vector<16x256xf32> -> vector<16x256xf32>
    %c0_7 = arith.constant 0 : index
    %c0_8 = arith.constant 0 : index
    %8 = vector.load %arg4[%c0_7, %c0_8] : memref<1x256xf32, #tpu.memory_space<vmem>>, vector<1x256xf32>
    %9 = vector.broadcast %8 : vector<1x256xf32> to vector<16x256xf32>
    %10 = arith.addf %7, %9 : vector<16x256xf32>
    %cst_9 = arith.constant 0.000000e+00 : f32
    %11 = vector.broadcast %cst_9 : f32 to vector<16x256xf32>
    %12 = arith.maximumf %10, %11 : vector<16x256xf32>
    %13 = arith.truncf %12 : vector<16x256xf32> to vector<16x256xbf16>
    %c0_10 = arith.constant 0 : index
    %c0_11 = arith.constant 0 : index
    %14 = vector.load %arg5[%c0_10, %c0_11] : memref<256x256xbf16, #tpu.memory_space<vmem>>, vector<256x256xbf16>
    %cst_12 = arith.constant dense<0.000000e+00> : vector<16x256xf32>
    %15 = tpu.matmul %13, %14, %cst_12 {dimension_numbers = #tpu.dot_dimension_numbers<[1], [0], [0], [1], [0, 0, 1, 1], [], []>} : vector<16x256xbf16>, vector<256x256xbf16>, vector<16x256xf32> -> vector<16x256xf32>
    %c0_13 = arith.constant 0 : index
    %c0_14 = arith.constant 0 : index
    %16 = vector.load %arg6[%c0_13, %c0_14] : memref<1x256xf32, #tpu.memory_space<vmem>>, vector<1x256xf32>
    %17 = vector.broadcast %16 : vector<1x256xf32> to vector<16x256xf32>
    %18 = arith.addf %15, %17 : vector<16x256xf32>
    %19 = vector.shape_cast %18 : vector<16x256xf32> to vector<1x16x256xf32>
    %20 = arith.mulf %19, %0 : vector<1x16x256xf32>
    %cst_15 = arith.constant dense<0.000000e+00> : vector<1x16xf32>
    %21 = vector.multi_reduction <add>, %20, %cst_15 [2] : vector<1x16x256xf32> to vector<1x16xf32>
    %22 = vector.shape_cast %21 : vector<1x16xf32> to vector<1x16x1xf32>
    %23 = math.tanh %22 : vector<1x16x1xf32>
    %cst_16 = arith.constant 1.000000e+00 : f32
    %24 = vector.broadcast %cst_16 : f32 to vector<1x16x1xf32>
    %25 = arith.addf %23, %24 : vector<1x16x1xf32>
    %c0_17 = arith.constant 0 : index
    %c0_18 = arith.constant 0 : index
    %26 = vector.load %arg7[%c0_17, %c0_18] : memref<256x256xbf16, #tpu.memory_space<vmem>>, vector<256x256xbf16>
    %cst_19 = arith.constant dense<0.000000e+00> : vector<16x256xf32>
    %27 = tpu.matmul %3, %26, %cst_19 {dimension_numbers = #tpu.dot_dimension_numbers<[1], [0], [0], [1], [0, 0, 1, 1], [], []>} : vector<16x256xbf16>, vector<256x256xbf16>, vector<16x256xf32> -> vector<16x256xf32>
    %c0_20 = arith.constant 0 : index
    %c0_21 = arith.constant 0 : index
    %28 = vector.load %arg8[%c0_20, %c0_21] : memref<1x256xf32, #tpu.memory_space<vmem>>, vector<1x256xf32>
    %29 = vector.broadcast %28 : vector<1x256xf32> to vector<16x256xf32>
    %30 = arith.addf %27, %29 : vector<16x256xf32>
    %cst_22 = arith.constant 0.000000e+00 : f32
    %31 = vector.broadcast %cst_22 : f32 to vector<16x256xf32>
    %32 = arith.maximumf %30, %31 : vector<16x256xf32>
    %33 = arith.truncf %32 : vector<16x256xf32> to vector<16x256xbf16>
    %c0_23 = arith.constant 0 : index
    %c0_24 = arith.constant 0 : index
    %34 = vector.load %arg9[%c0_23, %c0_24] : memref<256x256xbf16, #tpu.memory_space<vmem>>, vector<256x256xbf16>
    %cst_25 = arith.constant dense<0.000000e+00> : vector<16x256xf32>
    %35 = tpu.matmul %33, %34, %cst_25 {dimension_numbers = #tpu.dot_dimension_numbers<[1], [0], [0], [1], [0, 0, 1, 1], [], []>} : vector<16x256xbf16>, vector<256x256xbf16>, vector<16x256xf32> -> vector<16x256xf32>
    %c0_26 = arith.constant 0 : index
    %c0_27 = arith.constant 0 : index
    %36 = vector.load %arg10[%c0_26, %c0_27] : memref<1x256xf32, #tpu.memory_space<vmem>>, vector<1x256xf32>
    %37 = vector.broadcast %36 : vector<1x256xf32> to vector<16x256xf32>
    %38 = arith.addf %35, %37 : vector<16x256xf32>
    %39 = vector.shape_cast %38 : vector<16x256xf32> to vector<1x16x256xf32>
    %40 = arith.mulf %39, %1 : vector<1x16x256xf32>
    %cst_28 = arith.constant dense<0.000000e+00> : vector<1x16xf32>
    %41 = vector.multi_reduction <add>, %40, %cst_28 [2] : vector<1x16x256xf32> to vector<1x16xf32>
    %42 = vector.shape_cast %41 : vector<1x16xf32> to vector<1x16x1xf32>
    %43 = math.tanh %42 : vector<1x16x1xf32>
    %cst_29 = arith.constant 1.000000e+00 : f32
    %44 = vector.broadcast %cst_29 : f32 to vector<1x16x1xf32>
    %45 = arith.addf %43, %44 : vector<1x16x1xf32>
    %46 = vector.broadcast %25 : vector<1x16x1xf32> to vector<1x16x256xf32>
    %47 = arith.mulf %0, %46 : vector<1x16x256xf32>
    %48 = vector.shape_cast %47 : vector<1x16x256xf32> to vector<16x256xf32>
    %49 = arith.truncf %48 : vector<16x256xf32> to vector<16x256xbf16>
    %50 = vector.broadcast %45 : vector<1x16x1xf32> to vector<1x16x256xf32>
    %51 = arith.mulf %1, %50 : vector<1x16x256xf32>
    %52 = vector.shape_cast %51 : vector<1x16x256xf32> to vector<16x256xf32>
    %53 = arith.truncf %52 : vector<16x256xf32> to vector<16x256xbf16>
    %c0_30 = arith.constant 0 : index
    %c0_31 = arith.constant 0 : index
    %54 = vector.load %arg11[%c0_30, %c0_31] : memref<256x256xbf16, #tpu.memory_space<vmem>>, vector<256x256xbf16>
    %cst_32 = arith.constant dense<0.000000e+00> : vector<16x256xf32>
    %55 = tpu.matmul %49, %54, %cst_32 {dimension_numbers = #tpu.dot_dimension_numbers<[1], [0], [0], [1], [0, 0, 1, 1], [], []>} : vector<16x256xbf16>, vector<256x256xbf16>, vector<16x256xf32> -> vector<16x256xf32>
    %c0_33 = arith.constant 0 : index
    %c0_34 = arith.constant 0 : index
    %56 = vector.load %arg12[%c0_33, %c0_34] : memref<256x256xbf16, #tpu.memory_space<vmem>>, vector<256x256xbf16>
    %cst_35 = arith.constant dense<0.000000e+00> : vector<16x256xf32>
    %57 = tpu.matmul %53, %56, %cst_35 {dimension_numbers = #tpu.dot_dimension_numbers<[1], [0], [0], [1], [0, 0, 1, 1], [], []>} : vector<16x256xbf16>, vector<256x256xbf16>, vector<16x256xf32> -> vector<16x256xf32>
    %58 = arith.addf %55, %57 : vector<16x256xf32>
    %c0_36 = arith.constant 0 : index
    %c0_37 = arith.constant 0 : index
    %59 = vector.load %arg13[%c0_36, %c0_37] : memref<1x256xf32, #tpu.memory_space<vmem>>, vector<1x256xf32>
    %60 = vector.broadcast %59 : vector<1x256xf32> to vector<16x256xf32>
    %61 = arith.addf %58, %60 : vector<16x256xf32>
    %62 = vector.shape_cast %61 : vector<16x256xf32> to vector<1x16x256xf32>
    %c0_38 = arith.constant 0 : index
    %c0_39 = arith.constant 0 : index
    %c0_40 = arith.constant 0 : index
    %63 = vector.load %arg14[%c0_38, %c0_39, %c0_40] : memref<1x16x256xf32, #tpu.memory_space<vmem>>, vector<1x16x256xf32>
    tpu.vector_store %arg14[%c0_38, %c0_39, %c0_40], %62 {strides = array<i32>} : memref<1x16x256xf32, #tpu.memory_space<vmem>>, vector<1x16x256xf32>,
    return
  }
  func.func @transform_0(%arg0: i32) -> (i32, i32, i32) {
    %c0_i32 = arith.constant 0 : i32
    %c0_i32_0 = arith.constant 0 : i32
    %c0_i32_1 = arith.constant 0 : i32
    return %arg0, %c0_i32, %c0_i32_0 : i32, i32, i32
  }
  func.func @transform_1(%arg0: i32) -> (i32, i32, i32) {
    %c0_i32 = arith.constant 0 : i32
    %c0_i32_0 = arith.constant 0 : i32
    %c0_i32_1 = arith.constant 0 : i32
    return %arg0, %c0_i32, %c0_i32_0 : i32, i32, i32
  }
  func.func @transform_2(%arg0: i32) -> (i32, i32) {
    %c0_i32 = arith.constant 0 : i32
    %c0_i32_0 = arith.constant 0 : i32
    %c0_i32_1 = arith.constant 0 : i32
    return %c0_i32, %c0_i32_0 : i32, i32
  }
  func.func @transform_3(%arg0: i32) -> (i32, i32) {
    %c0_i32 = arith.constant 0 : i32
    %c0_i32_0 = arith.constant 0 : i32
    %c0_i32_1 = arith.constant 0 : i32
    return %c0_i32, %c0_i32_0 : i32, i32
  }
  func.func @transform_4(%arg0: i32) -> (i32, i32) {
    %c0_i32 = arith.constant 0 : i32
    %c0_i32_0 = arith.constant 0 : i32
    %c0_i32_1 = arith.constant 0 : i32
    return %c0_i32, %c0_i32_0 : i32, i32
  }
  func.func @transform_5(%arg0: i32) -> (i32, i32) {
    %c0_i32 = arith.constant 0 : i32
    %c0_i32_0 = arith.constant 0 : i32
    %c0_i32_1 = arith.constant 0 : i32
    return %c0_i32, %c0_i32_0 : i32, i32
  }
  func.func @transform_6(%arg0: i32) -> (i32, i32) {
    %c0_i32 = arith.constant 0 : i32
    %c0_i32_0 = arith.constant 0 : i32
    %c0_i32_1 = arith.constant 0 : i32
    return %c0_i32, %c0_i32_0 : i32, i32
  }
  func.func @transform_7(%arg0: i32) -> (i32, i32) {
    %c0_i32 = arith.constant 0 : i32
    %c0_i32_0 = arith.constant 0 : i32
    %c0_i32_1 = arith.constant 0 : i32
    return %c0_i32, %c0_i32_0 : i32, i32
  }
  func.func @transform_8(%arg0: i32) -> (i32, i32) {
    %c0_i32 = arith.constant 0 : i32
    %c0_i32_0 = arith.constant 0 : i32
    %c0_i32_1 = arith.constant 0 : i32
    return %c0_i32, %c0_i32_0 : i32, i32
  }
  func.func @transform_9(%arg0: i32) -> (i32, i32) {
    %c0_i32 = arith.constant 0 : i32
    %c0_i32_0 = arith.constant 0 : i32
    %c0_i32_1 = arith.constant 0 : i32
    return %c0_i32, %c0_i32_0 : i32, i32
  }
  func.func @transform_10(%arg0: i32) -> (i32, i32) {
    %c0_i32 = arith.constant 0 : i32
    %c0_i32_0 = arith.constant 0 : i32
    %c0_i32_1 = arith.constant 0 : i32
    return %c0_i32, %c0_i32_0 : i32, i32
  }
  func.func @transform_11(%arg0: i32) -> (i32, i32) {
    %c0_i32 = arith.constant 0 : i32
    %c0_i32_0 = arith.constant 0 : i32
    %c0_i32_1 = arith.constant 0 : i32
    return %c0_i32, %c0_i32_0 : i32, i32
  }
  func.func @transform_12(%arg0: i32) -> (i32, i32) {
    %c0_i32 = arith.constant 0 : i32
    %c0_i32_0 = arith.constant 0 : i32
    %c0_i32_1 = arith.constant 0 : i32
    return %c0_i32, %c0_i32_0 : i32, i32
  }
  func.func @transform_13(%arg0: i32) -> (i32, i32, i32) {
    %c0_i32 = arith.constant 0 : i32
    %c0_i32_0 = arith.constant 0 : i32
    %c0_i32_1 = arith.constant 0 : i32
    return %arg0, %c0_i32, %c0_i32_0 : i32, i32, i32
  }
}

</mosaic_0001>

<llo_original>
// kernel: forward_pretrain_supervised.6
$region0: #{forward_pretrain_supervised.6}
  #allocation0 [shape = 'u32[]', space=smem, size = 0x4, offset = 0x4, fixed_abs, tag = 'smem constant byte address 0x4 - core index']
  #allocation1 [shape = 'u32[144,128]{1,0:T(1,128)}', space=vmem, size = 0x12000, scoped, tag = 'internal scratch']
  %s0 = inlined_call_operand.vmem [shape: f32[2,16,256], index: 0, kind: input, shape index: {}]
  %s1 = inlined_call_operand.hbm [shape: f32[2,16,16], index: 1, kind: input, shape index: {}]
  %s2 = inlined_call_operand.vmem [shape: bf16[7,256,256], index: 2, kind: input, shape index: {}]
  %s3 = inlined_call_operand.hbm [shape: f32[7,1,256], index: 3, kind: input, shape index: {}]
  %s4 = inlined_call_operand.vmem [shape: bf16[7,256,256], index: 4, kind: input, shape index: {}]
  %s5 = inlined_call_operand.hbm [shape: f32[7,1,256], index: 5, kind: input, shape index: {}]
  %s6 = inlined_call_operand.hbm [shape: bf16[7,256,256], index: 6, kind: input, shape index: {}]
  %s7 = inlined_call_operand.hbm [shape: f32[7,1,256], index: 7, kind: input, shape index: {}]
  %s8 = inlined_call_operand.vmem [shape: bf16[256,256], index: 8, kind: input, shape index: {}]
  %s9 = inlined_call_operand.hbm [shape: f32[1,256], index: 9, kind: input, shape index: {}]
  %s10 = inlined_call_operand.vmem [shape: f32[2,16,256], index: 10, kind: output, shape index: {}]
  %s11 = sld [smem:[#allocation0]]
  $region104: #{forward_pretrain_supervised.6} parent=0
    _
  %s13 = ssub.s32 1, %s11
  %s14 = scalar_select 0, %s13, %s11
  $region1: #{forward_pretrain_supervised.6} parent=0
    #allocation2 [shape = 'u8[16384]{0}', space=vmem, size = 0x4000, scoped, tag = 'input window, operand 1']
    #allocation3 [shape = 's32[2]{0}', space=sflag, size = 0x8, scoped, tag = 'scoped memory for forward_pretrain_supervised.6']
    #allocation4 [shape = 'u8[7168]{0}', space=vmem, size = 0x1c00, scoped, tag = 'input window, operand 3, single buffered']
    #allocation5 [shape = 's32[1]{0}', space=sflag, size = 0x4, scoped, tag = 'scoped memory for forward_pretrain_supervised.6']
    #allocation6 [shape = 'u8[7168]{0}', space=vmem, size = 0x1c00, scoped, tag = 'input window, operand 5, single buffered']
    #allocation7 [shape = 'u8[917504]{0}', space=vmem, size = 0xe0000, scoped, tag = 'input window, operand 6, single buffered']
    #allocation8 [shape = 's32[1]{0}', space=sflag, size = 0x4, scoped, tag = 'scoped memory for forward_pretrain_supervised.6']
    #allocation9 [shape = 'u8[7168]{0}', space=vmem, size = 0x1c00, scoped, tag = 'input window, operand 7, single buffered']
    #allocation10 [shape = 'u8[1024]{0}', space=vmem, size = 0x400, scoped, tag = 'input window, operand 9, single buffered']
    #allocation11 [shape = 's32[1]{0}', space=sflag, size = 0x4, scoped, tag = 'scoped memory for forward_pretrain_supervised.6']
    %15 = vsyncpa [#allocation3], 0
    %s16 = scalar_lea.sflag [#allocation3], 1
    %17 = vsyncpa %s16, 0
    %18 = vsyncpa [#allocation5], 0
    %19 = vsyncpa [#allocation8], 0
    %20 = vsyncpa [#allocation11], 0
    loop: start=0, step=1, limit=4
    $region2: #{forward_pretrain_supervised.6} parent=1 // loop_pre_header
      _
    $region3: #{forward_pretrain_supervised.6} parent=1 // loop_header
      %s22 = sphi 0, %s26
      %p23 = scmp.ge.s32.totalorder %s22, 4
      %s32 = sphi 0, %s34
      %s35 = sphi 0, %s32
      %s36 = sphi 0, %s35
      %s52 = sphi 0, %s36
      %s58 = sphi 0, %s60
      %s61 = sphi 0, %s58
      %s62 = sphi 0, %s61
      %s78 = sphi 0, %s62
      %s82 = sphi 0, %s82
      %s84 = sphi 0, %s82
      %s85 = sphi 0, %s84
      %s99 = sphi 0, %s85
      %s103 = sphi 0, %s103
      %s105 = sphi 0, %s103
      %s106 = sphi 0, %s105
      %s120 = sphi 0, %s106
      %s124 = sphi 0, %s124
      %s126 = sphi 0, %s124
      %s127 = sphi 0, %s126
      %s141 = sphi 0, %s127
      %s145 = sphi 0, %s145
      %s147 = sphi 0, %s145
      %s148 = sphi 0, %s147
      %s162 = sphi 0, %s148
      %s166 = sphi 0, %s166
      %s168 = sphi 0, %s166
      %s169 = sphi 0, %s168
      %s183 = sphi 0, %s169
      %s187 = sphi 0, %s187
      %s189 = sphi 0, %s187
      %s190 = sphi 0, %s189
      %s204 = sphi 0, %s190
      %s208 = sphi 0, %s208
      %s210 = sphi 0, %s208
      %s211 = sphi 0, %s210
      %s225 = sphi 0, %s211
      %s229 = sphi 0, %s229
      %s231 = sphi 0, %s229
      %s232 = sphi 0, %s231
      %s246 = sphi 0, %s232
      %s252 = sphi 0, %s254
      %s255 = sphi 0, %s252
      %s256 = sphi 0, %s255
      %s272 = sphi 0, %s256
    $region4: #{forward_pretrain_supervised.6} parent=1 // loop_header_branch
      %25 = sbr.rel (%p23) target = $region8
    $region5: #{forward_pretrain_supervised.6} parent=1 // loop_body
      %s27 = ssub.s32 %s22, 1
      %s28 = ssub.s32 %s22, 2
      %s29 = sadd.s32 %s22, 1
      %s30 = ssub.s32 %s22, %s29
      %p31 = scmp.eq.s32.totalorder %s30, 0
      %s33 = sadd.s32 %s32, 1
      %s34 = scalar_select %p31, %s32, %s33
      %p37 = pneg %p31
      %p38 = scmp.eq.s32.totalorder %s22, 1
      %p39 = por %p37, %p38
      %p40 = scmp.ne.s32.totalorder %s32, %s35
      %p41 = scmp.eq.s32.totalorder %s22, 0
      %p42 = por %p40, %p41
      %p43 = scmp.ne.s32.totalorder %s32, %s35
      %p44 = scmp.eq.s32.totalorder %s27, 1
      %p45 = por %p43, %p44
      %p46 = scmp.ne.s32.totalorder %s35, %s36
      %p47 = scmp.eq.s32.totalorder %s27, 0
      %p48 = por %p46, %p47
      %p49 = scmp.ne.s32.totalorder %s35, %s36
      %p50 = scmp.eq.s32.totalorder %s28, 1
      %p51 = por %p49, %p50
      %p53 = scmp.ne.s32.totalorder %s36, %s52
      %p54 = scmp.eq.s32.totalorder %s28, 0
      %p55 = por %p53, %p54
      %s56 = ssub.s32 %s22, %s29
      %p57 = scmp.eq.s32.totalorder %s56, 0
      %s59 = sadd.s32 %s58, 1
      %s60 = scalar_select %p57, %s58, %s59
      %p63 = pneg %p57
      %p64 = scmp.eq.s32.totalorder %s22, 1
      %p65 = por %p63, %p64
      %p66 = scmp.ne.s32.totalorder %s58, %s61
      %p67 = scmp.eq.s32.totalorder %s22, 0
      %p68 = por %p66, %p67
      %p69 = scmp.ne.s32.totalorder %s58, %s61
      %p70 = scmp.eq.s32.totalorder %s27, 1
      %p71 = por %p69, %p70
      %p72 = scmp.ne.s32.totalorder %s61, %s62
      %p73 = scmp.eq.s32.totalorder %s27, 0
      %p74 = por %p72, %p73
      %p75 = scmp.ne.s32.totalorder %s61, %s62
      %p76 = scmp.eq.s32.totalorder %s28, 1
      %p77 = por %p75, %p76
      %p79 = scmp.ne.s32.totalorder %s62, %s78
      %p80 = scmp.eq.s32.totalorder %s28, 0
      %p81 = por %p79, %p80
      %s83 = sadd.s32 %s82, 1
      %p86 = scmp.eq.s32.totalorder %s22, 1
      %p87 = scmp.ne.s32.totalorder %s82, %s84
      %p88 = scmp.eq.s32.totalorder %s22, 0
      %p89 = por %p87, %p88
      %p90 = scmp.ne.s32.totalorder %s82, %s84
      %p91 = scmp.eq.s32.totalorder %s27, 1
      %p92 = por %p90, %p91
      %p93 = scmp.ne.s32.totalorder %s84, %s85
      %p94 = scmp.eq.s32.totalorder %s27, 0
      %p95 = por %p93, %p94
      %p96 = scmp.ne.s32.totalorder %s84, %s85
      %p97 = scmp.eq.s32.totalorder %s28, 1
      %p98 = por %p96, %p97
      %p100 = scmp.ne.s32.totalorder %s85, %s99
      %p101 = scmp.eq.s32.totalorder %s28, 0
      %p102 = por %p100, %p101
      %s104 = sadd.s32 %s103, 1
      %p107 = scmp.eq.s32.totalorder %s22, 1
      %p108 = scmp.ne.s32.totalorder %s103, %s105
      %p109 = scmp.eq.s32.totalorder %s22, 0
      %p110 = por %p108, %p109
      %p111 = scmp.ne.s32.totalorder %s103, %s105
      %p112 = scmp.eq.s32.totalorder %s27, 1
      %p113 = por %p111, %p112
      %p114 = scmp.ne.s32.totalorder %s105, %s106
      %p115 = scmp.eq.s32.totalorder %s27, 0
      %p116 = por %p114, %p115
      %p117 = scmp.ne.s32.totalorder %s105, %s106
      %p118 = scmp.eq.s32.totalorder %s28, 1
      %p119 = por %p117, %p118
      %p121 = scmp.ne.s32.totalorder %s106, %s120
      %p122 = scmp.eq.s32.totalorder %s28, 0
      %p123 = por %p121, %p122
      %s125 = sadd.s32 %s124, 1
      %p128 = scmp.eq.s32.totalorder %s22, 1
      %p129 = scmp.ne.s32.totalorder %s124, %s126
      %p130 = scmp.eq.s32.totalorder %s22, 0
      %p131 = por %p129, %p130
      %p132 = scmp.ne.s32.totalorder %s124, %s126
      %p133 = scmp.eq.s32.totalorder %s27, 1
      %p134 = por %p132, %p133
      %p135 = scmp.ne.s32.totalorder %s126, %s127
      %p136 = scmp.eq.s32.totalorder %s27, 0
      %p137 = por %p135, %p136
      %p138 = scmp.ne.s32.totalorder %s126, %s127
      %p139 = scmp.eq.s32.totalorder %s28, 1
      %p140 = por %p138, %p139
      %p142 = scmp.ne.s32.totalorder %s127, %s141
      %p143 = scmp.eq.s32.totalorder %s28, 0
      %p144 = por %p142, %p143
      %s146 = sadd.s32 %s145, 1
      %p149 = scmp.eq.s32.totalorder %s22, 1
      %p150 = scmp.ne.s32.totalorder %s145, %s147
      %p151 = scmp.eq.s32.totalorder %s22, 0
      %p152 = por %p150, %p151
      %p153 = scmp.ne.s32.totalorder %s145, %s147
      %p154 = scmp.eq.s32.totalorder %s27, 1
      %p155 = por %p153, %p154
      %p156 = scmp.ne.s32.totalorder %s147, %s148
      %p157 = scmp.eq.s32.totalorder %s27, 0
      %p158 = por %p156, %p157
      %p159 = scmp.ne.s32.totalorder %s147, %s148
      %p160 = scmp.eq.s32.totalorder %s28, 1
      %p161 = por %p159, %p160
      %p163 = scmp.ne.s32.totalorder %s148, %s162
      %p164 = scmp.eq.s32.totalorder %s28, 0
      %p165 = por %p163, %p164
      %s167 = sadd.s32 %s166, 1
      %p170 = scmp.eq.s32.totalorder %s22, 1
      %p171 = scmp.ne.s32.totalorder %s166, %s168
      %p172 = scmp.eq.s32.totalorder %s22, 0
      %p173 = por %p171, %p172
      %p174 = scmp.ne.s32.totalorder %s166, %s168
      %p175 = scmp.eq.s32.totalorder %s27, 1
      %p176 = por %p174, %p175
      %p177 = scmp.ne.s32.totalorder %s168, %s169
      %p178 = scmp.eq.s32.totalorder %s27, 0
      %p179 = por %p177, %p178
      %p180 = scmp.ne.s32.totalorder %s168, %s169
      %p181 = scmp.eq.s32.totalorder %s28, 1
      %p182 = por %p180, %p181
      %p184 = scmp.ne.s32.totalorder %s169, %s183
      %p185 = scmp.eq.s32.totalorder %s28, 0
      %p186 = por %p184, %p185
      %s188 = sadd.s32 %s187, 1
      %p191 = scmp.eq.s32.totalorder %s22, 1
      %p192 = scmp.ne.s32.totalorder %s187, %s189
      %p193 = scmp.eq.s32.totalorder %s22, 0
      %p194 = por %p192, %p193
      %p195 = scmp.ne.s32.totalorder %s187, %s189
      %p196 = scmp.eq.s32.totalorder %s27, 1
      %p197 = por %p195, %p196
      %p198 = scmp.ne.s32.totalorder %s189, %s190
      %p199 = scmp.eq.s32.totalorder %s27, 0
      %p200 = por %p198, %p199
      %p201 = scmp.ne.s32.totalorder %s189, %s190
      %p202 = scmp.eq.s32.totalorder %s28, 1
      %p203 = por %p201, %p202
      %p205 = scmp.ne.s32.totalorder %s190, %s204
      %p206 = scmp.eq.s32.totalorder %s28, 0
      %p207 = por %p205, %p206
      %s209 = sadd.s32 %s208, 1
      %p212 = scmp.eq.s32.totalorder %s22, 1
      %p213 = scmp.ne.s32.totalorder %s208, %s210
      %p214 = scmp.eq.s32.totalorder %s22, 0
      %p215 = por %p213, %p214
      %p216 = scmp.ne.s32.totalorder %s208, %s210
      %p217 = scmp.eq.s32.totalorder %s27, 1
      %p218 = por %p216, %p217
      %p219 = scmp.ne.s32.totalorder %s210, %s211
      %p220 = scmp.eq.s32.totalorder %s27, 0
      %p221 = por %p219, %p220
      %p222 = scmp.ne.s32.totalorder %s210, %s211
      %p223 = scmp.eq.s32.totalorder %s28, 1
      %p224 = por %p222, %p223
      %p226 = scmp.ne.s32.totalorder %s211, %s225
      %p227 = scmp.eq.s32.totalorder %s28, 0
      %p228 = por %p226, %p227
      %s230 = sadd.s32 %s229, 1
      %p233 = scmp.eq.s32.totalorder %s22, 1
      %p234 = scmp.ne.s32.totalorder %s229, %s231
      %p235 = scmp.eq.s32.totalorder %s22, 0
      %p236 = por %p234, %p235
      %p237 = scmp.ne.s32.totalorder %s229, %s231
      %p238 = scmp.eq.s32.totalorder %s27, 1
      %p239 = por %p237, %p238
      %p240 = scmp.ne.s32.totalorder %s231, %s232
      %p241 = scmp.eq.s32.totalorder %s27, 0
      %p242 = por %p240, %p241
      %p243 = scmp.ne.s32.totalorder %s231, %s232
      %p244 = scmp.eq.s32.totalorder %s28, 1
      %p245 = por %p243, %p244
      %p247 = scmp.ne.s32.totalorder %s232, %s246
      %p248 = scmp.eq.s32.totalorder %s28, 0
      %p249 = por %p247, %p248
      %s250 = ssub.s32 %s22, %s29
      %p251 = scmp.eq.s32.totalorder %s250, 0
      %s253 = sadd.s32 %s252, 1
      %s254 = scalar_select %p251, %s252, %s253
      %p257 = pneg %p251
      %p258 = scmp.eq.s32.totalorder %s22, 1
      %p259 = por %p257, %p258
      %p260 = scmp.ne.s32.totalorder %s252, %s255
      %p261 = scmp.eq.s32.totalorder %s22, 0
      %p262 = por %p260, %p261
      %p263 = scmp.ne.s32.totalorder %s252, %s255
      %p264 = scmp.eq.s32.totalorder %s27, 1
      %p265 = por %p263, %p264
      %p266 = scmp.ne.s32.totalorder %s255, %s256
      %p267 = scmp.eq.s32.totalorder %s27, 0
      %p268 = por %p266, %p267
      %p269 = scmp.ne.s32.totalorder %s255, %s256
      %p270 = scmp.eq.s32.totalorder %s28, 1
      %p271 = por %p269, %p270
      %p273 = scmp.ne.s32.totalorder %s256, %s272
      %p274 = scmp.eq.s32.totalorder %s28, 0
      %p275 = por %p273, %p274
      %p276 = scmp.le.s32.totalorder 1, %s22
      %p277 = scmp.lt.s32.totalorder %s22, 3
      %p278 = pnand %p276, %p277
      %p279 = pneg %p278
      // Predicated region
      $region9: #{forward_pretrain_supervised.6} parent=5 // pred_check
        _
      $region10: #{forward_pretrain_supervised.6} parent=5 // pred_check_branch
        %281 = sbr.rel (%p278) target = $region12
      $region11: #{forward_pretrain_supervised.6} parent=5 // pred_region
        %s282 = ssub.s32 %s22, 1
        // Predicated region
        $region13: #{forward_pretrain_supervised.6} parent=11 // pred_check
          %p283 = pneg %p95
        $region14: #{forward_pretrain_supervised.6} parent=11 // pred_check_branch
          %285 = sbr.rel (%p283) target = $region16
        $region15: #{forward_pretrain_supervised.6} parent=11 // pred_region
          _
        $region16: #{forward_pretrain_supervised.6} parent=11 // pred_fallthru
          _
        // Predicated region
        $region17: #{forward_pretrain_supervised.6} parent=11 // pred_check
          %p286 = pneg %p116
        $region18: #{forward_pretrain_supervised.6} parent=11 // pred_check_branch
          %288 = sbr.rel (%p286) target = $region20
        $region19: #{forward_pretrain_supervised.6} parent=11 // pred_region
          %s290 = ssub.s32 224, 224
          %291 = vsyncadd [#allocation5], %s290
          %s292 = sshll.u32 [#allocation4], 4
          %s293 = int_to_ptr.vmem [resolvable:$true] %s292
          %298 = dma.hbm_to_vmem [thread:$0]  %s3, 224, %s293, [#allocation5], 32, 32, 2
        $region20: #{forward_pretrain_supervised.6} parent=11 // pred_fallthru
          _
        // Predicated region
        $region21: #{forward_pretrain_supervised.6} parent=11 // pred_check
          %p299 = pneg %p137
        $region22: #{forward_pretrain_supervised.6} parent=11 // pred_check_branch
          %301 = sbr.rel (%p299) target = $region24
        $region23: #{forward_pretrain_supervised.6} parent=11 // pred_region
          _
        $region24: #{forward_pretrain_supervised.6} parent=11 // pred_fallthru
          _
        // Predicated region
        $region25: #{forward_pretrain_supervised.6} parent=11 // pred_check
          %p302 = pneg %p158
        $region26: #{forward_pretrain_supervised.6} parent=11 // pred_check_branch
          %304 = sbr.rel (%p302) target = $region28
        $region27: #{forward_pretrain_supervised.6} parent=11 // pred_region
          %s306 = ssub.s32 224, 224
          %307 = vsyncadd [#allocation5], %s306
          %s308 = sshll.u32 [#allocation6], 4
          %s309 = int_to_ptr.vmem [resolvable:$true] %s308
          %314 = dma.hbm_to_vmem [thread:$0]  %s5, 224, %s309, [#allocation5], 32, 32, 2
        $region28: #{forward_pretrain_supervised.6} parent=11 // pred_fallthru
          _
        // Predicated region
        $region29: #{forward_pretrain_supervised.6} parent=11 // pred_check
          %p315 = pneg %p179
        $region30: #{forward_pretrain_supervised.6} parent=11 // pred_check_branch
          %317 = sbr.rel (%p315) target = $region32
        $region31: #{forward_pretrain_supervised.6} parent=11 // pred_region
          %s319 = ssub.s32 28672, 28672
          %320 = vsyncadd [#allocation8], %s319
          %s321 = sshll.u32 [#allocation7], 4
          %s322 = int_to_ptr.vmem [resolvable:$true] %s321
          %327 = dma.hbm_to_vmem [thread:$0]  %s6, 28672, %s322, [#allocation8], 128, 128, 8
        $region32: #{forward_pretrain_supervised.6} parent=11 // pred_fallthru
          _
        // Predicated region
        $region33: #{forward_pretrain_supervised.6} parent=11 // pred_check
          %p328 = pneg %p200
        $region34: #{forward_pretrain_supervised.6} parent=11 // pred_check_branch
          %330 = sbr.rel (%p328) target = $region36
        $region35: #{forward_pretrain_supervised.6} parent=11 // pred_region
          %s332 = ssub.s32 224, 224
          %333 = vsyncadd [#allocation8], %s332
          %s334 = sshll.u32 [#allocation9], 4
          %s335 = int_to_ptr.vmem [resolvable:$true] %s334
          %340 = dma.hbm_to_vmem [thread:$0]  %s7, 224, %s335, [#allocation8], 32, 32, 2
        $region36: #{forward_pretrain_supervised.6} parent=11 // pred_fallthru
          _
        // Predicated region
        $region37: #{forward_pretrain_supervised.6} parent=11 // pred_check
          %p341 = pneg %p221
        $region38: #{forward_pretrain_supervised.6} parent=11 // pred_check_branch
          %343 = sbr.rel (%p341) target = $region40
        $region39: #{forward_pretrain_supervised.6} parent=11 // pred_region
          _
        $region40: #{forward_pretrain_supervised.6} parent=11 // pred_fallthru
          _
        // Predicated region
        $region41: #{forward_pretrain_supervised.6} parent=11 // pred_check
          %p344 = pneg %p242
        $region42: #{forward_pretrain_supervised.6} parent=11 // pred_check_branch
          %346 = sbr.rel (%p344) target = $region44
        $region43: #{forward_pretrain_supervised.6} parent=11 // pred_region
          %s348 = ssub.s32 32, 32
          %349 = vsyncadd [#allocation11], %s348
          %s351 = sshll.u32 [#allocation10], 4
          %s352 = int_to_ptr.vmem [resolvable:$true] %s351
          %354 = dma.hbm_to_vmem [thread:$0]  %s9, 32, %s352, [#allocation11]
        $region44: #{forward_pretrain_supervised.6} parent=11 // pred_fallthru
          _
      $region12: #{forward_pretrain_supervised.6} parent=5 // pred_fallthru
        _
      %p355 = scmp.lt.s32.totalorder %s22, 2
      // Predicated region
      $region45: #{forward_pretrain_supervised.6} parent=5 // pred_check
        %p356 = pneg %p355
      $region46: #{forward_pretrain_supervised.6} parent=5 // pred_check_branch
        %358 = sbr.rel (%p356) target = $region48
      $region47: #{forward_pretrain_supervised.6} parent=5 // pred_region
        // Predicated region
        $region49: #{forward_pretrain_supervised.6} parent=47 // pred_check
          %p359 = pneg %p42
        $region50: #{forward_pretrain_supervised.6} parent=47 // pred_check_branch
          %361 = sbr.rel (%p359) target = $region52
        $region51: #{forward_pretrain_supervised.6} parent=47 // pred_region
          %p362 = scmp.lt.s32.totalorder %s22, 1
          %s363 = scalar_select %p362, %s22, 1
          %s364 = smul.addr %s363, 4
          %s365 = smul.addr %s364, 8
          %s366 = scalar_lea.vmem %s0, %s365
        $region52: #{forward_pretrain_supervised.6} parent=47 // pred_fallthru
          _
        // Predicated region
        $region53: #{forward_pretrain_supervised.6} parent=47 // pred_check
          %p367 = pneg %p68
        $region54: #{forward_pretrain_supervised.6} parent=47 // pred_check_branch
          %369 = sbr.rel (%p367) target = $region56
        $region55: #{forward_pretrain_supervised.6} parent=47 // pred_region
          %s370 = sand.u32 %s58, 1
          %s371 = scalar_lea.sflag [#allocation3], %s370
          %s372 = sand.u32 %s58, 1
          %s373 = smul.addr %s372, 16
          %s374 = scalar_lea.vmem [#allocation2], %s373
          %s376 = ssub.s32 256, 256
          %377 = vsyncadd %s371, %s376
          %s378 = smul.addr %s22, 2
          %s379 = smul.addr %s378, 128
          %s380 = scalar_lea.hbm %s1, %s379
          %s381 = sshll.u32 %s374, 4
          %s382 = int_to_ptr.vmem [resolvable:$true] %s381
          %387 = dma.hbm_to_vmem [thread:$0]  %s380, 256, %s382, %s371, 128, 128, 8
        $region56: #{forward_pretrain_supervised.6} parent=47 // pred_fallthru
          _
      $region48: #{forward_pretrain_supervised.6} parent=5 // pred_fallthru
        _
      %p388 = scmp.le.s32.totalorder 1, %s22
      %p389 = scmp.lt.s32.totalorder %s22, 3
      %p390 = pnand %p388, %p389
      %p391 = pneg %p390
      // Predicated region
      $region57: #{forward_pretrain_supervised.6} parent=5 // pred_check
        _
      $region58: #{forward_pretrain_supervised.6} parent=5 // pred_check_branch
        %393 = sbr.rel (%p390) target = $region60
      $region59: #{forward_pretrain_supervised.6} parent=5 // pred_region
        %s394 = ssub.s32 %s22, 1
        %s395 = sand.u32 %s61, 1
        %s396 = scalar_lea.sflag [#allocation3], %s395
        %s397 = sand.u32 %s61, 1
        %s398 = smul.addr %s397, 16
        %s399 = scalar_lea.vmem [#allocation2], %s398
        // Predicated region
        $region61: #{forward_pretrain_supervised.6} parent=59 // pred_check
          %p400 = pneg %p74
        $region62: #{forward_pretrain_supervised.6} parent=59 // pred_check_branch
          %402 = sbr.rel (%p400) target = $region64
        $region63: #{forward_pretrain_supervised.6} parent=59 // pred_region
          %403 = dma.done %s396, 256
        $region64: #{forward_pretrain_supervised.6} parent=59 // pred_fallthru
          _
        // Predicated region
        $region65: #{forward_pretrain_supervised.6} parent=59 // pred_check
          %p404 = pneg %p116
        $region66: #{forward_pretrain_supervised.6} parent=59 // pred_check_branch
          %406 = sbr.rel (%p404) target = $region68
        $region67: #{forward_pretrain_supervised.6} parent=59 // pred_region
          %407 = dma.done [#allocation5], 224
        $region68: #{forward_pretrain_supervised.6} parent=59 // pred_fallthru
          _
        // Predicated region
        $region69: #{forward_pretrain_supervised.6} parent=59 // pred_check
          %p408 = pneg %p158
        $region70: #{forward_pretrain_supervised.6} parent=59 // pred_check_branch
          %410 = sbr.rel (%p408) target = $region72
        $region71: #{forward_pretrain_supervised.6} parent=59 // pred_region
          %411 = dma.done [#allocation5], 224
        $region72: #{forward_pretrain_supervised.6} parent=59 // pred_fallthru
          _
        // Predicated region
        $region73: #{forward_pretrain_supervised.6} parent=59 // pred_check
          %p412 = pneg %p179
        $region74: #{forward_pretrain_supervised.6} parent=59 // pred_check_branch
          %414 = sbr.rel (%p412) target = $region76
        $region75: #{forward_pretrain_supervised.6} parent=59 // pred_region
          %415 = dma.done [#allocation8], 28672
        $region76: #{forward_pretrain_supervised.6} parent=59 // pred_fallthru
          _
        // Predicated region
        $region77: #{forward_pretrain_supervised.6} parent=59 // pred_check
          %p416 = pneg %p200
        $region78: #{forward_pretrain_supervised.6} parent=59 // pred_check_branch
          %418 = sbr.rel (%p416) target = $region80
        $region79: #{forward_pretrain_supervised.6} parent=59 // pred_region
          %419 = dma.done [#allocation8], 224
        $region80: #{forward_pretrain_supervised.6} parent=59 // pred_fallthru
          _
        // Predicated region
        $region81: #{forward_pretrain_supervised.6} parent=59 // pred_check
          %p420 = pneg %p242
        $region82: #{forward_pretrain_supervised.6} parent=59 // pred_check_branch
          %422 = sbr.rel (%p420) target = $region84
        $region83: #{forward_pretrain_supervised.6} parent=59 // pred_region
          %423 = dma.done [#allocation11], 32
        $region84: #{forward_pretrain_supervised.6} parent=59 // pred_fallthru
          _
        %p424 = scmp.lt.s32.totalorder %s27, 1
        %s425 = scalar_select %p424, %s27, 1
        %s426 = smul.addr %s425, 4
        %s427 = smul.addr %s426, 8
        %s428 = scalar_lea.vmem %s0, %s427
        %p429 = pneg %p48
        %p430 = pneg %p45
        %s431 = sand.u32 %s61, 1
        %s432 = scalar_lea.sflag [#allocation3], %s431
        %s433 = sand.u32 %s61, 1
        %s434 = smul.addr %s433, 16
        %s435 = scalar_lea.vmem [#allocation2], %s434
        %p436 = pneg %p74
        %p437 = pneg %p71
        %p438 = pneg %p95
        %p439 = pneg %p92
        %p440 = pneg %p116
        %p441 = pneg %p113
        %p442 = pneg %p137
        %p443 = pneg %p134
        %p444 = pneg %p158
        %p445 = pneg %p155
        %p446 = pneg %p179
        %p447 = pneg %p176
        %p448 = pneg %p200
        %p449 = pneg %p197
        %p450 = pneg %p221
        %p451 = pneg %p218
        %p452 = pneg %p242
        %p453 = pneg %p239
        %p454 = pneg %p268
        %p455 = pneg %p265
        %p456 = scmp.lt.s32.totalorder %s27, 1
        %s457 = scalar_select %p456, %s27, 1
        %s458 = smul.addr %s457, 4
        %s459 = smul.addr %s458, 8
        %s460 = scalar_lea.vmem %s10, %s459
        %p461 = scmp.lt.s32.totalorder %s27, 1
        %s462 = scalar_select %p461, %s27, 1
        %s463 = smul.addr %s462, 4
        %s464 = smul.addr %s463, 8
        %s465 = scalar_lea.vmem %s0, %s464
        %p466 = scmp.lt.s32.totalorder %s27, 1
        %s467 = scalar_select %p466, %s27, 1
        %s468 = smul.addr %s467, 4
        %s469 = smul.addr %s468, 8
        %s470 = scalar_lea.vmem %s10, %s469
        %v472 = vlaneseq
        %v473 = vshrl.u32 %v472, 7
        %v474 = vadd.s32 %v473, 8
        %v475 = vlaneseq
        %v476 = vand.u32 %v475, 127
        %vm477 = vcmp.eq.s32.totalorder %v473, %v476
        %vm478 = vcmp.eq.s32.totalorder %v474, %v476
        %v479 = vld [vmem:[%s399] sm:$0xff]
        %v480 = vld [vmem:[%s399 + $0x8] sm:$0xff]
        %v481 = vsel %vm477, 1.0, %v479
        %v482 = vsel %vm478, 1.0, %v480
        %v483 = vsel %vm477, 1e-05, 0.0
        %v484 = vsel %vm478, 1e-05, 0.0
        %v485 = vld [vmem:[%s465] sm:$0xff]
        %v486 = vld [vmem:[%s465 + $0x8] sm:$0xff]
        %v487 = vld [vmem:[%s465 + $0x10] sm:$0xff]
        %v488 = vld [vmem:[%s465 + $0x18] sm:$0xff]
        loop: start=0, step=1, limit=7
        $region85: #{forward_pretrain_supervised.6} parent=59 // loop_pre_header
          _
        $region86: #{forward_pretrain_supervised.6} parent=59 // loop_header
          %s490 = sphi 0, %s494
          %p491 = scmp.ge.s32.totalorder %s490, 7
          %v495 = vphi %v485, %v1382
          %v496 = vphi %v486, %v1383
          %v497 = vphi %v487, %v1384
          %v498 = vphi %v488, %v1385
        $region87: #{forward_pretrain_supervised.6} parent=59 // loop_header_branch
          %493 = sbr.rel (%p491) target = $region91
        $region88: #{forward_pretrain_supervised.6} parent=59 // loop_body
          %v499 = vpack.c.bf16 %v497, %v495
          %v500 = vpack.c.bf16 %v498, %v496
          %s501 = smul.u32 %s490, 64
          %s502 = smul.addr %s501, 4
          %s503 = scalar_lea.vmem %s2, %s502
          %v504 = vld [vmem:[%s503] sm:$0xff]
          %v505 = vld [vmem:[%s503 + $0x8] sm:$0xff]
          %v506 = vld [vmem:[%s503 + $0x10] sm:$0xff]
          %v507 = vld [vmem:[%s503 + $0x18] sm:$0xff]
          %v508 = vld [vmem:[%s503 + $0x20] sm:$0xff]
          %v509 = vld [vmem:[%s503 + $0x28] sm:$0xff]
          %v510 = vld [vmem:[%s503 + $0x30] sm:$0xff]
          %v511 = vld [vmem:[%s503 + $0x38] sm:$0xff]
          %v512 = vld [vmem:[%s503 + $0x40] sm:$0xff]
          %v513 = vld [vmem:[%s503 + $0x48] sm:$0xff]
          %v514 = vld [vmem:[%s503 + $0x50] sm:$0xff]
          %v515 = vld [vmem:[%s503 + $0x58] sm:$0xff]
          %v516 = vld [vmem:[%s503 + $0x60] sm:$0xff]
          %v517 = vld [vmem:[%s503 + $0x68] sm:$0xff]
          %v518 = vld [vmem:[%s503 + $0x70] sm:$0xff]
          %v519 = vld [vmem:[%s503 + $0x78] sm:$0xff]
          %v520 = vld [vmem:[%s503 + $0x80] sm:$0xff]
          %v521 = vld [vmem:[%s503 + $0x88] sm:$0xff]
          %v522 = vld [vmem:[%s503 + $0x90] sm:$0xff]
          %v523 = vld [vmem:[%s503 + $0x98] sm:$0xff]
          %v524 = vld [vmem:[%s503 + $0xa0] sm:$0xff]
          %v525 = vld [vmem:[%s503 + $0xa8] sm:$0xff]
          %v526 = vld [vmem:[%s503 + $0xb0] sm:$0xff]
          %v527 = vld [vmem:[%s503 + $0xb8] sm:$0xff]
          %v528 = vld [vmem:[%s503 + $0xc0] sm:$0xff]
          %v529 = vld [vmem:[%s503 + $0xc8] sm:$0xff]
          %v530 = vld [vmem:[%s503 + $0xd0] sm:$0xff]
          %v531 = vld [vmem:[%s503 + $0xd8] sm:$0xff]
          %v532 = vld [vmem:[%s503 + $0xe0] sm:$0xff]
          %v533 = vld [vmem:[%s503 + $0xe8] sm:$0xff]
          %v534 = vld [vmem:[%s503 + $0xf0] sm:$0xff]
          %v535 = vld [vmem:[%s503 + $0xf8] sm:$0xff]
          %s536 = smul.u32 %s490, 2
          %s537 = scalar_lea.vmem [#allocation4], %s536
          %v538 = vld [vmem:[%s537] sm:$0x3]
          %v540 = vlaneseq
          %v541 = vshrl.u32 %v540, 7
          %v542 = vsub.s32 0, %v541
          %v543 = vrot.slane %v538, %v542
          %v544 = vlaneseq
          %v545 = vshrl.u32 %v544, 7
          %v546 = vsub.s32 1, %v545
          %v547 = vrot.slane %v538, %v546
          %v582 = vunpack.c.l.b16 %v504
          %v583 = vunpack.c.h.b16 %v504
          %v584 = vunpack.c.l.b16 %v505
          %v585 = vunpack.c.h.b16 %v505
          %v586 = vunpack.c.l.b16 %v506
          %v587 = vunpack.c.h.b16 %v506
          %v588 = vunpack.c.l.b16 %v507
          %v589 = vunpack.c.h.b16 %v507
          %v590 = vunpack.c.l.b16 %v508
          %v591 = vunpack.c.h.b16 %v508
          %v592 = vunpack.c.l.b16 %v509
          %v593 = vunpack.c.h.b16 %v509
          %v594 = vunpack.c.l.b16 %v510
          %v595 = vunpack.c.h.b16 %v510
          %v596 = vunpack.c.l.b16 %v511
          %v597 = vunpack.c.h.b16 %v511
          %v598 = vunpack.c.l.b16 %v512
          %v599 = vunpack.c.h.b16 %v512
          %v600 = vunpack.c.l.b16 %v513
          %v601 = vunpack.c.h.b16 %v513
          %v602 = vunpack.c.l.b16 %v514
          %v603 = vunpack.c.h.b16 %v514
          %v604 = vunpack.c.l.b16 %v515
          %v605 = vunpack.c.h.b16 %v515
          %v606 = vunpack.c.l.b16 %v516
          %v607 = vunpack.c.h.b16 %v516
          %v608 = vunpack.c.l.b16 %v517
          %v609 = vunpack.c.h.b16 %v517
          %v610 = vunpack.c.l.b16 %v518
          %v611 = vunpack.c.h.b16 %v518
          %v612 = vunpack.c.l.b16 %v519
          %v613 = vunpack.c.h.b16 %v519
          %v614 = vunpack.c.l.b16 %v520
          %v615 = vunpack.c.h.b16 %v520
          %v616 = vunpack.c.l.b16 %v521
          %v617 = vunpack.c.h.b16 %v521
          %v618 = vunpack.c.l.b16 %v522
          %v619 = vunpack.c.h.b16 %v522
          %v620 = vunpack.c.l.b16 %v523
          %v621 = vunpack.c.h.b16 %v523
          %v622 = vunpack.c.l.b16 %v524
          %v623 = vunpack.c.h.b16 %v524
          %v624 = vunpack.c.l.b16 %v525
          %v625 = vunpack.c.h.b16 %v525
          %v626 = vunpack.c.l.b16 %v526
          %v627 = vunpack.c.h.b16 %v526
          %v628 = vunpack.c.l.b16 %v527
          %v629 = vunpack.c.h.b16 %v527
          %v630 = vunpack.c.l.b16 %v528
          %v631 = vunpack.c.h.b16 %v528
          %v632 = vunpack.c.l.b16 %v529
          %v633 = vunpack.c.h.b16 %v529
          %v634 = vunpack.c.l.b16 %v530
          %v635 = vunpack.c.h.b16 %v530
          %v636 = vunpack.c.l.b16 %v531
          %v637 = vunpack.c.h.b16 %v531
          %v638 = vunpack.c.l.b16 %v532
          %v639 = vunpack.c.h.b16 %v532
          %v640 = vunpack.c.l.b16 %v533
          %v641 = vunpack.c.h.b16 %v533
          %v642 = vunpack.c.l.b16 %v534
          %v643 = vunpack.c.h.b16 %v534
          %v644 = vunpack.c.l.b16 %v535
          %v645 = vunpack.c.h.b16 %v535
          %v646 = vpack.c.b16 %v584, %v582
          %v647 = vpack.c.b16 %v585, %v583
          %v648 = vpack.c.b16 %v588, %v586
          %v649 = vpack.c.b16 %v589, %v587
          %v650 = vpack.c.b16 %v592, %v590
          %v651 = vpack.c.b16 %v593, %v591
          %v652 = vpack.c.b16 %v596, %v594
          %v653 = vpack.c.b16 %v597, %v595
          %v654 = vpack.c.b16 %v600, %v598
          %v655 = vpack.c.b16 %v601, %v599
          %v656 = vpack.c.b16 %v604, %v602
          %v657 = vpack.c.b16 %v605, %v603
          %v658 = vpack.c.b16 %v608, %v606
          %v659 = vpack.c.b16 %v609, %v607
          %v660 = vpack.c.b16 %v612, %v610
          %v661 = vpack.c.b16 %v613, %v611
          %v662 = vpack.c.b16 %v616, %v614
          %v663 = vpack.c.b16 %v617, %v615
          %v664 = vpack.c.b16 %v620, %v618
          %v665 = vpack.c.b16 %v621, %v619
          %v666 = vpack.c.b16 %v624, %v622
          %v667 = vpack.c.b16 %v625, %v623
          %v668 = vpack.c.b16 %v628, %v626
          %v669 = vpack.c.b16 %v629, %v627
          %v670 = vpack.c.b16 %v632, %v630
          %v671 = vpack.c.b16 %v633, %v631
          %v672 = vpack.c.b16 %v636, %v634
          %v673 = vpack.c.b16 %v637, %v635
          %v674 = vpack.c.b16 %v640, %v638
          %v675 = vpack.c.b16 %v641, %v639
          %v676 = vpack.c.b16 %v644, %v642
          %v677 = vpack.c.b16 %v645, %v643
          %710 = vmatprep.subr.bf16.mxu0 %v647
          %711 = vmatpush1.bf16.msra.mxu0 %v646
          %712 = vmatprep.subr.bf16.mxu0 %v649
          %713 = vmatpush1.bf16.msra.mxu0 %v648
          %714 = vmatprep.subr.bf16.mxu0 %v651
          %715 = vmatpush1.bf16.msra.mxu0 %v650
          %716 = vmatprep.subr.bf16.mxu0 %v653
          %717 = vmatpush1.bf16.msra.mxu0 %v652
          %718 = vmatprep.subr.bf16.mxu0 %v655
          %719 = vmatpush1.bf16.msra.mxu0 %v654
          %720 = vmatprep.subr.bf16.mxu0 %v657
          %721 = vmatpush1.bf16.msra.mxu0 %v656
          %722 = vmatprep.subr.bf16.mxu0 %v659
          %723 = vmatpush1.bf16.msra.mxu0 %v658
          %724 = vmatprep.subr.bf16.mxu0 %v661
          %725 = vmatpush1.bf16.msra.mxu0 %v660
          %726 = vmatprep.subr.bf16.mxu0 %v663
          %727 = vmatpush1.bf16.msra.mxu0 %v662
          %728 = vmatprep.subr.bf16.mxu0 %v665
          %729 = vmatpush1.bf16.msra.mxu0 %v664
          %730 = vmatprep.subr.bf16.mxu0 %v667
          %731 = vmatpush1.bf16.msra.mxu0 %v666
          %732 = vmatprep.subr.bf16.mxu0 %v669
          %733 = vmatpush1.bf16.msra.mxu0 %v668
          %734 = vmatprep.subr.bf16.mxu0 %v671
          %735 = vmatpush1.bf16.msra.mxu0 %v670
          %736 = vmatprep.subr.bf16.mxu0 %v673
          %737 = vmatpush1.bf16.msra.mxu0 %v672
          %738 = vmatprep.subr.bf16.mxu0 %v675
          %739 = vmatpush1.bf16.msra.mxu0 %v674
          %740 = vmatprep.subr.bf16.mxu0 %v677
          %741 = vmatpush1.bf16.msra.mxu0 %v676
          %742 = vmatprep.mubr.bf16.mxu0 %v500
          %743 = vmatmul.mubr.bf16.gmra.mrb[0].mxu0 %v499
          %v744 = vpop.f32.mrb[0].mxu0
          %v745 = vadd.f32 %v543, %v744
          %v746 = vpop.f32.mrb[0].mxu0
          %v747 = vadd.f32 %v547, %v746
          %v748 = vpop.f32.mrb[0].mxu0
          %v749 = vadd.f32 %v543, %v748
          %v750 = vpop.f32.mrb[0].mxu0
          %v751 = vadd.f32 %v547, %v750
          %752 = vdwg.mxu0
          %v753 = vpack.c.bf16 %v749, %v745
          %v754 = vpack.c.bf16 %v751, %v747
          %755 = vmatprep.subr.bf16.mxu0 %v500
          %756 = vmatpush1.bf16.xpose.msra.mxu0 %v499
          %757 = vmatprep.subr.bf16.mxu0 0
          %758 = vmatpush1.bf16.xpose.msra.mxu0 0
          %759 = vmatprep.subr.bf16.mxu0 0
          %760 = vmatpush1.bf16.xpose.msra.mxu0 0
          %761 = vmatprep.subr.bf16.mxu0 0
          %762 = vmatpush1.bf16.xpose.msra.mxu0 0
          %763 = vmatprep.subr.bf16.mxu0 0
          %764 = vmatpush1.bf16.xpose.msra.mxu0 0
          %765 = vmatprep.subr.bf16.mxu0 0
          %766 = vmatpush1.bf16.xpose.msra.mxu0 0
          %767 = vmatprep.subr.bf16.mxu0 0
          %768 = vmatpush1.bf16.xpose.msra.mxu0 0
          %769 = vmatprep.subr.bf16.mxu0 0
          %770 = vmatpush1.bf16.xpose.msra.mxu0 0
          %771 = vmatprep.subr.bf16.mxu0 0
          %772 = vmatpush1.bf16.xpose.msra.mxu0 0
          %773 = vmatprep.subr.bf16.mxu0 0
          %774 = vmatpush1.bf16.xpose.msra.mxu0 0
          %775 = vmatprep.subr.bf16.mxu0 0
          %776 = vmatpush1.bf16.xpose.msra.mxu0 0
          %777 = vmatprep.subr.bf16.mxu0 0
          %778 = vmatpush1.bf16.xpose.msra.mxu0 0
          %779 = vmatprep.subr.bf16.mxu0 0
          %780 = vmatpush1.bf16.xpose.msra.mxu0 0
          %781 = vmatprep.subr.bf16.mxu0 0
          %782 = vmatpush1.bf16.xpose.msra.mxu0 0
          %783 = vmatprep.subr.bf16.mxu0 0
          %784 = vmatpush1.bf16.xpose.msra.mxu0 0
          %785 = vmatprep.subr.bf16.mxu0 0
          %786 = vmatpush1.bf16.xpose.msra.mxu0 0
          %787 = vmatprep.mubr.bf16.mxu0 %v754
          %788 = vmatmul.mubr.bf16.gmra.mrb[0].mxu0 %v753
          %v789 = vpop.f32.mrb[0].mxu0
          %v790 = vadd.f32 0.0, %v789
          %v791 = vpop.f32.mrb[0].mxu0
          %v792 = vpop.f32.mrb[0].mxu0
          %v793 = vadd.f32 0.0, %v792
          %v794 = vpop.f32.mrb[0].mxu0
          %795 = vdwg.mxu0
          %v796 = vxor.u32 %v790, 2147483648
          %v797 = vxor.u32 %v793, 2147483648
          %v798 = vmul.f32 %v796, 1.442695
          %v799 = vpow.pop %v798
          %v800 = vmul.f32 %v797, 1.442695
          %v801 = vpow.pop %v800
          %v802 = vadd.f32 %v799, 1.0
          %v803 = vadd.f32 %v801, 1.0
          %v804 = vrcp.pop %v802
          %v805 = vmul.f32 1.0, %v804
          %v806 = vrcp.pop %v803
          %v807 = vmul.f32 1.0, %v806
          %v808 = vmul.f32 %v805, %v481
          %v809 = vmul.f32 %v807, %v482
          %v810 = vadd.f32 %v808, %v483
          %v811 = vadd.f32 %v809, %v484
          %vm812 = vcmask 130048
          %v813 = vsel %vm812, %v810, 0.0
          %814 = vadd.xlane.f32.xlu0 %v813
          %v815 = vpop.xlane.xlu0 %814
          %v816 = vsel %vm812, %v811, 0.0
          %817 = vadd.xlane.f32.xlu0 %v816
          %v818 = vpop.xlane.xlu0 %817
          %v819 = vrcp.pop %v815
          %v820 = vmul.f32 %v810, %v819
          %v821 = vrcp.pop %v818
          %v822 = vmul.f32 %v811, %v821
          %v823 = vpack.c.bf16 %v822, %v820
          %v825 = vsel %vm812, %v823, 0
          %827 = vmatprep.subr.bf16.mxu0 %v500
          %828 = vmatpush1.bf16.msra.mxu0 %v499
          %829 = vmatprep.subr.bf16.mxu0 0
          %830 = vmatpush1.bf16.msra.mxu0 0
          %831 = vmatprep.subr.bf16.mxu0 0
          %832 = vmatpush1.bf16.msra.mxu0 0
          %833 = vmatprep.subr.bf16.mxu0 0
          %834 = vmatpush1.bf16.msra.mxu0 0
          %835 = vmatprep.subr.bf16.mxu0 0
          %836 = vmatpush1.bf16.msra.mxu0 0
          %837 = vmatprep.subr.bf16.mxu0 0
          %838 = vmatpush1.bf16.msra.mxu0 0
          %839 = vmatprep.subr.bf16.mxu0 0
          %840 = vmatpush1.bf16.msra.mxu0 0
          %841 = vmatprep.subr.bf16.mxu0 0
          %842 = vmatpush1.bf16.msra.mxu0 0
          %843 = vmatprep.subr.bf16.mxu0 0
          %844 = vmatpush1.bf16.msra.mxu0 0
          %845 = vmatprep.subr.bf16.mxu0 0
          %846 = vmatpush1.bf16.msra.mxu0 0
          %847 = vmatprep.subr.bf16.mxu0 0
          %848 = vmatpush1.bf16.msra.mxu0 0
          %849 = vmatprep.subr.bf16.mxu0 0
          %850 = vmatpush1.bf16.msra.mxu0 0
          %851 = vmatprep.subr.bf16.mxu0 0
          %852 = vmatpush1.bf16.msra.mxu0 0
          %853 = vmatprep.subr.bf16.mxu0 0
          %854 = vmatpush1.bf16.msra.mxu0 0
          %855 = vmatprep.subr.bf16.mxu0 0
          %856 = vmatpush1.bf16.msra.mxu0 0
          %857 = vmatprep.subr.bf16.mxu0 0
          %858 = vmatpush1.bf16.msra.mxu0 0
          %859 = vmatprep.mubr.bf16.mxu0 0
          %860 = vmatmul.mubr.bf16.gmra.mrb[0].mxu0 %v825
          %v861 = vpop.f32.mrb[0].mxu0
          %v862 = vadd.f32 0.0, %v861
          %v863 = vpop.f32.mrb[0].mxu0
          %v864 = vadd.f32 0.0, %v863
          %v865 = vpop.f32.mrb[0].mxu0
          %v866 = vadd.f32 0.0, %v865
          %v867 = vpop.f32.mrb[0].mxu0
          %v868 = vadd.f32 0.0, %v867
          %869 = vdwg.mxu0
          %v870 = vpack.c.bf16 %v866, %v862
          %v871 = vpack.c.bf16 %v868, %v864
          %s872 = smul.addr %s501, 4
          %s873 = scalar_lea.vmem %s4, %s872
          %v874 = vld [vmem:[%s873] sm:$0xff]
          %v875 = vld [vmem:[%s873 + $0x8] sm:$0xff]
          %v876 = vld [vmem:[%s873 + $0x10] sm:$0xff]
          %v877 = vld [vmem:[%s873 + $0x18] sm:$0xff]
          %v878 = vld [vmem:[%s873 + $0x20] sm:$0xff]
          %v879 = vld [vmem:[%s873 + $0x28] sm:$0xff]
          %v880 = vld [vmem:[%s873 + $0x30] sm:$0xff]
          %v881 = vld [vmem:[%s873 + $0x38] sm:$0xff]
          %v882 = vld [vmem:[%s873 + $0x40] sm:$0xff]
          %v883 = vld [vmem:[%s873 + $0x48] sm:$0xff]
          %v884 = vld [vmem:[%s873 + $0x50] sm:$0xff]
          %v885 = vld [vmem:[%s873 + $0x58] sm:$0xff]
          %v886 = vld [vmem:[%s873 + $0x60] sm:$0xff]
          %v887 = vld [vmem:[%s873 + $0x68] sm:$0xff]
          %v888 = vld [vmem:[%s873 + $0x70] sm:$0xff]
          %v889 = vld [vmem:[%s873 + $0x78] sm:$0xff]
          %v890 = vld [vmem:[%s873 + $0x80] sm:$0xff]
          %v891 = vld [vmem:[%s873 + $0x88] sm:$0xff]
          %v892 = vld [vmem:[%s873 + $0x90] sm:$0xff]
          %v893 = vld [vmem:[%s873 + $0x98] sm:$0xff]
          %v894 = vld [vmem:[%s873 + $0xa0] sm:$0xff]
          %v895 = vld [vmem:[%s873 + $0xa8] sm:$0xff]
          %v896 = vld [vmem:[%s873 + $0xb0] sm:$0xff]
          %v897 = vld [vmem:[%s873 + $0xb8] sm:$0xff]
          %v898 = vld [vmem:[%s873 + $0xc0] sm:$0xff]
          %v899 = vld [vmem:[%s873 + $0xc8] sm:$0xff]
          %v900 = vld [vmem:[%s873 + $0xd0] sm:$0xff]
          %v901 = vld [vmem:[%s873 + $0xd8] sm:$0xff]
          %v902 = vld [vmem:[%s873 + $0xe0] sm:$0xff]
          %v903 = vld [vmem:[%s873 + $0xe8] sm:$0xff]
          %v904 = vld [vmem:[%s873 + $0xf0] sm:$0xff]
          %v905 = vld [vmem:[%s873 + $0xf8] sm:$0xff]
          %s906 = scalar_lea.vmem [#allocation6], %s536
          %v907 = vld [vmem:[%s906] sm:$0x3]
          %v909 = vlaneseq
          %v910 = vshrl.u32 %v909, 7
          %v911 = vsub.s32 0, %v910
          %v912 = vrot.slane %v907, %v911
          %v913 = vlaneseq
          %v914 = vshrl.u32 %v913, 7
          %v915 = vsub.s32 1, %v914
          %v916 = vrot.slane %v907, %v915
          %v951 = vunpack.c.l.b16 %v874
          %v952 = vunpack.c.h.b16 %v874
          %v953 = vunpack.c.l.b16 %v875
          %v954 = vunpack.c.h.b16 %v875
          %v955 = vunpack.c.l.b16 %v876
          %v956 = vunpack.c.h.b16 %v876
          %v957 = vunpack.c.l.b16 %v877
          %v958 = vunpack.c.h.b16 %v877
          %v959 = vunpack.c.l.b16 %v878
          %v960 = vunpack.c.h.b16 %v878
          %v961 = vunpack.c.l.b16 %v879
          %v962 = vunpack.c.h.b16 %v879
          %v963 = vunpack.c.l.b16 %v880
          %v964 = vunpack.c.h.b16 %v880
          %v965 = vunpack.c.l.b16 %v881
          %v966 = vunpack.c.h.b16 %v881
          %v967 = vunpack.c.l.b16 %v882
          %v968 = vunpack.c.h.b16 %v882
          %v969 = vunpack.c.l.b16 %v883
          %v970 = vunpack.c.h.b16 %v883
          %v971 = vunpack.c.l.b16 %v884
          %v972 = vunpack.c.h.b16 %v884
          %v973 = vunpack.c.l.b16 %v885
          %v974 = vunpack.c.h.b16 %v885
          %v975 = vunpack.c.l.b16 %v886
          %v976 = vunpack.c.h.b16 %v886
          %v977 = vunpack.c.l.b16 %v887
          %v978 = vunpack.c.h.b16 %v887
          %v979 = vunpack.c.l.b16 %v888
          %v980 = vunpack.c.h.b16 %v888
          %v981 = vunpack.c.l.b16 %v889
          %v982 = vunpack.c.h.b16 %v889
          %v983 = vunpack.c.l.b16 %v890
          %v984 = vunpack.c.h.b16 %v890
          %v985 = vunpack.c.l.b16 %v891
          %v986 = vunpack.c.h.b16 %v891
          %v987 = vunpack.c.l.b16 %v892
          %v988 = vunpack.c.h.b16 %v892
          %v989 = vunpack.c.l.b16 %v893
          %v990 = vunpack.c.h.b16 %v893
          %v991 = vunpack.c.l.b16 %v894
          %v992 = vunpack.c.h.b16 %v894
          %v993 = vunpack.c.l.b16 %v895
          %v994 = vunpack.c.h.b16 %v895
          %v995 = vunpack.c.l.b16 %v896
          %v996 = vunpack.c.h.b16 %v896
          %v997 = vunpack.c.l.b16 %v897
          %v998 = vunpack.c.h.b16 %v897
          %v999 = vunpack.c.l.b16 %v898
          %v1000 = vunpack.c.h.b16 %v898
          %v1001 = vunpack.c.l.b16 %v899
          %v1002 = vunpack.c.h.b16 %v899
          %v1003 = vunpack.c.l.b16 %v900
          %v1004 = vunpack.c.h.b16 %v900
          %v1005 = vunpack.c.l.b16 %v901
          %v1006 = vunpack.c.h.b16 %v901
          %v1007 = vunpack.c.l.b16 %v902
          %v1008 = vunpack.c.h.b16 %v902
          %v1009 = vunpack.c.l.b16 %v903
          %v1010 = vunpack.c.h.b16 %v903
          %v1011 = vunpack.c.l.b16 %v904
          %v1012 = vunpack.c.h.b16 %v904
          %v1013 = vunpack.c.l.b16 %v905
          %v1014 = vunpack.c.h.b16 %v905
          %v1015 = vpack.c.b16 %v953, %v951
          %v1016 = vpack.c.b16 %v954, %v952
          %v1017 = vpack.c.b16 %v957, %v955
          %v1018 = vpack.c.b16 %v958, %v956
          %v1019 = vpack.c.b16 %v961, %v959
          %v1020 = vpack.c.b16 %v962, %v960
          %v1021 = vpack.c.b16 %v965, %v963
          %v1022 = vpack.c.b16 %v966, %v964
          %v1023 = vpack.c.b16 %v969, %v967
          %v1024 = vpack.c.b16 %v970, %v968
          %v1025 = vpack.c.b16 %v973, %v971
          %v1026 = vpack.c.b16 %v974, %v972
          %v1027 = vpack.c.b16 %v977, %v975
          %v1028 = vpack.c.b16 %v978, %v976
          %v1029 = vpack.c.b16 %v981, %v979
          %v1030 = vpack.c.b16 %v982, %v980
          %v1031 = vpack.c.b16 %v985, %v983
          %v1032 = vpack.c.b16 %v986, %v984
          %v1033 = vpack.c.b16 %v989, %v987
          %v1034 = vpack.c.b16 %v990, %v988
          %v1035 = vpack.c.b16 %v993, %v991
          %v1036 = vpack.c.b16 %v994, %v992
          %v1037 = vpack.c.b16 %v997, %v995
          %v1038 = vpack.c.b16 %v998, %v996
          %v1039 = vpack.c.b16 %v1001, %v999
          %v1040 = vpack.c.b16 %v1002, %v1000
          %v1041 = vpack.c.b16 %v1005, %v1003
          %v1042 = vpack.c.b16 %v1006, %v1004
          %v1043 = vpack.c.b16 %v1009, %v1007
          %v1044 = vpack.c.b16 %v1010, %v1008
          %v1045 = vpack.c.b16 %v1013, %v1011
          %v1046 = vpack.c.b16 %v1014, %v1012
          %1079 = vmatprep.subr.bf16.mxu0 %v1016
          %1080 = vmatpush1.bf16.msra.mxu0 %v1015
          %1081 = vmatprep.subr.bf16.mxu0 %v1018
          %1082 = vmatpush1.bf16.msra.mxu0 %v1017
          %1083 = vmatprep.subr.bf16.mxu0 %v1020
          %1084 = vmatpush1.bf16.msra.mxu0 %v1019
          %1085 = vmatprep.subr.bf16.mxu0 %v1022
          %1086 = vmatpush1.bf16.msra.mxu0 %v1021
          %1087 = vmatprep.subr.bf16.mxu0 %v1024
          %1088 = vmatpush1.bf16.msra.mxu0 %v1023
          %1089 = vmatprep.subr.bf16.mxu0 %v1026
          %1090 = vmatpush1.bf16.msra.mxu0 %v1025
          %1091 = vmatprep.subr.bf16.mxu0 %v1028
          %1092 = vmatpush1.bf16.msra.mxu0 %v1027
          %1093 = vmatprep.subr.bf16.mxu0 %v1030
          %1094 = vmatpush1.bf16.msra.mxu0 %v1029
          %1095 = vmatprep.subr.bf16.mxu0 %v1032
          %1096 = vmatpush1.bf16.msra.mxu0 %v1031
          %1097 = vmatprep.subr.bf16.mxu0 %v1034
          %1098 = vmatpush1.bf16.msra.mxu0 %v1033
          %1099 = vmatprep.subr.bf16.mxu0 %v1036
          %1100 = vmatpush1.bf16.msra.mxu0 %v1035
          %1101 = vmatprep.subr.bf16.mxu0 %v1038
          %1102 = vmatpush1.bf16.msra.mxu0 %v1037
          %1103 = vmatprep.subr.bf16.mxu0 %v1040
          %1104 = vmatpush1.bf16.msra.mxu0 %v1039
          %1105 = vmatprep.subr.bf16.mxu0 %v1042
          %1106 = vmatpush1.bf16.msra.mxu0 %v1041
          %1107 = vmatprep.subr.bf16.mxu0 %v1044
          %1108 = vmatpush1.bf16.msra.mxu0 %v1043
          %1109 = vmatprep.subr.bf16.mxu0 %v1046
          %1110 = vmatpush1.bf16.msra.mxu0 %v1045
          %1111 = vmatprep.mubr.bf16.mxu0 %v871
          %1112 = vmatmul.mubr.bf16.gmra.mrb[0].mxu0 %v870
          %v1113 = vpop.f32.mrb[0].mxu0
          %v1114 = vadd.f32 %v912, %v1113
          %v1115 = vpop.f32.mrb[0].mxu0
          %v1116 = vadd.f32 %v916, %v1115
          %v1117 = vpop.f32.mrb[0].mxu0
          %v1118 = vadd.f32 %v912, %v1117
          %v1119 = vpop.f32.mrb[0].mxu0
          %v1120 = vadd.f32 %v916, %v1119
          %1121 = vdwg.mxu0
          %v1122 = vmax.f32 %v1114, 0.0
          %v1123 = vmax.f32 %v1116, 0.0
          %v1124 = vmax.f32 %v1118, 0.0
          %v1125 = vmax.f32 %v1120, 0.0
          %v1126 = vpack.c.bf16 %v1124, %v1122
          %v1127 = vpack.c.bf16 %v1125, %v1123
          %s1128 = smul.addr %s501, 4
          %s1129 = scalar_lea.vmem [#allocation7], %s1128
          %v1130 = vld [vmem:[%s1129] sm:$0xff]
          %v1131 = vld [vmem:[%s1129 + $0x8] sm:$0xff]
          %v1132 = vld [vmem:[%s1129 + $0x10] sm:$0xff]
          %v1133 = vld [vmem:[%s1129 + $0x18] sm:$0xff]
          %v1134 = vld [vmem:[%s1129 + $0x20] sm:$0xff]
          %v1135 = vld [vmem:[%s1129 + $0x28] sm:$0xff]
          %v1136 = vld [vmem:[%s1129 + $0x30] sm:$0xff]
          %v1137 = vld [vmem:[%s1129 + $0x38] sm:$0xff]
          %v1138 = vld [vmem:[%s1129 + $0x40] sm:$0xff]
          %v1139 = vld [vmem:[%s1129 + $0x48] sm:$0xff]
          %v1140 = vld [vmem:[%s1129 + $0x50] sm:$0xff]
          %v1141 = vld [vmem:[%s1129 + $0x58] sm:$0xff]
          %v1142 = vld [vmem:[%s1129 + $0x60] sm:$0xff]
          %v1143 = vld [vmem:[%s1129 + $0x68] sm:$0xff]
          %v1144 = vld [vmem:[%s1129 + $0x70] sm:$0xff]
          %v1145 = vld [vmem:[%s1129 + $0x78] sm:$0xff]
          %v1146 = vld [vmem:[%s1129 + $0x80] sm:$0xff]
          %v1147 = vld [vmem:[%s1129 + $0x88] sm:$0xff]
          %v1148 = vld [vmem:[%s1129 + $0x90] sm:$0xff]
          %v1149 = vld [vmem:[%s1129 + $0x98] sm:$0xff]
          %v1150 = vld [vmem:[%s1129 + $0xa0] sm:$0xff]
          %v1151 = vld [vmem:[%s1129 + $0xa8] sm:$0xff]
          %v1152 = vld [vmem:[%s1129 + $0xb0] sm:$0xff]
          %v1153 = vld [vmem:[%s1129 + $0xb8] sm:$0xff]
          %v1154 = vld [vmem:[%s1129 + $0xc0] sm:$0xff]
          %v1155 = vld [vmem:[%s1129 + $0xc8] sm:$0xff]
          %v1156 = vld [vmem:[%s1129 + $0xd0] sm:$0xff]
          %v1157 = vld [vmem:[%s1129 + $0xd8] sm:$0xff]
          %v1158 = vld [vmem:[%s1129 + $0xe0] sm:$0xff]
          %v1159 = vld [vmem:[%s1129 + $0xe8] sm:$0xff]
          %v1160 = vld [vmem:[%s1129 + $0xf0] sm:$0xff]
          %v1161 = vld [vmem:[%s1129 + $0xf8] sm:$0xff]
          %s1162 = scalar_lea.vmem [#allocation9], %s536
          %v1163 = vld [vmem:[%s1162] sm:$0x3]
          %v1165 = vlaneseq
          %v1166 = vshrl.u32 %v1165, 7
          %v1167 = vsub.s32 0, %v1166
          %v1168 = vrot.slane %v1163, %v1167
          %v1169 = vlaneseq
          %v1170 = vshrl.u32 %v1169, 7
          %v1171 = vsub.s32 1, %v1170
          %v1172 = vrot.slane %v1163, %v1171
          %v1207 = vunpack.c.l.b16 %v1130
          %v1208 = vunpack.c.h.b16 %v1130
          %v1209 = vunpack.c.l.b16 %v1131
          %v1210 = vunpack.c.h.b16 %v1131
          %v1211 = vunpack.c.l.b16 %v1132
          %v1212 = vunpack.c.h.b16 %v1132
          %v1213 = vunpack.c.l.b16 %v1133
          %v1214 = vunpack.c.h.b16 %v1133
          %v1215 = vunpack.c.l.b16 %v1134
          %v1216 = vunpack.c.h.b16 %v1134
          %v1217 = vunpack.c.l.b16 %v1135
          %v1218 = vunpack.c.h.b16 %v1135
          %v1219 = vunpack.c.l.b16 %v1136
          %v1220 = vunpack.c.h.b16 %v1136
          %v1221 = vunpack.c.l.b16 %v1137
          %v1222 = vunpack.c.h.b16 %v1137
          %v1223 = vunpack.c.l.b16 %v1138
          %v1224 = vunpack.c.h.b16 %v1138
          %v1225 = vunpack.c.l.b16 %v1139
          %v1226 = vunpack.c.h.b16 %v1139
          %v1227 = vunpack.c.l.b16 %v1140
          %v1228 = vunpack.c.h.b16 %v1140
          %v1229 = vunpack.c.l.b16 %v1141
          %v1230 = vunpack.c.h.b16 %v1141
          %v1231 = vunpack.c.l.b16 %v1142
          %v1232 = vunpack.c.h.b16 %v1142
          %v1233 = vunpack.c.l.b16 %v1143
          %v1234 = vunpack.c.h.b16 %v1143
          %v1235 = vunpack.c.l.b16 %v1144
          %v1236 = vunpack.c.h.b16 %v1144
          %v1237 = vunpack.c.l.b16 %v1145
          %v1238 = vunpack.c.h.b16 %v1145
          %v1239 = vunpack.c.l.b16 %v1146
          %v1240 = vunpack.c.h.b16 %v1146
          %v1241 = vunpack.c.l.b16 %v1147
          %v1242 = vunpack.c.h.b16 %v1147
          %v1243 = vunpack.c.l.b16 %v1148
          %v1244 = vunpack.c.h.b16 %v1148
          %v1245 = vunpack.c.l.b16 %v1149
          %v1246 = vunpack.c.h.b16 %v1149
          %v1247 = vunpack.c.l.b16 %v1150
          %v1248 = vunpack.c.h.b16 %v1150
          %v1249 = vunpack.c.l.b16 %v1151
          %v1250 = vunpack.c.h.b16 %v1151
          %v1251 = vunpack.c.l.b16 %v1152
          %v1252 = vunpack.c.h.b16 %v1152
          %v1253 = vunpack.c.l.b16 %v1153
          %v1254 = vunpack.c.h.b16 %v1153
          %v1255 = vunpack.c.l.b16 %v1154
          %v1256 = vunpack.c.h.b16 %v1154
          %v1257 = vunpack.c.l.b16 %v1155
          %v1258 = vunpack.c.h.b16 %v1155
          %v1259 = vunpack.c.l.b16 %v1156
          %v1260 = vunpack.c.h.b16 %v1156
          %v1261 = vunpack.c.l.b16 %v1157
          %v1262 = vunpack.c.h.b16 %v1157
          %v1263 = vunpack.c.l.b16 %v1158
          %v1264 = vunpack.c.h.b16 %v1158
          %v1265 = vunpack.c.l.b16 %v1159
          %v1266 = vunpack.c.h.b16 %v1159
          %v1267 = vunpack.c.l.b16 %v1160
          %v1268 = vunpack.c.h.b16 %v1160
          %v1269 = vunpack.c.l.b16 %v1161
          %v1270 = vunpack.c.h.b16 %v1161
          %v1271 = vpack.c.b16 %v1209, %v1207
          %v1272 = vpack.c.b16 %v1210, %v1208
          %v1273 = vpack.c.b16 %v1213, %v1211
          %v1274 = vpack.c.b16 %v1214, %v1212
          %v1275 = vpack.c.b16 %v1217, %v1215
          %v1276 = vpack.c.b16 %v1218, %v1216
          %v1277 = vpack.c.b16 %v1221, %v1219
          %v1278 = vpack.c.b16 %v1222, %v1220
          %v1279 = vpack.c.b16 %v1225, %v1223
          %v1280 = vpack.c.b16 %v1226, %v1224
          %v1281 = vpack.c.b16 %v1229, %v1227
          %v1282 = vpack.c.b16 %v1230, %v1228
          %v1283 = vpack.c.b16 %v1233, %v1231
          %v1284 = vpack.c.b16 %v1234, %v1232
          %v1285 = vpack.c.b16 %v1237, %v1235
          %v1286 = vpack.c.b16 %v1238, %v1236
          %v1287 = vpack.c.b16 %v1241, %v1239
          %v1288 = vpack.c.b16 %v1242, %v1240
          %v1289 = vpack.c.b16 %v1245, %v1243
          %v1290 = vpack.c.b16 %v1246, %v1244
          %v1291 = vpack.c.b16 %v1249, %v1247
          %v1292 = vpack.c.b16 %v1250, %v1248
          %v1293 = vpack.c.b16 %v1253, %v1251
          %v1294 = vpack.c.b16 %v1254, %v1252
          %v1295 = vpack.c.b16 %v1257, %v1255
          %v1296 = vpack.c.b16 %v1258, %v1256
          %v1297 = vpack.c.b16 %v1261, %v1259
          %v1298 = vpack.c.b16 %v1262, %v1260
          %v1299 = vpack.c.b16 %v1265, %v1263
          %v1300 = vpack.c.b16 %v1266, %v1264
          %v1301 = vpack.c.b16 %v1269, %v1267
          %v1302 = vpack.c.b16 %v1270, %v1268
          %1335 = vmatprep.subr.bf16.mxu0 %v1272
          %1336 = vmatpush1.bf16.msra.mxu0 %v1271
          %1337 = vmatprep.subr.bf16.mxu0 %v1274
          %1338 = vmatpush1.bf16.msra.mxu0 %v1273
          %1339 = vmatprep.subr.bf16.mxu0 %v1276
          %1340 = vmatpush1.bf16.msra.mxu0 %v1275
          %1341 = vmatprep.subr.bf16.mxu0 %v1278
          %1342 = vmatpush1.bf16.msra.mxu0 %v1277
          %1343 = vmatprep.subr.bf16.mxu0 %v1280
          %1344 = vmatpush1.bf16.msra.mxu0 %v1279
          %1345 = vmatprep.subr.bf16.mxu0 %v1282
          %1346 = vmatpush1.bf16.msra.mxu0 %v1281
          %1347 = vmatprep.subr.bf16.mxu0 %v1284
          %1348 = vmatpush1.bf16.msra.mxu0 %v1283
          %1349 = vmatprep.subr.bf16.mxu0 %v1286
          %1350 = vmatpush1.bf16.msra.mxu0 %v1285
          %1351 = vmatprep.subr.bf16.mxu0 %v1288
          %1352 = vmatpush1.bf16.msra.mxu0 %v1287
          %1353 = vmatprep.subr.bf16.mxu0 %v1290
          %1354 = vmatpush1.bf16.msra.mxu0 %v1289
          %1355 = vmatprep.subr.bf16.mxu0 %v1292
          %1356 = vmatpush1.bf16.msra.mxu0 %v1291
          %1357 = vmatprep.subr.bf16.mxu0 %v1294
          %1358 = vmatpush1.bf16.msra.mxu0 %v1293
          %1359 = vmatprep.subr.bf16.mxu0 %v1296
          %1360 = vmatpush1.bf16.msra.mxu0 %v1295
          %1361 = vmatprep.subr.bf16.mxu0 %v1298
          %1362 = vmatpush1.bf16.msra.mxu0 %v1297
          %1363 = vmatprep.subr.bf16.mxu0 %v1300
          %1364 = vmatpush1.bf16.msra.mxu0 %v1299
          %1365 = vmatprep.subr.bf16.mxu0 %v1302
          %1366 = vmatpush1.bf16.msra.mxu0 %v1301
          %1367 = vmatprep.mubr.bf16.mxu0 %v1127
          %1368 = vmatmul.mubr.bf16.gmra.mrb[0].mxu0 %v1126
          %v1369 = vpop.f32.mrb[0].mxu0
          %v1370 = vadd.f32 %v1168, %v1369
          %v1371 = vpop.f32.mrb[0].mxu0
          %v1372 = vadd.f32 %v1172, %v1371
          %v1373 = vpop.f32.mrb[0].mxu0
          %v1374 = vadd.f32 %v1168, %v1373
          %v1375 = vpop.f32.mrb[0].mxu0
          %v1376 = vadd.f32 %v1172, %v1375
          %1377 = vdwg.mxu0
          %v1378 = vmax.f32 %v1370, 0.0
          %v1379 = vmax.f32 %v1372, 0.0
          %v1380 = vmax.f32 %v1374, 0.0
          %v1381 = vmax.f32 %v1376, 0.0
          %v1382 = vadd.f32 %v1378, %v495
          %v1383 = vadd.f32 %v1379, %v496
          %v1384 = vadd.f32 %v1380, %v497
          %v1385 = vadd.f32 %v1381, %v498
        $region89: #{forward_pretrain_supervised.6} parent=59 // loop_footer
          %s494 = sadd.s32 1, %s490
        $region90: #{forward_pretrain_supervised.6} parent=59 // loop_footer_branch
          %489 = sbr.rel target = $region86
        $region91: #{forward_pretrain_supervised.6} parent=59 // loop_exit
          _
        %v1386 = vpack.c.bf16 %v497, %v495
        %v1387 = vpack.c.bf16 %v498, %v496
        %v1388 = vld [vmem:[%s8] sm:$0xff]
        %v1389 = vld [vmem:[%s8 + $0x8] sm:$0xff]
        %v1390 = vld [vmem:[%s8 + $0x10] sm:$0xff]
        %v1391 = vld [vmem:[%s8 + $0x18] sm:$0xff]
        %v1392 = vld [vmem:[%s8 + $0x20] sm:$0xff]
        %v1393 = vld [vmem:[%s8 + $0x28] sm:$0xff]
        %v1394 = vld [vmem:[%s8 + $0x30] sm:$0xff]
        %v1395 = vld [vmem:[%s8 + $0x38] sm:$0xff]
        %v1396 = vld [vmem:[%s8 + $0x40] sm:$0xff]
        %v1397 = vld [vmem:[%s8 + $0x48] sm:$0xff]
        %v1398 = vld [vmem:[%s8 + $0x50] sm:$0xff]
        %v1399 = vld [vmem:[%s8 + $0x58] sm:$0xff]
        %v1400 = vld [vmem:[%s8 + $0x60] sm:$0xff]
        %v1401 = vld [vmem:[%s8 + $0x68] sm:$0xff]
        %v1402 = vld [vmem:[%s8 + $0x70] sm:$0xff]
        %v1403 = vld [vmem:[%s8 + $0x78] sm:$0xff]
        %v1404 = vld [vmem:[%s8 + $0x80] sm:$0xff]
        %v1405 = vld [vmem:[%s8 + $0x88] sm:$0xff]
        %v1406 = vld [vmem:[%s8 + $0x90] sm:$0xff]
        %v1407 = vld [vmem:[%s8 + $0x98] sm:$0xff]
        %v1408 = vld [vmem:[%s8 + $0xa0] sm:$0xff]
        %v1409 = vld [vmem:[%s8 + $0xa8] sm:$0xff]
        %v1410 = vld [vmem:[%s8 + $0xb0] sm:$0xff]
        %v1411 = vld [vmem:[%s8 + $0xb8] sm:$0xff]
        %v1412 = vld [vmem:[%s8 + $0xc0] sm:$0xff]
        %v1413 = vld [vmem:[%s8 + $0xc8] sm:$0xff]
        %v1414 = vld [vmem:[%s8 + $0xd0] sm:$0xff]
        %v1415 = vld [vmem:[%s8 + $0xd8] sm:$0xff]
        %v1416 = vld [vmem:[%s8 + $0xe0] sm:$0xff]
        %v1417 = vld [vmem:[%s8 + $0xe8] sm:$0xff]
        %v1418 = vld [vmem:[%s8 + $0xf0] sm:$0xff]
        %v1419 = vld [vmem:[%s8 + $0xf8] sm:$0xff]
        %v1420 = vld [vmem:[#allocation10] sm:$0x3]
        %v1422 = vlaneseq
        %v1423 = vshrl.u32 %v1422, 7
        %v1424 = vsub.s32 0, %v1423
        %v1425 = vrot.slane %v1420, %v1424
        %v1426 = vlaneseq
        %v1427 = vshrl.u32 %v1426, 7
        %v1428 = vsub.s32 1, %v1427
        %v1429 = vrot.slane %v1420, %v1428
        %v1464 = vunpack.c.l.b16 %v1388
        %v1465 = vunpack.c.h.b16 %v1388
        %v1466 = vunpack.c.l.b16 %v1389
        %v1467 = vunpack.c.h.b16 %v1389
        %v1468 = vunpack.c.l.b16 %v1390
        %v1469 = vunpack.c.h.b16 %v1390
        %v1470 = vunpack.c.l.b16 %v1391
        %v1471 = vunpack.c.h.b16 %v1391
        %v1472 = vunpack.c.l.b16 %v1392
        %v1473 = vunpack.c.h.b16 %v1392
        %v1474 = vunpack.c.l.b16 %v1393
        %v1475 = vunpack.c.h.b16 %v1393
        %v1476 = vunpack.c.l.b16 %v1394
        %v1477 = vunpack.c.h.b16 %v1394
        %v1478 = vunpack.c.l.b16 %v1395
        %v1479 = vunpack.c.h.b16 %v1395
        %v1480 = vunpack.c.l.b16 %v1396
        %v1481 = vunpack.c.h.b16 %v1396
        %v1482 = vunpack.c.l.b16 %v1397
        %v1483 = vunpack.c.h.b16 %v1397
        %v1484 = vunpack.c.l.b16 %v1398
        %v1485 = vunpack.c.h.b16 %v1398
        %v1486 = vunpack.c.l.b16 %v1399
        %v1487 = vunpack.c.h.b16 %v1399
        %v1488 = vunpack.c.l.b16 %v1400
        %v1489 = vunpack.c.h.b16 %v1400
        %v1490 = vunpack.c.l.b16 %v1401
        %v1491 = vunpack.c.h.b16 %v1401
        %v1492 = vunpack.c.l.b16 %v1402
        %v1493 = vunpack.c.h.b16 %v1402
        %v1494 = vunpack.c.l.b16 %v1403
        %v1495 = vunpack.c.h.b16 %v1403
        %v1496 = vunpack.c.l.b16 %v1404
        %v1497 = vunpack.c.h.b16 %v1404
        %v1498 = vunpack.c.l.b16 %v1405
        %v1499 = vunpack.c.h.b16 %v1405
        %v1500 = vunpack.c.l.b16 %v1406
        %v1501 = vunpack.c.h.b16 %v1406
        %v1502 = vunpack.c.l.b16 %v1407
        %v1503 = vunpack.c.h.b16 %v1407
        %v1504 = vunpack.c.l.b16 %v1408
        %v1505 = vunpack.c.h.b16 %v1408
        %v1506 = vunpack.c.l.b16 %v1409
        %v1507 = vunpack.c.h.b16 %v1409
        %v1508 = vunpack.c.l.b16 %v1410
        %v1509 = vunpack.c.h.b16 %v1410
        %v1510 = vunpack.c.l.b16 %v1411
        %v1511 = vunpack.c.h.b16 %v1411
        %v1512 = vunpack.c.l.b16 %v1412
        %v1513 = vunpack.c.h.b16 %v1412
        %v1514 = vunpack.c.l.b16 %v1413
        %v1515 = vunpack.c.h.b16 %v1413
        %v1516 = vunpack.c.l.b16 %v1414
        %v1517 = vunpack.c.h.b16 %v1414
        %v1518 = vunpack.c.l.b16 %v1415
        %v1519 = vunpack.c.h.b16 %v1415
        %v1520 = vunpack.c.l.b16 %v1416
        %v1521 = vunpack.c.h.b16 %v1416
        %v1522 = vunpack.c.l.b16 %v1417
        %v1523 = vunpack.c.h.b16 %v1417
        %v1524 = vunpack.c.l.b16 %v1418
        %v1525 = vunpack.c.h.b16 %v1418
        %v1526 = vunpack.c.l.b16 %v1419
        %v1527 = vunpack.c.h.b16 %v1419
        %v1528 = vpack.c.b16 %v1466, %v1464
        %v1529 = vpack.c.b16 %v1467, %v1465
        %v1530 = vpack.c.b16 %v1470, %v1468
        %v1531 = vpack.c.b16 %v1471, %v1469
        %v1532 = vpack.c.b16 %v1474, %v1472
        %v1533 = vpack.c.b16 %v1475, %v1473
        %v1534 = vpack.c.b16 %v1478, %v1476
        %v1535 = vpack.c.b16 %v1479, %v1477
        %v1536 = vpack.c.b16 %v1482, %v1480
        %v1537 = vpack.c.b16 %v1483, %v1481
        %v1538 = vpack.c.b16 %v1486, %v1484
        %v1539 = vpack.c.b16 %v1487, %v1485
        %v1540 = vpack.c.b16 %v1490, %v1488
        %v1541 = vpack.c.b16 %v1491, %v1489
        %v1542 = vpack.c.b16 %v1494, %v1492
        %v1543 = vpack.c.b16 %v1495, %v1493
        %v1544 = vpack.c.b16 %v1498, %v1496
        %v1545 = vpack.c.b16 %v1499, %v1497
        %v1546 = vpack.c.b16 %v1502, %v1500
        %v1547 = vpack.c.b16 %v1503, %v1501
        %v1548 = vpack.c.b16 %v1506, %v1504
        %v1549 = vpack.c.b16 %v1507, %v1505
        %v1550 = vpack.c.b16 %v1510, %v1508
        %v1551 = vpack.c.b16 %v1511, %v1509
        %v1552 = vpack.c.b16 %v1514, %v1512
        %v1553 = vpack.c.b16 %v1515, %v1513
        %v1554 = vpack.c.b16 %v1518, %v1516
        %v1555 = vpack.c.b16 %v1519, %v1517
        %v1556 = vpack.c.b16 %v1522, %v1520
        %v1557 = vpack.c.b16 %v1523, %v1521
        %v1558 = vpack.c.b16 %v1526, %v1524
        %v1559 = vpack.c.b16 %v1527, %v1525
        %1592 = vmatprep.subr.bf16.mxu0 %v1529
        %1593 = vmatpush1.bf16.msra.mxu0 %v1528
        %1594 = vmatprep.subr.bf16.mxu0 %v1531
        %1595 = vmatpush1.bf16.msra.mxu0 %v1530
        %1596 = vmatprep.subr.bf16.mxu0 %v1533
        %1597 = vmatpush1.bf16.msra.mxu0 %v1532
        %1598 = vmatprep.subr.bf16.mxu0 %v1535
        %1599 = vmatpush1.bf16.msra.mxu0 %v1534
        %1600 = vmatprep.subr.bf16.mxu0 %v1537
        %1601 = vmatpush1.bf16.msra.mxu0 %v1536
        %1602 = vmatprep.subr.bf16.mxu0 %v1539
        %1603 = vmatpush1.bf16.msra.mxu0 %v1538
        %1604 = vmatprep.subr.bf16.mxu0 %v1541
        %1605 = vmatpush1.bf16.msra.mxu0 %v1540
        %1606 = vmatprep.subr.bf16.mxu0 %v1543
        %1607 = vmatpush1.bf16.msra.mxu0 %v1542
        %1608 = vmatprep.subr.bf16.mxu0 %v1545
        %1609 = vmatpush1.bf16.msra.mxu0 %v1544
        %1610 = vmatprep.subr.bf16.mxu0 %v1547
        %1611 = vmatpush1.bf16.msra.mxu0 %v1546
        %1612 = vmatprep.subr.bf16.mxu0 %v1549
        %1613 = vmatpush1.bf16.msra.mxu0 %v1548
        %1614 = vmatprep.subr.bf16.mxu0 %v1551
        %1615 = vmatpush1.bf16.msra.mxu0 %v1550
        %1616 = vmatprep.subr.bf16.mxu0 %v1553
        %1617 = vmatpush1.bf16.msra.mxu0 %v1552
        %1618 = vmatprep.subr.bf16.mxu0 %v1555
        %1619 = vmatpush1.bf16.msra.mxu0 %v1554
        %1620 = vmatprep.subr.bf16.mxu0 %v1557
        %1621 = vmatpush1.bf16.msra.mxu0 %v1556
        %1622 = vmatprep.subr.bf16.mxu0 %v1559
        %1623 = vmatpush1.bf16.msra.mxu0 %v1558
        %1624 = vmatprep.mubr.bf16.mxu0 %v1387
        %1625 = vmatmul.mubr.bf16.gmra.mrb[0].mxu0 %v1386
        %v1626 = vpop.f32.mrb[0].mxu0
        %v1627 = vadd.f32 %v1425, %v1626
        %v1628 = vpop.f32.mrb[0].mxu0
        %v1629 = vadd.f32 %v1429, %v1628
        %v1630 = vpop.f32.mrb[0].mxu0
        %v1631 = vadd.f32 %v1425, %v1630
        %v1632 = vpop.f32.mrb[0].mxu0
        %v1633 = vadd.f32 %v1429, %v1632
        %1634 = vdwg.mxu0
        %1635 = vst [vmem:[%s470] sm:$0xff] %v1627
        %1636 = vst [vmem:[%s470 + $0x8] sm:$0xff] %v1629
        %1637 = vst [vmem:[%s470 + $0x10] sm:$0xff] %v1631
        %1638 = vst [vmem:[%s470 + $0x18] sm:$0xff] %v1633
        %p1639 = scmp.lt.s32.totalorder %s27, 1
        %s1640 = scalar_select %p1639, %s27, 1
        %s1641 = smul.addr %s1640, 4
        %s1642 = smul.addr %s1641, 8
        %s1643 = scalar_lea.vmem %s10, %s1642
        // Predicated region
        $region92: #{forward_pretrain_supervised.6} parent=59 // pred_check
          %p1644 = pneg %p265
        $region93: #{forward_pretrain_supervised.6} parent=59 // pred_check_branch
          %1646 = sbr.rel (%p1644) target = $region95
        $region94: #{forward_pretrain_supervised.6} parent=59 // pred_region
          _
        $region95: #{forward_pretrain_supervised.6} parent=59 // pred_fallthru
          _
      $region60: #{forward_pretrain_supervised.6} parent=5 // pred_fallthru
        _
      %p1647 = scmp.le.s32.totalorder 2, %s22
      // Predicated region
      $region96: #{forward_pretrain_supervised.6} parent=5 // pred_check
        %p1648 = pneg %p1647
      $region97: #{forward_pretrain_supervised.6} parent=5 // pred_check_branch
        %1650 = sbr.rel (%p1648) target = $region99
      $region98: #{forward_pretrain_supervised.6} parent=5 // pred_region
        %s1651 = ssub.s32 %s22, 2
        // Predicated region
        $region100: #{forward_pretrain_supervised.6} parent=98 // pred_check
          %p1652 = pneg %p271
        $region101: #{forward_pretrain_supervised.6} parent=98 // pred_check_branch
          %1654 = sbr.rel (%p1652) target = $region103
        $region102: #{forward_pretrain_supervised.6} parent=98 // pred_region
          %p1655 = scmp.lt.s32.totalorder %s28, 1
          %s1656 = scalar_select %p1655, %s28, 1
          %s1657 = smul.addr %s1656, 4
          %s1658 = smul.addr %s1657, 8
          %s1659 = scalar_lea.vmem %s10, %s1658
        $region103: #{forward_pretrain_supervised.6} parent=98 // pred_fallthru
          _
      $region99: #{forward_pretrain_supervised.6} parent=5 // pred_fallthru
        _
    $region6: #{forward_pretrain_supervised.6} parent=1 // loop_footer
      %s26 = sadd.s32 1, %s22
    $region7: #{forward_pretrain_supervised.6} parent=1 // loop_footer_branch
      %21 = sbr.rel target = $region3
    $region8: #{forward_pretrain_supervised.6} parent=1 // loop_exit
      _
    %1660 = vsyncpa [#allocation3], 1
    %s1661 = scalar_lea.sflag [#allocation3], 1
    %1662 = vsyncpa %s1661, 1
    %1663 = vsyncpa [#allocation5], 1
    %1664 = vsyncpa [#allocation8], 1
    %1665 = vsyncpa [#allocation11], 1

// kernel: forward_pretrain_supervised.7
$region0: #{forward_pretrain_supervised.7}
  #allocation0 [shape = 'u32[]', space=smem, size = 0x4, offset = 0x4, fixed_abs, tag = 'smem constant byte address 0x4 - core index']
  #allocation1 [shape = 'u32[144,128]{1,0:T(1,128)}', space=vmem, size = 0x12000, scoped, tag = 'internal scratch']
  %s0 = inlined_call_operand.vmem [shape: f32[2,16,256], index: 0, kind: input, shape index: {}]
  %s1 = inlined_call_operand.vmem [shape: f32[2,16,256], index: 1, kind: input, shape index: {}]
  %s2 = inlined_call_operand.vmem [shape: bf16[256,256], index: 2, kind: input, shape index: {}]
  %s3 = inlined_call_operand.vmem [shape: f32[1,256], index: 3, kind: input, shape index: {}]
  %s4 = inlined_call_operand.vmem [shape: bf16[256,256], index: 4, kind: input, shape index: {}]
  %s5 = inlined_call_operand.vmem [shape: f32[1,256], index: 5, kind: input, shape index: {}]
  %s6 = inlined_call_operand.vmem [shape: bf16[256,256], index: 6, kind: input, shape index: {}]
  %s7 = inlined_call_operand.vmem [shape: f32[1,256], index: 7, kind: input, shape index: {}]
  %s8 = inlined_call_operand.vmem [shape: bf16[256,256], index: 8, kind: input, shape index: {}]
  %s9 = inlined_call_operand.vmem [shape: f32[1,256], index: 9, kind: input, shape index: {}]
  %s10 = inlined_call_operand.vmem [shape: bf16[256,256], index: 10, kind: input, shape index: {}]
  %s11 = inlined_call_operand.vmem [shape: bf16[256,256], index: 11, kind: input, shape index: {}]
  %s12 = inlined_call_operand.vmem [shape: f32[1,256], index: 12, kind: input, shape index: {}]
  %s13 = inlined_call_operand.vmem [shape: f32[2,16,256], index: 13, kind: output, shape index: {}]
  %s14 = sld [smem:[#allocation0]]
  $region85: #{forward_pretrain_supervised.7} parent=0
    _
  %s16 = ssub.s32 1, %s14
  %s17 = scalar_select 0, %s16, %s14
  loop: start=0, step=1, limit=4
  $region2: #{forward_pretrain_supervised.7} parent=0 // loop_pre_header
    _
  $region3: #{forward_pretrain_supervised.7} parent=0 // loop_header
    %s19 = sphi 0, %s23
    %p20 = scmp.ge.s32.totalorder %s19, 4
    %s29 = sphi 0, %s31
    %s32 = sphi 0, %s29
    %s33 = sphi 0, %s32
    %s49 = sphi 0, %s33
    %s55 = sphi 0, %s57
    %s58 = sphi 0, %s55
    %s59 = sphi 0, %s58
    %s75 = sphi 0, %s59
    %s79 = sphi 0, %s79
    %s81 = sphi 0, %s79
    %s82 = sphi 0, %s81
    %s96 = sphi 0, %s82
    %s100 = sphi 0, %s100
    %s102 = sphi 0, %s100
    %s103 = sphi 0, %s102
    %s117 = sphi 0, %s103
    %s121 = sphi 0, %s121
    %s123 = sphi 0, %s121
    %s124 = sphi 0, %s123
    %s138 = sphi 0, %s124
    %s142 = sphi 0, %s142
    %s144 = sphi 0, %s142
    %s145 = sphi 0, %s144
    %s159 = sphi 0, %s145
    %s163 = sphi 0, %s163
    %s165 = sphi 0, %s163
    %s166 = sphi 0, %s165
    %s180 = sphi 0, %s166
    %s184 = sphi 0, %s184
    %s186 = sphi 0, %s184
    %s187 = sphi 0, %s186
    %s201 = sphi 0, %s187
    %s205 = sphi 0, %s205
    %s207 = sphi 0, %s205
    %s208 = sphi 0, %s207
    %s222 = sphi 0, %s208
    %s226 = sphi 0, %s226
    %s228 = sphi 0, %s226
    %s229 = sphi 0, %s228
    %s243 = sphi 0, %s229
    %s247 = sphi 0, %s247
    %s249 = sphi 0, %s247
    %s250 = sphi 0, %s249
    %s264 = sphi 0, %s250
    %s268 = sphi 0, %s268
    %s270 = sphi 0, %s268
    %s271 = sphi 0, %s270
    %s285 = sphi 0, %s271
    %s289 = sphi 0, %s289
    %s291 = sphi 0, %s289
    %s292 = sphi 0, %s291
    %s306 = sphi 0, %s292
    %s312 = sphi 0, %s314
    %s315 = sphi 0, %s312
    %s316 = sphi 0, %s315
    %s332 = sphi 0, %s316
  $region4: #{forward_pretrain_supervised.7} parent=0 // loop_header_branch
    %22 = sbr.rel (%p20) target = $region8
  $region5: #{forward_pretrain_supervised.7} parent=0 // loop_body
    %s24 = ssub.s32 %s19, 1
    %s25 = ssub.s32 %s19, 2
    %s26 = sadd.s32 %s19, 1
    %s27 = ssub.s32 %s19, %s26
    %p28 = scmp.eq.s32.totalorder %s27, 0
    %s30 = sadd.s32 %s29, 1
    %s31 = scalar_select %p28, %s29, %s30
    %p34 = pneg %p28
    %p35 = scmp.eq.s32.totalorder %s19, 1
    %p36 = por %p34, %p35
    %p37 = scmp.ne.s32.totalorder %s29, %s32
    %p38 = scmp.eq.s32.totalorder %s19, 0
    %p39 = por %p37, %p38
    %p40 = scmp.ne.s32.totalorder %s29, %s32
    %p41 = scmp.eq.s32.totalorder %s24, 1
    %p42 = por %p40, %p41
    %p43 = scmp.ne.s32.totalorder %s32, %s33
    %p44 = scmp.eq.s32.totalorder %s24, 0
    %p45 = por %p43, %p44
    %p46 = scmp.ne.s32.totalorder %s32, %s33
    %p47 = scmp.eq.s32.totalorder %s25, 1
    %p48 = por %p46, %p47
    %p50 = scmp.ne.s32.totalorder %s33, %s49
    %p51 = scmp.eq.s32.totalorder %s25, 0
    %p52 = por %p50, %p51
    %s53 = ssub.s32 %s19, %s26
    %p54 = scmp.eq.s32.totalorder %s53, 0
    %s56 = sadd.s32 %s55, 1
    %s57 = scalar_select %p54, %s55, %s56
    %p60 = pneg %p54
    %p61 = scmp.eq.s32.totalorder %s19, 1
    %p62 = por %p60, %p61
    %p63 = scmp.ne.s32.totalorder %s55, %s58
    %p64 = scmp.eq.s32.totalorder %s19, 0
    %p65 = por %p63, %p64
    %p66 = scmp.ne.s32.totalorder %s55, %s58
    %p67 = scmp.eq.s32.totalorder %s24, 1
    %p68 = por %p66, %p67
    %p69 = scmp.ne.s32.totalorder %s58, %s59
    %p70 = scmp.eq.s32.totalorder %s24, 0
    %p71 = por %p69, %p70
    %p72 = scmp.ne.s32.totalorder %s58, %s59
    %p73 = scmp.eq.s32.totalorder %s25, 1
    %p74 = por %p72, %p73
    %p76 = scmp.ne.s32.totalorder %s59, %s75
    %p77 = scmp.eq.s32.totalorder %s25, 0
    %p78 = por %p76, %p77
    %s80 = sadd.s32 %s79, 1
    %p83 = scmp.eq.s32.totalorder %s19, 1
    %p84 = scmp.ne.s32.totalorder %s79, %s81
    %p85 = scmp.eq.s32.totalorder %s19, 0
    %p86 = por %p84, %p85
    %p87 = scmp.ne.s32.totalorder %s79, %s81
    %p88 = scmp.eq.s32.totalorder %s24, 1
    %p89 = por %p87, %p88
    %p90 = scmp.ne.s32.totalorder %s81, %s82
    %p91 = scmp.eq.s32.totalorder %s24, 0
    %p92 = por %p90, %p91
    %p93 = scmp.ne.s32.totalorder %s81, %s82
    %p94 = scmp.eq.s32.totalorder %s25, 1
    %p95 = por %p93, %p94
    %p97 = scmp.ne.s32.totalorder %s82, %s96
    %p98 = scmp.eq.s32.totalorder %s25, 0
    %p99 = por %p97, %p98
    %s101 = sadd.s32 %s100, 1
    %p104 = scmp.eq.s32.totalorder %s19, 1
    %p105 = scmp.ne.s32.totalorder %s100, %s102
    %p106 = scmp.eq.s32.totalorder %s19, 0
    %p107 = por %p105, %p106
    %p108 = scmp.ne.s32.totalorder %s100, %s102
    %p109 = scmp.eq.s32.totalorder %s24, 1
    %p110 = por %p108, %p109
    %p111 = scmp.ne.s32.totalorder %s102, %s103
    %p112 = scmp.eq.s32.totalorder %s24, 0
    %p113 = por %p111, %p112
    %p114 = scmp.ne.s32.totalorder %s102, %s103
    %p115 = scmp.eq.s32.totalorder %s25, 1
    %p116 = por %p114, %p115
    %p118 = scmp.ne.s32.totalorder %s103, %s117
    %p119 = scmp.eq.s32.totalorder %s25, 0
    %p120 = por %p118, %p119
    %s122 = sadd.s32 %s121, 1
    %p125 = scmp.eq.s32.totalorder %s19, 1
    %p126 = scmp.ne.s32.totalorder %s121, %s123
    %p127 = scmp.eq.s32.totalorder %s19, 0
    %p128 = por %p126, %p127
    %p129 = scmp.ne.s32.totalorder %s121, %s123
    %p130 = scmp.eq.s32.totalorder %s24, 1
    %p131 = por %p129, %p130
    %p132 = scmp.ne.s32.totalorder %s123, %s124
    %p133 = scmp.eq.s32.totalorder %s24, 0
    %p134 = por %p132, %p133
    %p135 = scmp.ne.s32.totalorder %s123, %s124
    %p136 = scmp.eq.s32.totalorder %s25, 1
    %p137 = por %p135, %p136
    %p139 = scmp.ne.s32.totalorder %s124, %s138
    %p140 = scmp.eq.s32.totalorder %s25, 0
    %p141 = por %p139, %p140
    %s143 = sadd.s32 %s142, 1
    %p146 = scmp.eq.s32.totalorder %s19, 1
    %p147 = scmp.ne.s32.totalorder %s142, %s144
    %p148 = scmp.eq.s32.totalorder %s19, 0
    %p149 = por %p147, %p148
    %p150 = scmp.ne.s32.totalorder %s142, %s144
    %p151 = scmp.eq.s32.totalorder %s24, 1
    %p152 = por %p150, %p151
    %p153 = scmp.ne.s32.totalorder %s144, %s145
    %p154 = scmp.eq.s32.totalorder %s24, 0
    %p155 = por %p153, %p154
    %p156 = scmp.ne.s32.totalorder %s144, %s145
    %p157 = scmp.eq.s32.totalorder %s25, 1
    %p158 = por %p156, %p157
    %p160 = scmp.ne.s32.totalorder %s145, %s159
    %p161 = scmp.eq.s32.totalorder %s25, 0
    %p162 = por %p160, %p161
    %s164 = sadd.s32 %s163, 1
    %p167 = scmp.eq.s32.totalorder %s19, 1
    %p168 = scmp.ne.s32.totalorder %s163, %s165
    %p169 = scmp.eq.s32.totalorder %s19, 0
    %p170 = por %p168, %p169
    %p171 = scmp.ne.s32.totalorder %s163, %s165
    %p172 = scmp.eq.s32.totalorder %s24, 1
    %p173 = por %p171, %p172
    %p174 = scmp.ne.s32.totalorder %s165, %s166
    %p175 = scmp.eq.s32.totalorder %s24, 0
    %p176 = por %p174, %p175
    %p177 = scmp.ne.s32.totalorder %s165, %s166
    %p178 = scmp.eq.s32.totalorder %s25, 1
    %p179 = por %p177, %p178
    %p181 = scmp.ne.s32.totalorder %s166, %s180
    %p182 = scmp.eq.s32.totalorder %s25, 0
    %p183 = por %p181, %p182
    %s185 = sadd.s32 %s184, 1
    %p188 = scmp.eq.s32.totalorder %s19, 1
    %p189 = scmp.ne.s32.totalorder %s184, %s186
    %p190 = scmp.eq.s32.totalorder %s19, 0
    %p191 = por %p189, %p190
    %p192 = scmp.ne.s32.totalorder %s184, %s186
    %p193 = scmp.eq.s32.totalorder %s24, 1
    %p194 = por %p192, %p193
    %p195 = scmp.ne.s32.totalorder %s186, %s187
    %p196 = scmp.eq.s32.totalorder %s24, 0
    %p197 = por %p195, %p196
    %p198 = scmp.ne.s32.totalorder %s186, %s187
    %p199 = scmp.eq.s32.totalorder %s25, 1
    %p200 = por %p198, %p199
    %p202 = scmp.ne.s32.totalorder %s187, %s201
    %p203 = scmp.eq.s32.totalorder %s25, 0
    %p204 = por %p202, %p203
    %s206 = sadd.s32 %s205, 1
    %p209 = scmp.eq.s32.totalorder %s19, 1
    %p210 = scmp.ne.s32.totalorder %s205, %s207
    %p211 = scmp.eq.s32.totalorder %s19, 0
    %p212 = por %p210, %p211
    %p213 = scmp.ne.s32.totalorder %s205, %s207
    %p214 = scmp.eq.s32.totalorder %s24, 1
    %p215 = por %p213, %p214
    %p216 = scmp.ne.s32.totalorder %s207, %s208
    %p217 = scmp.eq.s32.totalorder %s24, 0
    %p218 = por %p216, %p217
    %p219 = scmp.ne.s32.totalorder %s207, %s208
    %p220 = scmp.eq.s32.totalorder %s25, 1
    %p221 = por %p219, %p220
    %p223 = scmp.ne.s32.totalorder %s208, %s222
    %p224 = scmp.eq.s32.totalorder %s25, 0
    %p225 = por %p223, %p224
    %s227 = sadd.s32 %s226, 1
    %p230 = scmp.eq.s32.totalorder %s19, 1
    %p231 = scmp.ne.s32.totalorder %s226, %s228
    %p232 = scmp.eq.s32.totalorder %s19, 0
    %p233 = por %p231, %p232
    %p234 = scmp.ne.s32.totalorder %s226, %s228
    %p235 = scmp.eq.s32.totalorder %s24, 1
    %p236 = por %p234, %p235
    %p237 = scmp.ne.s32.totalorder %s228, %s229
    %p238 = scmp.eq.s32.totalorder %s24, 0
    %p239 = por %p237, %p238
    %p240 = scmp.ne.s32.totalorder %s228, %s229
    %p241 = scmp.eq.s32.totalorder %s25, 1
    %p242 = por %p240, %p241
    %p244 = scmp.ne.s32.totalorder %s229, %s243
    %p245 = scmp.eq.s32.totalorder %s25, 0
    %p246 = por %p244, %p245
    %s248 = sadd.s32 %s247, 1
    %p251 = scmp.eq.s32.totalorder %s19, 1
    %p252 = scmp.ne.s32.totalorder %s247, %s249
    %p253 = scmp.eq.s32.totalorder %s19, 0
    %p254 = por %p252, %p253
    %p255 = scmp.ne.s32.totalorder %s247, %s249
    %p256 = scmp.eq.s32.totalorder %s24, 1
    %p257 = por %p255, %p256
    %p258 = scmp.ne.s32.totalorder %s249, %s250
    %p259 = scmp.eq.s32.totalorder %s24, 0
    %p260 = por %p258, %p259
    %p261 = scmp.ne.s32.totalorder %s249, %s250
    %p262 = scmp.eq.s32.totalorder %s25, 1
    %p263 = por %p261, %p262
    %p265 = scmp.ne.s32.totalorder %s250, %s264
    %p266 = scmp.eq.s32.totalorder %s25, 0
    %p267 = por %p265, %p266
    %s269 = sadd.s32 %s268, 1
    %p272 = scmp.eq.s32.totalorder %s19, 1
    %p273 = scmp.ne.s32.totalorder %s268, %s270
    %p274 = scmp.eq.s32.totalorder %s19, 0
    %p275 = por %p273, %p274
    %p276 = scmp.ne.s32.totalorder %s268, %s270
    %p277 = scmp.eq.s32.totalorder %s24, 1
    %p278 = por %p276, %p277
    %p279 = scmp.ne.s32.totalorder %s270, %s271
    %p280 = scmp.eq.s32.totalorder %s24, 0
    %p281 = por %p279, %p280
    %p282 = scmp.ne.s32.totalorder %s270, %s271
    %p283 = scmp.eq.s32.totalorder %s25, 1
    %p284 = por %p282, %p283
    %p286 = scmp.ne.s32.totalorder %s271, %s285
    %p287 = scmp.eq.s32.totalorder %s25, 0
    %p288 = por %p286, %p287
    %s290 = sadd.s32 %s289, 1
    %p293 = scmp.eq.s32.totalorder %s19, 1
    %p294 = scmp.ne.s32.totalorder %s289, %s291
    %p295 = scmp.eq.s32.totalorder %s19, 0
    %p296 = por %p294, %p295
    %p297 = scmp.ne.s32.totalorder %s289, %s291
    %p298 = scmp.eq.s32.totalorder %s24, 1
    %p299 = por %p297, %p298
    %p300 = scmp.ne.s32.totalorder %s291, %s292
    %p301 = scmp.eq.s32.totalorder %s24, 0
    %p302 = por %p300, %p301
    %p303 = scmp.ne.s32.totalorder %s291, %s292
    %p304 = scmp.eq.s32.totalorder %s25, 1
    %p305 = por %p303, %p304
    %p307 = scmp.ne.s32.totalorder %s292, %s306
    %p308 = scmp.eq.s32.totalorder %s25, 0
    %p309 = por %p307, %p308
    %s310 = ssub.s32 %s19, %s26
    %p311 = scmp.eq.s32.totalorder %s310, 0
    %s313 = sadd.s32 %s312, 1
    %s314 = scalar_select %p311, %s312, %s313
    %p317 = pneg %p311
    %p318 = scmp.eq.s32.totalorder %s19, 1
    %p319 = por %p317, %p318
    %p320 = scmp.ne.s32.totalorder %s312, %s315
    %p321 = scmp.eq.s32.totalorder %s19, 0
    %p322 = por %p320, %p321
    %p323 = scmp.ne.s32.totalorder %s312, %s315
    %p324 = scmp.eq.s32.totalorder %s24, 1
    %p325 = por %p323, %p324
    %p326 = scmp.ne.s32.totalorder %s315, %s316
    %p327 = scmp.eq.s32.totalorder %s24, 0
    %p328 = por %p326, %p327
    %p329 = scmp.ne.s32.totalorder %s315, %s316
    %p330 = scmp.eq.s32.totalorder %s25, 1
    %p331 = por %p329, %p330
    %p333 = scmp.ne.s32.totalorder %s316, %s332
    %p334 = scmp.eq.s32.totalorder %s25, 0
    %p335 = por %p333, %p334
    %p336 = scmp.le.s32.totalorder 1, %s19
    %p337 = scmp.lt.s32.totalorder %s19, 3
    %p338 = pnand %p336, %p337
    %p339 = pneg %p338
    // Predicated region
    $region9: #{forward_pretrain_supervised.7} parent=5 // pred_check
      _
    $region10: #{forward_pretrain_supervised.7} parent=5 // pred_check_branch
      %341 = sbr.rel (%p338) target = $region12
    $region11: #{forward_pretrain_supervised.7} parent=5 // pred_region
      %s342 = ssub.s32 %s19, 1
      // Predicated region
      $region13: #{forward_pretrain_supervised.7} parent=11 // pred_check
        %p343 = pneg %p92
      $region14: #{forward_pretrain_supervised.7} parent=11 // pred_check_branch
        %345 = sbr.rel (%p343) target = $region16
      $region15: #{forward_pretrain_supervised.7} parent=11 // pred_region
        _
      $region16: #{forward_pretrain_supervised.7} parent=11 // pred_fallthru
        _
      // Predicated region
      $region17: #{forward_pretrain_supervised.7} parent=11 // pred_check
        %p346 = pneg %p113
      $region18: #{forward_pretrain_supervised.7} parent=11 // pred_check_branch
        %348 = sbr.rel (%p346) target = $region20
      $region19: #{forward_pretrain_supervised.7} parent=11 // pred_region
        _
      $region20: #{forward_pretrain_supervised.7} parent=11 // pred_fallthru
        _
      // Predicated region
      $region21: #{forward_pretrain_supervised.7} parent=11 // pred_check
        %p349 = pneg %p134
      $region22: #{forward_pretrain_supervised.7} parent=11 // pred_check_branch
        %351 = sbr.rel (%p349) target = $region24
      $region23: #{forward_pretrain_supervised.7} parent=11 // pred_region
        _
      $region24: #{forward_pretrain_supervised.7} parent=11 // pred_fallthru
        _
      // Predicated region
      $region25: #{forward_pretrain_supervised.7} parent=11 // pred_check
        %p352 = pneg %p155
      $region26: #{forward_pretrain_supervised.7} parent=11 // pred_check_branch
        %354 = sbr.rel (%p352) target = $region28
      $region27: #{forward_pretrain_supervised.7} parent=11 // pred_region
        _
      $region28: #{forward_pretrain_supervised.7} parent=11 // pred_fallthru
        _
      // Predicated region
      $region29: #{forward_pretrain_supervised.7} parent=11 // pred_check
        %p355 = pneg %p176
      $region30: #{forward_pretrain_supervised.7} parent=11 // pred_check_branch
        %357 = sbr.rel (%p355) target = $region32
      $region31: #{forward_pretrain_supervised.7} parent=11 // pred_region
        _
      $region32: #{forward_pretrain_supervised.7} parent=11 // pred_fallthru
        _
      // Predicated region
      $region33: #{forward_pretrain_supervised.7} parent=11 // pred_check
        %p358 = pneg %p197
      $region34: #{forward_pretrain_supervised.7} parent=11 // pred_check_branch
        %360 = sbr.rel (%p358) target = $region36
      $region35: #{forward_pretrain_supervised.7} parent=11 // pred_region
        _
      $region36: #{forward_pretrain_supervised.7} parent=11 // pred_fallthru
        _
      // Predicated region
      $region37: #{forward_pretrain_supervised.7} parent=11 // pred_check
        %p361 = pneg %p218
      $region38: #{forward_pretrain_supervised.7} parent=11 // pred_check_branch
        %363 = sbr.rel (%p361) target = $region40
      $region39: #{forward_pretrain_supervised.7} parent=11 // pred_region
        _
      $region40: #{forward_pretrain_supervised.7} parent=11 // pred_fallthru
        _
      // Predicated region
      $region41: #{forward_pretrain_supervised.7} parent=11 // pred_check
        %p364 = pneg %p239
      $region42: #{forward_pretrain_supervised.7} parent=11 // pred_check_branch
        %366 = sbr.rel (%p364) target = $region44
      $region43: #{forward_pretrain_supervised.7} parent=11 // pred_region
        _
      $region44: #{forward_pretrain_supervised.7} parent=11 // pred_fallthru
        _
      // Predicated region
      $region45: #{forward_pretrain_supervised.7} parent=11 // pred_check
        %p367 = pneg %p260
      $region46: #{forward_pretrain_supervised.7} parent=11 // pred_check_branch
        %369 = sbr.rel (%p367) target = $region48
      $region47: #{forward_pretrain_supervised.7} parent=11 // pred_region
        _
      $region48: #{forward_pretrain_supervised.7} parent=11 // pred_fallthru
        _
      // Predicated region
      $region49: #{forward_pretrain_supervised.7} parent=11 // pred_check
        %p370 = pneg %p281
      $region50: #{forward_pretrain_supervised.7} parent=11 // pred_check_branch
        %372 = sbr.rel (%p370) target = $region52
      $region51: #{forward_pretrain_supervised.7} parent=11 // pred_region
        _
      $region52: #{forward_pretrain_supervised.7} parent=11 // pred_fallthru
        _
      // Predicated region
      $region53: #{forward_pretrain_supervised.7} parent=11 // pred_check
        %p373 = pneg %p302
      $region54: #{forward_pretrain_supervised.7} parent=11 // pred_check_branch
        %375 = sbr.rel (%p373) target = $region56
      $region55: #{forward_pretrain_supervised.7} parent=11 // pred_region
        _
      $region56: #{forward_pretrain_supervised.7} parent=11 // pred_fallthru
        _
    $region12: #{forward_pretrain_supervised.7} parent=5 // pred_fallthru
      _
    %p376 = scmp.lt.s32.totalorder %s19, 2
    // Predicated region
    $region57: #{forward_pretrain_supervised.7} parent=5 // pred_check
      %p377 = pneg %p376
    $region58: #{forward_pretrain_supervised.7} parent=5 // pred_check_branch
      %379 = sbr.rel (%p377) target = $region60
    $region59: #{forward_pretrain_supervised.7} parent=5 // pred_region
      // Predicated region
      $region61: #{forward_pretrain_supervised.7} parent=59 // pred_check
        %p380 = pneg %p39
      $region62: #{forward_pretrain_supervised.7} parent=59 // pred_check_branch
        %382 = sbr.rel (%p380) target = $region64
      $region63: #{forward_pretrain_supervised.7} parent=59 // pred_region
        %p383 = scmp.lt.s32.totalorder %s19, 1
        %s384 = scalar_select %p383, %s19, 1
        %s385 = smul.addr %s384, 4
        %s386 = smul.addr %s385, 8
        %s387 = scalar_lea.vmem %s0, %s386
      $region64: #{forward_pretrain_supervised.7} parent=59 // pred_fallthru
        _
      // Predicated region
      $region65: #{forward_pretrain_supervised.7} parent=59 // pred_check
        %p388 = pneg %p65
      $region66: #{forward_pretrain_supervised.7} parent=59 // pred_check_branch
        %390 = sbr.rel (%p388) target = $region68
      $region67: #{forward_pretrain_supervised.7} parent=59 // pred_region
        %p391 = scmp.lt.s32.totalorder %s19, 1
        %s392 = scalar_select %p391, %s19, 1
        %s393 = smul.addr %s392, 4
        %s394 = smul.addr %s393, 8
        %s395 = scalar_lea.vmem %s1, %s394
      $region68: #{forward_pretrain_supervised.7} parent=59 // pred_fallthru
        _
    $region60: #{forward_pretrain_supervised.7} parent=5 // pred_fallthru
      _
    %p396 = scmp.le.s32.totalorder 1, %s19
    %p397 = scmp.lt.s32.totalorder %s19, 3
    %p398 = pnand %p396, %p397
    %p399 = pneg %p398
    // Predicated region
    $region69: #{forward_pretrain_supervised.7} parent=5 // pred_check
      _
    $region70: #{forward_pretrain_supervised.7} parent=5 // pred_check_branch
      %401 = sbr.rel (%p398) target = $region72
    $region71: #{forward_pretrain_supervised.7} parent=5 // pred_region
      %s402 = ssub.s32 %s19, 1
      %p403 = scmp.lt.s32.totalorder %s24, 1
      %s404 = scalar_select %p403, %s24, 1
      %s405 = smul.addr %s404, 4
      %s406 = smul.addr %s405, 8
      %s407 = scalar_lea.vmem %s0, %s406
      %p408 = pneg %p45
      %p409 = pneg %p42
      %p410 = scmp.lt.s32.totalorder %s24, 1
      %s411 = scalar_select %p410, %s24, 1
      %s412 = smul.addr %s411, 4
      %s413 = smul.addr %s412, 8
      %s414 = scalar_lea.vmem %s1, %s413
      %p415 = pneg %p71
      %p416 = pneg %p68
      %p417 = pneg %p92
      %p418 = pneg %p89
      %p419 = pneg %p113
      %p420 = pneg %p110
      %p421 = pneg %p134
      %p422 = pneg %p131
      %p423 = pneg %p155
      %p424 = pneg %p152
      %p425 = pneg %p176
      %p426 = pneg %p173
      %p427 = pneg %p197
      %p428 = pneg %p194
      %p429 = pneg %p218
      %p430 = pneg %p215
      %p431 = pneg %p239
      %p432 = pneg %p236
      %p433 = pneg %p260
      %p434 = pneg %p257
      %p435 = pneg %p281
      %p436 = pneg %p278
      %p437 = pneg %p302
      %p438 = pneg %p299
      %p439 = pneg %p328
      %p440 = pneg %p325
      %p441 = scmp.lt.s32.totalorder %s24, 1
      %s442 = scalar_select %p441, %s24, 1
      %s443 = smul.addr %s442, 4
      %s444 = smul.addr %s443, 8
      %s445 = scalar_lea.vmem %s13, %s444
      %p446 = scmp.lt.s32.totalorder %s24, 1
      %s447 = scalar_select %p446, %s24, 1
      %s448 = smul.addr %s447, 4
      %s449 = smul.addr %s448, 8
      %s450 = scalar_lea.vmem %s0, %s449
      %p451 = scmp.lt.s32.totalorder %s24, 1
      %s452 = scalar_select %p451, %s24, 1
      %s453 = smul.addr %s452, 4
      %s454 = smul.addr %s453, 8
      %s455 = scalar_lea.vmem %s1, %s454
      %p456 = scmp.lt.s32.totalorder %s24, 1
      %s457 = scalar_select %p456, %s24, 1
      %s458 = smul.addr %s457, 4
      %s459 = smul.addr %s458, 8
      %s460 = scalar_lea.vmem %s13, %s459
      %v461 = vld [vmem:[%s450] sm:$0xff]
      %v462 = vld [vmem:[%s450 + $0x8] sm:$0xff]
      %v463 = vld [vmem:[%s450 + $0x10] sm:$0xff]
      %v464 = vld [vmem:[%s450 + $0x18] sm:$0xff]
      %v465 = vld [vmem:[%s455] sm:$0xff]
      %v466 = vld [vmem:[%s455 + $0x8] sm:$0xff]
      %v467 = vld [vmem:[%s455 + $0x10] sm:$0xff]
      %v468 = vld [vmem:[%s455 + $0x18] sm:$0xff]
      %v469 = vpack.c.bf16 %v463, %v461
      %v470 = vpack.c.bf16 %v464, %v462
      %v471 = vpack.c.bf16 %v467, %v465
      %v472 = vpack.c.bf16 %v468, %v466
      %v473 = vld [vmem:[%s2] sm:$0xff]
      %v474 = vld [vmem:[%s2 + $0x8] sm:$0xff]
      %v475 = vld [vmem:[%s2 + $0x10] sm:$0xff]
      %v476 = vld [vmem:[%s2 + $0x18] sm:$0xff]
      %v477 = vld [vmem:[%s2 + $0x20] sm:$0xff]
      %v478 = vld [vmem:[%s2 + $0x28] sm:$0xff]
      %v479 = vld [vmem:[%s2 + $0x30] sm:$0xff]
      %v480 = vld [vmem:[%s2 + $0x38] sm:$0xff]
      %v481 = vld [vmem:[%s2 + $0x40] sm:$0xff]
      %v482 = vld [vmem:[%s2 + $0x48] sm:$0xff]
      %v483 = vld [vmem:[%s2 + $0x50] sm:$0xff]
      %v484 = vld [vmem:[%s2 + $0x58] sm:$0xff]
      %v485 = vld [vmem:[%s2 + $0x60] sm:$0xff]
      %v486 = vld [vmem:[%s2 + $0x68] sm:$0xff]
      %v487 = vld [vmem:[%s2 + $0x70] sm:$0xff]
      %v488 = vld [vmem:[%s2 + $0x78] sm:$0xff]
      %v489 = vld [vmem:[%s2 + $0x80] sm:$0xff]
      %v490 = vld [vmem:[%s2 + $0x88] sm:$0xff]
      %v491 = vld [vmem:[%s2 + $0x90] sm:$0xff]
      %v492 = vld [vmem:[%s2 + $0x98] sm:$0xff]
      %v493 = vld [vmem:[%s2 + $0xa0] sm:$0xff]
      %v494 = vld [vmem:[%s2 + $0xa8] sm:$0xff]
      %v495 = vld [vmem:[%s2 + $0xb0] sm:$0xff]
      %v496 = vld [vmem:[%s2 + $0xb8] sm:$0xff]
      %v497 = vld [vmem:[%s2 + $0xc0] sm:$0xff]
      %v498 = vld [vmem:[%s2 + $0xc8] sm:$0xff]
      %v499 = vld [vmem:[%s2 + $0xd0] sm:$0xff]
      %v500 = vld [vmem:[%s2 + $0xd8] sm:$0xff]
      %v501 = vld [vmem:[%s2 + $0xe0] sm:$0xff]
      %v502 = vld [vmem:[%s2 + $0xe8] sm:$0xff]
      %v503 = vld [vmem:[%s2 + $0xf0] sm:$0xff]
      %v504 = vld [vmem:[%s2 + $0xf8] sm:$0xff]
      %v505 = vld [vmem:[%s3] sm:$0x3]
      %v507 = vlaneseq
      %v508 = vshrl.u32 %v507, 7
      %v509 = vsub.s32 0, %v508
      %v510 = vrot.slane %v505, %v509
      %v511 = vlaneseq
      %v512 = vshrl.u32 %v511, 7
      %v513 = vsub.s32 1, %v512
      %v514 = vrot.slane %v505, %v513
      %v549 = vunpack.c.l.b16 %v473
      %v550 = vunpack.c.h.b16 %v473
      %v551 = vunpack.c.l.b16 %v474
      %v552 = vunpack.c.h.b16 %v474
      %v553 = vunpack.c.l.b16 %v475
      %v554 = vunpack.c.h.b16 %v475
      %v555 = vunpack.c.l.b16 %v476
      %v556 = vunpack.c.h.b16 %v476
      %v557 = vunpack.c.l.b16 %v477
      %v558 = vunpack.c.h.b16 %v477
      %v559 = vunpack.c.l.b16 %v478
      %v560 = vunpack.c.h.b16 %v478
      %v561 = vunpack.c.l.b16 %v479
      %v562 = vunpack.c.h.b16 %v479
      %v563 = vunpack.c.l.b16 %v480
      %v564 = vunpack.c.h.b16 %v480
      %v565 = vunpack.c.l.b16 %v481
      %v566 = vunpack.c.h.b16 %v481
      %v567 = vunpack.c.l.b16 %v482
      %v568 = vunpack.c.h.b16 %v482
      %v569 = vunpack.c.l.b16 %v483
      %v570 = vunpack.c.h.b16 %v483
      %v571 = vunpack.c.l.b16 %v484
      %v572 = vunpack.c.h.b16 %v484
      %v573 = vunpack.c.l.b16 %v485
      %v574 = vunpack.c.h.b16 %v485
      %v575 = vunpack.c.l.b16 %v486
      %v576 = vunpack.c.h.b16 %v486
      %v577 = vunpack.c.l.b16 %v487
      %v578 = vunpack.c.h.b16 %v487
      %v579 = vunpack.c.l.b16 %v488
      %v580 = vunpack.c.h.b16 %v488
      %v581 = vunpack.c.l.b16 %v489
      %v582 = vunpack.c.h.b16 %v489
      %v583 = vunpack.c.l.b16 %v490
      %v584 = vunpack.c.h.b16 %v490
      %v585 = vunpack.c.l.b16 %v491
      %v586 = vunpack.c.h.b16 %v491
      %v587 = vunpack.c.l.b16 %v492
      %v588 = vunpack.c.h.b16 %v492
      %v589 = vunpack.c.l.b16 %v493
      %v590 = vunpack.c.h.b16 %v493
      %v591 = vunpack.c.l.b16 %v494
      %v592 = vunpack.c.h.b16 %v494
      %v593 = vunpack.c.l.b16 %v495
      %v594 = vunpack.c.h.b16 %v495
      %v595 = vunpack.c.l.b16 %v496
      %v596 = vunpack.c.h.b16 %v496
      %v597 = vunpack.c.l.b16 %v497
      %v598 = vunpack.c.h.b16 %v497
      %v599 = vunpack.c.l.b16 %v498
      %v600 = vunpack.c.h.b16 %v498
      %v601 = vunpack.c.l.b16 %v499
      %v602 = vunpack.c.h.b16 %v499
      %v603 = vunpack.c.l.b16 %v500
      %v604 = vunpack.c.h.b16 %v500
      %v605 = vunpack.c.l.b16 %v501
      %v606 = vunpack.c.h.b16 %v501
      %v607 = vunpack.c.l.b16 %v502
      %v608 = vunpack.c.h.b16 %v502
      %v609 = vunpack.c.l.b16 %v503
      %v610 = vunpack.c.h.b16 %v503
      %v611 = vunpack.c.l.b16 %v504
      %v612 = vunpack.c.h.b16 %v504
      %v613 = vpack.c.b16 %v551, %v549
      %v614 = vpack.c.b16 %v552, %v550
      %v615 = vpack.c.b16 %v555, %v553
      %v616 = vpack.c.b16 %v556, %v554
      %v617 = vpack.c.b16 %v559, %v557
      %v618 = vpack.c.b16 %v560, %v558
      %v619 = vpack.c.b16 %v563, %v561
      %v620 = vpack.c.b16 %v564, %v562
      %v621 = vpack.c.b16 %v567, %v565
      %v622 = vpack.c.b16 %v568, %v566
      %v623 = vpack.c.b16 %v571, %v569
      %v624 = vpack.c.b16 %v572, %v570
      %v625 = vpack.c.b16 %v575, %v573
      %v626 = vpack.c.b16 %v576, %v574
      %v627 = vpack.c.b16 %v579, %v577
      %v628 = vpack.c.b16 %v580, %v578
      %v629 = vpack.c.b16 %v583, %v581
      %v630 = vpack.c.b16 %v584, %v582
      %v631 = vpack.c.b16 %v587, %v585
      %v632 = vpack.c.b16 %v588, %v586
      %v633 = vpack.c.b16 %v591, %v589
      %v634 = vpack.c.b16 %v592, %v590
      %v635 = vpack.c.b16 %v595, %v593
      %v636 = vpack.c.b16 %v596, %v594
      %v637 = vpack.c.b16 %v599, %v597
      %v638 = vpack.c.b16 %v600, %v598
      %v639 = vpack.c.b16 %v603, %v601
      %v640 = vpack.c.b16 %v604, %v602
      %v641 = vpack.c.b16 %v607, %v605
      %v642 = vpack.c.b16 %v608, %v606
      %v643 = vpack.c.b16 %v611, %v609
      %v644 = vpack.c.b16 %v612, %v610
      %677 = vmatprep.subr.bf16.mxu0 %v614
      %678 = vmatpush1.bf16.msra.mxu0 %v613
      %679 = vmatprep.subr.bf16.mxu0 %v616
      %680 = vmatpush1.bf16.msra.mxu0 %v615
      %681 = vmatprep.subr.bf16.mxu0 %v618
      %682 = vmatpush1.bf16.msra.mxu0 %v617
      %683 = vmatprep.subr.bf16.mxu0 %v620
      %684 = vmatpush1.bf16.msra.mxu0 %v619
      %685 = vmatprep.subr.bf16.mxu0 %v622
      %686 = vmatpush1.bf16.msra.mxu0 %v621
      %687 = vmatprep.subr.bf16.mxu0 %v624
      %688 = vmatpush1.bf16.msra.mxu0 %v623
      %689 = vmatprep.subr.bf16.mxu0 %v626
      %690 = vmatpush1.bf16.msra.mxu0 %v625
      %691 = vmatprep.subr.bf16.mxu0 %v628
      %692 = vmatpush1.bf16.msra.mxu0 %v627
      %693 = vmatprep.subr.bf16.mxu0 %v630
      %694 = vmatpush1.bf16.msra.mxu0 %v629
      %695 = vmatprep.subr.bf16.mxu0 %v632
      %696 = vmatpush1.bf16.msra.mxu0 %v631
      %697 = vmatprep.subr.bf16.mxu0 %v634
      %698 = vmatpush1.bf16.msra.mxu0 %v633
      %699 = vmatprep.subr.bf16.mxu0 %v636
      %700 = vmatpush1.bf16.msra.mxu0 %v635
      %701 = vmatprep.subr.bf16.mxu0 %v638
      %702 = vmatpush1.bf16.msra.mxu0 %v637
      %703 = vmatprep.subr.bf16.mxu0 %v640
      %704 = vmatpush1.bf16.msra.mxu0 %v639
      %705 = vmatprep.subr.bf16.mxu0 %v642
      %706 = vmatpush1.bf16.msra.mxu0 %v641
      %707 = vmatprep.subr.bf16.mxu0 %v644
      %708 = vmatpush1.bf16.msra.mxu0 %v643
      %709 = vmatprep.mubr.bf16.mxu0 %v472
      %710 = vmatmul.mubr.bf16.gmra.mrb[0].mxu0 %v471
      %v711 = vpop.f32.mrb[0].mxu0
      %v712 = vadd.f32 %v510, %v711
      %v713 = vpop.f32.mrb[0].mxu0
      %v714 = vadd.f32 %v514, %v713
      %v715 = vpop.f32.mrb[0].mxu0
      %v716 = vadd.f32 %v510, %v715
      %v717 = vpop.f32.mrb[0].mxu0
      %v718 = vadd.f32 %v514, %v717
      %719 = vdwg.mxu0
      %v720 = vmax.f32 %v712, 0.0
      %v721 = vmax.f32 %v714, 0.0
      %v722 = vmax.f32 %v716, 0.0
      %v723 = vmax.f32 %v718, 0.0
      %v724 = vpack.c.bf16 %v722, %v720
      %v725 = vpack.c.bf16 %v723, %v721
      %v726 = vld [vmem:[%s4] sm:$0xff]
      %v727 = vld [vmem:[%s4 + $0x8] sm:$0xff]
      %v728 = vld [vmem:[%s4 + $0x10] sm:$0xff]
      %v729 = vld [vmem:[%s4 + $0x18] sm:$0xff]
      %v730 = vld [vmem:[%s4 + $0x20] sm:$0xff]
      %v731 = vld [vmem:[%s4 + $0x28] sm:$0xff]
      %v732 = vld [vmem:[%s4 + $0x30] sm:$0xff]
      %v733 = vld [vmem:[%s4 + $0x38] sm:$0xff]
      %v734 = vld [vmem:[%s4 + $0x40] sm:$0xff]
      %v735 = vld [vmem:[%s4 + $0x48] sm:$0xff]
      %v736 = vld [vmem:[%s4 + $0x50] sm:$0xff]
      %v737 = vld [vmem:[%s4 + $0x58] sm:$0xff]
      %v738 = vld [vmem:[%s4 + $0x60] sm:$0xff]
      %v739 = vld [vmem:[%s4 + $0x68] sm:$0xff]
      %v740 = vld [vmem:[%s4 + $0x70] sm:$0xff]
      %v741 = vld [vmem:[%s4 + $0x78] sm:$0xff]
      %v742 = vld [vmem:[%s4 + $0x80] sm:$0xff]
      %v743 = vld [vmem:[%s4 + $0x88] sm:$0xff]
      %v744 = vld [vmem:[%s4 + $0x90] sm:$0xff]
      %v745 = vld [vmem:[%s4 + $0x98] sm:$0xff]
      %v746 = vld [vmem:[%s4 + $0xa0] sm:$0xff]
      %v747 = vld [vmem:[%s4 + $0xa8] sm:$0xff]
      %v748 = vld [vmem:[%s4 + $0xb0] sm:$0xff]
      %v749 = vld [vmem:[%s4 + $0xb8] sm:$0xff]
      %v750 = vld [vmem:[%s4 + $0xc0] sm:$0xff]
      %v751 = vld [vmem:[%s4 + $0xc8] sm:$0xff]
      %v752 = vld [vmem:[%s4 + $0xd0] sm:$0xff]
      %v753 = vld [vmem:[%s4 + $0xd8] sm:$0xff]
      %v754 = vld [vmem:[%s4 + $0xe0] sm:$0xff]
      %v755 = vld [vmem:[%s4 + $0xe8] sm:$0xff]
      %v756 = vld [vmem:[%s4 + $0xf0] sm:$0xff]
      %v757 = vld [vmem:[%s4 + $0xf8] sm:$0xff]
      %v758 = vld [vmem:[%s5] sm:$0x3]
      %v760 = vlaneseq
      %v761 = vshrl.u32 %v760, 7
      %v762 = vsub.s32 0, %v761
      %v763 = vrot.slane %v758, %v762
      %v764 = vlaneseq
      %v765 = vshrl.u32 %v764, 7
      %v766 = vsub.s32 1, %v765
      %v767 = vrot.slane %v758, %v766
      %v802 = vunpack.c.l.b16 %v726
      %v803 = vunpack.c.h.b16 %v726
      %v804 = vunpack.c.l.b16 %v727
      %v805 = vunpack.c.h.b16 %v727
      %v806 = vunpack.c.l.b16 %v728
      %v807 = vunpack.c.h.b16 %v728
      %v808 = vunpack.c.l.b16 %v729
      %v809 = vunpack.c.h.b16 %v729
      %v810 = vunpack.c.l.b16 %v730
      %v811 = vunpack.c.h.b16 %v730
      %v812 = vunpack.c.l.b16 %v731
      %v813 = vunpack.c.h.b16 %v731
      %v814 = vunpack.c.l.b16 %v732
      %v815 = vunpack.c.h.b16 %v732
      %v816 = vunpack.c.l.b16 %v733
      %v817 = vunpack.c.h.b16 %v733
      %v818 = vunpack.c.l.b16 %v734
      %v819 = vunpack.c.h.b16 %v734
      %v820 = vunpack.c.l.b16 %v735
      %v821 = vunpack.c.h.b16 %v735
      %v822 = vunpack.c.l.b16 %v736
      %v823 = vunpack.c.h.b16 %v736
      %v824 = vunpack.c.l.b16 %v737
      %v825 = vunpack.c.h.b16 %v737
      %v826 = vunpack.c.l.b16 %v738
      %v827 = vunpack.c.h.b16 %v738
      %v828 = vunpack.c.l.b16 %v739
      %v829 = vunpack.c.h.b16 %v739
      %v830 = vunpack.c.l.b16 %v740
      %v831 = vunpack.c.h.b16 %v740
      %v832 = vunpack.c.l.b16 %v741
      %v833 = vunpack.c.h.b16 %v741
      %v834 = vunpack.c.l.b16 %v742
      %v835 = vunpack.c.h.b16 %v742
      %v836 = vunpack.c.l.b16 %v743
      %v837 = vunpack.c.h.b16 %v743
      %v838 = vunpack.c.l.b16 %v744
      %v839 = vunpack.c.h.b16 %v744
      %v840 = vunpack.c.l.b16 %v745
      %v841 = vunpack.c.h.b16 %v745
      %v842 = vunpack.c.l.b16 %v746
      %v843 = vunpack.c.h.b16 %v746
      %v844 = vunpack.c.l.b16 %v747
      %v845 = vunpack.c.h.b16 %v747
      %v846 = vunpack.c.l.b16 %v748
      %v847 = vunpack.c.h.b16 %v748
      %v848 = vunpack.c.l.b16 %v749
      %v849 = vunpack.c.h.b16 %v749
      %v850 = vunpack.c.l.b16 %v750
      %v851 = vunpack.c.h.b16 %v750
      %v852 = vunpack.c.l.b16 %v751
      %v853 = vunpack.c.h.b16 %v751
      %v854 = vunpack.c.l.b16 %v752
      %v855 = vunpack.c.h.b16 %v752
      %v856 = vunpack.c.l.b16 %v753
      %v857 = vunpack.c.h.b16 %v753
      %v858 = vunpack.c.l.b16 %v754
      %v859 = vunpack.c.h.b16 %v754
      %v860 = vunpack.c.l.b16 %v755
      %v861 = vunpack.c.h.b16 %v755
      %v862 = vunpack.c.l.b16 %v756
      %v863 = vunpack.c.h.b16 %v756
      %v864 = vunpack.c.l.b16 %v757
      %v865 = vunpack.c.h.b16 %v757
      %v866 = vpack.c.b16 %v804, %v802
      %v867 = vpack.c.b16 %v805, %v803
      %v868 = vpack.c.b16 %v808, %v806
      %v869 = vpack.c.b16 %v809, %v807
      %v870 = vpack.c.b16 %v812, %v810
      %v871 = vpack.c.b16 %v813, %v811
      %v872 = vpack.c.b16 %v816, %v814
      %v873 = vpack.c.b16 %v817, %v815
      %v874 = vpack.c.b16 %v820, %v818
      %v875 = vpack.c.b16 %v821, %v819
      %v876 = vpack.c.b16 %v824, %v822
      %v877 = vpack.c.b16 %v825, %v823
      %v878 = vpack.c.b16 %v828, %v826
      %v879 = vpack.c.b16 %v829, %v827
      %v880 = vpack.c.b16 %v832, %v830
      %v881 = vpack.c.b16 %v833, %v831
      %v882 = vpack.c.b16 %v836, %v834
      %v883 = vpack.c.b16 %v837, %v835
      %v884 = vpack.c.b16 %v840, %v838
      %v885 = vpack.c.b16 %v841, %v839
      %v886 = vpack.c.b16 %v844, %v842
      %v887 = vpack.c.b16 %v845, %v843
      %v888 = vpack.c.b16 %v848, %v846
      %v889 = vpack.c.b16 %v849, %v847
      %v890 = vpack.c.b16 %v852, %v850
      %v891 = vpack.c.b16 %v853, %v851
      %v892 = vpack.c.b16 %v856, %v854
      %v893 = vpack.c.b16 %v857, %v855
      %v894 = vpack.c.b16 %v860, %v858
      %v895 = vpack.c.b16 %v861, %v859
      %v896 = vpack.c.b16 %v864, %v862
      %v897 = vpack.c.b16 %v865, %v863
      %930 = vmatprep.subr.bf16.mxu0 %v867
      %931 = vmatpush1.bf16.msra.mxu0 %v866
      %932 = vmatprep.subr.bf16.mxu0 %v869
      %933 = vmatpush1.bf16.msra.mxu0 %v868
      %934 = vmatprep.subr.bf16.mxu0 %v871
      %935 = vmatpush1.bf16.msra.mxu0 %v870
      %936 = vmatprep.subr.bf16.mxu0 %v873
      %937 = vmatpush1.bf16.msra.mxu0 %v872
      %938 = vmatprep.subr.bf16.mxu0 %v875
      %939 = vmatpush1.bf16.msra.mxu0 %v874
      %940 = vmatprep.subr.bf16.mxu0 %v877
      %941 = vmatpush1.bf16.msra.mxu0 %v876
      %942 = vmatprep.subr.bf16.mxu0 %v879
      %943 = vmatpush1.bf16.msra.mxu0 %v878
      %944 = vmatprep.subr.bf16.mxu0 %v881
      %945 = vmatpush1.bf16.msra.mxu0 %v880
      %946 = vmatprep.subr.bf16.mxu0 %v883
      %947 = vmatpush1.bf16.msra.mxu0 %v882
      %948 = vmatprep.subr.bf16.mxu0 %v885
      %949 = vmatpush1.bf16.msra.mxu0 %v884
      %950 = vmatprep.subr.bf16.mxu0 %v887
      %951 = vmatpush1.bf16.msra.mxu0 %v886
      %952 = vmatprep.subr.bf16.mxu0 %v889
      %953 = vmatpush1.bf16.msra.mxu0 %v888
      %954 = vmatprep.subr.bf16.mxu0 %v891
      %955 = vmatpush1.bf16.msra.mxu0 %v890
      %956 = vmatprep.subr.bf16.mxu0 %v893
      %957 = vmatpush1.bf16.msra.mxu0 %v892
      %958 = vmatprep.subr.bf16.mxu0 %v895
      %959 = vmatpush1.bf16.msra.mxu0 %v894
      %960 = vmatprep.subr.bf16.mxu0 %v897
      %961 = vmatpush1.bf16.msra.mxu0 %v896
      %962 = vmatprep.mubr.bf16.mxu0 %v725
      %963 = vmatmul.mubr.bf16.gmra.mrb[0].mxu0 %v724
      %v964 = vpop.f32.mrb[0].mxu0
      %v965 = vadd.f32 %v763, %v964
      %v966 = vpop.f32.mrb[0].mxu0
      %v967 = vadd.f32 %v767, %v966
      %v968 = vpop.f32.mrb[0].mxu0
      %v969 = vadd.f32 %v763, %v968
      %v970 = vpop.f32.mrb[0].mxu0
      %v971 = vadd.f32 %v767, %v970
      %972 = vdwg.mxu0
      %v973 = vmul.f32 %v965, %v461
      %v974 = vmul.f32 %v967, %v462
      %v975 = vmul.f32 %v969, %v463
      %v976 = vmul.f32 %v971, %v464
      %v977 = vadd.f32 %v973, %v974
      %978 = vadd.xlane.f32.xlu0 %v977
      %v979 = vpop.xlane.xlu0 %978
      %v980 = vadd.f32 %v975, %v976
      %981 = vadd.xlane.f32.xlu0 %v980
      %v982 = vpop.xlane.xlu0 %981
      %v983 = vtanh.pop %v979
      %v984 = vtanh.pop %v982
      %v985 = vadd.f32 %v983, 1.0
      %v986 = vadd.f32 %v984, 1.0
      %v987 = vld [vmem:[%s6] sm:$0xff]
      %v988 = vld [vmem:[%s6 + $0x8] sm:$0xff]
      %v989 = vld [vmem:[%s6 + $0x10] sm:$0xff]
      %v990 = vld [vmem:[%s6 + $0x18] sm:$0xff]
      %v991 = vld [vmem:[%s6 + $0x20] sm:$0xff]
      %v992 = vld [vmem:[%s6 + $0x28] sm:$0xff]
      %v993 = vld [vmem:[%s6 + $0x30] sm:$0xff]
      %v994 = vld [vmem:[%s6 + $0x38] sm:$0xff]
      %v995 = vld [vmem:[%s6 + $0x40] sm:$0xff]
      %v996 = vld [vmem:[%s6 + $0x48] sm:$0xff]
      %v997 = vld [vmem:[%s6 + $0x50] sm:$0xff]
      %v998 = vld [vmem:[%s6 + $0x58] sm:$0xff]
      %v999 = vld [vmem:[%s6 + $0x60] sm:$0xff]
      %v1000 = vld [vmem:[%s6 + $0x68] sm:$0xff]
      %v1001 = vld [vmem:[%s6 + $0x70] sm:$0xff]
      %v1002 = vld [vmem:[%s6 + $0x78] sm:$0xff]
      %v1003 = vld [vmem:[%s6 + $0x80] sm:$0xff]
      %v1004 = vld [vmem:[%s6 + $0x88] sm:$0xff]
      %v1005 = vld [vmem:[%s6 + $0x90] sm:$0xff]
      %v1006 = vld [vmem:[%s6 + $0x98] sm:$0xff]
      %v1007 = vld [vmem:[%s6 + $0xa0] sm:$0xff]
      %v1008 = vld [vmem:[%s6 + $0xa8] sm:$0xff]
      %v1009 = vld [vmem:[%s6 + $0xb0] sm:$0xff]
      %v1010 = vld [vmem:[%s6 + $0xb8] sm:$0xff]
      %v1011 = vld [vmem:[%s6 + $0xc0] sm:$0xff]
      %v1012 = vld [vmem:[%s6 + $0xc8] sm:$0xff]
      %v1013 = vld [vmem:[%s6 + $0xd0] sm:$0xff]
      %v1014 = vld [vmem:[%s6 + $0xd8] sm:$0xff]
      %v1015 = vld [vmem:[%s6 + $0xe0] sm:$0xff]
      %v1016 = vld [vmem:[%s6 + $0xe8] sm:$0xff]
      %v1017 = vld [vmem:[%s6 + $0xf0] sm:$0xff]
      %v1018 = vld [vmem:[%s6 + $0xf8] sm:$0xff]
      %v1019 = vld [vmem:[%s7] sm:$0x3]
      %v1021 = vlaneseq
      %v1022 = vshrl.u32 %v1021, 7
      %v1023 = vsub.s32 0, %v1022
      %v1024 = vrot.slane %v1019, %v1023
      %v1025 = vlaneseq
      %v1026 = vshrl.u32 %v1025, 7
      %v1027 = vsub.s32 1, %v1026
      %v1028 = vrot.slane %v1019, %v1027
      %v1063 = vunpack.c.l.b16 %v987
      %v1064 = vunpack.c.h.b16 %v987
      %v1065 = vunpack.c.l.b16 %v988
      %v1066 = vunpack.c.h.b16 %v988
      %v1067 = vunpack.c.l.b16 %v989
      %v1068 = vunpack.c.h.b16 %v989
      %v1069 = vunpack.c.l.b16 %v990
      %v1070 = vunpack.c.h.b16 %v990
      %v1071 = vunpack.c.l.b16 %v991
      %v1072 = vunpack.c.h.b16 %v991
      %v1073 = vunpack.c.l.b16 %v992
      %v1074 = vunpack.c.h.b16 %v992
      %v1075 = vunpack.c.l.b16 %v993
      %v1076 = vunpack.c.h.b16 %v993
      %v1077 = vunpack.c.l.b16 %v994
      %v1078 = vunpack.c.h.b16 %v994
      %v1079 = vunpack.c.l.b16 %v995
      %v1080 = vunpack.c.h.b16 %v995
      %v1081 = vunpack.c.l.b16 %v996
      %v1082 = vunpack.c.h.b16 %v996
      %v1083 = vunpack.c.l.b16 %v997
      %v1084 = vunpack.c.h.b16 %v997
      %v1085 = vunpack.c.l.b16 %v998
      %v1086 = vunpack.c.h.b16 %v998
      %v1087 = vunpack.c.l.b16 %v999
      %v1088 = vunpack.c.h.b16 %v999
      %v1089 = vunpack.c.l.b16 %v1000
      %v1090 = vunpack.c.h.b16 %v1000
      %v1091 = vunpack.c.l.b16 %v1001
      %v1092 = vunpack.c.h.b16 %v1001
      %v1093 = vunpack.c.l.b16 %v1002
      %v1094 = vunpack.c.h.b16 %v1002
      %v1095 = vunpack.c.l.b16 %v1003
      %v1096 = vunpack.c.h.b16 %v1003
      %v1097 = vunpack.c.l.b16 %v1004
      %v1098 = vunpack.c.h.b16 %v1004
      %v1099 = vunpack.c.l.b16 %v1005
      %v1100 = vunpack.c.h.b16 %v1005
      %v1101 = vunpack.c.l.b16 %v1006
      %v1102 = vunpack.c.h.b16 %v1006
      %v1103 = vunpack.c.l.b16 %v1007
      %v1104 = vunpack.c.h.b16 %v1007
      %v1105 = vunpack.c.l.b16 %v1008
      %v1106 = vunpack.c.h.b16 %v1008
      %v1107 = vunpack.c.l.b16 %v1009
      %v1108 = vunpack.c.h.b16 %v1009
      %v1109 = vunpack.c.l.b16 %v1010
      %v1110 = vunpack.c.h.b16 %v1010
      %v1111 = vunpack.c.l.b16 %v1011
      %v1112 = vunpack.c.h.b16 %v1011
      %v1113 = vunpack.c.l.b16 %v1012
      %v1114 = vunpack.c.h.b16 %v1012
      %v1115 = vunpack.c.l.b16 %v1013
      %v1116 = vunpack.c.h.b16 %v1013
      %v1117 = vunpack.c.l.b16 %v1014
      %v1118 = vunpack.c.h.b16 %v1014
      %v1119 = vunpack.c.l.b16 %v1015
      %v1120 = vunpack.c.h.b16 %v1015
      %v1121 = vunpack.c.l.b16 %v1016
      %v1122 = vunpack.c.h.b16 %v1016
      %v1123 = vunpack.c.l.b16 %v1017
      %v1124 = vunpack.c.h.b16 %v1017
      %v1125 = vunpack.c.l.b16 %v1018
      %v1126 = vunpack.c.h.b16 %v1018
      %v1127 = vpack.c.b16 %v1065, %v1063
      %v1128 = vpack.c.b16 %v1066, %v1064
      %v1129 = vpack.c.b16 %v1069, %v1067
      %v1130 = vpack.c.b16 %v1070, %v1068
      %v1131 = vpack.c.b16 %v1073, %v1071
      %v1132 = vpack.c.b16 %v1074, %v1072
      %v1133 = vpack.c.b16 %v1077, %v1075
      %v1134 = vpack.c.b16 %v1078, %v1076
      %v1135 = vpack.c.b16 %v1081, %v1079
      %v1136 = vpack.c.b16 %v1082, %v1080
      %v1137 = vpack.c.b16 %v1085, %v1083
      %v1138 = vpack.c.b16 %v1086, %v1084
      %v1139 = vpack.c.b16 %v1089, %v1087
      %v1140 = vpack.c.b16 %v1090, %v1088
      %v1141 = vpack.c.b16 %v1093, %v1091
      %v1142 = vpack.c.b16 %v1094, %v1092
      %v1143 = vpack.c.b16 %v1097, %v1095
      %v1144 = vpack.c.b16 %v1098, %v1096
      %v1145 = vpack.c.b16 %v1101, %v1099
      %v1146 = vpack.c.b16 %v1102, %v1100
      %v1147 = vpack.c.b16 %v1105, %v1103
      %v1148 = vpack.c.b16 %v1106, %v1104
      %v1149 = vpack.c.b16 %v1109, %v1107
      %v1150 = vpack.c.b16 %v1110, %v1108
      %v1151 = vpack.c.b16 %v1113, %v1111
      %v1152 = vpack.c.b16 %v1114, %v1112
      %v1153 = vpack.c.b16 %v1117, %v1115
      %v1154 = vpack.c.b16 %v1118, %v1116
      %v1155 = vpack.c.b16 %v1121, %v1119
      %v1156 = vpack.c.b16 %v1122, %v1120
      %v1157 = vpack.c.b16 %v1125, %v1123
      %v1158 = vpack.c.b16 %v1126, %v1124
      %1191 = vmatprep.subr.bf16.mxu0 %v1128
      %1192 = vmatpush1.bf16.msra.mxu0 %v1127
      %1193 = vmatprep.subr.bf16.mxu0 %v1130
      %1194 = vmatpush1.bf16.msra.mxu0 %v1129
      %1195 = vmatprep.subr.bf16.mxu0 %v1132
      %1196 = vmatpush1.bf16.msra.mxu0 %v1131
      %1197 = vmatprep.subr.bf16.mxu0 %v1134
      %1198 = vmatpush1.bf16.msra.mxu0 %v1133
      %1199 = vmatprep.subr.bf16.mxu0 %v1136
      %1200 = vmatpush1.bf16.msra.mxu0 %v1135
      %1201 = vmatprep.subr.bf16.mxu0 %v1138
      %1202 = vmatpush1.bf16.msra.mxu0 %v1137
      %1203 = vmatprep.subr.bf16.mxu0 %v1140
      %1204 = vmatpush1.bf16.msra.mxu0 %v1139
      %1205 = vmatprep.subr.bf16.mxu0 %v1142
      %1206 = vmatpush1.bf16.msra.mxu0 %v1141
      %1207 = vmatprep.subr.bf16.mxu0 %v1144
      %1208 = vmatpush1.bf16.msra.mxu0 %v1143
      %1209 = vmatprep.subr.bf16.mxu0 %v1146
      %1210 = vmatpush1.bf16.msra.mxu0 %v1145
      %1211 = vmatprep.subr.bf16.mxu0 %v1148
      %1212 = vmatpush1.bf16.msra.mxu0 %v1147
      %1213 = vmatprep.subr.bf16.mxu0 %v1150
      %1214 = vmatpush1.bf16.msra.mxu0 %v1149
      %1215 = vmatprep.subr.bf16.mxu0 %v1152
      %1216 = vmatpush1.bf16.msra.mxu0 %v1151
      %1217 = vmatprep.subr.bf16.mxu0 %v1154
      %1218 = vmatpush1.bf16.msra.mxu0 %v1153
      %1219 = vmatprep.subr.bf16.mxu0 %v1156
      %1220 = vmatpush1.bf16.msra.mxu0 %v1155
      %1221 = vmatprep.subr.bf16.mxu0 %v1158
      %1222 = vmatpush1.bf16.msra.mxu0 %v1157
      %1223 = vmatprep.mubr.bf16.mxu0 %v470
      %1224 = vmatmul.mubr.bf16.gmra.mrb[0].mxu0 %v469
      %v1225 = vpop.f32.mrb[0].mxu0
      %v1226 = vadd.f32 %v1024, %v1225
      %v1227 = vpop.f32.mrb[0].mxu0
      %v1228 = vadd.f32 %v1028, %v1227
      %v1229 = vpop.f32.mrb[0].mxu0
      %v1230 = vadd.f32 %v1024, %v1229
      %v1231 = vpop.f32.mrb[0].mxu0
      %v1232 = vadd.f32 %v1028, %v1231
      %1233 = vdwg.mxu0
      %v1234 = vmax.f32 %v1226, 0.0
      %v1235 = vmax.f32 %v1228, 0.0
      %v1236 = vmax.f32 %v1230, 0.0
      %v1237 = vmax.f32 %v1232, 0.0
      %v1238 = vpack.c.bf16 %v1236, %v1234
      %v1239 = vpack.c.bf16 %v1237, %v1235
      %v1240 = vld [vmem:[%s8] sm:$0xff]
      %v1241 = vld [vmem:[%s8 + $0x8] sm:$0xff]
      %v1242 = vld [vmem:[%s8 + $0x10] sm:$0xff]
      %v1243 = vld [vmem:[%s8 + $0x18] sm:$0xff]
      %v1244 = vld [vmem:[%s8 + $0x20] sm:$0xff]
      %v1245 = vld [vmem:[%s8 + $0x28] sm:$0xff]
      %v1246 = vld [vmem:[%s8 + $0x30] sm:$0xff]
      %v1247 = vld [vmem:[%s8 + $0x38] sm:$0xff]
      %v1248 = vld [vmem:[%s8 + $0x40] sm:$0xff]
      %v1249 = vld [vmem:[%s8 + $0x48] sm:$0xff]
      %v1250 = vld [vmem:[%s8 + $0x50] sm:$0xff]
      %v1251 = vld [vmem:[%s8 + $0x58] sm:$0xff]
      %v1252 = vld [vmem:[%s8 + $0x60] sm:$0xff]
      %v1253 = vld [vmem:[%s8 + $0x68] sm:$0xff]
      %v1254 = vld [vmem:[%s8 + $0x70] sm:$0xff]
      %v1255 = vld [vmem:[%s8 + $0x78] sm:$0xff]
      %v1256 = vld [vmem:[%s8 + $0x80] sm:$0xff]
      %v1257 = vld [vmem:[%s8 + $0x88] sm:$0xff]
      %v1258 = vld [vmem:[%s8 + $0x90] sm:$0xff]
      %v1259 = vld [vmem:[%s8 + $0x98] sm:$0xff]
      %v1260 = vld [vmem:[%s8 + $0xa0] sm:$0xff]
      %v1261 = vld [vmem:[%s8 + $0xa8] sm:$0xff]
      %v1262 = vld [vmem:[%s8 + $0xb0] sm:$0xff]
      %v1263 = vld [vmem:[%s8 + $0xb8] sm:$0xff]
      %v1264 = vld [vmem:[%s8 + $0xc0] sm:$0xff]
      %v1265 = vld [vmem:[%s8 + $0xc8] sm:$0xff]
      %v1266 = vld [vmem:[%s8 + $0xd0] sm:$0xff]
      %v1267 = vld [vmem:[%s8 + $0xd8] sm:$0xff]
      %v1268 = vld [vmem:[%s8 + $0xe0] sm:$0xff]
      %v1269 = vld [vmem:[%s8 + $0xe8] sm:$0xff]
      %v1270 = vld [vmem:[%s8 + $0xf0] sm:$0xff]
      %v1271 = vld [vmem:[%s8 + $0xf8] sm:$0xff]
      %v1272 = vld [vmem:[%s9] sm:$0x3]
      %v1274 = vlaneseq
      %v1275 = vshrl.u32 %v1274, 7
      %v1276 = vsub.s32 0, %v1275
      %v1277 = vrot.slane %v1272, %v1276
      %v1278 = vlaneseq
      %v1279 = vshrl.u32 %v1278, 7
      %v1280 = vsub.s32 1, %v1279
      %v1281 = vrot.slane %v1272, %v1280
      %v1316 = vunpack.c.l.b16 %v1240
      %v1317 = vunpack.c.h.b16 %v1240
      %v1318 = vunpack.c.l.b16 %v1241
      %v1319 = vunpack.c.h.b16 %v1241
      %v1320 = vunpack.c.l.b16 %v1242
      %v1321 = vunpack.c.h.b16 %v1242
      %v1322 = vunpack.c.l.b16 %v1243
      %v1323 = vunpack.c.h.b16 %v1243
      %v1324 = vunpack.c.l.b16 %v1244
      %v1325 = vunpack.c.h.b16 %v1244
      %v1326 = vunpack.c.l.b16 %v1245
      %v1327 = vunpack.c.h.b16 %v1245
      %v1328 = vunpack.c.l.b16 %v1246
      %v1329 = vunpack.c.h.b16 %v1246
      %v1330 = vunpack.c.l.b16 %v1247
      %v1331 = vunpack.c.h.b16 %v1247
      %v1332 = vunpack.c.l.b16 %v1248
      %v1333 = vunpack.c.h.b16 %v1248
      %v1334 = vunpack.c.l.b16 %v1249
      %v1335 = vunpack.c.h.b16 %v1249
      %v1336 = vunpack.c.l.b16 %v1250
      %v1337 = vunpack.c.h.b16 %v1250
      %v1338 = vunpack.c.l.b16 %v1251
      %v1339 = vunpack.c.h.b16 %v1251
      %v1340 = vunpack.c.l.b16 %v1252
      %v1341 = vunpack.c.h.b16 %v1252
      %v1342 = vunpack.c.l.b16 %v1253
      %v1343 = vunpack.c.h.b16 %v1253
      %v1344 = vunpack.c.l.b16 %v1254
      %v1345 = vunpack.c.h.b16 %v1254
      %v1346 = vunpack.c.l.b16 %v1255
      %v1347 = vunpack.c.h.b16 %v1255
      %v1348 = vunpack.c.l.b16 %v1256
      %v1349 = vunpack.c.h.b16 %v1256
      %v1350 = vunpack.c.l.b16 %v1257
      %v1351 = vunpack.c.h.b16 %v1257
      %v1352 = vunpack.c.l.b16 %v1258
      %v1353 = vunpack.c.h.b16 %v1258
      %v1354 = vunpack.c.l.b16 %v1259
      %v1355 = vunpack.c.h.b16 %v1259
      %v1356 = vunpack.c.l.b16 %v1260
      %v1357 = vunpack.c.h.b16 %v1260
      %v1358 = vunpack.c.l.b16 %v1261
      %v1359 = vunpack.c.h.b16 %v1261
      %v1360 = vunpack.c.l.b16 %v1262
      %v1361 = vunpack.c.h.b16 %v1262
      %v1362 = vunpack.c.l.b16 %v1263
      %v1363 = vunpack.c.h.b16 %v1263
      %v1364 = vunpack.c.l.b16 %v1264
      %v1365 = vunpack.c.h.b16 %v1264
      %v1366 = vunpack.c.l.b16 %v1265
      %v1367 = vunpack.c.h.b16 %v1265
      %v1368 = vunpack.c.l.b16 %v1266
      %v1369 = vunpack.c.h.b16 %v1266
      %v1370 = vunpack.c.l.b16 %v1267
      %v1371 = vunpack.c.h.b16 %v1267
      %v1372 = vunpack.c.l.b16 %v1268
      %v1373 = vunpack.c.h.b16 %v1268
      %v1374 = vunpack.c.l.b16 %v1269
      %v1375 = vunpack.c.h.b16 %v1269
      %v1376 = vunpack.c.l.b16 %v1270
      %v1377 = vunpack.c.h.b16 %v1270
      %v1378 = vunpack.c.l.b16 %v1271
      %v1379 = vunpack.c.h.b16 %v1271
      %v1380 = vpack.c.b16 %v1318, %v1316
      %v1381 = vpack.c.b16 %v1319, %v1317
      %v1382 = vpack.c.b16 %v1322, %v1320
      %v1383 = vpack.c.b16 %v1323, %v1321
      %v1384 = vpack.c.b16 %v1326, %v1324
      %v1385 = vpack.c.b16 %v1327, %v1325
      %v1386 = vpack.c.b16 %v1330, %v1328
      %v1387 = vpack.c.b16 %v1331, %v1329
      %v1388 = vpack.c.b16 %v1334, %v1332
      %v1389 = vpack.c.b16 %v1335, %v1333
      %v1390 = vpack.c.b16 %v1338, %v1336
      %v1391 = vpack.c.b16 %v1339, %v1337
      %v1392 = vpack.c.b16 %v1342, %v1340
      %v1393 = vpack.c.b16 %v1343, %v1341
      %v1394 = vpack.c.b16 %v1346, %v1344
      %v1395 = vpack.c.b16 %v1347, %v1345
      %v1396 = vpack.c.b16 %v1350, %v1348
      %v1397 = vpack.c.b16 %v1351, %v1349
      %v1398 = vpack.c.b16 %v1354, %v1352
      %v1399 = vpack.c.b16 %v1355, %v1353
      %v1400 = vpack.c.b16 %v1358, %v1356
      %v1401 = vpack.c.b16 %v1359, %v1357
      %v1402 = vpack.c.b16 %v1362, %v1360
      %v1403 = vpack.c.b16 %v1363, %v1361
      %v1404 = vpack.c.b16 %v1366, %v1364
      %v1405 = vpack.c.b16 %v1367, %v1365
      %v1406 = vpack.c.b16 %v1370, %v1368
      %v1407 = vpack.c.b16 %v1371, %v1369
      %v1408 = vpack.c.b16 %v1374, %v1372
      %v1409 = vpack.c.b16 %v1375, %v1373
      %v1410 = vpack.c.b16 %v1378, %v1376
      %v1411 = vpack.c.b16 %v1379, %v1377
      %1444 = vmatprep.subr.bf16.mxu0 %v1381
      %1445 = vmatpush1.bf16.msra.mxu0 %v1380
      %1446 = vmatprep.subr.bf16.mxu0 %v1383
      %1447 = vmatpush1.bf16.msra.mxu0 %v1382
      %1448 = vmatprep.subr.bf16.mxu0 %v1385
      %1449 = vmatpush1.bf16.msra.mxu0 %v1384
      %1450 = vmatprep.subr.bf16.mxu0 %v1387
      %1451 = vmatpush1.bf16.msra.mxu0 %v1386
      %1452 = vmatprep.subr.bf16.mxu0 %v1389
      %1453 = vmatpush1.bf16.msra.mxu0 %v1388
      %1454 = vmatprep.subr.bf16.mxu0 %v1391
      %1455 = vmatpush1.bf16.msra.mxu0 %v1390
      %1456 = vmatprep.subr.bf16.mxu0 %v1393
      %1457 = vmatpush1.bf16.msra.mxu0 %v1392
      %1458 = vmatprep.subr.bf16.mxu0 %v1395
      %1459 = vmatpush1.bf16.msra.mxu0 %v1394
      %1460 = vmatprep.subr.bf16.mxu0 %v1397
      %1461 = vmatpush1.bf16.msra.mxu0 %v1396
      %1462 = vmatprep.subr.bf16.mxu0 %v1399
      %1463 = vmatpush1.bf16.msra.mxu0 %v1398
      %1464 = vmatprep.subr.bf16.mxu0 %v1401
      %1465 = vmatpush1.bf16.msra.mxu0 %v1400
      %1466 = vmatprep.subr.bf16.mxu0 %v1403
      %1467 = vmatpush1.bf16.msra.mxu0 %v1402
      %1468 = vmatprep.subr.bf16.mxu0 %v1405
      %1469 = vmatpush1.bf16.msra.mxu0 %v1404
      %1470 = vmatprep.subr.bf16.mxu0 %v1407
      %1471 = vmatpush1.bf16.msra.mxu0 %v1406
      %1472 = vmatprep.subr.bf16.mxu0 %v1409
      %1473 = vmatpush1.bf16.msra.mxu0 %v1408
      %1474 = vmatprep.subr.bf16.mxu0 %v1411
      %1475 = vmatpush1.bf16.msra.mxu0 %v1410
      %1476 = vmatprep.mubr.bf16.mxu0 %v1239
      %1477 = vmatmul.mubr.bf16.gmra.mrb[0].mxu0 %v1238
      %v1478 = vpop.f32.mrb[0].mxu0
      %v1479 = vadd.f32 %v1277, %v1478
      %v1480 = vpop.f32.mrb[0].mxu0
      %v1481 = vadd.f32 %v1281, %v1480
      %v1482 = vpop.f32.mrb[0].mxu0
      %v1483 = vadd.f32 %v1277, %v1482
      %v1484 = vpop.f32.mrb[0].mxu0
      %v1485 = vadd.f32 %v1281, %v1484
      %1486 = vdwg.mxu0
      %v1487 = vmul.f32 %v1479, %v465
      %v1488 = vmul.f32 %v1481, %v466
      %v1489 = vmul.f32 %v1483, %v467
      %v1490 = vmul.f32 %v1485, %v468
      %v1491 = vadd.f32 %v1487, %v1488
      %1492 = vadd.xlane.f32.xlu0 %v1491
      %v1493 = vpop.xlane.xlu0 %1492
      %v1494 = vadd.f32 %v1489, %v1490
      %1495 = vadd.xlane.f32.xlu0 %v1494
      %v1496 = vpop.xlane.xlu0 %1495
      %v1497 = vtanh.pop %v1493
      %v1498 = vtanh.pop %v1496
      %v1499 = vadd.f32 %v1497, 1.0
      %v1500 = vadd.f32 %v1498, 1.0
      %v1501 = vmul.f32 %v461, %v985
      %v1502 = vmul.f32 %v462, %v985
      %v1503 = vmul.f32 %v463, %v986
      %v1504 = vmul.f32 %v464, %v986
      %v1505 = vpack.c.bf16 %v1503, %v1501
      %v1506 = vpack.c.bf16 %v1504, %v1502
      %v1507 = vmul.f32 %v465, %v1499
      %v1508 = vmul.f32 %v466, %v1499
      %v1509 = vmul.f32 %v467, %v1500
      %v1510 = vmul.f32 %v468, %v1500
      %v1511 = vpack.c.bf16 %v1509, %v1507
      %v1512 = vpack.c.bf16 %v1510, %v1508
      %v1513 = vld [vmem:[%s10] sm:$0xff]
      %v1514 = vld [vmem:[%s10 + $0x8] sm:$0xff]
      %v1515 = vld [vmem:[%s10 + $0x10] sm:$0xff]
      %v1516 = vld [vmem:[%s10 + $0x18] sm:$0xff]
      %v1517 = vld [vmem:[%s10 + $0x20] sm:$0xff]
      %v1518 = vld [vmem:[%s10 + $0x28] sm:$0xff]
      %v1519 = vld [vmem:[%s10 + $0x30] sm:$0xff]
      %v1520 = vld [vmem:[%s10 + $0x38] sm:$0xff]
      %v1521 = vld [vmem:[%s10 + $0x40] sm:$0xff]
      %v1522 = vld [vmem:[%s10 + $0x48] sm:$0xff]
      %v1523 = vld [vmem:[%s10 + $0x50] sm:$0xff]
      %v1524 = vld [vmem:[%s10 + $0x58] sm:$0xff]
      %v1525 = vld [vmem:[%s10 + $0x60] sm:$0xff]
      %v1526 = vld [vmem:[%s10 + $0x68] sm:$0xff]
      %v1527 = vld [vmem:[%s10 + $0x70] sm:$0xff]
      %v1528 = vld [vmem:[%s10 + $0x78] sm:$0xff]
      %v1529 = vld [vmem:[%s10 + $0x80] sm:$0xff]
      %v1530 = vld [vmem:[%s10 + $0x88] sm:$0xff]
      %v1531 = vld [vmem:[%s10 + $0x90] sm:$0xff]
      %v1532 = vld [vmem:[%s10 + $0x98] sm:$0xff]
      %v1533 = vld [vmem:[%s10 + $0xa0] sm:$0xff]
      %v1534 = vld [vmem:[%s10 + $0xa8] sm:$0xff]
      %v1535 = vld [vmem:[%s10 + $0xb0] sm:$0xff]
      %v1536 = vld [vmem:[%s10 + $0xb8] sm:$0xff]
      %v1537 = vld [vmem:[%s10 + $0xc0] sm:$0xff]
      %v1538 = vld [vmem:[%s10 + $0xc8] sm:$0xff]
      %v1539 = vld [vmem:[%s10 + $0xd0] sm:$0xff]
      %v1540 = vld [vmem:[%s10 + $0xd8] sm:$0xff]
      %v1541 = vld [vmem:[%s10 + $0xe0] sm:$0xff]
      %v1542 = vld [vmem:[%s10 + $0xe8] sm:$0xff]
      %v1543 = vld [vmem:[%s10 + $0xf0] sm:$0xff]
      %v1544 = vld [vmem:[%s10 + $0xf8] sm:$0xff]
      %v1545 = vld [vmem:[%s11] sm:$0xff]
      %v1546 = vld [vmem:[%s11 + $0x8] sm:$0xff]
      %v1547 = vld [vmem:[%s11 + $0x10] sm:$0xff]
      %v1548 = vld [vmem:[%s11 + $0x18] sm:$0xff]
      %v1549 = vld [vmem:[%s11 + $0x20] sm:$0xff]
      %v1550 = vld [vmem:[%s11 + $0x28] sm:$0xff]
      %v1551 = vld [vmem:[%s11 + $0x30] sm:$0xff]
      %v1552 = vld [vmem:[%s11 + $0x38] sm:$0xff]
      %v1553 = vld [vmem:[%s11 + $0x40] sm:$0xff]
      %v1554 = vld [vmem:[%s11 + $0x48] sm:$0xff]
      %v1555 = vld [vmem:[%s11 + $0x50] sm:$0xff]
      %v1556 = vld [vmem:[%s11 + $0x58] sm:$0xff]
      %v1557 = vld [vmem:[%s11 + $0x60] sm:$0xff]
      %v1558 = vld [vmem:[%s11 + $0x68] sm:$0xff]
      %v1559 = vld [vmem:[%s11 + $0x70] sm:$0xff]
      %v1560 = vld [vmem:[%s11 + $0x78] sm:$0xff]
      %v1561 = vld [vmem:[%s11 + $0x80] sm:$0xff]
      %v1562 = vld [vmem:[%s11 + $0x88] sm:$0xff]
      %v1563 = vld [vmem:[%s11 + $0x90] sm:$0xff]
      %v1564 = vld [vmem:[%s11 + $0x98] sm:$0xff]
      %v1565 = vld [vmem:[%s11 + $0xa0] sm:$0xff]
      %v1566 = vld [vmem:[%s11 + $0xa8] sm:$0xff]
      %v1567 = vld [vmem:[%s11 + $0xb0] sm:$0xff]
      %v1568 = vld [vmem:[%s11 + $0xb8] sm:$0xff]
      %v1569 = vld [vmem:[%s11 + $0xc0] sm:$0xff]
      %v1570 = vld [vmem:[%s11 + $0xc8] sm:$0xff]
      %v1571 = vld [vmem:[%s11 + $0xd0] sm:$0xff]
      %v1572 = vld [vmem:[%s11 + $0xd8] sm:$0xff]
      %v1573 = vld [vmem:[%s11 + $0xe0] sm:$0xff]
      %v1574 = vld [vmem:[%s11 + $0xe8] sm:$0xff]
      %v1575 = vld [vmem:[%s11 + $0xf0] sm:$0xff]
      %v1576 = vld [vmem:[%s11 + $0xf8] sm:$0xff]
      %v1609 = vunpack.c.l.b16 %v1545
      %v1610 = vunpack.c.h.b16 %v1545
      %v1611 = vunpack.c.l.b16 %v1546
      %v1612 = vunpack.c.h.b16 %v1546
      %v1613 = vunpack.c.l.b16 %v1547
      %v1614 = vunpack.c.h.b16 %v1547
      %v1615 = vunpack.c.l.b16 %v1548
      %v1616 = vunpack.c.h.b16 %v1548
      %v1617 = vunpack.c.l.b16 %v1549
      %v1618 = vunpack.c.h.b16 %v1549
      %v1619 = vunpack.c.l.b16 %v1550
      %v1620 = vunpack.c.h.b16 %v1550
      %v1621 = vunpack.c.l.b16 %v1551
      %v1622 = vunpack.c.h.b16 %v1551
      %v1623 = vunpack.c.l.b16 %v1552
      %v1624 = vunpack.c.h.b16 %v1552
      %v1625 = vunpack.c.l.b16 %v1553
      %v1626 = vunpack.c.h.b16 %v1553
      %v1627 = vunpack.c.l.b16 %v1554
      %v1628 = vunpack.c.h.b16 %v1554
      %v1629 = vunpack.c.l.b16 %v1555
      %v1630 = vunpack.c.h.b16 %v1555
      %v1631 = vunpack.c.l.b16 %v1556
      %v1632 = vunpack.c.h.b16 %v1556
      %v1633 = vunpack.c.l.b16 %v1557
      %v1634 = vunpack.c.h.b16 %v1557
      %v1635 = vunpack.c.l.b16 %v1558
      %v1636 = vunpack.c.h.b16 %v1558
      %v1637 = vunpack.c.l.b16 %v1559
      %v1638 = vunpack.c.h.b16 %v1559
      %v1639 = vunpack.c.l.b16 %v1560
      %v1640 = vunpack.c.h.b16 %v1560
      %v1641 = vunpack.c.l.b16 %v1561
      %v1642 = vunpack.c.h.b16 %v1561
      %v1643 = vunpack.c.l.b16 %v1562
      %v1644 = vunpack.c.h.b16 %v1562
      %v1645 = vunpack.c.l.b16 %v1563
      %v1646 = vunpack.c.h.b16 %v1563
      %v1647 = vunpack.c.l.b16 %v1564
      %v1648 = vunpack.c.h.b16 %v1564
      %v1649 = vunpack.c.l.b16 %v1565
      %v1650 = vunpack.c.h.b16 %v1565
      %v1651 = vunpack.c.l.b16 %v1566
      %v1652 = vunpack.c.h.b16 %v1566
      %v1653 = vunpack.c.l.b16 %v1567
      %v1654 = vunpack.c.h.b16 %v1567
      %v1655 = vunpack.c.l.b16 %v1568
      %v1656 = vunpack.c.h.b16 %v1568
      %v1657 = vunpack.c.l.b16 %v1569
      %v1658 = vunpack.c.h.b16 %v1569
      %v1659 = vunpack.c.l.b16 %v1570
      %v1660 = vunpack.c.h.b16 %v1570
      %v1661 = vunpack.c.l.b16 %v1571
      %v1662 = vunpack.c.h.b16 %v1571
      %v1663 = vunpack.c.l.b16 %v1572
      %v1664 = vunpack.c.h.b16 %v1572
      %v1665 = vunpack.c.l.b16 %v1573
      %v1666 = vunpack.c.h.b16 %v1573
      %v1667 = vunpack.c.l.b16 %v1574
      %v1668 = vunpack.c.h.b16 %v1574
      %v1669 = vunpack.c.l.b16 %v1575
      %v1670 = vunpack.c.h.b16 %v1575
      %v1671 = vunpack.c.l.b16 %v1576
      %v1672 = vunpack.c.h.b16 %v1576
      %v1673 = vpack.c.b16 %v1611, %v1609
      %v1674 = vpack.c.b16 %v1612, %v1610
      %v1675 = vpack.c.b16 %v1615, %v1613
      %v1676 = vpack.c.b16 %v1616, %v1614
      %v1677 = vpack.c.b16 %v1619, %v1617
      %v1678 = vpack.c.b16 %v1620, %v1618
      %v1679 = vpack.c.b16 %v1623, %v1621
      %v1680 = vpack.c.b16 %v1624, %v1622
      %v1681 = vpack.c.b16 %v1627, %v1625
      %v1682 = vpack.c.b16 %v1628, %v1626
      %v1683 = vpack.c.b16 %v1631, %v1629
      %v1684 = vpack.c.b16 %v1632, %v1630
      %v1685 = vpack.c.b16 %v1635, %v1633
      %v1686 = vpack.c.b16 %v1636, %v1634
      %v1687 = vpack.c.b16 %v1639, %v1637
      %v1688 = vpack.c.b16 %v1640, %v1638
      %v1689 = vpack.c.b16 %v1643, %v1641
      %v1690 = vpack.c.b16 %v1644, %v1642
      %v1691 = vpack.c.b16 %v1647, %v1645
      %v1692 = vpack.c.b16 %v1648, %v1646
      %v1693 = vpack.c.b16 %v1651, %v1649
      %v1694 = vpack.c.b16 %v1652, %v1650
      %v1695 = vpack.c.b16 %v1655, %v1653
      %v1696 = vpack.c.b16 %v1656, %v1654
      %v1697 = vpack.c.b16 %v1659, %v1657
      %v1698 = vpack.c.b16 %v1660, %v1658
      %v1699 = vpack.c.b16 %v1663, %v1661
      %v1700 = vpack.c.b16 %v1664, %v1662
      %v1701 = vpack.c.b16 %v1667, %v1665
      %v1702 = vpack.c.b16 %v1668, %v1666
      %v1703 = vpack.c.b16 %v1671, %v1669
      %v1704 = vpack.c.b16 %v1672, %v1670
      %1737 = vmatprep.subr.bf16.mxu0 %v1674
      %1738 = vmatpush1.bf16.msra.mxu0 %v1673
      %1739 = vmatprep.subr.bf16.mxu0 %v1676
      %1740 = vmatpush1.bf16.msra.mxu0 %v1675
      %1741 = vmatprep.subr.bf16.mxu0 %v1678
      %1742 = vmatpush1.bf16.msra.mxu0 %v1677
      %1743 = vmatprep.subr.bf16.mxu0 %v1680
      %1744 = vmatpush1.bf16.msra.mxu0 %v1679
      %1745 = vmatprep.subr.bf16.mxu0 %v1682
      %1746 = vmatpush1.bf16.msra.mxu0 %v1681
      %1747 = vmatprep.subr.bf16.mxu0 %v1684
      %1748 = vmatpush1.bf16.msra.mxu0 %v1683
      %1749 = vmatprep.subr.bf16.mxu0 %v1686
      %1750 = vmatpush1.bf16.msra.mxu0 %v1685
      %1751 = vmatprep.subr.bf16.mxu0 %v1688
      %1752 = vmatpush1.bf16.msra.mxu0 %v1687
      %1753 = vmatprep.subr.bf16.mxu0 %v1690
      %1754 = vmatpush1.bf16.msra.mxu0 %v1689
      %1755 = vmatprep.subr.bf16.mxu0 %v1692
      %1756 = vmatpush1.bf16.msra.mxu0 %v1691
      %1757 = vmatprep.subr.bf16.mxu0 %v1694
      %1758 = vmatpush1.bf16.msra.mxu0 %v1693
      %1759 = vmatprep.subr.bf16.mxu0 %v1696
      %1760 = vmatpush1.bf16.msra.mxu0 %v1695
      %1761 = vmatprep.subr.bf16.mxu0 %v1698
      %1762 = vmatpush1.bf16.msra.mxu0 %v1697
      %1763 = vmatprep.subr.bf16.mxu0 %v1700
      %1764 = vmatpush1.bf16.msra.mxu0 %v1699
      %1765 = vmatprep.subr.bf16.mxu0 %v1702
      %1766 = vmatpush1.bf16.msra.mxu0 %v1701
      %1767 = vmatprep.subr.bf16.mxu0 %v1704
      %1768 = vmatpush1.bf16.msra.mxu0 %v1703
      %1769 = vmatprep.mubr.bf16.mxu0 %v1512
      %1770 = vmatmul.mubr.bf16.gmra.mrb[0].mxu0 %v1511
      %v1771 = vpop.f32.mrb[0].mxu0
      %v1772 = vadd.f32 0.0, %v1771
      %v1773 = vpop.f32.mrb[0].mxu0
      %v1774 = vadd.f32 0.0, %v1773
      %v1775 = vpop.f32.mrb[0].mxu0
      %v1776 = vadd.f32 0.0, %v1775
      %v1777 = vpop.f32.mrb[0].mxu0
      %v1778 = vadd.f32 0.0, %v1777
      %1779 = vdwg.mxu0
      %v1812 = vunpack.c.l.b16 %v1513
      %v1813 = vunpack.c.h.b16 %v1513
      %v1814 = vunpack.c.l.b16 %v1514
      %v1815 = vunpack.c.h.b16 %v1514
      %v1816 = vunpack.c.l.b16 %v1515
      %v1817 = vunpack.c.h.b16 %v1515
      %v1818 = vunpack.c.l.b16 %v1516
      %v1819 = vunpack.c.h.b16 %v1516
      %v1820 = vunpack.c.l.b16 %v1517
      %v1821 = vunpack.c.h.b16 %v1517
      %v1822 = vunpack.c.l.b16 %v1518
      %v1823 = vunpack.c.h.b16 %v1518
      %v1824 = vunpack.c.l.b16 %v1519
      %v1825 = vunpack.c.h.b16 %v1519
      %v1826 = vunpack.c.l.b16 %v1520
      %v1827 = vunpack.c.h.b16 %v1520
      %v1828 = vunpack.c.l.b16 %v1521
      %v1829 = vunpack.c.h.b16 %v1521
      %v1830 = vunpack.c.l.b16 %v1522
      %v1831 = vunpack.c.h.b16 %v1522
      %v1832 = vunpack.c.l.b16 %v1523
      %v1833 = vunpack.c.h.b16 %v1523
      %v1834 = vunpack.c.l.b16 %v1524
      %v1835 = vunpack.c.h.b16 %v1524
      %v1836 = vunpack.c.l.b16 %v1525
      %v1837 = vunpack.c.h.b16 %v1525
      %v1838 = vunpack.c.l.b16 %v1526
      %v1839 = vunpack.c.h.b16 %v1526
      %v1840 = vunpack.c.l.b16 %v1527
      %v1841 = vunpack.c.h.b16 %v1527
      %v1842 = vunpack.c.l.b16 %v1528
      %v1843 = vunpack.c.h.b16 %v1528
      %v1844 = vunpack.c.l.b16 %v1529
      %v1845 = vunpack.c.h.b16 %v1529
      %v1846 = vunpack.c.l.b16 %v1530
      %v1847 = vunpack.c.h.b16 %v1530
      %v1848 = vunpack.c.l.b16 %v1531
      %v1849 = vunpack.c.h.b16 %v1531
      %v1850 = vunpack.c.l.b16 %v1532
      %v1851 = vunpack.c.h.b16 %v1532
      %v1852 = vunpack.c.l.b16 %v1533
      %v1853 = vunpack.c.h.b16 %v1533
      %v1854 = vunpack.c.l.b16 %v1534
      %v1855 = vunpack.c.h.b16 %v1534
      %v1856 = vunpack.c.l.b16 %v1535
      %v1857 = vunpack.c.h.b16 %v1535
      %v1858 = vunpack.c.l.b16 %v1536
      %v1859 = vunpack.c.h.b16 %v1536
      %v1860 = vunpack.c.l.b16 %v1537
      %v1861 = vunpack.c.h.b16 %v1537
      %v1862 = vunpack.c.l.b16 %v1538
      %v1863 = vunpack.c.h.b16 %v1538
      %v1864 = vunpack.c.l.b16 %v1539
      %v1865 = vunpack.c.h.b16 %v1539
      %v1866 = vunpack.c.l.b16 %v1540
      %v1867 = vunpack.c.h.b16 %v1540
      %v1868 = vunpack.c.l.b16 %v1541
      %v1869 = vunpack.c.h.b16 %v1541
      %v1870 = vunpack.c.l.b16 %v1542
      %v1871 = vunpack.c.h.b16 %v1542
      %v1872 = vunpack.c.l.b16 %v1543
      %v1873 = vunpack.c.h.b16 %v1543
      %v1874 = vunpack.c.l.b16 %v1544
      %v1875 = vunpack.c.h.b16 %v1544
      %v1876 = vpack.c.b16 %v1814, %v1812
      %v1877 = vpack.c.b16 %v1815, %v1813
      %v1878 = vpack.c.b16 %v1818, %v1816
      %v1879 = vpack.c.b16 %v1819, %v1817
      %v1880 = vpack.c.b16 %v1822, %v1820
      %v1881 = vpack.c.b16 %v1823, %v1821
      %v1882 = vpack.c.b16 %v1826, %v1824
      %v1883 = vpack.c.b16 %v1827, %v1825
      %v1884 = vpack.c.b16 %v1830, %v1828
      %v1885 = vpack.c.b16 %v1831, %v1829
      %v1886 = vpack.c.b16 %v1834, %v1832
      %v1887 = vpack.c.b16 %v1835, %v1833
      %v1888 = vpack.c.b16 %v1838, %v1836
      %v1889 = vpack.c.b16 %v1839, %v1837
      %v1890 = vpack.c.b16 %v1842, %v1840
      %v1891 = vpack.c.b16 %v1843, %v1841
      %v1892 = vpack.c.b16 %v1846, %v1844
      %v1893 = vpack.c.b16 %v1847, %v1845
      %v1894 = vpack.c.b16 %v1850, %v1848
      %v1895 = vpack.c.b16 %v1851, %v1849
      %v1896 = vpack.c.b16 %v1854, %v1852
      %v1897 = vpack.c.b16 %v1855, %v1853
      %v1898 = vpack.c.b16 %v1858, %v1856
      %v1899 = vpack.c.b16 %v1859, %v1857
      %v1900 = vpack.c.b16 %v1862, %v1860
      %v1901 = vpack.c.b16 %v1863, %v1861
      %v1902 = vpack.c.b16 %v1866, %v1864
      %v1903 = vpack.c.b16 %v1867, %v1865
      %v1904 = vpack.c.b16 %v1870, %v1868
      %v1905 = vpack.c.b16 %v1871, %v1869
      %v1906 = vpack.c.b16 %v1874, %v1872
      %v1907 = vpack.c.b16 %v1875, %v1873
      %1940 = vmatprep.subr.bf16.mxu0 %v1877
      %1941 = vmatpush1.bf16.msra.mxu0 %v1876
      %1942 = vmatprep.subr.bf16.mxu0 %v1879
      %1943 = vmatpush1.bf16.msra.mxu0 %v1878
      %1944 = vmatprep.subr.bf16.mxu0 %v1881
      %1945 = vmatpush1.bf16.msra.mxu0 %v1880
      %1946 = vmatprep.subr.bf16.mxu0 %v1883
      %1947 = vmatpush1.bf16.msra.mxu0 %v1882
      %1948 = vmatprep.subr.bf16.mxu0 %v1885
      %1949 = vmatpush1.bf16.msra.mxu0 %v1884
      %1950 = vmatprep.subr.bf16.mxu0 %v1887
      %1951 = vmatpush1.bf16.msra.mxu0 %v1886
      %1952 = vmatprep.subr.bf16.mxu0 %v1889
      %1953 = vmatpush1.bf16.msra.mxu0 %v1888
      %1954 = vmatprep.subr.bf16.mxu0 %v1891
      %1955 = vmatpush1.bf16.msra.mxu0 %v1890
      %1956 = vmatprep.subr.bf16.mxu0 %v1893
      %1957 = vmatpush1.bf16.msra.mxu0 %v1892
      %1958 = vmatprep.subr.bf16.mxu0 %v1895
      %1959 = vmatpush1.bf16.msra.mxu0 %v1894
      %1960 = vmatprep.subr.bf16.mxu0 %v1897
      %1961 = vmatpush1.bf16.msra.mxu0 %v1896
      %1962 = vmatprep.subr.bf16.mxu0 %v1899
      %1963 = vmatpush1.bf16.msra.mxu0 %v1898
      %1964 = vmatprep.subr.bf16.mxu0 %v1901
      %1965 = vmatpush1.bf16.msra.mxu0 %v1900
      %1966 = vmatprep.subr.bf16.mxu0 %v1903
      %1967 = vmatpush1.bf16.msra.mxu0 %v1902
      %1968 = vmatprep.subr.bf16.mxu0 %v1905
      %1969 = vmatpush1.bf16.msra.mxu0 %v1904
      %1970 = vmatprep.subr.bf16.mxu0 %v1907
      %1971 = vmatpush1.bf16.msra.mxu0 %v1906
      %1972 = vmatprep.mubr.bf16.mxu0 %v1506
      %1973 = vmatmul.mubr.bf16.gmra.mrb[0].mxu0 %v1505
      %v1974 = vpop.f32.mrb[0].mxu0
      %v1975 = vadd.f32 %v1772, %v1974
      %v1976 = vpop.f32.mrb[0].mxu0
      %v1977 = vadd.f32 %v1774, %v1976
      %v1978 = vpop.f32.mrb[0].mxu0
      %v1979 = vadd.f32 %v1776, %v1978
      %v1980 = vpop.f32.mrb[0].mxu0
      %v1981 = vadd.f32 %v1778, %v1980
      %1982 = vdwg.mxu0
      %v1983 = vld [vmem:[%s12] sm:$0x3]
      %v1985 = vlaneseq
      %v1986 = vshrl.u32 %v1985, 7
      %v1987 = vsub.s32 0, %v1986
      %v1988 = vrot.slane %v1983, %v1987
      %v1989 = vlaneseq
      %v1990 = vshrl.u32 %v1989, 7
      %v1991 = vsub.s32 1, %v1990
      %v1992 = vrot.slane %v1983, %v1991
      %v1995 = vadd.f32 %v1975, %v1988
      %v1996 = vadd.f32 %v1977, %v1992
      %v1997 = vadd.f32 %v1979, %v1988
      %v1998 = vadd.f32 %v1981, %v1992
      %1999 = vst [vmem:[%s460] sm:$0xff] %v1995
      %2000 = vst [vmem:[%s460 + $0x8] sm:$0xff] %v1996
      %2001 = vst [vmem:[%s460 + $0x10] sm:$0xff] %v1997
      %2002 = vst [vmem:[%s460 + $0x18] sm:$0xff] %v1998
      %p2003 = scmp.lt.s32.totalorder %s24, 1
      %s2004 = scalar_select %p2003, %s24, 1
      %s2005 = smul.addr %s2004, 4
      %s2006 = smul.addr %s2005, 8
      %s2007 = scalar_lea.vmem %s13, %s2006
      // Predicated region
      $region73: #{forward_pretrain_supervised.7} parent=71 // pred_check
        %p2008 = pneg %p325
      $region74: #{forward_pretrain_supervised.7} parent=71 // pred_check_branch
        %2010 = sbr.rel (%p2008) target = $region76
      $region75: #{forward_pretrain_supervised.7} parent=71 // pred_region
        _
      $region76: #{forward_pretrain_supervised.7} parent=71 // pred_fallthru
        _
    $region72: #{forward_pretrain_supervised.7} parent=5 // pred_fallthru
      _
    %p2011 = scmp.le.s32.totalorder 2, %s19
    // Predicated region
    $region77: #{forward_pretrain_supervised.7} parent=5 // pred_check
      %p2012 = pneg %p2011
    $region78: #{forward_pretrain_supervised.7} parent=5 // pred_check_branch
      %2014 = sbr.rel (%p2012) target = $region80
    $region79: #{forward_pretrain_supervised.7} parent=5 // pred_region
      %s2015 = ssub.s32 %s19, 2
      // Predicated region
      $region81: #{forward_pretrain_supervised.7} parent=79 // pred_check
        %p2016 = pneg %p331
      $region82: #{forward_pretrain_supervised.7} parent=79 // pred_check_branch
        %2018 = sbr.rel (%p2016) target = $region84
      $region83: #{forward_pretrain_supervised.7} parent=79 // pred_region
        %p2019 = scmp.lt.s32.totalorder %s25, 1
        %s2020 = scalar_select %p2019, %s25, 1
        %s2021 = smul.addr %s2020, 4
        %s2022 = smul.addr %s2021, 8
        %s2023 = scalar_lea.vmem %s13, %s2022
      $region84: #{forward_pretrain_supervised.7} parent=79 // pred_fallthru
        _
    $region80: #{forward_pretrain_supervised.7} parent=5 // pred_fallthru
      _
  $region6: #{forward_pretrain_supervised.7} parent=0 // loop_footer
    %s23 = sadd.s32 1, %s19
  $region7: #{forward_pretrain_supervised.7} parent=0 // loop_footer_branch
    %18 = sbr.rel target = $region3
  $region8: #{forward_pretrain_supervised.7} parent=0 // loop_exit
    _

// kernel: forward_pretrain_supervised.4
$region0: #{forward_pretrain_supervised.4}
  #allocation0 [shape = 'u32[]', space=smem, size = 0x4, offset = 0x4, fixed_abs, tag = 'smem constant byte address 0x4 - core index']
  #allocation1 [shape = 'u32[144,128]{1,0:T(1,128)}', space=vmem, size = 0x12000, scoped, tag = 'internal scratch']
  #allocation2 [shape = 'f32[8,256]{1,0:T(8,128)}', space=vmem, size = 0x2000, scoped, tag = 'scratch operand']
  %s0 = inlined_call_operand.vmem [shape: f32[4,8,256], index: 0, kind: input, shape index: {}]
  %s1 = inlined_call_operand.vmem [shape: bf16[256,768], index: 1, kind: input, shape index: {}]
  %s2 = inlined_call_operand.vmem [shape: f32[1,768], index: 2, kind: input, shape index: {}]
  %s3 = inlined_call_operand.hbm [shape: bf16[256,768], index: 3, kind: input, shape index: {}]
  %s4 = inlined_call_operand.hbm [shape: f32[1,768], index: 4, kind: input, shape index: {}]
  %s5 = inlined_call_operand.vmem [shape: f32[4,8,256], index: 5, kind: output, shape index: {}]
  %s6 = sld [smem:[#allocation0]]
  $region42: #{forward_pretrain_supervised.4} parent=0
    _
  %s8 = ssub.s32 1, %s6
  %s9 = scalar_select 0, %s8, %s6
  $region1: #{forward_pretrain_supervised.4} parent=0
    #allocation3 [shape = 'u8[393216]{0}', space=vmem, size = 0x60000, scoped, tag = 'input window, operand 3, single buffered']
    #allocation4 [shape = 's32[1]{0}', space=sflag, size = 0x4, scoped, tag = 'scoped memory for forward_pretrain_supervised.4']
    #allocation5 [shape = 'u8[3072]{0}', space=vmem, size = 0xc00, scoped, tag = 'input window, operand 4, single buffered']
    #allocation6 [shape = 's32[1]{0}', space=sflag, size = 0x4, scoped, tag = 'scoped memory for forward_pretrain_supervised.4']
    %10 = vsyncpa [#allocation4], 0
    %11 = vsyncpa [#allocation6], 0
    // Predicated region
    $region2: #{forward_pretrain_supervised.4} parent=1 // pred_check
      _
    $region3: #{forward_pretrain_supervised.4} parent=1 // pred_check_branch
      %13 = sbr.rel (0) target = $region5
    $region4: #{forward_pretrain_supervised.4} parent=1 // pred_region
      _
    $region5: #{forward_pretrain_supervised.4} parent=1 // pred_fallthru
      _
    // Predicated region
    $region6: #{forward_pretrain_supervised.4} parent=1 // pred_check
      _
    $region7: #{forward_pretrain_supervised.4} parent=1 // pred_check_branch
      %15 = sbr.rel (0) target = $region9
    $region8: #{forward_pretrain_supervised.4} parent=1 // pred_region
      _
    $region9: #{forward_pretrain_supervised.4} parent=1 // pred_fallthru
      _
    // Predicated region
    $region10: #{forward_pretrain_supervised.4} parent=1 // pred_check
      _
    $region11: #{forward_pretrain_supervised.4} parent=1 // pred_check_branch
      %17 = sbr.rel (0) target = $region13
    $region12: #{forward_pretrain_supervised.4} parent=1 // pred_region
      _
    $region13: #{forward_pretrain_supervised.4} parent=1 // pred_fallthru
      _
    // Predicated region
    $region14: #{forward_pretrain_supervised.4} parent=1 // pred_check
      _
    $region15: #{forward_pretrain_supervised.4} parent=1 // pred_check_branch
      %19 = sbr.rel (0) target = $region17
    $region16: #{forward_pretrain_supervised.4} parent=1 // pred_region
      %s21 = ssub.s32 12288, 12288
      %22 = vsyncadd [#allocation4], %s21
      %s23 = sshll.u32 [#allocation3], 4
      %s24 = int_to_ptr.vmem [resolvable:$true] %s23
      %29 = dma.hbm_to_vmem [thread:$0]  %s3, 12288, %s24, [#allocation4], 384, 384, 24
    $region17: #{forward_pretrain_supervised.4} parent=1 // pred_fallthru
      _
    // Predicated region
    $region18: #{forward_pretrain_supervised.4} parent=1 // pred_check
      _
    $region19: #{forward_pretrain_supervised.4} parent=1 // pred_check_branch
      %31 = sbr.rel (0) target = $region21
    $region20: #{forward_pretrain_supervised.4} parent=1 // pred_region
      %s33 = ssub.s32 96, 96
      %34 = vsyncadd [#allocation6], %s33
      %s36 = sshll.u32 [#allocation5], 4
      %s37 = int_to_ptr.vmem [resolvable:$true] %s36
      %39 = dma.hbm_to_vmem [thread:$0]  %s4, 96, %s37, [#allocation6]
    $region21: #{forward_pretrain_supervised.4} parent=1 // pred_fallthru
      _
    // Predicated region
    $region22: #{forward_pretrain_supervised.4} parent=1 // pred_check
      _
    $region23: #{forward_pretrain_supervised.4} parent=1 // pred_check_branch
      %41 = sbr.rel (0) target = $region25
    $region24: #{forward_pretrain_supervised.4} parent=1 // pred_region
      %42 = dma.done [#allocation4], 12288
    $region25: #{forward_pretrain_supervised.4} parent=1 // pred_fallthru
      _
    // Predicated region
    $region26: #{forward_pretrain_supervised.4} parent=1 // pred_check
      _
    $region27: #{forward_pretrain_supervised.4} parent=1 // pred_check_branch
      %44 = sbr.rel (0) target = $region29
    $region28: #{forward_pretrain_supervised.4} parent=1 // pred_region
      %45 = dma.done [#allocation6], 96
    $region29: #{forward_pretrain_supervised.4} parent=1 // pred_fallthru
      _
    %p46 = scmp.eq.s32.totalorder 0, 0
    // Predicated region
    $region30: #{forward_pretrain_supervised.4} parent=1 // pred_check
      %p47 = pneg %p46
    $region31: #{forward_pretrain_supervised.4} parent=1 // pred_check_branch
      %49 = sbr.rel (%p47) target = $region33
    $region32: #{forward_pretrain_supervised.4} parent=1 // pred_region
      %50 = vst [vmem:[#allocation2] sm:$0xff] 0.0
      %51 = vst [vmem:[#allocation2 + $0x8] sm:$0xff] 0.0
    $region33: #{forward_pretrain_supervised.4} parent=1 // pred_fallthru
      _
    %v52 = vld [vmem:[%s0] sm:$0xff]
    %v53 = vld [vmem:[%s0 + $0x8] sm:$0xff]
    %v54 = vld [vmem:[%s0 + $0x10] sm:$0xff]
    %v55 = vld [vmem:[%s0 + $0x18] sm:$0xff]
    %v56 = vld [vmem:[%s0 + $0x20] sm:$0xff]
    %v57 = vld [vmem:[%s0 + $0x28] sm:$0xff]
    %v58 = vld [vmem:[%s0 + $0x30] sm:$0xff]
    %v59 = vld [vmem:[%s0 + $0x38] sm:$0xff]
    %v60 = vpack.c.bf16 %v54, %v52
    %v61 = vpack.c.bf16 %v55, %v53
    %v62 = vpack.c.bf16 %v58, %v56
    %v63 = vpack.c.bf16 %v59, %v57
    %v64 = vld [vmem:[%s1] sm:$0xff]
    %v65 = vld [vmem:[%s1 + $0x8] sm:$0xff]
    %v66 = vld [vmem:[%s1 + $0x10] sm:$0xff]
    %v67 = vld [vmem:[%s1 + $0x18] sm:$0xff]
    %v68 = vld [vmem:[%s1 + $0x20] sm:$0xff]
    %v69 = vld [vmem:[%s1 + $0x28] sm:$0xff]
    %v70 = vld [vmem:[%s1 + $0x30] sm:$0xff]
    %v71 = vld [vmem:[%s1 + $0x38] sm:$0xff]
    %v72 = vld [vmem:[%s1 + $0x40] sm:$0xff]
    %v73 = vld [vmem:[%s1 + $0x48] sm:$0xff]
    %v74 = vld [vmem:[%s1 + $0x50] sm:$0xff]
    %v75 = vld [vmem:[%s1 + $0x58] sm:$0xff]
    %v76 = vld [vmem:[%s1 + $0x60] sm:$0xff]
    %v77 = vld [vmem:[%s1 + $0x68] sm:$0xff]
    %v78 = vld [vmem:[%s1 + $0x70] sm:$0xff]
    %v79 = vld [vmem:[%s1 + $0x78] sm:$0xff]
    %v80 = vld [vmem:[%s1 + $0x80] sm:$0xff]
    %v81 = vld [vmem:[%s1 + $0x88] sm:$0xff]
    %v82 = vld [vmem:[%s1 + $0x90] sm:$0xff]
    %v83 = vld [vmem:[%s1 + $0x98] sm:$0xff]
    %v84 = vld [vmem:[%s1 + $0xa0] sm:$0xff]
    %v85 = vld [vmem:[%s1 + $0xa8] sm:$0xff]
    %v86 = vld [vmem:[%s1 + $0xb0] sm:$0xff]
    %v87 = vld [vmem:[%s1 + $0xb8] sm:$0xff]
    %v88 = vld [vmem:[%s1 + $0xc0] sm:$0xff]
    %v89 = vld [vmem:[%s1 + $0xc8] sm:$0xff]
    %v90 = vld [vmem:[%s1 + $0xd0] sm:$0xff]
    %v91 = vld [vmem:[%s1 + $0xd8] sm:$0xff]
    %v92 = vld [vmem:[%s1 + $0xe0] sm:$0xff]
    %v93 = vld [vmem:[%s1 + $0xe8] sm:$0xff]
    %v94 = vld [vmem:[%s1 + $0xf0] sm:$0xff]
    %v95 = vld [vmem:[%s1 + $0xf8] sm:$0xff]
    %v96 = vld [vmem:[%s1 + $0x100] sm:$0xff]
    %v97 = vld [vmem:[%s1 + $0x108] sm:$0xff]
    %v98 = vld [vmem:[%s1 + $0x110] sm:$0xff]
    %v99 = vld [vmem:[%s1 + $0x118] sm:$0xff]
    %v100 = vld [vmem:[%s1 + $0x120] sm:$0xff]
    %v101 = vld [vmem:[%s1 + $0x128] sm:$0xff]
    %v102 = vld [vmem:[%s1 + $0x130] sm:$0xff]
    %v103 = vld [vmem:[%s1 + $0x138] sm:$0xff]
    %v104 = vld [vmem:[%s1 + $0x140] sm:$0xff]
    %v105 = vld [vmem:[%s1 + $0x148] sm:$0xff]
    %v106 = vld [vmem:[%s1 + $0x150] sm:$0xff]
    %v107 = vld [vmem:[%s1 + $0x158] sm:$0xff]
    %v108 = vld [vmem:[%s1 + $0x160] sm:$0xff]
    %v109 = vld [vmem:[%s1 + $0x168] sm:$0xff]
    %v110 = vld [vmem:[%s1 + $0x170] sm:$0xff]
    %v111 = vld [vmem:[%s1 + $0x178] sm:$0xff]
    %v112 = vld [vmem:[%s1 + $0x180] sm:$0xff]
    %v113 = vld [vmem:[%s1 + $0x188] sm:$0xff]
    %v114 = vld [vmem:[%s1 + $0x190] sm:$0xff]
    %v115 = vld [vmem:[%s1 + $0x198] sm:$0xff]
    %v116 = vld [vmem:[%s1 + $0x1a0] sm:$0xff]
    %v117 = vld [vmem:[%s1 + $0x1a8] sm:$0xff]
    %v118 = vld [vmem:[%s1 + $0x1b0] sm:$0xff]
    %v119 = vld [vmem:[%s1 + $0x1b8] sm:$0xff]
    %v120 = vld [vmem:[%s1 + $0x1c0] sm:$0xff]
    %v121 = vld [vmem:[%s1 + $0x1c8] sm:$0xff]
    %v122 = vld [vmem:[%s1 + $0x1d0] sm:$0xff]
    %v123 = vld [vmem:[%s1 + $0x1d8] sm:$0xff]
    %v124 = vld [vmem:[%s1 + $0x1e0] sm:$0xff]
    %v125 = vld [vmem:[%s1 + $0x1e8] sm:$0xff]
    %v126 = vld [vmem:[%s1 + $0x1f0] sm:$0xff]
    %v127 = vld [vmem:[%s1 + $0x1f8] sm:$0xff]
    %v128 = vld [vmem:[%s1 + $0x200] sm:$0xff]
    %v129 = vld [vmem:[%s1 + $0x208] sm:$0xff]
    %v130 = vld [vmem:[%s1 + $0x210] sm:$0xff]
    %v131 = vld [vmem:[%s1 + $0x218] sm:$0xff]
    %v132 = vld [vmem:[%s1 + $0x220] sm:$0xff]
    %v133 = vld [vmem:[%s1 + $0x228] sm:$0xff]
    %v134 = vld [vmem:[%s1 + $0x230] sm:$0xff]
    %v135 = vld [vmem:[%s1 + $0x238] sm:$0xff]
    %v136 = vld [vmem:[%s1 + $0x240] sm:$0xff]
    %v137 = vld [vmem:[%s1 + $0x248] sm:$0xff]
    %v138 = vld [vmem:[%s1 + $0x250] sm:$0xff]
    %v139 = vld [vmem:[%s1 + $0x258] sm:$0xff]
    %v140 = vld [vmem:[%s1 + $0x260] sm:$0xff]
    %v141 = vld [vmem:[%s1 + $0x268] sm:$0xff]
    %v142 = vld [vmem:[%s1 + $0x270] sm:$0xff]
    %v143 = vld [vmem:[%s1 + $0x278] sm:$0xff]
    %v144 = vld [vmem:[%s1 + $0x280] sm:$0xff]
    %v145 = vld [vmem:[%s1 + $0x288] sm:$0xff]
    %v146 = vld [vmem:[%s1 + $0x290] sm:$0xff]
    %v147 = vld [vmem:[%s1 + $0x298] sm:$0xff]
    %v148 = vld [vmem:[%s1 + $0x2a0] sm:$0xff]
    %v149 = vld [vmem:[%s1 + $0x2a8] sm:$0xff]
    %v150 = vld [vmem:[%s1 + $0x2b0] sm:$0xff]
    %v151 = vld [vmem:[%s1 + $0x2b8] sm:$0xff]
    %v152 = vld [vmem:[%s1 + $0x2c0] sm:$0xff]
    %v153 = vld [vmem:[%s1 + $0x2c8] sm:$0xff]
    %v154 = vld [vmem:[%s1 + $0x2d0] sm:$0xff]
    %v155 = vld [vmem:[%s1 + $0x2d8] sm:$0xff]
    %v156 = vld [vmem:[%s1 + $0x2e0] sm:$0xff]
    %v157 = vld [vmem:[%s1 + $0x2e8] sm:$0xff]
    %v158 = vld [vmem:[%s1 + $0x2f0] sm:$0xff]
    %v159 = vld [vmem:[%s1 + $0x2f8] sm:$0xff]
    %v160 = vld [vmem:[%s2] sm:$0x3f]
    %v162 = vlaneseq
    %v163 = vshrl.u32 %v162, 7
    %v164 = vsub.s32 0, %v163
    %v165 = vrot.slane %v160, %v164
    %v166 = vlaneseq
    %v167 = vshrl.u32 %v166, 7
    %v168 = vsub.s32 1, %v167
    %v169 = vrot.slane %v160, %v168
    %v170 = vlaneseq
    %v171 = vshrl.u32 %v170, 7
    %v172 = vsub.s32 2, %v171
    %v173 = vrot.slane %v160, %v172
    %v174 = vlaneseq
    %v175 = vshrl.u32 %v174, 7
    %v176 = vsub.s32 3, %v175
    %v177 = vrot.slane %v160, %v176
    %v178 = vlaneseq
    %v179 = vshrl.u32 %v178, 7
    %v180 = vsub.s32 4, %v179
    %v181 = vrot.slane %v160, %v180
    %v182 = vlaneseq
    %v183 = vshrl.u32 %v182, 7
    %v184 = vsub.s32 5, %v183
    %v185 = vrot.slane %v160, %v184
    %v288 = vunpack.c.l.b16 %v64
    %v289 = vunpack.c.h.b16 %v64
    %v290 = vunpack.c.l.b16 %v65
    %v291 = vunpack.c.h.b16 %v65
    %v292 = vunpack.c.l.b16 %v66
    %v293 = vunpack.c.h.b16 %v66
    %v294 = vunpack.c.l.b16 %v67
    %v295 = vunpack.c.h.b16 %v67
    %v296 = vunpack.c.l.b16 %v68
    %v297 = vunpack.c.h.b16 %v68
    %v298 = vunpack.c.l.b16 %v69
    %v299 = vunpack.c.h.b16 %v69
    %v300 = vunpack.c.l.b16 %v70
    %v301 = vunpack.c.h.b16 %v70
    %v302 = vunpack.c.l.b16 %v71
    %v303 = vunpack.c.h.b16 %v71
    %v304 = vunpack.c.l.b16 %v72
    %v305 = vunpack.c.h.b16 %v72
    %v306 = vunpack.c.l.b16 %v73
    %v307 = vunpack.c.h.b16 %v73
    %v308 = vunpack.c.l.b16 %v74
    %v309 = vunpack.c.h.b16 %v74
    %v310 = vunpack.c.l.b16 %v75
    %v311 = vunpack.c.h.b16 %v75
    %v312 = vunpack.c.l.b16 %v76
    %v313 = vunpack.c.h.b16 %v76
    %v314 = vunpack.c.l.b16 %v77
    %v315 = vunpack.c.h.b16 %v77
    %v316 = vunpack.c.l.b16 %v78
    %v317 = vunpack.c.h.b16 %v78
    %v318 = vunpack.c.l.b16 %v79
    %v319 = vunpack.c.h.b16 %v79
    %v320 = vunpack.c.l.b16 %v80
    %v321 = vunpack.c.h.b16 %v80
    %v322 = vunpack.c.l.b16 %v81
    %v323 = vunpack.c.h.b16 %v81
    %v324 = vunpack.c.l.b16 %v82
    %v325 = vunpack.c.h.b16 %v82
    %v326 = vunpack.c.l.b16 %v83
    %v327 = vunpack.c.h.b16 %v83
    %v328 = vunpack.c.l.b16 %v84
    %v329 = vunpack.c.h.b16 %v84
    %v330 = vunpack.c.l.b16 %v85
    %v331 = vunpack.c.h.b16 %v85
    %v332 = vunpack.c.l.b16 %v86
    %v333 = vunpack.c.h.b16 %v86
    %v334 = vunpack.c.l.b16 %v87
    %v335 = vunpack.c.h.b16 %v87
    %v336 = vunpack.c.l.b16 %v88
    %v337 = vunpack.c.h.b16 %v88
    %v338 = vunpack.c.l.b16 %v89
    %v339 = vunpack.c.h.b16 %v89
    %v340 = vunpack.c.l.b16 %v90
    %v341 = vunpack.c.h.b16 %v90
    %v342 = vunpack.c.l.b16 %v91
    %v343 = vunpack.c.h.b16 %v91
    %v344 = vunpack.c.l.b16 %v92
    %v345 = vunpack.c.h.b16 %v92
    %v346 = vunpack.c.l.b16 %v93
    %v347 = vunpack.c.h.b16 %v93
    %v348 = vunpack.c.l.b16 %v94
    %v349 = vunpack.c.h.b16 %v94
    %v350 = vunpack.c.l.b16 %v95
    %v351 = vunpack.c.h.b16 %v95
    %v352 = vunpack.c.l.b16 %v96
    %v353 = vunpack.c.h.b16 %v96
    %v354 = vunpack.c.l.b16 %v97
    %v355 = vunpack.c.h.b16 %v97
    %v356 = vunpack.c.l.b16 %v98
    %v357 = vunpack.c.h.b16 %v98
    %v358 = vunpack.c.l.b16 %v99
    %v359 = vunpack.c.h.b16 %v99
    %v360 = vunpack.c.l.b16 %v100
    %v361 = vunpack.c.h.b16 %v100
    %v362 = vunpack.c.l.b16 %v101
    %v363 = vunpack.c.h.b16 %v101
    %v364 = vunpack.c.l.b16 %v102
    %v365 = vunpack.c.h.b16 %v102
    %v366 = vunpack.c.l.b16 %v103
    %v367 = vunpack.c.h.b16 %v103
    %v368 = vunpack.c.l.b16 %v104
    %v369 = vunpack.c.h.b16 %v104
    %v370 = vunpack.c.l.b16 %v105
    %v371 = vunpack.c.h.b16 %v105
    %v372 = vunpack.c.l.b16 %v106
    %v373 = vunpack.c.h.b16 %v106
    %v374 = vunpack.c.l.b16 %v107
    %v375 = vunpack.c.h.b16 %v107
    %v376 = vunpack.c.l.b16 %v108
    %v377 = vunpack.c.h.b16 %v108
    %v378 = vunpack.c.l.b16 %v109
    %v379 = vunpack.c.h.b16 %v109
    %v380 = vunpack.c.l.b16 %v110
    %v381 = vunpack.c.h.b16 %v110
    %v382 = vunpack.c.l.b16 %v111
    %v383 = vunpack.c.h.b16 %v111
    %v384 = vunpack.c.l.b16 %v112
    %v385 = vunpack.c.h.b16 %v112
    %v386 = vunpack.c.l.b16 %v113
    %v387 = vunpack.c.h.b16 %v113
    %v388 = vunpack.c.l.b16 %v114
    %v389 = vunpack.c.h.b16 %v114
    %v390 = vunpack.c.l.b16 %v115
    %v391 = vunpack.c.h.b16 %v115
    %v392 = vunpack.c.l.b16 %v116
    %v393 = vunpack.c.h.b16 %v116
    %v394 = vunpack.c.l.b16 %v117
    %v395 = vunpack.c.h.b16 %v117
    %v396 = vunpack.c.l.b16 %v118
    %v397 = vunpack.c.h.b16 %v118
    %v398 = vunpack.c.l.b16 %v119
    %v399 = vunpack.c.h.b16 %v119
    %v400 = vunpack.c.l.b16 %v120
    %v401 = vunpack.c.h.b16 %v120
    %v402 = vunpack.c.l.b16 %v121
    %v403 = vunpack.c.h.b16 %v121
    %v404 = vunpack.c.l.b16 %v122
    %v405 = vunpack.c.h.b16 %v122
    %v406 = vunpack.c.l.b16 %v123
    %v407 = vunpack.c.h.b16 %v123
    %v408 = vunpack.c.l.b16 %v124
    %v409 = vunpack.c.h.b16 %v124
    %v410 = vunpack.c.l.b16 %v125
    %v411 = vunpack.c.h.b16 %v125
    %v412 = vunpack.c.l.b16 %v126
    %v413 = vunpack.c.h.b16 %v126
    %v414 = vunpack.c.l.b16 %v127
    %v415 = vunpack.c.h.b16 %v127
    %v416 = vunpack.c.l.b16 %v128
    %v417 = vunpack.c.h.b16 %v128
    %v418 = vunpack.c.l.b16 %v129
    %v419 = vunpack.c.h.b16 %v129
    %v420 = vunpack.c.l.b16 %v130
    %v421 = vunpack.c.h.b16 %v130
    %v422 = vunpack.c.l.b16 %v131
    %v423 = vunpack.c.h.b16 %v131
    %v424 = vunpack.c.l.b16 %v132
    %v425 = vunpack.c.h.b16 %v132
    %v426 = vunpack.c.l.b16 %v133
    %v427 = vunpack.c.h.b16 %v133
    %v428 = vunpack.c.l.b16 %v134
    %v429 = vunpack.c.h.b16 %v134
    %v430 = vunpack.c.l.b16 %v135
    %v431 = vunpack.c.h.b16 %v135
    %v432 = vunpack.c.l.b16 %v136
    %v433 = vunpack.c.h.b16 %v136
    %v434 = vunpack.c.l.b16 %v137
    %v435 = vunpack.c.h.b16 %v137
    %v436 = vunpack.c.l.b16 %v138
    %v437 = vunpack.c.h.b16 %v138
    %v438 = vunpack.c.l.b16 %v139
    %v439 = vunpack.c.h.b16 %v139
    %v440 = vunpack.c.l.b16 %v140
    %v441 = vunpack.c.h.b16 %v140
    %v442 = vunpack.c.l.b16 %v141
    %v443 = vunpack.c.h.b16 %v141
    %v444 = vunpack.c.l.b16 %v142
    %v445 = vunpack.c.h.b16 %v142
    %v446 = vunpack.c.l.b16 %v143
    %v447 = vunpack.c.h.b16 %v143
    %v448 = vunpack.c.l.b16 %v144
    %v449 = vunpack.c.h.b16 %v144
    %v450 = vunpack.c.l.b16 %v145
    %v451 = vunpack.c.h.b16 %v145
    %v452 = vunpack.c.l.b16 %v146
    %v453 = vunpack.c.h.b16 %v146
    %v454 = vunpack.c.l.b16 %v147
    %v455 = vunpack.c.h.b16 %v147
    %v456 = vunpack.c.l.b16 %v148
    %v457 = vunpack.c.h.b16 %v148
    %v458 = vunpack.c.l.b16 %v149
    %v459 = vunpack.c.h.b16 %v149
    %v460 = vunpack.c.l.b16 %v150
    %v461 = vunpack.c.h.b16 %v150
    %v462 = vunpack.c.l.b16 %v151
    %v463 = vunpack.c.h.b16 %v151
    %v464 = vunpack.c.l.b16 %v152
    %v465 = vunpack.c.h.b16 %v152
    %v466 = vunpack.c.l.b16 %v153
    %v467 = vunpack.c.h.b16 %v153
    %v468 = vunpack.c.l.b16 %v154
    %v469 = vunpack.c.h.b16 %v154
    %v470 = vunpack.c.l.b16 %v155
    %v471 = vunpack.c.h.b16 %v155
    %v472 = vunpack.c.l.b16 %v156
    %v473 = vunpack.c.h.b16 %v156
    %v474 = vunpack.c.l.b16 %v157
    %v475 = vunpack.c.h.b16 %v157
    %v476 = vunpack.c.l.b16 %v158
    %v477 = vunpack.c.h.b16 %v158
    %v478 = vunpack.c.l.b16 %v159
    %v479 = vunpack.c.h.b16 %v159
    %v480 = vpack.c.b16 %v294, %v288
    %v481 = vpack.c.b16 %v295, %v289
    %v482 = vpack.c.b16 %v296, %v290
    %v483 = vpack.c.b16 %v297, %v291
    %v484 = vpack.c.b16 %v298, %v292
    %v485 = vpack.c.b16 %v299, %v293
    %v486 = vpack.c.b16 %v306, %v300
    %v487 = vpack.c.b16 %v307, %v301
    %v488 = vpack.c.b16 %v308, %v302
    %v489 = vpack.c.b16 %v309, %v303
    %v490 = vpack.c.b16 %v310, %v304
    %v491 = vpack.c.b16 %v311, %v305
    %v492 = vpack.c.b16 %v318, %v312
    %v493 = vpack.c.b16 %v319, %v313
    %v494 = vpack.c.b16 %v320, %v314
    %v495 = vpack.c.b16 %v321, %v315
    %v496 = vpack.c.b16 %v322, %v316
    %v497 = vpack.c.b16 %v323, %v317
    %v498 = vpack.c.b16 %v330, %v324
    %v499 = vpack.c.b16 %v331, %v325
    %v500 = vpack.c.b16 %v332, %v326
    %v501 = vpack.c.b16 %v333, %v327
    %v502 = vpack.c.b16 %v334, %v328
    %v503 = vpack.c.b16 %v335, %v329
    %v504 = vpack.c.b16 %v342, %v336
    %v505 = vpack.c.b16 %v343, %v337
    %v506 = vpack.c.b16 %v344, %v338
    %v507 = vpack.c.b16 %v345, %v339
    %v508 = vpack.c.b16 %v346, %v340
    %v509 = vpack.c.b16 %v347, %v341
    %v510 = vpack.c.b16 %v354, %v348
    %v511 = vpack.c.b16 %v355, %v349
    %v512 = vpack.c.b16 %v356, %v350
    %v513 = vpack.c.b16 %v357, %v351
    %v514 = vpack.c.b16 %v358, %v352
    %v515 = vpack.c.b16 %v359, %v353
    %v516 = vpack.c.b16 %v366, %v360
    %v517 = vpack.c.b16 %v367, %v361
    %v518 = vpack.c.b16 %v368, %v362
    %v519 = vpack.c.b16 %v369, %v363
    %v520 = vpack.c.b16 %v370, %v364
    %v521 = vpack.c.b16 %v371, %v365
    %v522 = vpack.c.b16 %v378, %v372
    %v523 = vpack.c.b16 %v379, %v373
    %v524 = vpack.c.b16 %v380, %v374
    %v525 = vpack.c.b16 %v381, %v375
    %v526 = vpack.c.b16 %v382, %v376
    %v527 = vpack.c.b16 %v383, %v377
    %v528 = vpack.c.b16 %v390, %v384
    %v529 = vpack.c.b16 %v391, %v385
    %v530 = vpack.c.b16 %v392, %v386
    %v531 = vpack.c.b16 %v393, %v387
    %v532 = vpack.c.b16 %v394, %v388
    %v533 = vpack.c.b16 %v395, %v389
    %v534 = vpack.c.b16 %v402, %v396
    %v535 = vpack.c.b16 %v403, %v397
    %v536 = vpack.c.b16 %v404, %v398
    %v537 = vpack.c.b16 %v405, %v399
    %v538 = vpack.c.b16 %v406, %v400
    %v539 = vpack.c.b16 %v407, %v401
    %v540 = vpack.c.b16 %v414, %v408
    %v541 = vpack.c.b16 %v415, %v409
    %v542 = vpack.c.b16 %v416, %v410
    %v543 = vpack.c.b16 %v417, %v411
    %v544 = vpack.c.b16 %v418, %v412
    %v545 = vpack.c.b16 %v419, %v413
    %v546 = vpack.c.b16 %v426, %v420
    %v547 = vpack.c.b16 %v427, %v421
    %v548 = vpack.c.b16 %v428, %v422
    %v549 = vpack.c.b16 %v429, %v423
    %v550 = vpack.c.b16 %v430, %v424
    %v551 = vpack.c.b16 %v431, %v425
    %v552 = vpack.c.b16 %v438, %v432
    %v553 = vpack.c.b16 %v439, %v433
    %v554 = vpack.c.b16 %v440, %v434
    %v555 = vpack.c.b16 %v441, %v435
    %v556 = vpack.c.b16 %v442, %v436
    %v557 = vpack.c.b16 %v443, %v437
    %v558 = vpack.c.b16 %v450, %v444
    %v559 = vpack.c.b16 %v451, %v445
    %v560 = vpack.c.b16 %v452, %v446
    %v561 = vpack.c.b16 %v453, %v447
    %v562 = vpack.c.b16 %v454, %v448
    %v563 = vpack.c.b16 %v455, %v449
    %v564 = vpack.c.b16 %v462, %v456
    %v565 = vpack.c.b16 %v463, %v457
    %v566 = vpack.c.b16 %v464, %v458
    %v567 = vpack.c.b16 %v465, %v459
    %v568 = vpack.c.b16 %v466, %v460
    %v569 = vpack.c.b16 %v467, %v461
    %v570 = vpack.c.b16 %v474, %v468
    %v571 = vpack.c.b16 %v475, %v469
    %v572 = vpack.c.b16 %v476, %v470
    %v573 = vpack.c.b16 %v477, %v471
    %v574 = vpack.c.b16 %v478, %v472
    %v575 = vpack.c.b16 %v479, %v473
    %672 = vmatprep.subr.bf16.mxu0 %v481
    %673 = vmatpush1.bf16.msra.mxu0 %v480
    %674 = vmatprep.subr.bf16.mxu0 %v487
    %675 = vmatpush1.bf16.msra.mxu0 %v486
    %676 = vmatprep.subr.bf16.mxu0 %v493
    %677 = vmatpush1.bf16.msra.mxu0 %v492
    %678 = vmatprep.subr.bf16.mxu0 %v499
    %679 = vmatpush1.bf16.msra.mxu0 %v498
    %680 = vmatprep.subr.bf16.mxu0 %v505
    %681 = vmatpush1.bf16.msra.mxu0 %v504
    %682 = vmatprep.subr.bf16.mxu0 %v511
    %683 = vmatpush1.bf16.msra.mxu0 %v510
    %684 = vmatprep.subr.bf16.mxu0 %v517
    %685 = vmatpush1.bf16.msra.mxu0 %v516
    %686 = vmatprep.subr.bf16.mxu0 %v523
    %687 = vmatpush1.bf16.msra.mxu0 %v522
    %688 = vmatprep.subr.bf16.mxu0 %v529
    %689 = vmatpush1.bf16.msra.mxu0 %v528
    %690 = vmatprep.subr.bf16.mxu0 %v535
    %691 = vmatpush1.bf16.msra.mxu0 %v534
    %692 = vmatprep.subr.bf16.mxu0 %v541
    %693 = vmatpush1.bf16.msra.mxu0 %v540
    %694 = vmatprep.subr.bf16.mxu0 %v547
    %695 = vmatpush1.bf16.msra.mxu0 %v546
    %696 = vmatprep.subr.bf16.mxu0 %v553
    %697 = vmatpush1.bf16.msra.mxu0 %v552
    %698 = vmatprep.subr.bf16.mxu0 %v559
    %699 = vmatpush1.bf16.msra.mxu0 %v558
    %700 = vmatprep.subr.bf16.mxu0 %v565
    %701 = vmatpush1.bf16.msra.mxu0 %v564
    %702 = vmatprep.subr.bf16.mxu0 %v571
    %703 = vmatpush1.bf16.msra.mxu0 %v570
    %704 = vmatprep.mubr.bf16.mxu0 %v61
    %705 = vmatmul.mubr.bf16.gmra.mrb[0].mxu0 %v60
    %v706 = vpop.f32.mrb[0].mxu0
    %v707 = vadd.f32 %v165, %v706
    %v708 = vpop.f32.mrb[0].mxu0
    %v709 = vadd.f32 %v169, %v708
    %v710 = vpop.f32.mrb[0].mxu0
    %v711 = vadd.f32 %v165, %v710
    %v712 = vpop.f32.mrb[0].mxu0
    %v713 = vadd.f32 %v169, %v712
    %714 = vmatprep.mubr.bf16.mxu0 %v63
    %715 = vmatmul.mubr.bf16.gmra.mrb[0].mxu0 %v62
    %v716 = vpop.f32.mrb[0].mxu0
    %v717 = vadd.f32 %v165, %v716
    %v718 = vpop.f32.mrb[0].mxu0
    %v719 = vadd.f32 %v169, %v718
    %v720 = vpop.f32.mrb[0].mxu0
    %v721 = vadd.f32 %v165, %v720
    %v722 = vpop.f32.mrb[0].mxu0
    %v723 = vadd.f32 %v169, %v722
    %724 = vdwg.mxu0
    %725 = vmatprep.subr.bf16.mxu0 %v483
    %726 = vmatpush1.bf16.msra.mxu0 %v482
    %727 = vmatprep.subr.bf16.mxu0 %v489
    %728 = vmatpush1.bf16.msra.mxu0 %v488
    %729 = vmatprep.subr.bf16.mxu0 %v495
    %730 = vmatpush1.bf16.msra.mxu0 %v494
    %731 = vmatprep.subr.bf16.mxu0 %v501
    %732 = vmatpush1.bf16.msra.mxu0 %v500
    %733 = vmatprep.subr.bf16.mxu0 %v507
    %734 = vmatpush1.bf16.msra.mxu0 %v506
    %735 = vmatprep.subr.bf16.mxu0 %v513
    %736 = vmatpush1.bf16.msra.mxu0 %v512
    %737 = vmatprep.subr.bf16.mxu0 %v519
    %738 = vmatpush1.bf16.msra.mxu0 %v518
    %739 = vmatprep.subr.bf16.mxu0 %v525
    %740 = vmatpush1.bf16.msra.mxu0 %v524
    %741 = vmatprep.subr.bf16.mxu0 %v531
    %742 = vmatpush1.bf16.msra.mxu0 %v530
    %743 = vmatprep.subr.bf16.mxu0 %v537
    %744 = vmatpush1.bf16.msra.mxu0 %v536
    %745 = vmatprep.subr.bf16.mxu0 %v543
    %746 = vmatpush1.bf16.msra.mxu0 %v542
    %747 = vmatprep.subr.bf16.mxu0 %v549
    %748 = vmatpush1.bf16.msra.mxu0 %v548
    %749 = vmatprep.subr.bf16.mxu0 %v555
    %750 = vmatpush1.bf16.msra.mxu0 %v554
    %751 = vmatprep.subr.bf16.mxu0 %v561
    %752 = vmatpush1.bf16.msra.mxu0 %v560
    %753 = vmatprep.subr.bf16.mxu0 %v567
    %754 = vmatpush1.bf16.msra.mxu0 %v566
    %755 = vmatprep.subr.bf16.mxu0 %v573
    %756 = vmatpush1.bf16.msra.mxu0 %v572
    %757 = vmatprep.mubr.bf16.mxu0 %v61
    %758 = vmatmul.mubr.bf16.gmra.mrb[0].mxu0 %v60
    %v759 = vpop.f32.mrb[0].mxu0
    %v760 = vadd.f32 %v173, %v759
    %v761 = vpop.f32.mrb[0].mxu0
    %v762 = vadd.f32 %v177, %v761
    %v763 = vpop.f32.mrb[0].mxu0
    %v764 = vadd.f32 %v173, %v763
    %v765 = vpop.f32.mrb[0].mxu0
    %v766 = vadd.f32 %v177, %v765
    %767 = vmatprep.mubr.bf16.mxu0 %v63
    %768 = vmatmul.mubr.bf16.gmra.mrb[0].mxu0 %v62
    %v769 = vpop.f32.mrb[0].mxu0
    %v770 = vadd.f32 %v173, %v769
    %v771 = vpop.f32.mrb[0].mxu0
    %v772 = vadd.f32 %v177, %v771
    %v773 = vpop.f32.mrb[0].mxu0
    %v774 = vadd.f32 %v173, %v773
    %v775 = vpop.f32.mrb[0].mxu0
    %v776 = vadd.f32 %v177, %v775
    %777 = vdwg.mxu0
    %778 = vmatprep.subr.bf16.mxu0 %v485
    %779 = vmatpush1.bf16.msra.mxu0 %v484
    %780 = vmatprep.subr.bf16.mxu0 %v491
    %781 = vmatpush1.bf16.msra.mxu0 %v490
    %782 = vmatprep.subr.bf16.mxu0 %v497
    %783 = vmatpush1.bf16.msra.mxu0 %v496
    %784 = vmatprep.subr.bf16.mxu0 %v503
    %785 = vmatpush1.bf16.msra.mxu0 %v502
    %786 = vmatprep.subr.bf16.mxu0 %v509
    %787 = vmatpush1.bf16.msra.mxu0 %v508
    %788 = vmatprep.subr.bf16.mxu0 %v515
    %789 = vmatpush1.bf16.msra.mxu0 %v514
    %790 = vmatprep.subr.bf16.mxu0 %v521
    %791 = vmatpush1.bf16.msra.mxu0 %v520
    %792 = vmatprep.subr.bf16.mxu0 %v527
    %793 = vmatpush1.bf16.msra.mxu0 %v526
    %794 = vmatprep.subr.bf16.mxu0 %v533
    %795 = vmatpush1.bf16.msra.mxu0 %v532
    %796 = vmatprep.subr.bf16.mxu0 %v539
    %797 = vmatpush1.bf16.msra.mxu0 %v538
    %798 = vmatprep.subr.bf16.mxu0 %v545
    %799 = vmatpush1.bf16.msra.mxu0 %v544
    %800 = vmatprep.subr.bf16.mxu0 %v551
    %801 = vmatpush1.bf16.msra.mxu0 %v550
    %802 = vmatprep.subr.bf16.mxu0 %v557
    %803 = vmatpush1.bf16.msra.mxu0 %v556
    %804 = vmatprep.subr.bf16.mxu0 %v563
    %805 = vmatpush1.bf16.msra.mxu0 %v562
    %806 = vmatprep.subr.bf16.mxu0 %v569
    %807 = vmatpush1.bf16.msra.mxu0 %v568
    %808 = vmatprep.subr.bf16.mxu0 %v575
    %809 = vmatpush1.bf16.msra.mxu0 %v574
    %810 = vmatprep.mubr.bf16.mxu0 %v61
    %811 = vmatmul.mubr.bf16.gmra.mrb[0].mxu0 %v60
    %v812 = vpop.f32.mrb[0].mxu0
    %v813 = vadd.f32 %v181, %v812
    %v814 = vpop.f32.mrb[0].mxu0
    %v815 = vadd.f32 %v185, %v814
    %v816 = vpop.f32.mrb[0].mxu0
    %v817 = vadd.f32 %v181, %v816
    %v818 = vpop.f32.mrb[0].mxu0
    %v819 = vadd.f32 %v185, %v818
    %820 = vmatprep.mubr.bf16.mxu0 %v63
    %821 = vmatmul.mubr.bf16.gmra.mrb[0].mxu0 %v62
    %v822 = vpop.f32.mrb[0].mxu0
    %v823 = vadd.f32 %v181, %v822
    %v824 = vpop.f32.mrb[0].mxu0
    %v825 = vadd.f32 %v185, %v824
    %v826 = vpop.f32.mrb[0].mxu0
    %v827 = vadd.f32 %v181, %v826
    %v828 = vpop.f32.mrb[0].mxu0
    %v829 = vadd.f32 %v185, %v828
    %830 = vdwg.mxu0
    %v831 = vld [vmem:[#allocation3] sm:$0xff]
    %v832 = vld [vmem:[#allocation3 + $0x8] sm:$0xff]
    %v833 = vld [vmem:[#allocation3 + $0x10] sm:$0xff]
    %v834 = vld [vmem:[#allocation3 + $0x18] sm:$0xff]
    %v835 = vld [vmem:[#allocation3 + $0x20] sm:$0xff]
    %v836 = vld [vmem:[#allocation3 + $0x28] sm:$0xff]
    %v837 = vld [vmem:[#allocation3 + $0x30] sm:$0xff]
    %v838 = vld [vmem:[#allocation3 + $0x38] sm:$0xff]
    %v839 = vld [vmem:[#allocation3 + $0x40] sm:$0xff]
    %v840 = vld [vmem:[#allocation3 + $0x48] sm:$0xff]
    %v841 = vld [vmem:[#allocation3 + $0x50] sm:$0xff]
    %v842 = vld [vmem:[#allocation3 + $0x58] sm:$0xff]
    %v843 = vld [vmem:[#allocation3 + $0x60] sm:$0xff]
    %v844 = vld [vmem:[#allocation3 + $0x68] sm:$0xff]
    %v845 = vld [vmem:[#allocation3 + $0x70] sm:$0xff]
    %v846 = vld [vmem:[#allocation3 + $0x78] sm:$0xff]
    %v847 = vld [vmem:[#allocation3 + $0x80] sm:$0xff]
    %v848 = vld [vmem:[#allocation3 + $0x88] sm:$0xff]
    %v849 = vld [vmem:[#allocation3 + $0x90] sm:$0xff]
    %v850 = vld [vmem:[#allocation3 + $0x98] sm:$0xff]
    %v851 = vld [vmem:[#allocation3 + $0xa0] sm:$0xff]
    %v852 = vld [vmem:[#allocation3 + $0xa8] sm:$0xff]
    %v853 = vld [vmem:[#allocation3 + $0xb0] sm:$0xff]
    %v854 = vld [vmem:[#allocation3 + $0xb8] sm:$0xff]
    %v855 = vld [vmem:[#allocation3 + $0xc0] sm:$0xff]
    %v856 = vld [vmem:[#allocation3 + $0xc8] sm:$0xff]
    %v857 = vld [vmem:[#allocation3 + $0xd0] sm:$0xff]
    %v858 = vld [vmem:[#allocation3 + $0xd8] sm:$0xff]
    %v859 = vld [vmem:[#allocation3 + $0xe0] sm:$0xff]
    %v860 = vld [vmem:[#allocation3 + $0xe8] sm:$0xff]
    %v861 = vld [vmem:[#allocation3 + $0xf0] sm:$0xff]
    %v862 = vld [vmem:[#allocation3 + $0xf8] sm:$0xff]
    %v863 = vld [vmem:[#allocation3 + $0x100] sm:$0xff]
    %v864 = vld [vmem:[#allocation3 + $0x108] sm:$0xff]
    %v865 = vld [vmem:[#allocation3 + $0x110] sm:$0xff]
    %v866 = vld [vmem:[#allocation3 + $0x118] sm:$0xff]
    %v867 = vld [vmem:[#allocation3 + $0x120] sm:$0xff]
    %v868 = vld [vmem:[#allocation3 + $0x128] sm:$0xff]
    %v869 = vld [vmem:[#allocation3 + $0x130] sm:$0xff]
    %v870 = vld [vmem:[#allocation3 + $0x138] sm:$0xff]
    %v871 = vld [vmem:[#allocation3 + $0x140] sm:$0xff]
    %v872 = vld [vmem:[#allocation3 + $0x148] sm:$0xff]
    %v873 = vld [vmem:[#allocation3 + $0x150] sm:$0xff]
    %v874 = vld [vmem:[#allocation3 + $0x158] sm:$0xff]
    %v875 = vld [vmem:[#allocation3 + $0x160] sm:$0xff]
    %v876 = vld [vmem:[#allocation3 + $0x168] sm:$0xff]
    %v877 = vld [vmem:[#allocation3 + $0x170] sm:$0xff]
    %v878 = vld [vmem:[#allocation3 + $0x178] sm:$0xff]
    %v879 = vld [vmem:[#allocation3 + $0x180] sm:$0xff]
    %v880 = vld [vmem:[#allocation3 + $0x188] sm:$0xff]
    %v881 = vld [vmem:[#allocation3 + $0x190] sm:$0xff]
    %v882 = vld [vmem:[#allocation3 + $0x198] sm:$0xff]
    %v883 = vld [vmem:[#allocation3 + $0x1a0] sm:$0xff]
    %v884 = vld [vmem:[#allocation3 + $0x1a8] sm:$0xff]
    %v885 = vld [vmem:[#allocation3 + $0x1b0] sm:$0xff]
    %v886 = vld [vmem:[#allocation3 + $0x1b8] sm:$0xff]
    %v887 = vld [vmem:[#allocation3 + $0x1c0] sm:$0xff]
    %v888 = vld [vmem:[#allocation3 + $0x1c8] sm:$0xff]
    %v889 = vld [vmem:[#allocation3 + $0x1d0] sm:$0xff]
    %v890 = vld [vmem:[#allocation3 + $0x1d8] sm:$0xff]
    %v891 = vld [vmem:[#allocation3 + $0x1e0] sm:$0xff]
    %v892 = vld [vmem:[#allocation3 + $0x1e8] sm:$0xff]
    %v893 = vld [vmem:[#allocation3 + $0x1f0] sm:$0xff]
    %v894 = vld [vmem:[#allocation3 + $0x1f8] sm:$0xff]
    %v895 = vld [vmem:[#allocation3 + $0x200] sm:$0xff]
    %v896 = vld [vmem:[#allocation3 + $0x208] sm:$0xff]
    %v897 = vld [vmem:[#allocation3 + $0x210] sm:$0xff]
    %v898 = vld [vmem:[#allocation3 + $0x218] sm:$0xff]
    %v899 = vld [vmem:[#allocation3 + $0x220] sm:$0xff]
    %v900 = vld [vmem:[#allocation3 + $0x228] sm:$0xff]
    %v901 = vld [vmem:[#allocation3 + $0x230] sm:$0xff]
    %v902 = vld [vmem:[#allocation3 + $0x238] sm:$0xff]
    %v903 = vld [vmem:[#allocation3 + $0x240] sm:$0xff]
    %v904 = vld [vmem:[#allocation3 + $0x248] sm:$0xff]
    %v905 = vld [vmem:[#allocation3 + $0x250] sm:$0xff]
    %v906 = vld [vmem:[#allocation3 + $0x258] sm:$0xff]
    %v907 = vld [vmem:[#allocation3 + $0x260] sm:$0xff]
    %v908 = vld [vmem:[#allocation3 + $0x268] sm:$0xff]
    %v909 = vld [vmem:[#allocation3 + $0x270] sm:$0xff]
    %v910 = vld [vmem:[#allocation3 + $0x278] sm:$0xff]
    %v911 = vld [vmem:[#allocation3 + $0x280] sm:$0xff]
    %v912 = vld [vmem:[#allocation3 + $0x288] sm:$0xff]
    %v913 = vld [vmem:[#allocation3 + $0x290] sm:$0xff]
    %v914 = vld [vmem:[#allocation3 + $0x298] sm:$0xff]
    %v915 = vld [vmem:[#allocation3 + $0x2a0] sm:$0xff]
    %v916 = vld [vmem:[#allocation3 + $0x2a8] sm:$0xff]
    %v917 = vld [vmem:[#allocation3 + $0x2b0] sm:$0xff]
    %v918 = vld [vmem:[#allocation3 + $0x2b8] sm:$0xff]
    %v919 = vld [vmem:[#allocation3 + $0x2c0] sm:$0xff]
    %v920 = vld [vmem:[#allocation3 + $0x2c8] sm:$0xff]
    %v921 = vld [vmem:[#allocation3 + $0x2d0] sm:$0xff]
    %v922 = vld [vmem:[#allocation3 + $0x2d8] sm:$0xff]
    %v923 = vld [vmem:[#allocation3 + $0x2e0] sm:$0xff]
    %v924 = vld [vmem:[#allocation3 + $0x2e8] sm:$0xff]
    %v925 = vld [vmem:[#allocation3 + $0x2f0] sm:$0xff]
    %v926 = vld [vmem:[#allocation3 + $0x2f8] sm:$0xff]
    %v927 = vld [vmem:[#allocation5] sm:$0x3f]
    %v928 = vld [vmem:[#allocation2] sm:$0xff]
    %v929 = vld [vmem:[#allocation2 + $0x8] sm:$0xff]
    %v930 = vpack.c.bf16 %v928, %v928
    %v931 = vpack.c.bf16 %v929, %v929
    %v933 = vlaneseq
    %v934 = vshrl.u32 %v933, 7
    %v935 = vsub.s32 0, %v934
    %v936 = vrot.slane %v927, %v935
    %v937 = vlaneseq
    %v938 = vshrl.u32 %v937, 7
    %v939 = vsub.s32 1, %v938
    %v940 = vrot.slane %v927, %v939
    %v941 = vlaneseq
    %v942 = vshrl.u32 %v941, 7
    %v943 = vsub.s32 2, %v942
    %v944 = vrot.slane %v927, %v943
    %v945 = vlaneseq
    %v946 = vshrl.u32 %v945, 7
    %v947 = vsub.s32 3, %v946
    %v948 = vrot.slane %v927, %v947
    %v949 = vlaneseq
    %v950 = vshrl.u32 %v949, 7
    %v951 = vsub.s32 4, %v950
    %v952 = vrot.slane %v927, %v951
    %v953 = vlaneseq
    %v954 = vshrl.u32 %v953, 7
    %v955 = vsub.s32 5, %v954
    %v956 = vrot.slane %v927, %v955
    %v1059 = vunpack.c.l.b16 %v831
    %v1060 = vunpack.c.h.b16 %v831
    %v1061 = vunpack.c.l.b16 %v832
    %v1062 = vunpack.c.h.b16 %v832
    %v1063 = vunpack.c.l.b16 %v833
    %v1064 = vunpack.c.h.b16 %v833
    %v1065 = vunpack.c.l.b16 %v834
    %v1066 = vunpack.c.h.b16 %v834
    %v1067 = vunpack.c.l.b16 %v835
    %v1068 = vunpack.c.h.b16 %v835
    %v1069 = vunpack.c.l.b16 %v836
    %v1070 = vunpack.c.h.b16 %v836
    %v1071 = vunpack.c.l.b16 %v837
    %v1072 = vunpack.c.h.b16 %v837
    %v1073 = vunpack.c.l.b16 %v838
    %v1074 = vunpack.c.h.b16 %v838
    %v1075 = vunpack.c.l.b16 %v839
    %v1076 = vunpack.c.h.b16 %v839
    %v1077 = vunpack.c.l.b16 %v840
    %v1078 = vunpack.c.h.b16 %v840
    %v1079 = vunpack.c.l.b16 %v841
    %v1080 = vunpack.c.h.b16 %v841
    %v1081 = vunpack.c.l.b16 %v842
    %v1082 = vunpack.c.h.b16 %v842
    %v1083 = vunpack.c.l.b16 %v843
    %v1084 = vunpack.c.h.b16 %v843
    %v1085 = vunpack.c.l.b16 %v844
    %v1086 = vunpack.c.h.b16 %v844
    %v1087 = vunpack.c.l.b16 %v845
    %v1088 = vunpack.c.h.b16 %v845
    %v1089 = vunpack.c.l.b16 %v846
    %v1090 = vunpack.c.h.b16 %v846
    %v1091 = vunpack.c.l.b16 %v847
    %v1092 = vunpack.c.h.b16 %v847
    %v1093 = vunpack.c.l.b16 %v848
    %v1094 = vunpack.c.h.b16 %v848
    %v1095 = vunpack.c.l.b16 %v849
    %v1096 = vunpack.c.h.b16 %v849
    %v1097 = vunpack.c.l.b16 %v850
    %v1098 = vunpack.c.h.b16 %v850
    %v1099 = vunpack.c.l.b16 %v851
    %v1100 = vunpack.c.h.b16 %v851
    %v1101 = vunpack.c.l.b16 %v852
    %v1102 = vunpack.c.h.b16 %v852
    %v1103 = vunpack.c.l.b16 %v853
    %v1104 = vunpack.c.h.b16 %v853
    %v1105 = vunpack.c.l.b16 %v854
    %v1106 = vunpack.c.h.b16 %v854
    %v1107 = vunpack.c.l.b16 %v855
    %v1108 = vunpack.c.h.b16 %v855
    %v1109 = vunpack.c.l.b16 %v856
    %v1110 = vunpack.c.h.b16 %v856
    %v1111 = vunpack.c.l.b16 %v857
    %v1112 = vunpack.c.h.b16 %v857
    %v1113 = vunpack.c.l.b16 %v858
    %v1114 = vunpack.c.h.b16 %v858
    %v1115 = vunpack.c.l.b16 %v859
    %v1116 = vunpack.c.h.b16 %v859
    %v1117 = vunpack.c.l.b16 %v860
    %v1118 = vunpack.c.h.b16 %v860
    %v1119 = vunpack.c.l.b16 %v861
    %v1120 = vunpack.c.h.b16 %v861
    %v1121 = vunpack.c.l.b16 %v862
    %v1122 = vunpack.c.h.b16 %v862
    %v1123 = vunpack.c.l.b16 %v863
    %v1124 = vunpack.c.h.b16 %v863
    %v1125 = vunpack.c.l.b16 %v864
    %v1126 = vunpack.c.h.b16 %v864
    %v1127 = vunpack.c.l.b16 %v865
    %v1128 = vunpack.c.h.b16 %v865
    %v1129 = vunpack.c.l.b16 %v866
    %v1130 = vunpack.c.h.b16 %v866
    %v1131 = vunpack.c.l.b16 %v867
    %v1132 = vunpack.c.h.b16 %v867
    %v1133 = vunpack.c.l.b16 %v868
    %v1134 = vunpack.c.h.b16 %v868
    %v1135 = vunpack.c.l.b16 %v869
    %v1136 = vunpack.c.h.b16 %v869
    %v1137 = vunpack.c.l.b16 %v870
    %v1138 = vunpack.c.h.b16 %v870
    %v1139 = vunpack.c.l.b16 %v871
    %v1140 = vunpack.c.h.b16 %v871
    %v1141 = vunpack.c.l.b16 %v872
    %v1142 = vunpack.c.h.b16 %v872
    %v1143 = vunpack.c.l.b16 %v873
    %v1144 = vunpack.c.h.b16 %v873
    %v1145 = vunpack.c.l.b16 %v874
    %v1146 = vunpack.c.h.b16 %v874
    %v1147 = vunpack.c.l.b16 %v875
    %v1148 = vunpack.c.h.b16 %v875
    %v1149 = vunpack.c.l.b16 %v876
    %v1150 = vunpack.c.h.b16 %v876
    %v1151 = vunpack.c.l.b16 %v877
    %v1152 = vunpack.c.h.b16 %v877
    %v1153 = vunpack.c.l.b16 %v878
    %v1154 = vunpack.c.h.b16 %v878
    %v1155 = vunpack.c.l.b16 %v879
    %v1156 = vunpack.c.h.b16 %v879
    %v1157 = vunpack.c.l.b16 %v880
    %v1158 = vunpack.c.h.b16 %v880
    %v1159 = vunpack.c.l.b16 %v881
    %v1160 = vunpack.c.h.b16 %v881
    %v1161 = vunpack.c.l.b16 %v882
    %v1162 = vunpack.c.h.b16 %v882
    %v1163 = vunpack.c.l.b16 %v883
    %v1164 = vunpack.c.h.b16 %v883
    %v1165 = vunpack.c.l.b16 %v884
    %v1166 = vunpack.c.h.b16 %v884
    %v1167 = vunpack.c.l.b16 %v885
    %v1168 = vunpack.c.h.b16 %v885
    %v1169 = vunpack.c.l.b16 %v886
    %v1170 = vunpack.c.h.b16 %v886
    %v1171 = vunpack.c.l.b16 %v887
    %v1172 = vunpack.c.h.b16 %v887
    %v1173 = vunpack.c.l.b16 %v888
    %v1174 = vunpack.c.h.b16 %v888
    %v1175 = vunpack.c.l.b16 %v889
    %v1176 = vunpack.c.h.b16 %v889
    %v1177 = vunpack.c.l.b16 %v890
    %v1178 = vunpack.c.h.b16 %v890
    %v1179 = vunpack.c.l.b16 %v891
    %v1180 = vunpack.c.h.b16 %v891
    %v1181 = vunpack.c.l.b16 %v892
    %v1182 = vunpack.c.h.b16 %v892
    %v1183 = vunpack.c.l.b16 %v893
    %v1184 = vunpack.c.h.b16 %v893
    %v1185 = vunpack.c.l.b16 %v894
    %v1186 = vunpack.c.h.b16 %v894
    %v1187 = vunpack.c.l.b16 %v895
    %v1188 = vunpack.c.h.b16 %v895
    %v1189 = vunpack.c.l.b16 %v896
    %v1190 = vunpack.c.h.b16 %v896
    %v1191 = vunpack.c.l.b16 %v897
    %v1192 = vunpack.c.h.b16 %v897
    %v1193 = vunpack.c.l.b16 %v898
    %v1194 = vunpack.c.h.b16 %v898
    %v1195 = vunpack.c.l.b16 %v899
    %v1196 = vunpack.c.h.b16 %v899
    %v1197 = vunpack.c.l.b16 %v900
    %v1198 = vunpack.c.h.b16 %v900
    %v1199 = vunpack.c.l.b16 %v901
    %v1200 = vunpack.c.h.b16 %v901
    %v1201 = vunpack.c.l.b16 %v902
    %v1202 = vunpack.c.h.b16 %v902
    %v1203 = vunpack.c.l.b16 %v903
    %v1204 = vunpack.c.h.b16 %v903
    %v1205 = vunpack.c.l.b16 %v904
    %v1206 = vunpack.c.h.b16 %v904
    %v1207 = vunpack.c.l.b16 %v905
    %v1208 = vunpack.c.h.b16 %v905
    %v1209 = vunpack.c.l.b16 %v906
    %v1210 = vunpack.c.h.b16 %v906
    %v1211 = vunpack.c.l.b16 %v907
    %v1212 = vunpack.c.h.b16 %v907
    %v1213 = vunpack.c.l.b16 %v908
    %v1214 = vunpack.c.h.b16 %v908
    %v1215 = vunpack.c.l.b16 %v909
    %v1216 = vunpack.c.h.b16 %v909
    %v1217 = vunpack.c.l.b16 %v910
    %v1218 = vunpack.c.h.b16 %v910
    %v1219 = vunpack.c.l.b16 %v911
    %v1220 = vunpack.c.h.b16 %v911
    %v1221 = vunpack.c.l.b16 %v912
    %v1222 = vunpack.c.h.b16 %v912
    %v1223 = vunpack.c.l.b16 %v913
    %v1224 = vunpack.c.h.b16 %v913
    %v1225 = vunpack.c.l.b16 %v914
    %v1226 = vunpack.c.h.b16 %v914
    %v1227 = vunpack.c.l.b16 %v915
    %v1228 = vunpack.c.h.b16 %v915
    %v1229 = vunpack.c.l.b16 %v916
    %v1230 = vunpack.c.h.b16 %v916
    %v1231 = vunpack.c.l.b16 %v917
    %v1232 = vunpack.c.h.b16 %v917
    %v1233 = vunpack.c.l.b16 %v918
    %v1234 = vunpack.c.h.b16 %v918
    %v1235 = vunpack.c.l.b16 %v919
    %v1236 = vunpack.c.h.b16 %v919
    %v1237 = vunpack.c.l.b16 %v920
    %v1238 = vunpack.c.h.b16 %v920
    %v1239 = vunpack.c.l.b16 %v921
    %v1240 = vunpack.c.h.b16 %v921
    %v1241 = vunpack.c.l.b16 %v922
    %v1242 = vunpack.c.h.b16 %v922
    %v1243 = vunpack.c.l.b16 %v923
    %v1244 = vunpack.c.h.b16 %v923
    %v1245 = vunpack.c.l.b16 %v924
    %v1246 = vunpack.c.h.b16 %v924
    %v1247 = vunpack.c.l.b16 %v925
    %v1248 = vunpack.c.h.b16 %v925
    %v1249 = vunpack.c.l.b16 %v926
    %v1250 = vunpack.c.h.b16 %v926
    %v1251 = vpack.c.b16 %v1065, %v1059
    %v1252 = vpack.c.b16 %v1066, %v1060
    %v1253 = vpack.c.b16 %v1067, %v1061
    %v1254 = vpack.c.b16 %v1068, %v1062
    %v1255 = vpack.c.b16 %v1069, %v1063
    %v1256 = vpack.c.b16 %v1070, %v1064
    %v1257 = vpack.c.b16 %v1077, %v1071
    %v1258 = vpack.c.b16 %v1078, %v1072
    %v1259 = vpack.c.b16 %v1079, %v1073
    %v1260 = vpack.c.b16 %v1080, %v1074
    %v1261 = vpack.c.b16 %v1081, %v1075
    %v1262 = vpack.c.b16 %v1082, %v1076
    %v1263 = vpack.c.b16 %v1089, %v1083
    %v1264 = vpack.c.b16 %v1090, %v1084
    %v1265 = vpack.c.b16 %v1091, %v1085
    %v1266 = vpack.c.b16 %v1092, %v1086
    %v1267 = vpack.c.b16 %v1093, %v1087
    %v1268 = vpack.c.b16 %v1094, %v1088
    %v1269 = vpack.c.b16 %v1101, %v1095
    %v1270 = vpack.c.b16 %v1102, %v1096
    %v1271 = vpack.c.b16 %v1103, %v1097
    %v1272 = vpack.c.b16 %v1104, %v1098
    %v1273 = vpack.c.b16 %v1105, %v1099
    %v1274 = vpack.c.b16 %v1106, %v1100
    %v1275 = vpack.c.b16 %v1113, %v1107
    %v1276 = vpack.c.b16 %v1114, %v1108
    %v1277 = vpack.c.b16 %v1115, %v1109
    %v1278 = vpack.c.b16 %v1116, %v1110
    %v1279 = vpack.c.b16 %v1117, %v1111
    %v1280 = vpack.c.b16 %v1118, %v1112
    %v1281 = vpack.c.b16 %v1125, %v1119
    %v1282 = vpack.c.b16 %v1126, %v1120
    %v1283 = vpack.c.b16 %v1127, %v1121
    %v1284 = vpack.c.b16 %v1128, %v1122
    %v1285 = vpack.c.b16 %v1129, %v1123
    %v1286 = vpack.c.b16 %v1130, %v1124
    %v1287 = vpack.c.b16 %v1137, %v1131
    %v1288 = vpack.c.b16 %v1138, %v1132
    %v1289 = vpack.c.b16 %v1139, %v1133
    %v1290 = vpack.c.b16 %v1140, %v1134
    %v1291 = vpack.c.b16 %v1141, %v1135
    %v1292 = vpack.c.b16 %v1142, %v1136
    %v1293 = vpack.c.b16 %v1149, %v1143
    %v1294 = vpack.c.b16 %v1150, %v1144
    %v1295 = vpack.c.b16 %v1151, %v1145
    %v1296 = vpack.c.b16 %v1152, %v1146
    %v1297 = vpack.c.b16 %v1153, %v1147
    %v1298 = vpack.c.b16 %v1154, %v1148
    %v1299 = vpack.c.b16 %v1161, %v1155
    %v1300 = vpack.c.b16 %v1162, %v1156
    %v1301 = vpack.c.b16 %v1163, %v1157
    %v1302 = vpack.c.b16 %v1164, %v1158
    %v1303 = vpack.c.b16 %v1165, %v1159
    %v1304 = vpack.c.b16 %v1166, %v1160
    %v1305 = vpack.c.b16 %v1173, %v1167
    %v1306 = vpack.c.b16 %v1174, %v1168
    %v1307 = vpack.c.b16 %v1175, %v1169
    %v1308 = vpack.c.b16 %v1176, %v1170
    %v1309 = vpack.c.b16 %v1177, %v1171
    %v1310 = vpack.c.b16 %v1178, %v1172
    %v1311 = vpack.c.b16 %v1185, %v1179
    %v1312 = vpack.c.b16 %v1186, %v1180
    %v1313 = vpack.c.b16 %v1187, %v1181
    %v1314 = vpack.c.b16 %v1188, %v1182
    %v1315 = vpack.c.b16 %v1189, %v1183
    %v1316 = vpack.c.b16 %v1190, %v1184
    %v1317 = vpack.c.b16 %v1197, %v1191
    %v1318 = vpack.c.b16 %v1198, %v1192
    %v1319 = vpack.c.b16 %v1199, %v1193
    %v1320 = vpack.c.b16 %v1200, %v1194
    %v1321 = vpack.c.b16 %v1201, %v1195
    %v1322 = vpack.c.b16 %v1202, %v1196
    %v1323 = vpack.c.b16 %v1209, %v1203
    %v1324 = vpack.c.b16 %v1210, %v1204
    %v1325 = vpack.c.b16 %v1211, %v1205
    %v1326 = vpack.c.b16 %v1212, %v1206
    %v1327 = vpack.c.b16 %v1213, %v1207
    %v1328 = vpack.c.b16 %v1214, %v1208
    %v1329 = vpack.c.b16 %v1221, %v1215
    %v1330 = vpack.c.b16 %v1222, %v1216
    %v1331 = vpack.c.b16 %v1223, %v1217
    %v1332 = vpack.c.b16 %v1224, %v1218
    %v1333 = vpack.c.b16 %v1225, %v1219
    %v1334 = vpack.c.b16 %v1226, %v1220
    %v1335 = vpack.c.b16 %v1233, %v1227
    %v1336 = vpack.c.b16 %v1234, %v1228
    %v1337 = vpack.c.b16 %v1235, %v1229
    %v1338 = vpack.c.b16 %v1236, %v1230
    %v1339 = vpack.c.b16 %v1237, %v1231
    %v1340 = vpack.c.b16 %v1238, %v1232
    %v1341 = vpack.c.b16 %v1245, %v1239
    %v1342 = vpack.c.b16 %v1246, %v1240
    %v1343 = vpack.c.b16 %v1247, %v1241
    %v1344 = vpack.c.b16 %v1248, %v1242
    %v1345 = vpack.c.b16 %v1249, %v1243
    %v1346 = vpack.c.b16 %v1250, %v1244
    %1443 = vmatprep.subr.bf16.mxu0 %v1252
    %1444 = vmatpush1.bf16.msra.mxu0 %v1251
    %1445 = vmatprep.subr.bf16.mxu0 %v1258
    %1446 = vmatpush1.bf16.msra.mxu0 %v1257
    %1447 = vmatprep.subr.bf16.mxu0 %v1264
    %1448 = vmatpush1.bf16.msra.mxu0 %v1263
    %1449 = vmatprep.subr.bf16.mxu0 %v1270
    %1450 = vmatpush1.bf16.msra.mxu0 %v1269
    %1451 = vmatprep.subr.bf16.mxu0 %v1276
    %1452 = vmatpush1.bf16.msra.mxu0 %v1275
    %1453 = vmatprep.subr.bf16.mxu0 %v1282
    %1454 = vmatpush1.bf16.msra.mxu0 %v1281
    %1455 = vmatprep.subr.bf16.mxu0 %v1288
    %1456 = vmatpush1.bf16.msra.mxu0 %v1287
    %1457 = vmatprep.subr.bf16.mxu0 %v1294
    %1458 = vmatpush1.bf16.msra.mxu0 %v1293
    %1459 = vmatprep.subr.bf16.mxu0 %v1300
    %1460 = vmatpush1.bf16.msra.mxu0 %v1299
    %1461 = vmatprep.subr.bf16.mxu0 %v1306
    %1462 = vmatpush1.bf16.msra.mxu0 %v1305
    %1463 = vmatprep.subr.bf16.mxu0 %v1312
    %1464 = vmatpush1.bf16.msra.mxu0 %v1311
    %1465 = vmatprep.subr.bf16.mxu0 %v1318
    %1466 = vmatpush1.bf16.msra.mxu0 %v1317
    %1467 = vmatprep.subr.bf16.mxu0 %v1324
    %1468 = vmatpush1.bf16.msra.mxu0 %v1323
    %1469 = vmatprep.subr.bf16.mxu0 %v1330
    %1470 = vmatpush1.bf16.msra.mxu0 %v1329
    %1471 = vmatprep.subr.bf16.mxu0 %v1336
    %1472 = vmatpush1.bf16.msra.mxu0 %v1335
    %1473 = vmatprep.subr.bf16.mxu0 %v1342
    %1474 = vmatpush1.bf16.msra.mxu0 %v1341
    %1475 = vmatprep.mubr.bf16.mxu0 %v931
    %1476 = vmatmul.mubr.bf16.gmra.mrb[0].mxu0 %v930
    %v1477 = vpop.f32.mrb[0].mxu0
    %v1478 = vadd.f32 %v936, %v1477
    %v1479 = vpop.f32.mrb[0].mxu0
    %v1480 = vadd.f32 %v940, %v1479
    %v1481 = vpop.f32.mrb[0].mxu0
    %v1482 = vpop.f32.mrb[0].mxu0
    %1483 = vdwg.mxu0
    %1484 = vmatprep.subr.bf16.mxu0 %v1254
    %1485 = vmatpush1.bf16.msra.mxu0 %v1253
    %1486 = vmatprep.subr.bf16.mxu0 %v1260
    %1487 = vmatpush1.bf16.msra.mxu0 %v1259
    %1488 = vmatprep.subr.bf16.mxu0 %v1266
    %1489 = vmatpush1.bf16.msra.mxu0 %v1265
    %1490 = vmatprep.subr.bf16.mxu0 %v1272
    %1491 = vmatpush1.bf16.msra.mxu0 %v1271
    %1492 = vmatprep.subr.bf16.mxu0 %v1278
    %1493 = vmatpush1.bf16.msra.mxu0 %v1277
    %1494 = vmatprep.subr.bf16.mxu0 %v1284
    %1495 = vmatpush1.bf16.msra.mxu0 %v1283
    %1496 = vmatprep.subr.bf16.mxu0 %v1290
    %1497 = vmatpush1.bf16.msra.mxu0 %v1289
    %1498 = vmatprep.subr.bf16.mxu0 %v1296
    %1499 = vmatpush1.bf16.msra.mxu0 %v1295
    %1500 = vmatprep.subr.bf16.mxu0 %v1302
    %1501 = vmatpush1.bf16.msra.mxu0 %v1301
    %1502 = vmatprep.subr.bf16.mxu0 %v1308
    %1503 = vmatpush1.bf16.msra.mxu0 %v1307
    %1504 = vmatprep.subr.bf16.mxu0 %v1314
    %1505 = vmatpush1.bf16.msra.mxu0 %v1313
    %1506 = vmatprep.subr.bf16.mxu0 %v1320
    %1507 = vmatpush1.bf16.msra.mxu0 %v1319
    %1508 = vmatprep.subr.bf16.mxu0 %v1326
    %1509 = vmatpush1.bf16.msra.mxu0 %v1325
    %1510 = vmatprep.subr.bf16.mxu0 %v1332
    %1511 = vmatpush1.bf16.msra.mxu0 %v1331
    %1512 = vmatprep.subr.bf16.mxu0 %v1338
    %1513 = vmatpush1.bf16.msra.mxu0 %v1337
    %1514 = vmatprep.subr.bf16.mxu0 %v1344
    %1515 = vmatpush1.bf16.msra.mxu0 %v1343
    %1516 = vmatprep.mubr.bf16.mxu0 %v931
    %1517 = vmatmul.mubr.bf16.gmra.mrb[0].mxu0 %v930
    %v1518 = vpop.f32.mrb[0].mxu0
    %v1519 = vadd.f32 %v944, %v1518
    %v1520 = vpop.f32.mrb[0].mxu0
    %v1521 = vadd.f32 %v948, %v1520
    %v1522 = vpop.f32.mrb[0].mxu0
    %v1523 = vpop.f32.mrb[0].mxu0
    %1524 = vdwg.mxu0
    %1525 = vmatprep.subr.bf16.mxu0 %v1256
    %1526 = vmatpush1.bf16.msra.mxu0 %v1255
    %1527 = vmatprep.subr.bf16.mxu0 %v1262
    %1528 = vmatpush1.bf16.msra.mxu0 %v1261
    %1529 = vmatprep.subr.bf16.mxu0 %v1268
    %1530 = vmatpush1.bf16.msra.mxu0 %v1267
    %1531 = vmatprep.subr.bf16.mxu0 %v1274
    %1532 = vmatpush1.bf16.msra.mxu0 %v1273
    %1533 = vmatprep.subr.bf16.mxu0 %v1280
    %1534 = vmatpush1.bf16.msra.mxu0 %v1279
    %1535 = vmatprep.subr.bf16.mxu0 %v1286
    %1536 = vmatpush1.bf16.msra.mxu0 %v1285
    %1537 = vmatprep.subr.bf16.mxu0 %v1292
    %1538 = vmatpush1.bf16.msra.mxu0 %v1291
    %1539 = vmatprep.subr.bf16.mxu0 %v1298
    %1540 = vmatpush1.bf16.msra.mxu0 %v1297
    %1541 = vmatprep.subr.bf16.mxu0 %v1304
    %1542 = vmatpush1.bf16.msra.mxu0 %v1303
    %1543 = vmatprep.subr.bf16.mxu0 %v1310
    %1544 = vmatpush1.bf16.msra.mxu0 %v1309
    %1545 = vmatprep.subr.bf16.mxu0 %v1316
    %1546 = vmatpush1.bf16.msra.mxu0 %v1315
    %1547 = vmatprep.subr.bf16.mxu0 %v1322
    %1548 = vmatpush1.bf16.msra.mxu0 %v1321
    %1549 = vmatprep.subr.bf16.mxu0 %v1328
    %1550 = vmatpush1.bf16.msra.mxu0 %v1327
    %1551 = vmatprep.subr.bf16.mxu0 %v1334
    %1552 = vmatpush1.bf16.msra.mxu0 %v1333
    %1553 = vmatprep.subr.bf16.mxu0 %v1340
    %1554 = vmatpush1.bf16.msra.mxu0 %v1339
    %1555 = vmatprep.subr.bf16.mxu0 %v1346
    %1556 = vmatpush1.bf16.msra.mxu0 %v1345
    %1557 = vmatprep.mubr.bf16.mxu0 %v931
    %1558 = vmatmul.mubr.bf16.gmra.mrb[0].mxu0 %v930
    %v1559 = vpop.f32.mrb[0].mxu0
    %v1560 = vadd.f32 %v952, %v1559
    %v1561 = vpop.f32.mrb[0].mxu0
    %v1562 = vadd.f32 %v956, %v1561
    %v1563 = vpop.f32.mrb[0].mxu0
    %v1564 = vpop.f32.mrb[0].mxu0
    %1565 = vdwg.mxu0
    %v1566 = vadd.f32 %v707, %v1478
    %v1567 = vadd.f32 %v709, %v1480
    %v1568 = vxor.u32 %v1566, 2147483648
    %v1569 = vxor.u32 %v1567, 2147483648
    %v1570 = vmul.f32 %v1568, 1.442695
    %v1571 = vpow.pop %v1570
    %v1572 = vmul.f32 %v1569, 1.442695
    %v1573 = vpow.pop %v1572
    %v1574 = vadd.f32 %v1571, 1.0
    %v1575 = vadd.f32 %v1573, 1.0
    %v1576 = vrcp.pop %v1574
    %v1577 = vmul.f32 1.0, %v1576
    %v1578 = vrcp.pop %v1575
    %v1579 = vmul.f32 1.0, %v1578
    %v1580 = vadd.f32 %v760, %v1519
    %v1581 = vadd.f32 %v762, %v1521
    %v1582 = vxor.u32 %v1580, 2147483648
    %v1583 = vxor.u32 %v1581, 2147483648
    %v1584 = vmul.f32 %v1582, 1.442695
    %v1585 = vpow.pop %v1584
    %v1586 = vmul.f32 %v1583, 1.442695
    %v1587 = vpow.pop %v1586
    %v1588 = vadd.f32 %v1585, 1.0
    %v1589 = vadd.f32 %v1587, 1.0
    %v1590 = vrcp.pop %v1588
    %v1591 = vmul.f32 1.0, %v1590
    %v1592 = vrcp.pop %v1589
    %v1593 = vmul.f32 1.0, %v1592
    %v1594 = vmul.f32 %v1577, %v1560
    %v1595 = vmul.f32 %v1579, %v1562
    %v1596 = vadd.f32 %v813, %v1594
    %v1597 = vadd.f32 %v815, %v1595
    %v1598 = vtanh.pop %v1596
    %v1599 = vtanh.pop %v1597
    %v1600 = vsub.f32 1.0, %v1591
    %v1601 = vsub.f32 1.0, %v1593
    %v1602 = vmul.f32 %v1600, %v1598
    %v1603 = vmul.f32 %v1601, %v1599
    %v1604 = vmul.f32 %v1591, %v928
    %v1605 = vmul.f32 %v1593, %v929
    %v1606 = vadd.f32 %v1602, %v1604
    %v1607 = vadd.f32 %v1603, %v1605
    %1608 = vst [vmem:[%s5] sm:$0xff] %v1606
    %1609 = vst [vmem:[%s5 + $0x8] sm:$0xff] %v1607
    %v1610 = vpack.c.bf16 %v1606, %v1606
    %v1611 = vpack.c.bf16 %v1607, %v1607
    %1612 = vmatprep.subr.bf16.mxu0 %v1252
    %1613 = vmatpush1.bf16.msra.mxu0 %v1251
    %1614 = vmatprep.subr.bf16.mxu0 %v1258
    %1615 = vmatpush1.bf16.msra.mxu0 %v1257
    %1616 = vmatprep.subr.bf16.mxu0 %v1264
    %1617 = vmatpush1.bf16.msra.mxu0 %v1263
    %1618 = vmatprep.subr.bf16.mxu0 %v1270
    %1619 = vmatpush1.bf16.msra.mxu0 %v1269
    %1620 = vmatprep.subr.bf16.mxu0 %v1276
    %1621 = vmatpush1.bf16.msra.mxu0 %v1275
    %1622 = vmatprep.subr.bf16.mxu0 %v1282
    %1623 = vmatpush1.bf16.msra.mxu0 %v1281
    %1624 = vmatprep.subr.bf16.mxu0 %v1288
    %1625 = vmatpush1.bf16.msra.mxu0 %v1287
    %1626 = vmatprep.subr.bf16.mxu0 %v1294
    %1627 = vmatpush1.bf16.msra.mxu0 %v1293
    %1628 = vmatprep.subr.bf16.mxu0 %v1300
    %1629 = vmatpush1.bf16.msra.mxu0 %v1299
    %1630 = vmatprep.subr.bf16.mxu0 %v1306
    %1631 = vmatpush1.bf16.msra.mxu0 %v1305
    %1632 = vmatprep.subr.bf16.mxu0 %v1312
    %1633 = vmatpush1.bf16.msra.mxu0 %v1311
    %1634 = vmatprep.subr.bf16.mxu0 %v1318
    %1635 = vmatpush1.bf16.msra.mxu0 %v1317
    %1636 = vmatprep.subr.bf16.mxu0 %v1324
    %1637 = vmatpush1.bf16.msra.mxu0 %v1323
    %1638 = vmatprep.subr.bf16.mxu0 %v1330
    %1639 = vmatpush1.bf16.msra.mxu0 %v1329
    %1640 = vmatprep.subr.bf16.mxu0 %v1336
    %1641 = vmatpush1.bf16.msra.mxu0 %v1335
    %1642 = vmatprep.subr.bf16.mxu0 %v1342
    %1643 = vmatpush1.bf16.msra.mxu0 %v1341
    %1644 = vmatprep.mubr.bf16.mxu0 %v1611
    %1645 = vmatmul.mubr.bf16.gmra.mrb[0].mxu0 %v1610
    %v1646 = vpop.f32.mrb[0].mxu0
    %v1647 = vadd.f32 %v936, %v1646
    %v1648 = vpop.f32.mrb[0].mxu0
    %v1649 = vadd.f32 %v940, %v1648
    %v1650 = vpop.f32.mrb[0].mxu0
    %v1651 = vpop.f32.mrb[0].mxu0
    %1652 = vdwg.mxu0
    %1653 = vmatprep.subr.bf16.mxu0 %v1254
    %1654 = vmatpush1.bf16.msra.mxu0 %v1253
    %1655 = vmatprep.subr.bf16.mxu0 %v1260
    %1656 = vmatpush1.bf16.msra.mxu0 %v1259
    %1657 = vmatprep.subr.bf16.mxu0 %v1266
    %1658 = vmatpush1.bf16.msra.mxu0 %v1265
    %1659 = vmatprep.subr.bf16.mxu0 %v1272
    %1660 = vmatpush1.bf16.msra.mxu0 %v1271
    %1661 = vmatprep.subr.bf16.mxu0 %v1278
    %1662 = vmatpush1.bf16.msra.mxu0 %v1277
    %1663 = vmatprep.subr.bf16.mxu0 %v1284
    %1664 = vmatpush1.bf16.msra.mxu0 %v1283
    %1665 = vmatprep.subr.bf16.mxu0 %v1290
    %1666 = vmatpush1.bf16.msra.mxu0 %v1289
    %1667 = vmatprep.subr.bf16.mxu0 %v1296
    %1668 = vmatpush1.bf16.msra.mxu0 %v1295
    %1669 = vmatprep.subr.bf16.mxu0 %v1302
    %1670 = vmatpush1.bf16.msra.mxu0 %v1301
    %1671 = vmatprep.subr.bf16.mxu0 %v1308
    %1672 = vmatpush1.bf16.msra.mxu0 %v1307
    %1673 = vmatprep.subr.bf16.mxu0 %v1314
    %1674 = vmatpush1.bf16.msra.mxu0 %v1313
    %1675 = vmatprep.subr.bf16.mxu0 %v1320
    %1676 = vmatpush1.bf16.msra.mxu0 %v1319
    %1677 = vmatprep.subr.bf16.mxu0 %v1326
    %1678 = vmatpush1.bf16.msra.mxu0 %v1325
    %1679 = vmatprep.subr.bf16.mxu0 %v1332
    %1680 = vmatpush1.bf16.msra.mxu0 %v1331
    %1681 = vmatprep.subr.bf16.mxu0 %v1338
    %1682 = vmatpush1.bf16.msra.mxu0 %v1337
    %1683 = vmatprep.subr.bf16.mxu0 %v1344
    %1684 = vmatpush1.bf16.msra.mxu0 %v1343
    %1685 = vmatprep.mubr.bf16.mxu0 %v1611
    %1686 = vmatmul.mubr.bf16.gmra.mrb[0].mxu0 %v1610
    %v1687 = vpop.f32.mrb[0].mxu0
    %v1688 = vadd.f32 %v944, %v1687
    %v1689 = vpop.f32.mrb[0].mxu0
    %v1690 = vadd.f32 %v948, %v1689
    %v1691 = vpop.f32.mrb[0].mxu0
    %v1692 = vpop.f32.mrb[0].mxu0
    %1693 = vdwg.mxu0
    %1694 = vmatprep.subr.bf16.mxu0 %v1256
    %1695 = vmatpush1.bf16.msra.mxu0 %v1255
    %1696 = vmatprep.subr.bf16.mxu0 %v1262
    %1697 = vmatpush1.bf16.msra.mxu0 %v1261
    %1698 = vmatprep.subr.bf16.mxu0 %v1268
    %1699 = vmatpush1.bf16.msra.mxu0 %v1267
    %1700 = vmatprep.subr.bf16.mxu0 %v1274
    %1701 = vmatpush1.bf16.msra.mxu0 %v1273
    %1702 = vmatprep.subr.bf16.mxu0 %v1280
    %1703 = vmatpush1.bf16.msra.mxu0 %v1279
    %1704 = vmatprep.subr.bf16.mxu0 %v1286
    %1705 = vmatpush1.bf16.msra.mxu0 %v1285
    %1706 = vmatprep.subr.bf16.mxu0 %v1292
    %1707 = vmatpush1.bf16.msra.mxu0 %v1291
    %1708 = vmatprep.subr.bf16.mxu0 %v1298
    %1709 = vmatpush1.bf16.msra.mxu0 %v1297
    %1710 = vmatprep.subr.bf16.mxu0 %v1304
    %1711 = vmatpush1.bf16.msra.mxu0 %v1303
    %1712 = vmatprep.subr.bf16.mxu0 %v1310
    %1713 = vmatpush1.bf16.msra.mxu0 %v1309
    %1714 = vmatprep.subr.bf16.mxu0 %v1316
    %1715 = vmatpush1.bf16.msra.mxu0 %v1315
    %1716 = vmatprep.subr.bf16.mxu0 %v1322
    %1717 = vmatpush1.bf16.msra.mxu0 %v1321
    %1718 = vmatprep.subr.bf16.mxu0 %v1328
    %1719 = vmatpush1.bf16.msra.mxu0 %v1327
    %1720 = vmatprep.subr.bf16.mxu0 %v1334
    %1721 = vmatpush1.bf16.msra.mxu0 %v1333
    %1722 = vmatprep.subr.bf16.mxu0 %v1340
    %1723 = vmatpush1.bf16.msra.mxu0 %v1339
    %1724 = vmatprep.subr.bf16.mxu0 %v1346
    %1725 = vmatpush1.bf16.msra.mxu0 %v1345
    %1726 = vmatprep.mubr.bf16.mxu0 %v1611
    %1727 = vmatmul.mubr.bf16.gmra.mrb[0].mxu0 %v1610
    %v1728 = vpop.f32.mrb[0].mxu0
    %v1729 = vadd.f32 %v952, %v1728
    %v1730 = vpop.f32.mrb[0].mxu0
    %v1731 = vadd.f32 %v956, %v1730
    %v1732 = vpop.f32.mrb[0].mxu0
    %v1733 = vpop.f32.mrb[0].mxu0
    %1734 = vdwg.mxu0
    %v1735 = vadd.f32 %v711, %v1647
    %v1736 = vadd.f32 %v713, %v1649
    %v1737 = vxor.u32 %v1735, 2147483648
    %v1738 = vxor.u32 %v1736, 2147483648
    %v1739 = vmul.f32 %v1737, 1.442695
    %v1740 = vpow.pop %v1739
    %v1741 = vmul.f32 %v1738, 1.442695
    %v1742 = vpow.pop %v1741
    %v1743 = vadd.f32 %v1740, 1.0
    %v1744 = vadd.f32 %v1742, 1.0
    %v1745 = vrcp.pop %v1743
    %v1746 = vmul.f32 1.0, %v1745
    %v1747 = vrcp.pop %v1744
    %v1748 = vmul.f32 1.0, %v1747
    %v1749 = vadd.f32 %v764, %v1688
    %v1750 = vadd.f32 %v766, %v1690
    %v1751 = vxor.u32 %v1749, 2147483648
    %v1752 = vxor.u32 %v1750, 2147483648
    %v1753 = vmul.f32 %v1751, 1.442695
    %v1754 = vpow.pop %v1753
    %v1755 = vmul.f32 %v1752, 1.442695
    %v1756 = vpow.pop %v1755
    %v1757 = vadd.f32 %v1754, 1.0
    %v1758 = vadd.f32 %v1756, 1.0
    %v1759 = vrcp.pop %v1757
    %v1760 = vmul.f32 1.0, %v1759
    %v1761 = vrcp.pop %v1758
    %v1762 = vmul.f32 1.0, %v1761
    %v1763 = vmul.f32 %v1746, %v1729
    %v1764 = vmul.f32 %v1748, %v1731
    %v1765 = vadd.f32 %v817, %v1763
    %v1766 = vadd.f32 %v819, %v1764
    %v1767 = vtanh.pop %v1765
    %v1768 = vtanh.pop %v1766
    %v1769 = vsub.f32 1.0, %v1760
    %v1770 = vsub.f32 1.0, %v1762
    %v1771 = vmul.f32 %v1769, %v1767
    %v1772 = vmul.f32 %v1770, %v1768
    %v1773 = vmul.f32 %v1760, %v1606
    %v1774 = vmul.f32 %v1762, %v1607
    %v1775 = vadd.f32 %v1771, %v1773
    %v1776 = vadd.f32 %v1772, %v1774
    %s1777 = scalar_lea.vmem %s5, 16
    %1778 = vst [vmem:[%s1777] sm:$0xff] %v1775
    %1779 = vst [vmem:[%s1777 + $0x8] sm:$0xff] %v1776
    %v1780 = vpack.c.bf16 %v1775, %v1775
    %v1781 = vpack.c.bf16 %v1776, %v1776
    %1782 = vmatprep.subr.bf16.mxu0 %v1252
    %1783 = vmatpush1.bf16.msra.mxu0 %v1251
    %1784 = vmatprep.subr.bf16.mxu0 %v1258
    %1785 = vmatpush1.bf16.msra.mxu0 %v1257
    %1786 = vmatprep.subr.bf16.mxu0 %v1264
    %1787 = vmatpush1.bf16.msra.mxu0 %v1263
    %1788 = vmatprep.subr.bf16.mxu0 %v1270
    %1789 = vmatpush1.bf16.msra.mxu0 %v1269
    %1790 = vmatprep.subr.bf16.mxu0 %v1276
    %1791 = vmatpush1.bf16.msra.mxu0 %v1275
    %1792 = vmatprep.subr.bf16.mxu0 %v1282
    %1793 = vmatpush1.bf16.msra.mxu0 %v1281
    %1794 = vmatprep.subr.bf16.mxu0 %v1288
    %1795 = vmatpush1.bf16.msra.mxu0 %v1287
    %1796 = vmatprep.subr.bf16.mxu0 %v1294
    %1797 = vmatpush1.bf16.msra.mxu0 %v1293
    %1798 = vmatprep.subr.bf16.mxu0 %v1300
    %1799 = vmatpush1.bf16.msra.mxu0 %v1299
    %1800 = vmatprep.subr.bf16.mxu0 %v1306
    %1801 = vmatpush1.bf16.msra.mxu0 %v1305
    %1802 = vmatprep.subr.bf16.mxu0 %v1312
    %1803 = vmatpush1.bf16.msra.mxu0 %v1311
    %1804 = vmatprep.subr.bf16.mxu0 %v1318
    %1805 = vmatpush1.bf16.msra.mxu0 %v1317
    %1806 = vmatprep.subr.bf16.mxu0 %v1324
    %1807 = vmatpush1.bf16.msra.mxu0 %v1323
    %1808 = vmatprep.subr.bf16.mxu0 %v1330
    %1809 = vmatpush1.bf16.msra.mxu0 %v1329
    %1810 = vmatprep.subr.bf16.mxu0 %v1336
    %1811 = vmatpush1.bf16.msra.mxu0 %v1335
    %1812 = vmatprep.subr.bf16.mxu0 %v1342
    %1813 = vmatpush1.bf16.msra.mxu0 %v1341
    %1814 = vmatprep.mubr.bf16.mxu0 %v1781
    %1815 = vmatmul.mubr.bf16.gmra.mrb[0].mxu0 %v1780
    %v1816 = vpop.f32.mrb[0].mxu0
    %v1817 = vadd.f32 %v936, %v1816
    %v1818 = vpop.f32.mrb[0].mxu0
    %v1819 = vadd.f32 %v940, %v1818
    %v1820 = vpop.f32.mrb[0].mxu0
    %v1821 = vpop.f32.mrb[0].mxu0
    %1822 = vdwg.mxu0
    %1823 = vmatprep.subr.bf16.mxu0 %v1254
    %1824 = vmatpush1.bf16.msra.mxu0 %v1253
    %1825 = vmatprep.subr.bf16.mxu0 %v1260
    %1826 = vmatpush1.bf16.msra.mxu0 %v1259
    %1827 = vmatprep.subr.bf16.mxu0 %v1266
    %1828 = vmatpush1.bf16.msra.mxu0 %v1265
    %1829 = vmatprep.subr.bf16.mxu0 %v1272
    %1830 = vmatpush1.bf16.msra.mxu0 %v1271
    %1831 = vmatprep.subr.bf16.mxu0 %v1278
    %1832 = vmatpush1.bf16.msra.mxu0 %v1277
    %1833 = vmatprep.subr.bf16.mxu0 %v1284
    %1834 = vmatpush1.bf16.msra.mxu0 %v1283
    %1835 = vmatprep.subr.bf16.mxu0 %v1290
    %1836 = vmatpush1.bf16.msra.mxu0 %v1289
    %1837 = vmatprep.subr.bf16.mxu0 %v1296
    %1838 = vmatpush1.bf16.msra.mxu0 %v1295
    %1839 = vmatprep.subr.bf16.mxu0 %v1302
    %1840 = vmatpush1.bf16.msra.mxu0 %v1301
    %1841 = vmatprep.subr.bf16.mxu0 %v1308
    %1842 = vmatpush1.bf16.msra.mxu0 %v1307
    %1843 = vmatprep.subr.bf16.mxu0 %v1314
    %1844 = vmatpush1.bf16.msra.mxu0 %v1313
    %1845 = vmatprep.subr.bf16.mxu0 %v1320
    %1846 = vmatpush1.bf16.msra.mxu0 %v1319
    %1847 = vmatprep.subr.bf16.mxu0 %v1326
    %1848 = vmatpush1.bf16.msra.mxu0 %v1325
    %1849 = vmatprep.subr.bf16.mxu0 %v1332
    %1850 = vmatpush1.bf16.msra.mxu0 %v1331
    %1851 = vmatprep.subr.bf16.mxu0 %v1338
    %1852 = vmatpush1.bf16.msra.mxu0 %v1337
    %1853 = vmatprep.subr.bf16.mxu0 %v1344
    %1854 = vmatpush1.bf16.msra.mxu0 %v1343
    %1855 = vmatprep.mubr.bf16.mxu0 %v1781
    %1856 = vmatmul.mubr.bf16.gmra.mrb[0].mxu0 %v1780
    %v1857 = vpop.f32.mrb[0].mxu0
    %v1858 = vadd.f32 %v944, %v1857
    %v1859 = vpop.f32.mrb[0].mxu0
    %v1860 = vadd.f32 %v948, %v1859
    %v1861 = vpop.f32.mrb[0].mxu0
    %v1862 = vpop.f32.mrb[0].mxu0
    %1863 = vdwg.mxu0
    %1864 = vmatprep.subr.bf16.mxu0 %v1256
    %1865 = vmatpush1.bf16.msra.mxu0 %v1255
    %1866 = vmatprep.subr.bf16.mxu0 %v1262
    %1867 = vmatpush1.bf16.msra.mxu0 %v1261
    %1868 = vmatprep.subr.bf16.mxu0 %v1268
    %1869 = vmatpush1.bf16.msra.mxu0 %v1267
    %1870 = vmatprep.subr.bf16.mxu0 %v1274
    %1871 = vmatpush1.bf16.msra.mxu0 %v1273
    %1872 = vmatprep.subr.bf16.mxu0 %v1280
    %1873 = vmatpush1.bf16.msra.mxu0 %v1279
    %1874 = vmatprep.subr.bf16.mxu0 %v1286
    %1875 = vmatpush1.bf16.msra.mxu0 %v1285
    %1876 = vmatprep.subr.bf16.mxu0 %v1292
    %1877 = vmatpush1.bf16.msra.mxu0 %v1291
    %1878 = vmatprep.subr.bf16.mxu0 %v1298
    %1879 = vmatpush1.bf16.msra.mxu0 %v1297
    %1880 = vmatprep.subr.bf16.mxu0 %v1304
    %1881 = vmatpush1.bf16.msra.mxu0 %v1303
    %1882 = vmatprep.subr.bf16.mxu0 %v1310
    %1883 = vmatpush1.bf16.msra.mxu0 %v1309
    %1884 = vmatprep.subr.bf16.mxu0 %v1316
    %1885 = vmatpush1.bf16.msra.mxu0 %v1315
    %1886 = vmatprep.subr.bf16.mxu0 %v1322
    %1887 = vmatpush1.bf16.msra.mxu0 %v1321
    %1888 = vmatprep.subr.bf16.mxu0 %v1328
    %1889 = vmatpush1.bf16.msra.mxu0 %v1327
    %1890 = vmatprep.subr.bf16.mxu0 %v1334
    %1891 = vmatpush1.bf16.msra.mxu0 %v1333
    %1892 = vmatprep.subr.bf16.mxu0 %v1340
    %1893 = vmatpush1.bf16.msra.mxu0 %v1339
    %1894 = vmatprep.subr.bf16.mxu0 %v1346
    %1895 = vmatpush1.bf16.msra.mxu0 %v1345
    %1896 = vmatprep.mubr.bf16.mxu0 %v1781
    %1897 = vmatmul.mubr.bf16.gmra.mrb[0].mxu0 %v1780
    %v1898 = vpop.f32.mrb[0].mxu0
    %v1899 = vadd.f32 %v952, %v1898
    %v1900 = vpop.f32.mrb[0].mxu0
    %v1901 = vadd.f32 %v956, %v1900
    %v1902 = vpop.f32.mrb[0].mxu0
    %v1903 = vpop.f32.mrb[0].mxu0
    %1904 = vdwg.mxu0
    %v1905 = vadd.f32 %v717, %v1817
    %v1906 = vadd.f32 %v719, %v1819
    %v1907 = vxor.u32 %v1905, 2147483648
    %v1908 = vxor.u32 %v1906, 2147483648
    %v1909 = vmul.f32 %v1907, 1.442695
    %v1910 = vpow.pop %v1909
    %v1911 = vmul.f32 %v1908, 1.442695
    %v1912 = vpow.pop %v1911
    %v1913 = vadd.f32 %v1910, 1.0
    %v1914 = vadd.f32 %v1912, 1.0
    %v1915 = vrcp.pop %v1913
    %v1916 = vmul.f32 1.0, %v1915
    %v1917 = vrcp.pop %v1914
    %v1918 = vmul.f32 1.0, %v1917
    %v1919 = vadd.f32 %v770, %v1858
    %v1920 = vadd.f32 %v772, %v1860
    %v1921 = vxor.u32 %v1919, 2147483648
    %v1922 = vxor.u32 %v1920, 2147483648
    %v1923 = vmul.f32 %v1921, 1.442695
    %v1924 = vpow.pop %v1923
    %v1925 = vmul.f32 %v1922, 1.442695
    %v1926 = vpow.pop %v1925
    %v1927 = vadd.f32 %v1924, 1.0
    %v1928 = vadd.f32 %v1926, 1.0
    %v1929 = vrcp.pop %v1927
    %v1930 = vmul.f32 1.0, %v1929
    %v1931 = vrcp.pop %v1928
    %v1932 = vmul.f32 1.0, %v1931
    %v1933 = vmul.f32 %v1916, %v1899
    %v1934 = vmul.f32 %v1918, %v1901
    %v1935 = vadd.f32 %v823, %v1933
    %v1936 = vadd.f32 %v825, %v1934
    %v1937 = vtanh.pop %v1935
    %v1938 = vtanh.pop %v1936
    %v1939 = vsub.f32 1.0, %v1930
    %v1940 = vsub.f32 1.0, %v1932
    %v1941 = vmul.f32 %v1939, %v1937
    %v1942 = vmul.f32 %v1940, %v1938
    %v1943 = vmul.f32 %v1930, %v1775
    %v1944 = vmul.f32 %v1932, %v1776
    %v1945 = vadd.f32 %v1941, %v1943
    %v1946 = vadd.f32 %v1942, %v1944
    %s1947 = scalar_lea.vmem %s5, 32
    %1948 = vst [vmem:[%s1947] sm:$0xff] %v1945
    %1949 = vst [vmem:[%s1947 + $0x8] sm:$0xff] %v1946
    %v1950 = vpack.c.bf16 %v1945, %v1945
    %v1951 = vpack.c.bf16 %v1946, %v1946
    %1952 = vmatprep.subr.bf16.mxu0 %v1252
    %1953 = vmatpush1.bf16.msra.mxu0 %v1251
    %1954 = vmatprep.subr.bf16.mxu0 %v1258
    %1955 = vmatpush1.bf16.msra.mxu0 %v1257
    %1956 = vmatprep.subr.bf16.mxu0 %v1264
    %1957 = vmatpush1.bf16.msra.mxu0 %v1263
    %1958 = vmatprep.subr.bf16.mxu0 %v1270
    %1959 = vmatpush1.bf16.msra.mxu0 %v1269
    %1960 = vmatprep.subr.bf16.mxu0 %v1276
    %1961 = vmatpush1.bf16.msra.mxu0 %v1275
    %1962 = vmatprep.subr.bf16.mxu0 %v1282
    %1963 = vmatpush1.bf16.msra.mxu0 %v1281
    %1964 = vmatprep.subr.bf16.mxu0 %v1288
    %1965 = vmatpush1.bf16.msra.mxu0 %v1287
    %1966 = vmatprep.subr.bf16.mxu0 %v1294
    %1967 = vmatpush1.bf16.msra.mxu0 %v1293
    %1968 = vmatprep.subr.bf16.mxu0 %v1300
    %1969 = vmatpush1.bf16.msra.mxu0 %v1299
    %1970 = vmatprep.subr.bf16.mxu0 %v1306
    %1971 = vmatpush1.bf16.msra.mxu0 %v1305
    %1972 = vmatprep.subr.bf16.mxu0 %v1312
    %1973 = vmatpush1.bf16.msra.mxu0 %v1311
    %1974 = vmatprep.subr.bf16.mxu0 %v1318
    %1975 = vmatpush1.bf16.msra.mxu0 %v1317
    %1976 = vmatprep.subr.bf16.mxu0 %v1324
    %1977 = vmatpush1.bf16.msra.mxu0 %v1323
    %1978 = vmatprep.subr.bf16.mxu0 %v1330
    %1979 = vmatpush1.bf16.msra.mxu0 %v1329
    %1980 = vmatprep.subr.bf16.mxu0 %v1336
    %1981 = vmatpush1.bf16.msra.mxu0 %v1335
    %1982 = vmatprep.subr.bf16.mxu0 %v1342
    %1983 = vmatpush1.bf16.msra.mxu0 %v1341
    %1984 = vmatprep.mubr.bf16.mxu0 %v1951
    %1985 = vmatmul.mubr.bf16.gmra.mrb[0].mxu0 %v1950
    %v1986 = vpop.f32.mrb[0].mxu0
    %v1987 = vadd.f32 %v936, %v1986
    %v1988 = vpop.f32.mrb[0].mxu0
    %v1989 = vadd.f32 %v940, %v1988
    %v1990 = vpop.f32.mrb[0].mxu0
    %v1991 = vpop.f32.mrb[0].mxu0
    %1992 = vdwg.mxu0
    %1993 = vmatprep.subr.bf16.mxu0 %v1254
    %1994 = vmatpush1.bf16.msra.mxu0 %v1253
    %1995 = vmatprep.subr.bf16.mxu0 %v1260
    %1996 = vmatpush1.bf16.msra.mxu0 %v1259
    %1997 = vmatprep.subr.bf16.mxu0 %v1266
    %1998 = vmatpush1.bf16.msra.mxu0 %v1265
    %1999 = vmatprep.subr.bf16.mxu0 %v1272
    %2000 = vmatpush1.bf16.msra.mxu0 %v1271
    %2001 = vmatprep.subr.bf16.mxu0 %v1278
    %2002 = vmatpush1.bf16.msra.mxu0 %v1277
    %2003 = vmatprep.subr.bf16.mxu0 %v1284
    %2004 = vmatpush1.bf16.msra.mxu0 %v1283
    %2005 = vmatprep.subr.bf16.mxu0 %v1290
    %2006 = vmatpush1.bf16.msra.mxu0 %v1289
    %2007 = vmatprep.subr.bf16.mxu0 %v1296
    %2008 = vmatpush1.bf16.msra.mxu0 %v1295
    %2009 = vmatprep.subr.bf16.mxu0 %v1302
    %2010 = vmatpush1.bf16.msra.mxu0 %v1301
    %2011 = vmatprep.subr.bf16.mxu0 %v1308
    %2012 = vmatpush1.bf16.msra.mxu0 %v1307
    %2013 = vmatprep.subr.bf16.mxu0 %v1314
    %2014 = vmatpush1.bf16.msra.mxu0 %v1313
    %2015 = vmatprep.subr.bf16.mxu0 %v1320
    %2016 = vmatpush1.bf16.msra.mxu0 %v1319
    %2017 = vmatprep.subr.bf16.mxu0 %v1326
    %2018 = vmatpush1.bf16.msra.mxu0 %v1325
    %2019 = vmatprep.subr.bf16.mxu0 %v1332
    %2020 = vmatpush1.bf16.msra.mxu0 %v1331
    %2021 = vmatprep.subr.bf16.mxu0 %v1338
    %2022 = vmatpush1.bf16.msra.mxu0 %v1337
    %2023 = vmatprep.subr.bf16.mxu0 %v1344
    %2024 = vmatpush1.bf16.msra.mxu0 %v1343
    %2025 = vmatprep.mubr.bf16.mxu0 %v1951
    %2026 = vmatmul.mubr.bf16.gmra.mrb[0].mxu0 %v1950
    %v2027 = vpop.f32.mrb[0].mxu0
    %v2028 = vadd.f32 %v944, %v2027
    %v2029 = vpop.f32.mrb[0].mxu0
    %v2030 = vadd.f32 %v948, %v2029
    %v2031 = vpop.f32.mrb[0].mxu0
    %v2032 = vpop.f32.mrb[0].mxu0
    %2033 = vdwg.mxu0
    %2034 = vmatprep.subr.bf16.mxu0 %v1256
    %2035 = vmatpush1.bf16.msra.mxu0 %v1255
    %2036 = vmatprep.subr.bf16.mxu0 %v1262
    %2037 = vmatpush1.bf16.msra.mxu0 %v1261
    %2038 = vmatprep.subr.bf16.mxu0 %v1268
    %2039 = vmatpush1.bf16.msra.mxu0 %v1267
    %2040 = vmatprep.subr.bf16.mxu0 %v1274
    %2041 = vmatpush1.bf16.msra.mxu0 %v1273
    %2042 = vmatprep.subr.bf16.mxu0 %v1280
    %2043 = vmatpush1.bf16.msra.mxu0 %v1279
    %2044 = vmatprep.subr.bf16.mxu0 %v1286
    %2045 = vmatpush1.bf16.msra.mxu0 %v1285
    %2046 = vmatprep.subr.bf16.mxu0 %v1292
    %2047 = vmatpush1.bf16.msra.mxu0 %v1291
    %2048 = vmatprep.subr.bf16.mxu0 %v1298
    %2049 = vmatpush1.bf16.msra.mxu0 %v1297
    %2050 = vmatprep.subr.bf16.mxu0 %v1304
    %2051 = vmatpush1.bf16.msra.mxu0 %v1303
    %2052 = vmatprep.subr.bf16.mxu0 %v1310
    %2053 = vmatpush1.bf16.msra.mxu0 %v1309
    %2054 = vmatprep.subr.bf16.mxu0 %v1316
    %2055 = vmatpush1.bf16.msra.mxu0 %v1315
    %2056 = vmatprep.subr.bf16.mxu0 %v1322
    %2057 = vmatpush1.bf16.msra.mxu0 %v1321
    %2058 = vmatprep.subr.bf16.mxu0 %v1328
    %2059 = vmatpush1.bf16.msra.mxu0 %v1327
    %2060 = vmatprep.subr.bf16.mxu0 %v1334
    %2061 = vmatpush1.bf16.msra.mxu0 %v1333
    %2062 = vmatprep.subr.bf16.mxu0 %v1340
    %2063 = vmatpush1.bf16.msra.mxu0 %v1339
    %2064 = vmatprep.subr.bf16.mxu0 %v1346
    %2065 = vmatpush1.bf16.msra.mxu0 %v1345
    %2066 = vmatprep.mubr.bf16.mxu0 %v1951
    %2067 = vmatmul.mubr.bf16.gmra.mrb[0].mxu0 %v1950
    %v2068 = vpop.f32.mrb[0].mxu0
    %v2069 = vadd.f32 %v952, %v2068
    %v2070 = vpop.f32.mrb[0].mxu0
    %v2071 = vadd.f32 %v956, %v2070
    %v2072 = vpop.f32.mrb[0].mxu0
    %v2073 = vpop.f32.mrb[0].mxu0
    %2074 = vdwg.mxu0
    %v2075 = vadd.f32 %v721, %v1987
    %v2076 = vadd.f32 %v723, %v1989
    %v2077 = vxor.u32 %v2075, 2147483648
    %v2078 = vxor.u32 %v2076, 2147483648
    %v2079 = vmul.f32 %v2077, 1.442695
    %v2080 = vpow.pop %v2079
    %v2081 = vmul.f32 %v2078, 1.442695
    %v2082 = vpow.pop %v2081
    %v2083 = vadd.f32 %v2080, 1.0
    %v2084 = vadd.f32 %v2082, 1.0
    %v2085 = vrcp.pop %v2083
    %v2086 = vmul.f32 1.0, %v2085
    %v2087 = vrcp.pop %v2084
    %v2088 = vmul.f32 1.0, %v2087
    %v2089 = vadd.f32 %v774, %v2028
    %v2090 = vadd.f32 %v776, %v2030
    %v2091 = vxor.u32 %v2089, 2147483648
    %v2092 = vxor.u32 %v2090, 2147483648
    %v2093 = vmul.f32 %v2091, 1.442695
    %v2094 = vpow.pop %v2093
    %v2095 = vmul.f32 %v2092, 1.442695
    %v2096 = vpow.pop %v2095
    %v2097 = vadd.f32 %v2094, 1.0
    %v2098 = vadd.f32 %v2096, 1.0
    %v2099 = vrcp.pop %v2097
    %v2100 = vmul.f32 1.0, %v2099
    %v2101 = vrcp.pop %v2098
    %v2102 = vmul.f32 1.0, %v2101
    %v2103 = vmul.f32 %v2086, %v2069
    %v2104 = vmul.f32 %v2088, %v2071
    %v2105 = vadd.f32 %v827, %v2103
    %v2106 = vadd.f32 %v829, %v2104
    %v2107 = vtanh.pop %v2105
    %v2108 = vtanh.pop %v2106
    %v2109 = vsub.f32 1.0, %v2100
    %v2110 = vsub.f32 1.0, %v2102
    %v2111 = vmul.f32 %v2109, %v2107
    %v2112 = vmul.f32 %v2110, %v2108
    %v2113 = vmul.f32 %v2100, %v1945
    %v2114 = vmul.f32 %v2102, %v1946
    %v2115 = vadd.f32 %v2111, %v2113
    %v2116 = vadd.f32 %v2112, %v2114
    %s2117 = scalar_lea.vmem %s5, 48
    %2118 = vst [vmem:[%s2117] sm:$0xff] %v2115
    %2119 = vst [vmem:[%s2117 + $0x8] sm:$0xff] %v2116
    %2120 = vst [vmem:[#allocation2] sm:$0xff] %v2115
    %2121 = vst [vmem:[#allocation2 + $0x8] sm:$0xff] %v2116
    // Predicated region
    $region34: #{forward_pretrain_supervised.4} parent=1 // pred_check
      _
    $region35: #{forward_pretrain_supervised.4} parent=1 // pred_check_branch
      %2123 = sbr.rel (0) target = $region37
    $region36: #{forward_pretrain_supervised.4} parent=1 // pred_region
      _
    $region37: #{forward_pretrain_supervised.4} parent=1 // pred_fallthru
      _
    // Predicated region
    $region38: #{forward_pretrain_supervised.4} parent=1 // pred_check
      _
    $region39: #{forward_pretrain_supervised.4} parent=1 // pred_check_branch
      %2125 = sbr.rel (0) target = $region41
    $region40: #{forward_pretrain_supervised.4} parent=1 // pred_region
      _
    $region41: #{forward_pretrain_supervised.4} parent=1 // pred_fallthru
      _
    %2126 = vsyncpa [#allocation4], 1
    %2127 = vsyncpa [#allocation6], 1

// kernel: forward_pretrain_supervised.5
$region0: #{forward_pretrain_supervised.5}
  #allocation0 [shape = 'u32[]', space=smem, size = 0x4, offset = 0x4, fixed_abs, tag = 'smem constant byte address 0x4 - core index']
  #allocation1 [shape = 'u32[144,128]{1,0:T(1,128)}', space=vmem, size = 0x12000, scoped, tag = 'internal scratch']
  #allocation2 [shape = 'f32[8,256]{1,0:T(8,128)}', space=vmem, size = 0x2000, scoped, tag = 'scratch operand']
  %s0 = inlined_call_operand.vmem [shape: f32[4,8,256], index: 0, kind: input, shape index: {}]
  %s1 = inlined_call_operand.hbm [shape: bf16[256,768], index: 1, kind: input, shape index: {}]
  %s2 = inlined_call_operand.hbm [shape: f32[1,768], index: 2, kind: input, shape index: {}]
  %s3 = inlined_call_operand.hbm [shape: bf16[256,768], index: 3, kind: input, shape index: {}]
  %s4 = inlined_call_operand.hbm [shape: f32[1,768], index: 4, kind: input, shape index: {}]
  %s5 = inlined_call_operand.vmem [shape: f32[4,8,256], index: 5, kind: output, shape index: {}]
  %s6 = sld [smem:[#allocation0]]
  $region50: #{forward_pretrain_supervised.5} parent=0
    _
  %s8 = ssub.s32 1, %s6
  %s9 = scalar_select 0, %s8, %s6
  $region1: #{forward_pretrain_supervised.5} parent=0
    #allocation3 [shape = 'u8[393216]{0}', space=vmem, size = 0x60000, scoped, tag = 'input window, operand 1, single buffered']
    #allocation4 [shape = 's32[1]{0}', space=sflag, size = 0x4, scoped, tag = 'scoped memory for forward_pretrain_supervised.5']
    #allocation5 [shape = 'u8[3072]{0}', space=vmem, size = 0xc00, scoped, tag = 'input window, operand 2, single buffered']
    #allocation6 [shape = 's32[1]{0}', space=sflag, size = 0x4, scoped, tag = 'scoped memory for forward_pretrain_supervised.5']
    #allocation7 [shape = 'u8[393216]{0}', space=vmem, size = 0x60000, scoped, tag = 'input window, operand 3, single buffered']
    #allocation8 [shape = 'u8[3072]{0}', space=vmem, size = 0xc00, scoped, tag = 'input window, operand 4, single buffered']
    #allocation9 [shape = 's32[1]{0}', space=sflag, size = 0x4, scoped, tag = 'scoped memory for forward_pretrain_supervised.5']
    %10 = vsyncpa [#allocation4], 0
    %11 = vsyncpa [#allocation6], 0
    %12 = vsyncpa [#allocation9], 0
    // Predicated region
    $region2: #{forward_pretrain_supervised.5} parent=1 // pred_check
      _
    $region3: #{forward_pretrain_supervised.5} parent=1 // pred_check_branch
      %14 = sbr.rel (0) target = $region5
    $region4: #{forward_pretrain_supervised.5} parent=1 // pred_region
      _
    $region5: #{forward_pretrain_supervised.5} parent=1 // pred_fallthru
      _
    // Predicated region
    $region6: #{forward_pretrain_supervised.5} parent=1 // pred_check
      _
    $region7: #{forward_pretrain_supervised.5} parent=1 // pred_check_branch
      %16 = sbr.rel (0) target = $region9
    $region8: #{forward_pretrain_supervised.5} parent=1 // pred_region
      %s18 = ssub.s32 12288, 12288
      %19 = vsyncadd [#allocation4], %s18
      %s20 = sshll.u32 [#allocation3], 4
      %s21 = int_to_ptr.vmem [resolvable:$true] %s20
      %26 = dma.hbm_to_vmem [thread:$0]  %s1, 12288, %s21, [#allocation4], 384, 384, 24
    $region9: #{forward_pretrain_supervised.5} parent=1 // pred_fallthru
      _
    // Predicated region
    $region10: #{forward_pretrain_supervised.5} parent=1 // pred_check
      _
    $region11: #{forward_pretrain_supervised.5} parent=1 // pred_check_branch
      %28 = sbr.rel (0) target = $region13
    $region12: #{forward_pretrain_supervised.5} parent=1 // pred_region
      %s30 = ssub.s32 96, 96
      %31 = vsyncadd [#allocation6], %s30
      %s33 = sshll.u32 [#allocation5], 4
      %s34 = int_to_ptr.vmem [resolvable:$true] %s33
      %36 = dma.hbm_to_vmem [thread:$0]  %s2, 96, %s34, [#allocation6]
    $region13: #{forward_pretrain_supervised.5} parent=1 // pred_fallthru
      _
    // Predicated region
    $region14: #{forward_pretrain_supervised.5} parent=1 // pred_check
      _
    $region15: #{forward_pretrain_supervised.5} parent=1 // pred_check_branch
      %38 = sbr.rel (0) target = $region17
    $region16: #{forward_pretrain_supervised.5} parent=1 // pred_region
      %s40 = ssub.s32 12288, 12288
      %41 = vsyncadd [#allocation6], %s40
      %s42 = sshll.u32 [#allocation7], 4
      %s43 = int_to_ptr.vmem [resolvable:$true] %s42
      %48 = dma.hbm_to_vmem [thread:$0]  %s3, 12288, %s43, [#allocation6], 384, 384, 24
    $region17: #{forward_pretrain_supervised.5} parent=1 // pred_fallthru
      _
    // Predicated region
    $region18: #{forward_pretrain_supervised.5} parent=1 // pred_check
      _
    $region19: #{forward_pretrain_supervised.5} parent=1 // pred_check_branch
      %50 = sbr.rel (0) target = $region21
    $region20: #{forward_pretrain_supervised.5} parent=1 // pred_region
      %s52 = ssub.s32 96, 96
      %53 = vsyncadd [#allocation9], %s52
      %s55 = sshll.u32 [#allocation8], 4
      %s56 = int_to_ptr.vmem [resolvable:$true] %s55
      %58 = dma.hbm_to_vmem [thread:$0]  %s4, 96, %s56, [#allocation9]
    $region21: #{forward_pretrain_supervised.5} parent=1 // pred_fallthru
      _
    // Predicated region
    $region22: #{forward_pretrain_supervised.5} parent=1 // pred_check
      _
    $region23: #{forward_pretrain_supervised.5} parent=1 // pred_check_branch
      %60 = sbr.rel (0) target = $region25
    $region24: #{forward_pretrain_supervised.5} parent=1 // pred_region
      %61 = dma.done [#allocation4], 12288
    $region25: #{forward_pretrain_supervised.5} parent=1 // pred_fallthru
      _
    // Predicated region
    $region26: #{forward_pretrain_supervised.5} parent=1 // pred_check
      _
    $region27: #{forward_pretrain_supervised.5} parent=1 // pred_check_branch
      %63 = sbr.rel (0) target = $region29
    $region28: #{forward_pretrain_supervised.5} parent=1 // pred_region
      %64 = dma.done [#allocation6], 96
    $region29: #{forward_pretrain_supervised.5} parent=1 // pred_fallthru
      _
    // Predicated region
    $region30: #{forward_pretrain_supervised.5} parent=1 // pred_check
      _
    $region31: #{forward_pretrain_supervised.5} parent=1 // pred_check_branch
      %66 = sbr.rel (0) target = $region33
    $region32: #{forward_pretrain_supervised.5} parent=1 // pred_region
      %67 = dma.done [#allocation6], 12288
    $region33: #{forward_pretrain_supervised.5} parent=1 // pred_fallthru
      _
    // Predicated region
    $region34: #{forward_pretrain_supervised.5} parent=1 // pred_check
      _
    $region35: #{forward_pretrain_supervised.5} parent=1 // pred_check_branch
      %69 = sbr.rel (0) target = $region37
    $region36: #{forward_pretrain_supervised.5} parent=1 // pred_region
      %70 = dma.done [#allocation9], 96
    $region37: #{forward_pretrain_supervised.5} parent=1 // pred_fallthru
      _
    %p71 = scmp.eq.s32.totalorder 0, 0
    // Predicated region
    $region38: #{forward_pretrain_supervised.5} parent=1 // pred_check
      %p72 = pneg %p71
    $region39: #{forward_pretrain_supervised.5} parent=1 // pred_check_branch
      %74 = sbr.rel (%p72) target = $region41
    $region40: #{forward_pretrain_supervised.5} parent=1 // pred_region
      %75 = vst [vmem:[#allocation2] sm:$0xff] 0.0
      %76 = vst [vmem:[#allocation2 + $0x8] sm:$0xff] 0.0
    $region41: #{forward_pretrain_supervised.5} parent=1 // pred_fallthru
      _
    %v77 = vld [vmem:[%s0] sm:$0xff]
    %v78 = vld [vmem:[%s0 + $0x8] sm:$0xff]
    %v79 = vld [vmem:[%s0 + $0x10] sm:$0xff]
    %v80 = vld [vmem:[%s0 + $0x18] sm:$0xff]
    %v81 = vld [vmem:[%s0 + $0x20] sm:$0xff]
    %v82 = vld [vmem:[%s0 + $0x28] sm:$0xff]
    %v83 = vld [vmem:[%s0 + $0x30] sm:$0xff]
    %v84 = vld [vmem:[%s0 + $0x38] sm:$0xff]
    %v85 = vpack.c.bf16 %v79, %v77
    %v86 = vpack.c.bf16 %v80, %v78
    %v87 = vpack.c.bf16 %v83, %v81
    %v88 = vpack.c.bf16 %v84, %v82
    %v89 = vld [vmem:[#allocation3] sm:$0xff]
    %v90 = vld [vmem:[#allocation3 + $0x8] sm:$0xff]
    %v91 = vld [vmem:[#allocation3 + $0x10] sm:$0xff]
    %v92 = vld [vmem:[#allocation3 + $0x18] sm:$0xff]
    %v93 = vld [vmem:[#allocation3 + $0x20] sm:$0xff]
    %v94 = vld [vmem:[#allocation3 + $0x28] sm:$0xff]
    %v95 = vld [vmem:[#allocation3 + $0x30] sm:$0xff]
    %v96 = vld [vmem:[#allocation3 + $0x38] sm:$0xff]
    %v97 = vld [vmem:[#allocation3 + $0x40] sm:$0xff]
    %v98 = vld [vmem:[#allocation3 + $0x48] sm:$0xff]
    %v99 = vld [vmem:[#allocation3 + $0x50] sm:$0xff]
    %v100 = vld [vmem:[#allocation3 + $0x58] sm:$0xff]
    %v101 = vld [vmem:[#allocation3 + $0x60] sm:$0xff]
    %v102 = vld [vmem:[#allocation3 + $0x68] sm:$0xff]
    %v103 = vld [vmem:[#allocation3 + $0x70] sm:$0xff]
    %v104 = vld [vmem:[#allocation3 + $0x78] sm:$0xff]
    %v105 = vld [vmem:[#allocation3 + $0x80] sm:$0xff]
    %v106 = vld [vmem:[#allocation3 + $0x88] sm:$0xff]
    %v107 = vld [vmem:[#allocation3 + $0x90] sm:$0xff]
    %v108 = vld [vmem:[#allocation3 + $0x98] sm:$0xff]
    %v109 = vld [vmem:[#allocation3 + $0xa0] sm:$0xff]
    %v110 = vld [vmem:[#allocation3 + $0xa8] sm:$0xff]
    %v111 = vld [vmem:[#allocation3 + $0xb0] sm:$0xff]
    %v112 = vld [vmem:[#allocation3 + $0xb8] sm:$0xff]
    %v113 = vld [vmem:[#allocation3 + $0xc0] sm:$0xff]
    %v114 = vld [vmem:[#allocation3 + $0xc8] sm:$0xff]
    %v115 = vld [vmem:[#allocation3 + $0xd0] sm:$0xff]
    %v116 = vld [vmem:[#allocation3 + $0xd8] sm:$0xff]
    %v117 = vld [vmem:[#allocation3 + $0xe0] sm:$0xff]
    %v118 = vld [vmem:[#allocation3 + $0xe8] sm:$0xff]
    %v119 = vld [vmem:[#allocation3 + $0xf0] sm:$0xff]
    %v120 = vld [vmem:[#allocation3 + $0xf8] sm:$0xff]
    %v121 = vld [vmem:[#allocation3 + $0x100] sm:$0xff]
    %v122 = vld [vmem:[#allocation3 + $0x108] sm:$0xff]
    %v123 = vld [vmem:[#allocation3 + $0x110] sm:$0xff]
    %v124 = vld [vmem:[#allocation3 + $0x118] sm:$0xff]
    %v125 = vld [vmem:[#allocation3 + $0x120] sm:$0xff]
    %v126 = vld [vmem:[#allocation3 + $0x128] sm:$0xff]
    %v127 = vld [vmem:[#allocation3 + $0x130] sm:$0xff]
    %v128 = vld [vmem:[#allocation3 + $0x138] sm:$0xff]
    %v129 = vld [vmem:[#allocation3 + $0x140] sm:$0xff]
    %v130 = vld [vmem:[#allocation3 + $0x148] sm:$0xff]
    %v131 = vld [vmem:[#allocation3 + $0x150] sm:$0xff]
    %v132 = vld [vmem:[#allocation3 + $0x158] sm:$0xff]
    %v133 = vld [vmem:[#allocation3 + $0x160] sm:$0xff]
    %v134 = vld [vmem:[#allocation3 + $0x168] sm:$0xff]
    %v135 = vld [vmem:[#allocation3 + $0x170] sm:$0xff]
    %v136 = vld [vmem:[#allocation3 + $0x178] sm:$0xff]
    %v137 = vld [vmem:[#allocation3 + $0x180] sm:$0xff]
    %v138 = vld [vmem:[#allocation3 + $0x188] sm:$0xff]
    %v139 = vld [vmem:[#allocation3 + $0x190] sm:$0xff]
    %v140 = vld [vmem:[#allocation3 + $0x198] sm:$0xff]
    %v141 = vld [vmem:[#allocation3 + $0x1a0] sm:$0xff]
    %v142 = vld [vmem:[#allocation3 + $0x1a8] sm:$0xff]
    %v143 = vld [vmem:[#allocation3 + $0x1b0] sm:$0xff]
    %v144 = vld [vmem:[#allocation3 + $0x1b8] sm:$0xff]
    %v145 = vld [vmem:[#allocation3 + $0x1c0] sm:$0xff]
    %v146 = vld [vmem:[#allocation3 + $0x1c8] sm:$0xff]
    %v147 = vld [vmem:[#allocation3 + $0x1d0] sm:$0xff]
    %v148 = vld [vmem:[#allocation3 + $0x1d8] sm:$0xff]
    %v149 = vld [vmem:[#allocation3 + $0x1e0] sm:$0xff]
    %v150 = vld [vmem:[#allocation3 + $0x1e8] sm:$0xff]
    %v151 = vld [vmem:[#allocation3 + $0x1f0] sm:$0xff]
    %v152 = vld [vmem:[#allocation3 + $0x1f8] sm:$0xff]
    %v153 = vld [vmem:[#allocation3 + $0x200] sm:$0xff]
    %v154 = vld [vmem:[#allocation3 + $0x208] sm:$0xff]
    %v155 = vld [vmem:[#allocation3 + $0x210] sm:$0xff]
    %v156 = vld [vmem:[#allocation3 + $0x218] sm:$0xff]
    %v157 = vld [vmem:[#allocation3 + $0x220] sm:$0xff]
    %v158 = vld [vmem:[#allocation3 + $0x228] sm:$0xff]
    %v159 = vld [vmem:[#allocation3 + $0x230] sm:$0xff]
    %v160 = vld [vmem:[#allocation3 + $0x238] sm:$0xff]
    %v161 = vld [vmem:[#allocation3 + $0x240] sm:$0xff]
    %v162 = vld [vmem:[#allocation3 + $0x248] sm:$0xff]
    %v163 = vld [vmem:[#allocation3 + $0x250] sm:$0xff]
    %v164 = vld [vmem:[#allocation3 + $0x258] sm:$0xff]
    %v165 = vld [vmem:[#allocation3 + $0x260] sm:$0xff]
    %v166 = vld [vmem:[#allocation3 + $0x268] sm:$0xff]
    %v167 = vld [vmem:[#allocation3 + $0x270] sm:$0xff]
    %v168 = vld [vmem:[#allocation3 + $0x278] sm:$0xff]
    %v169 = vld [vmem:[#allocation3 + $0x280] sm:$0xff]
    %v170 = vld [vmem:[#allocation3 + $0x288] sm:$0xff]
    %v171 = vld [vmem:[#allocation3 + $0x290] sm:$0xff]
    %v172 = vld [vmem:[#allocation3 + $0x298] sm:$0xff]
    %v173 = vld [vmem:[#allocation3 + $0x2a0] sm:$0xff]
    %v174 = vld [vmem:[#allocation3 + $0x2a8] sm:$0xff]
    %v175 = vld [vmem:[#allocation3 + $0x2b0] sm:$0xff]
    %v176 = vld [vmem:[#allocation3 + $0x2b8] sm:$0xff]
    %v177 = vld [vmem:[#allocation3 + $0x2c0] sm:$0xff]
    %v178 = vld [vmem:[#allocation3 + $0x2c8] sm:$0xff]
    %v179 = vld [vmem:[#allocation3 + $0x2d0] sm:$0xff]
    %v180 = vld [vmem:[#allocation3 + $0x2d8] sm:$0xff]
    %v181 = vld [vmem:[#allocation3 + $0x2e0] sm:$0xff]
    %v182 = vld [vmem:[#allocation3 + $0x2e8] sm:$0xff]
    %v183 = vld [vmem:[#allocation3 + $0x2f0] sm:$0xff]
    %v184 = vld [vmem:[#allocation3 + $0x2f8] sm:$0xff]
    %v185 = vld [vmem:[#allocation5] sm:$0x3f]
    %v187 = vlaneseq
    %v188 = vshrl.u32 %v187, 7
    %v189 = vsub.s32 0, %v188
    %v190 = vrot.slane %v185, %v189
    %v191 = vlaneseq
    %v192 = vshrl.u32 %v191, 7
    %v193 = vsub.s32 1, %v192
    %v194 = vrot.slane %v185, %v193
    %v195 = vlaneseq
    %v196 = vshrl.u32 %v195, 7
    %v197 = vsub.s32 2, %v196
    %v198 = vrot.slane %v185, %v197
    %v199 = vlaneseq
    %v200 = vshrl.u32 %v199, 7
    %v201 = vsub.s32 3, %v200
    %v202 = vrot.slane %v185, %v201
    %v203 = vlaneseq
    %v204 = vshrl.u32 %v203, 7
    %v205 = vsub.s32 4, %v204
    %v206 = vrot.slane %v185, %v205
    %v207 = vlaneseq
    %v208 = vshrl.u32 %v207, 7
    %v209 = vsub.s32 5, %v208
    %v210 = vrot.slane %v185, %v209
    %v313 = vunpack.c.l.b16 %v89
    %v314 = vunpack.c.h.b16 %v89
    %v315 = vunpack.c.l.b16 %v90
    %v316 = vunpack.c.h.b16 %v90
    %v317 = vunpack.c.l.b16 %v91
    %v318 = vunpack.c.h.b16 %v91
    %v319 = vunpack.c.l.b16 %v92
    %v320 = vunpack.c.h.b16 %v92
    %v321 = vunpack.c.l.b16 %v93
    %v322 = vunpack.c.h.b16 %v93
    %v323 = vunpack.c.l.b16 %v94
    %v324 = vunpack.c.h.b16 %v94
    %v325 = vunpack.c.l.b16 %v95
    %v326 = vunpack.c.h.b16 %v95
    %v327 = vunpack.c.l.b16 %v96
    %v328 = vunpack.c.h.b16 %v96
    %v329 = vunpack.c.l.b16 %v97
    %v330 = vunpack.c.h.b16 %v97
    %v331 = vunpack.c.l.b16 %v98
    %v332 = vunpack.c.h.b16 %v98
    %v333 = vunpack.c.l.b16 %v99
    %v334 = vunpack.c.h.b16 %v99
    %v335 = vunpack.c.l.b16 %v100
    %v336 = vunpack.c.h.b16 %v100
    %v337 = vunpack.c.l.b16 %v101
    %v338 = vunpack.c.h.b16 %v101
    %v339 = vunpack.c.l.b16 %v102
    %v340 = vunpack.c.h.b16 %v102
    %v341 = vunpack.c.l.b16 %v103
    %v342 = vunpack.c.h.b16 %v103
    %v343 = vunpack.c.l.b16 %v104
    %v344 = vunpack.c.h.b16 %v104
    %v345 = vunpack.c.l.b16 %v105
    %v346 = vunpack.c.h.b16 %v105
    %v347 = vunpack.c.l.b16 %v106
    %v348 = vunpack.c.h.b16 %v106
    %v349 = vunpack.c.l.b16 %v107
    %v350 = vunpack.c.h.b16 %v107
    %v351 = vunpack.c.l.b16 %v108
    %v352 = vunpack.c.h.b16 %v108
    %v353 = vunpack.c.l.b16 %v109
    %v354 = vunpack.c.h.b16 %v109
    %v355 = vunpack.c.l.b16 %v110
    %v356 = vunpack.c.h.b16 %v110
    %v357 = vunpack.c.l.b16 %v111
    %v358 = vunpack.c.h.b16 %v111
    %v359 = vunpack.c.l.b16 %v112
    %v360 = vunpack.c.h.b16 %v112
    %v361 = vunpack.c.l.b16 %v113
    %v362 = vunpack.c.h.b16 %v113
    %v363 = vunpack.c.l.b16 %v114
    %v364 = vunpack.c.h.b16 %v114
    %v365 = vunpack.c.l.b16 %v115
    %v366 = vunpack.c.h.b16 %v115
    %v367 = vunpack.c.l.b16 %v116
    %v368 = vunpack.c.h.b16 %v116
    %v369 = vunpack.c.l.b16 %v117
    %v370 = vunpack.c.h.b16 %v117
    %v371 = vunpack.c.l.b16 %v118
    %v372 = vunpack.c.h.b16 %v118
    %v373 = vunpack.c.l.b16 %v119
    %v374 = vunpack.c.h.b16 %v119
    %v375 = vunpack.c.l.b16 %v120
    %v376 = vunpack.c.h.b16 %v120
    %v377 = vunpack.c.l.b16 %v121
    %v378 = vunpack.c.h.b16 %v121
    %v379 = vunpack.c.l.b16 %v122
    %v380 = vunpack.c.h.b16 %v122
    %v381 = vunpack.c.l.b16 %v123
    %v382 = vunpack.c.h.b16 %v123
    %v383 = vunpack.c.l.b16 %v124
    %v384 = vunpack.c.h.b16 %v124
    %v385 = vunpack.c.l.b16 %v125
    %v386 = vunpack.c.h.b16 %v125
    %v387 = vunpack.c.l.b16 %v126
    %v388 = vunpack.c.h.b16 %v126
    %v389 = vunpack.c.l.b16 %v127
    %v390 = vunpack.c.h.b16 %v127
    %v391 = vunpack.c.l.b16 %v128
    %v392 = vunpack.c.h.b16 %v128
    %v393 = vunpack.c.l.b16 %v129
    %v394 = vunpack.c.h.b16 %v129
    %v395 = vunpack.c.l.b16 %v130
    %v396 = vunpack.c.h.b16 %v130
    %v397 = vunpack.c.l.b16 %v131
    %v398 = vunpack.c.h.b16 %v131
    %v399 = vunpack.c.l.b16 %v132
    %v400 = vunpack.c.h.b16 %v132
    %v401 = vunpack.c.l.b16 %v133
    %v402 = vunpack.c.h.b16 %v133
    %v403 = vunpack.c.l.b16 %v134
    %v404 = vunpack.c.h.b16 %v134
    %v405 = vunpack.c.l.b16 %v135
    %v406 = vunpack.c.h.b16 %v135
    %v407 = vunpack.c.l.b16 %v136
    %v408 = vunpack.c.h.b16 %v136
    %v409 = vunpack.c.l.b16 %v137
    %v410 = vunpack.c.h.b16 %v137
    %v411 = vunpack.c.l.b16 %v138
    %v412 = vunpack.c.h.b16 %v138
    %v413 = vunpack.c.l.b16 %v139
    %v414 = vunpack.c.h.b16 %v139
    %v415 = vunpack.c.l.b16 %v140
    %v416 = vunpack.c.h.b16 %v140
    %v417 = vunpack.c.l.b16 %v141
    %v418 = vunpack.c.h.b16 %v141
    %v419 = vunpack.c.l.b16 %v142
    %v420 = vunpack.c.h.b16 %v142
    %v421 = vunpack.c.l.b16 %v143
    %v422 = vunpack.c.h.b16 %v143
    %v423 = vunpack.c.l.b16 %v144
    %v424 = vunpack.c.h.b16 %v144
    %v425 = vunpack.c.l.b16 %v145
    %v426 = vunpack.c.h.b16 %v145
    %v427 = vunpack.c.l.b16 %v146
    %v428 = vunpack.c.h.b16 %v146
    %v429 = vunpack.c.l.b16 %v147
    %v430 = vunpack.c.h.b16 %v147
    %v431 = vunpack.c.l.b16 %v148
    %v432 = vunpack.c.h.b16 %v148
    %v433 = vunpack.c.l.b16 %v149
    %v434 = vunpack.c.h.b16 %v149
    %v435 = vunpack.c.l.b16 %v150
    %v436 = vunpack.c.h.b16 %v150
    %v437 = vunpack.c.l.b16 %v151
    %v438 = vunpack.c.h.b16 %v151
    %v439 = vunpack.c.l.b16 %v152
    %v440 = vunpack.c.h.b16 %v152
    %v441 = vunpack.c.l.b16 %v153
    %v442 = vunpack.c.h.b16 %v153
    %v443 = vunpack.c.l.b16 %v154
    %v444 = vunpack.c.h.b16 %v154
    %v445 = vunpack.c.l.b16 %v155
    %v446 = vunpack.c.h.b16 %v155
    %v447 = vunpack.c.l.b16 %v156
    %v448 = vunpack.c.h.b16 %v156
    %v449 = vunpack.c.l.b16 %v157
    %v450 = vunpack.c.h.b16 %v157
    %v451 = vunpack.c.l.b16 %v158
    %v452 = vunpack.c.h.b16 %v158
    %v453 = vunpack.c.l.b16 %v159
    %v454 = vunpack.c.h.b16 %v159
    %v455 = vunpack.c.l.b16 %v160
    %v456 = vunpack.c.h.b16 %v160
    %v457 = vunpack.c.l.b16 %v161
    %v458 = vunpack.c.h.b16 %v161
    %v459 = vunpack.c.l.b16 %v162
    %v460 = vunpack.c.h.b16 %v162
    %v461 = vunpack.c.l.b16 %v163
    %v462 = vunpack.c.h.b16 %v163
    %v463 = vunpack.c.l.b16 %v164
    %v464 = vunpack.c.h.b16 %v164
    %v465 = vunpack.c.l.b16 %v165
    %v466 = vunpack.c.h.b16 %v165
    %v467 = vunpack.c.l.b16 %v166
    %v468 = vunpack.c.h.b16 %v166
    %v469 = vunpack.c.l.b16 %v167
    %v470 = vunpack.c.h.b16 %v167
    %v471 = vunpack.c.l.b16 %v168
    %v472 = vunpack.c.h.b16 %v168
    %v473 = vunpack.c.l.b16 %v169
    %v474 = vunpack.c.h.b16 %v169
    %v475 = vunpack.c.l.b16 %v170
    %v476 = vunpack.c.h.b16 %v170
    %v477 = vunpack.c.l.b16 %v171
    %v478 = vunpack.c.h.b16 %v171
    %v479 = vunpack.c.l.b16 %v172
    %v480 = vunpack.c.h.b16 %v172
    %v481 = vunpack.c.l.b16 %v173
    %v482 = vunpack.c.h.b16 %v173
    %v483 = vunpack.c.l.b16 %v174
    %v484 = vunpack.c.h.b16 %v174
    %v485 = vunpack.c.l.b16 %v175
    %v486 = vunpack.c.h.b16 %v175
    %v487 = vunpack.c.l.b16 %v176
    %v488 = vunpack.c.h.b16 %v176
    %v489 = vunpack.c.l.b16 %v177
    %v490 = vunpack.c.h.b16 %v177
    %v491 = vunpack.c.l.b16 %v178
    %v492 = vunpack.c.h.b16 %v178
    %v493 = vunpack.c.l.b16 %v179
    %v494 = vunpack.c.h.b16 %v179
    %v495 = vunpack.c.l.b16 %v180
    %v496 = vunpack.c.h.b16 %v180
    %v497 = vunpack.c.l.b16 %v181
    %v498 = vunpack.c.h.b16 %v181
    %v499 = vunpack.c.l.b16 %v182
    %v500 = vunpack.c.h.b16 %v182
    %v501 = vunpack.c.l.b16 %v183
    %v502 = vunpack.c.h.b16 %v183
    %v503 = vunpack.c.l.b16 %v184
    %v504 = vunpack.c.h.b16 %v184
    %v505 = vpack.c.b16 %v319, %v313
    %v506 = vpack.c.b16 %v320, %v314
    %v507 = vpack.c.b16 %v321, %v315
    %v508 = vpack.c.b16 %v322, %v316
    %v509 = vpack.c.b16 %v323, %v317
    %v510 = vpack.c.b16 %v324, %v318
    %v511 = vpack.c.b16 %v331, %v325
    %v512 = vpack.c.b16 %v332, %v326
    %v513 = vpack.c.b16 %v333, %v327
    %v514 = vpack.c.b16 %v334, %v328
    %v515 = vpack.c.b16 %v335, %v329
    %v516 = vpack.c.b16 %v336, %v330
    %v517 = vpack.c.b16 %v343, %v337
    %v518 = vpack.c.b16 %v344, %v338
    %v519 = vpack.c.b16 %v345, %v339
    %v520 = vpack.c.b16 %v346, %v340
    %v521 = vpack.c.b16 %v347, %v341
    %v522 = vpack.c.b16 %v348, %v342
    %v523 = vpack.c.b16 %v355, %v349
    %v524 = vpack.c.b16 %v356, %v350
    %v525 = vpack.c.b16 %v357, %v351
    %v526 = vpack.c.b16 %v358, %v352
    %v527 = vpack.c.b16 %v359, %v353
    %v528 = vpack.c.b16 %v360, %v354
    %v529 = vpack.c.b16 %v367, %v361
    %v530 = vpack.c.b16 %v368, %v362
    %v531 = vpack.c.b16 %v369, %v363
    %v532 = vpack.c.b16 %v370, %v364
    %v533 = vpack.c.b16 %v371, %v365
    %v534 = vpack.c.b16 %v372, %v366
    %v535 = vpack.c.b16 %v379, %v373
    %v536 = vpack.c.b16 %v380, %v374
    %v537 = vpack.c.b16 %v381, %v375
    %v538 = vpack.c.b16 %v382, %v376
    %v539 = vpack.c.b16 %v383, %v377
    %v540 = vpack.c.b16 %v384, %v378
    %v541 = vpack.c.b16 %v391, %v385
    %v542 = vpack.c.b16 %v392, %v386
    %v543 = vpack.c.b16 %v393, %v387
    %v544 = vpack.c.b16 %v394, %v388
    %v545 = vpack.c.b16 %v395, %v389
    %v546 = vpack.c.b16 %v396, %v390
    %v547 = vpack.c.b16 %v403, %v397
    %v548 = vpack.c.b16 %v404, %v398
    %v549 = vpack.c.b16 %v405, %v399
    %v550 = vpack.c.b16 %v406, %v400
    %v551 = vpack.c.b16 %v407, %v401
    %v552 = vpack.c.b16 %v408, %v402
    %v553 = vpack.c.b16 %v415, %v409
    %v554 = vpack.c.b16 %v416, %v410
    %v555 = vpack.c.b16 %v417, %v411
    %v556 = vpack.c.b16 %v418, %v412
    %v557 = vpack.c.b16 %v419, %v413
    %v558 = vpack.c.b16 %v420, %v414
    %v559 = vpack.c.b16 %v427, %v421
    %v560 = vpack.c.b16 %v428, %v422
    %v561 = vpack.c.b16 %v429, %v423
    %v562 = vpack.c.b16 %v430, %v424
    %v563 = vpack.c.b16 %v431, %v425
    %v564 = vpack.c.b16 %v432, %v426
    %v565 = vpack.c.b16 %v439, %v433
    %v566 = vpack.c.b16 %v440, %v434
    %v567 = vpack.c.b16 %v441, %v435
    %v568 = vpack.c.b16 %v442, %v436
    %v569 = vpack.c.b16 %v443, %v437
    %v570 = vpack.c.b16 %v444, %v438
    %v571 = vpack.c.b16 %v451, %v445
    %v572 = vpack.c.b16 %v452, %v446
    %v573 = vpack.c.b16 %v453, %v447
    %v574 = vpack.c.b16 %v454, %v448
    %v575 = vpack.c.b16 %v455, %v449
    %v576 = vpack.c.b16 %v456, %v450
    %v577 = vpack.c.b16 %v463, %v457
    %v578 = vpack.c.b16 %v464, %v458
    %v579 = vpack.c.b16 %v465, %v459
    %v580 = vpack.c.b16 %v466, %v460
    %v581 = vpack.c.b16 %v467, %v461
    %v582 = vpack.c.b16 %v468, %v462
    %v583 = vpack.c.b16 %v475, %v469
    %v584 = vpack.c.b16 %v476, %v470
    %v585 = vpack.c.b16 %v477, %v471
    %v586 = vpack.c.b16 %v478, %v472
    %v587 = vpack.c.b16 %v479, %v473
    %v588 = vpack.c.b16 %v480, %v474
    %v589 = vpack.c.b16 %v487, %v481
    %v590 = vpack.c.b16 %v488, %v482
    %v591 = vpack.c.b16 %v489, %v483
    %v592 = vpack.c.b16 %v490, %v484
    %v593 = vpack.c.b16 %v491, %v485
    %v594 = vpack.c.b16 %v492, %v486
    %v595 = vpack.c.b16 %v499, %v493
    %v596 = vpack.c.b16 %v500, %v494
    %v597 = vpack.c.b16 %v501, %v495
    %v598 = vpack.c.b16 %v502, %v496
    %v599 = vpack.c.b16 %v503, %v497
    %v600 = vpack.c.b16 %v504, %v498
    %697 = vmatprep.subr.bf16.mxu0 %v506
    %698 = vmatpush1.bf16.msra.mxu0 %v505
    %699 = vmatprep.subr.bf16.mxu0 %v512
    %700 = vmatpush1.bf16.msra.mxu0 %v511
    %701 = vmatprep.subr.bf16.mxu0 %v518
    %702 = vmatpush1.bf16.msra.mxu0 %v517
    %703 = vmatprep.subr.bf16.mxu0 %v524
    %704 = vmatpush1.bf16.msra.mxu0 %v523
    %705 = vmatprep.subr.bf16.mxu0 %v530
    %706 = vmatpush1.bf16.msra.mxu0 %v529
    %707 = vmatprep.subr.bf16.mxu0 %v536
    %708 = vmatpush1.bf16.msra.mxu0 %v535
    %709 = vmatprep.subr.bf16.mxu0 %v542
    %710 = vmatpush1.bf16.msra.mxu0 %v541
    %711 = vmatprep.subr.bf16.mxu0 %v548
    %712 = vmatpush1.bf16.msra.mxu0 %v547
    %713 = vmatprep.subr.bf16.mxu0 %v554
    %714 = vmatpush1.bf16.msra.mxu0 %v553
    %715 = vmatprep.subr.bf16.mxu0 %v560
    %716 = vmatpush1.bf16.msra.mxu0 %v559
    %717 = vmatprep.subr.bf16.mxu0 %v566
    %718 = vmatpush1.bf16.msra.mxu0 %v565
    %719 = vmatprep.subr.bf16.mxu0 %v572
    %720 = vmatpush1.bf16.msra.mxu0 %v571
    %721 = vmatprep.subr.bf16.mxu0 %v578
    %722 = vmatpush1.bf16.msra.mxu0 %v577
    %723 = vmatprep.subr.bf16.mxu0 %v584
    %724 = vmatpush1.bf16.msra.mxu0 %v583
    %725 = vmatprep.subr.bf16.mxu0 %v590
    %726 = vmatpush1.bf16.msra.mxu0 %v589
    %727 = vmatprep.subr.bf16.mxu0 %v596
    %728 = vmatpush1.bf16.msra.mxu0 %v595
    %729 = vmatprep.mubr.bf16.mxu0 %v86
    %730 = vmatmul.mubr.bf16.gmra.mrb[0].mxu0 %v85
    %v731 = vpop.f32.mrb[0].mxu0
    %v732 = vadd.f32 %v190, %v731
    %v733 = vpop.f32.mrb[0].mxu0
    %v734 = vadd.f32 %v194, %v733
    %v735 = vpop.f32.mrb[0].mxu0
    %v736 = vadd.f32 %v190, %v735
    %v737 = vpop.f32.mrb[0].mxu0
    %v738 = vadd.f32 %v194, %v737
    %739 = vmatprep.mubr.bf16.mxu0 %v88
    %740 = vmatmul.mubr.bf16.gmra.mrb[0].mxu0 %v87
    %v741 = vpop.f32.mrb[0].mxu0
    %v742 = vadd.f32 %v190, %v741
    %v743 = vpop.f32.mrb[0].mxu0
    %v744 = vadd.f32 %v194, %v743
    %v745 = vpop.f32.mrb[0].mxu0
    %v746 = vadd.f32 %v190, %v745
    %v747 = vpop.f32.mrb[0].mxu0
    %v748 = vadd.f32 %v194, %v747
    %749 = vdwg.mxu0
    %750 = vmatprep.subr.bf16.mxu0 %v508
    %751 = vmatpush1.bf16.msra.mxu0 %v507
    %752 = vmatprep.subr.bf16.mxu0 %v514
    %753 = vmatpush1.bf16.msra.mxu0 %v513
    %754 = vmatprep.subr.bf16.mxu0 %v520
    %755 = vmatpush1.bf16.msra.mxu0 %v519
    %756 = vmatprep.subr.bf16.mxu0 %v526
    %757 = vmatpush1.bf16.msra.mxu0 %v525
    %758 = vmatprep.subr.bf16.mxu0 %v532
    %759 = vmatpush1.bf16.msra.mxu0 %v531
    %760 = vmatprep.subr.bf16.mxu0 %v538
    %761 = vmatpush1.bf16.msra.mxu0 %v537
    %762 = vmatprep.subr.bf16.mxu0 %v544
    %763 = vmatpush1.bf16.msra.mxu0 %v543
    %764 = vmatprep.subr.bf16.mxu0 %v550
    %765 = vmatpush1.bf16.msra.mxu0 %v549
    %766 = vmatprep.subr.bf16.mxu0 %v556
    %767 = vmatpush1.bf16.msra.mxu0 %v555
    %768 = vmatprep.subr.bf16.mxu0 %v562
    %769 = vmatpush1.bf16.msra.mxu0 %v561
    %770 = vmatprep.subr.bf16.mxu0 %v568
    %771 = vmatpush1.bf16.msra.mxu0 %v567
    %772 = vmatprep.subr.bf16.mxu0 %v574
    %773 = vmatpush1.bf16.msra.mxu0 %v573
    %774 = vmatprep.subr.bf16.mxu0 %v580
    %775 = vmatpush1.bf16.msra.mxu0 %v579
    %776 = vmatprep.subr.bf16.mxu0 %v586
    %777 = vmatpush1.bf16.msra.mxu0 %v585
    %778 = vmatprep.subr.bf16.mxu0 %v592
    %779 = vmatpush1.bf16.msra.mxu0 %v591
    %780 = vmatprep.subr.bf16.mxu0 %v598
    %781 = vmatpush1.bf16.msra.mxu0 %v597
    %782 = vmatprep.mubr.bf16.mxu0 %v86
    %783 = vmatmul.mubr.bf16.gmra.mrb[0].mxu0 %v85
    %v784 = vpop.f32.mrb[0].mxu0
    %v785 = vadd.f32 %v198, %v784
    %v786 = vpop.f32.mrb[0].mxu0
    %v787 = vadd.f32 %v202, %v786
    %v788 = vpop.f32.mrb[0].mxu0
    %v789 = vadd.f32 %v198, %v788
    %v790 = vpop.f32.mrb[0].mxu0
    %v791 = vadd.f32 %v202, %v790
    %792 = vmatprep.mubr.bf16.mxu0 %v88
    %793 = vmatmul.mubr.bf16.gmra.mrb[0].mxu0 %v87
    %v794 = vpop.f32.mrb[0].mxu0
    %v795 = vadd.f32 %v198, %v794
    %v796 = vpop.f32.mrb[0].mxu0
    %v797 = vadd.f32 %v202, %v796
    %v798 = vpop.f32.mrb[0].mxu0
    %v799 = vadd.f32 %v198, %v798
    %v800 = vpop.f32.mrb[0].mxu0
    %v801 = vadd.f32 %v202, %v800
    %802 = vdwg.mxu0
    %803 = vmatprep.subr.bf16.mxu0 %v510
    %804 = vmatpush1.bf16.msra.mxu0 %v509
    %805 = vmatprep.subr.bf16.mxu0 %v516
    %806 = vmatpush1.bf16.msra.mxu0 %v515
    %807 = vmatprep.subr.bf16.mxu0 %v522
    %808 = vmatpush1.bf16.msra.mxu0 %v521
    %809 = vmatprep.subr.bf16.mxu0 %v528
    %810 = vmatpush1.bf16.msra.mxu0 %v527
    %811 = vmatprep.subr.bf16.mxu0 %v534
    %812 = vmatpush1.bf16.msra.mxu0 %v533
    %813 = vmatprep.subr.bf16.mxu0 %v540
    %814 = vmatpush1.bf16.msra.mxu0 %v539
    %815 = vmatprep.subr.bf16.mxu0 %v546
    %816 = vmatpush1.bf16.msra.mxu0 %v545
    %817 = vmatprep.subr.bf16.mxu0 %v552
    %818 = vmatpush1.bf16.msra.mxu0 %v551
    %819 = vmatprep.subr.bf16.mxu0 %v558
    %820 = vmatpush1.bf16.msra.mxu0 %v557
    %821 = vmatprep.subr.bf16.mxu0 %v564
    %822 = vmatpush1.bf16.msra.mxu0 %v563
    %823 = vmatprep.subr.bf16.mxu0 %v570
    %824 = vmatpush1.bf16.msra.mxu0 %v569
    %825 = vmatprep.subr.bf16.mxu0 %v576
    %826 = vmatpush1.bf16.msra.mxu0 %v575
    %827 = vmatprep.subr.bf16.mxu0 %v582
    %828 = vmatpush1.bf16.msra.mxu0 %v581
    %829 = vmatprep.subr.bf16.mxu0 %v588
    %830 = vmatpush1.bf16.msra.mxu0 %v587
    %831 = vmatprep.subr.bf16.mxu0 %v594
    %832 = vmatpush1.bf16.msra.mxu0 %v593
    %833 = vmatprep.subr.bf16.mxu0 %v600
    %834 = vmatpush1.bf16.msra.mxu0 %v599
    %835 = vmatprep.mubr.bf16.mxu0 %v86
    %836 = vmatmul.mubr.bf16.gmra.mrb[0].mxu0 %v85
    %v837 = vpop.f32.mrb[0].mxu0
    %v838 = vadd.f32 %v206, %v837
    %v839 = vpop.f32.mrb[0].mxu0
    %v840 = vadd.f32 %v210, %v839
    %v841 = vpop.f32.mrb[0].mxu0
    %v842 = vadd.f32 %v206, %v841
    %v843 = vpop.f32.mrb[0].mxu0
    %v844 = vadd.f32 %v210, %v843
    %845 = vmatprep.mubr.bf16.mxu0 %v88
    %846 = vmatmul.mubr.bf16.gmra.mrb[0].mxu0 %v87
    %v847 = vpop.f32.mrb[0].mxu0
    %v848 = vadd.f32 %v206, %v847
    %v849 = vpop.f32.mrb[0].mxu0
    %v850 = vadd.f32 %v210, %v849
    %v851 = vpop.f32.mrb[0].mxu0
    %v852 = vadd.f32 %v206, %v851
    %v853 = vpop.f32.mrb[0].mxu0
    %v854 = vadd.f32 %v210, %v853
    %855 = vdwg.mxu0
    %v856 = vld [vmem:[#allocation7] sm:$0xff]
    %v857 = vld [vmem:[#allocation7 + $0x8] sm:$0xff]
    %v858 = vld [vmem:[#allocation7 + $0x10] sm:$0xff]
    %v859 = vld [vmem:[#allocation7 + $0x18] sm:$0xff]
    %v860 = vld [vmem:[#allocation7 + $0x20] sm:$0xff]
    %v861 = vld [vmem:[#allocation7 + $0x28] sm:$0xff]
    %v862 = vld [vmem:[#allocation7 + $0x30] sm:$0xff]
    %v863 = vld [vmem:[#allocation7 + $0x38] sm:$0xff]
    %v864 = vld [vmem:[#allocation7 + $0x40] sm:$0xff]
    %v865 = vld [vmem:[#allocation7 + $0x48] sm:$0xff]
    %v866 = vld [vmem:[#allocation7 + $0x50] sm:$0xff]
    %v867 = vld [vmem:[#allocation7 + $0x58] sm:$0xff]
    %v868 = vld [vmem:[#allocation7 + $0x60] sm:$0xff]
    %v869 = vld [vmem:[#allocation7 + $0x68] sm:$0xff]
    %v870 = vld [vmem:[#allocation7 + $0x70] sm:$0xff]
    %v871 = vld [vmem:[#allocation7 + $0x78] sm:$0xff]
    %v872 = vld [vmem:[#allocation7 + $0x80] sm:$0xff]
    %v873 = vld [vmem:[#allocation7 + $0x88] sm:$0xff]
    %v874 = vld [vmem:[#allocation7 + $0x90] sm:$0xff]
    %v875 = vld [vmem:[#allocation7 + $0x98] sm:$0xff]
    %v876 = vld [vmem:[#allocation7 + $0xa0] sm:$0xff]
    %v877 = vld [vmem:[#allocation7 + $0xa8] sm:$0xff]
    %v878 = vld [vmem:[#allocation7 + $0xb0] sm:$0xff]
    %v879 = vld [vmem:[#allocation7 + $0xb8] sm:$0xff]
    %v880 = vld [vmem:[#allocation7 + $0xc0] sm:$0xff]
    %v881 = vld [vmem:[#allocation7 + $0xc8] sm:$0xff]
    %v882 = vld [vmem:[#allocation7 + $0xd0] sm:$0xff]
    %v883 = vld [vmem:[#allocation7 + $0xd8] sm:$0xff]
    %v884 = vld [vmem:[#allocation7 + $0xe0] sm:$0xff]
    %v885 = vld [vmem:[#allocation7 + $0xe8] sm:$0xff]
    %v886 = vld [vmem:[#allocation7 + $0xf0] sm:$0xff]
    %v887 = vld [vmem:[#allocation7 + $0xf8] sm:$0xff]
    %v888 = vld [vmem:[#allocation7 + $0x100] sm:$0xff]
    %v889 = vld [vmem:[#allocation7 + $0x108] sm:$0xff]
    %v890 = vld [vmem:[#allocation7 + $0x110] sm:$0xff]
    %v891 = vld [vmem:[#allocation7 + $0x118] sm:$0xff]
    %v892 = vld [vmem:[#allocation7 + $0x120] sm:$0xff]
    %v893 = vld [vmem:[#allocation7 + $0x128] sm:$0xff]
    %v894 = vld [vmem:[#allocation7 + $0x130] sm:$0xff]
    %v895 = vld [vmem:[#allocation7 + $0x138] sm:$0xff]
    %v896 = vld [vmem:[#allocation7 + $0x140] sm:$0xff]
    %v897 = vld [vmem:[#allocation7 + $0x148] sm:$0xff]
    %v898 = vld [vmem:[#allocation7 + $0x150] sm:$0xff]
    %v899 = vld [vmem:[#allocation7 + $0x158] sm:$0xff]
    %v900 = vld [vmem:[#allocation7 + $0x160] sm:$0xff]
    %v901 = vld [vmem:[#allocation7 + $0x168] sm:$0xff]
    %v902 = vld [vmem:[#allocation7 + $0x170] sm:$0xff]
    %v903 = vld [vmem:[#allocation7 + $0x178] sm:$0xff]
    %v904 = vld [vmem:[#allocation7 + $0x180] sm:$0xff]
    %v905 = vld [vmem:[#allocation7 + $0x188] sm:$0xff]
    %v906 = vld [vmem:[#allocation7 + $0x190] sm:$0xff]
    %v907 = vld [vmem:[#allocation7 + $0x198] sm:$0xff]
    %v908 = vld [vmem:[#allocation7 + $0x1a0] sm:$0xff]
    %v909 = vld [vmem:[#allocation7 + $0x1a8] sm:$0xff]
    %v910 = vld [vmem:[#allocation7 + $0x1b0] sm:$0xff]
    %v911 = vld [vmem:[#allocation7 + $0x1b8] sm:$0xff]
    %v912 = vld [vmem:[#allocation7 + $0x1c0] sm:$0xff]
    %v913 = vld [vmem:[#allocation7 + $0x1c8] sm:$0xff]
    %v914 = vld [vmem:[#allocation7 + $0x1d0] sm:$0xff]
    %v915 = vld [vmem:[#allocation7 + $0x1d8] sm:$0xff]
    %v916 = vld [vmem:[#allocation7 + $0x1e0] sm:$0xff]
    %v917 = vld [vmem:[#allocation7 + $0x1e8] sm:$0xff]
    %v918 = vld [vmem:[#allocation7 + $0x1f0] sm:$0xff]
    %v919 = vld [vmem:[#allocation7 + $0x1f8] sm:$0xff]
    %v920 = vld [vmem:[#allocation7 + $0x200] sm:$0xff]
    %v921 = vld [vmem:[#allocation7 + $0x208] sm:$0xff]
    %v922 = vld [vmem:[#allocation7 + $0x210] sm:$0xff]
    %v923 = vld [vmem:[#allocation7 + $0x218] sm:$0xff]
    %v924 = vld [vmem:[#allocation7 + $0x220] sm:$0xff]
    %v925 = vld [vmem:[#allocation7 + $0x228] sm:$0xff]
    %v926 = vld [vmem:[#allocation7 + $0x230] sm:$0xff]
    %v927 = vld [vmem:[#allocation7 + $0x238] sm:$0xff]
    %v928 = vld [vmem:[#allocation7 + $0x240] sm:$0xff]
    %v929 = vld [vmem:[#allocation7 + $0x248] sm:$0xff]
    %v930 = vld [vmem:[#allocation7 + $0x250] sm:$0xff]
    %v931 = vld [vmem:[#allocation7 + $0x258] sm:$0xff]
    %v932 = vld [vmem:[#allocation7 + $0x260] sm:$0xff]
    %v933 = vld [vmem:[#allocation7 + $0x268] sm:$0xff]
    %v934 = vld [vmem:[#allocation7 + $0x270] sm:$0xff]
    %v935 = vld [vmem:[#allocation7 + $0x278] sm:$0xff]
    %v936 = vld [vmem:[#allocation7 + $0x280] sm:$0xff]
    %v937 = vld [vmem:[#allocation7 + $0x288] sm:$0xff]
    %v938 = vld [vmem:[#allocation7 + $0x290] sm:$0xff]
    %v939 = vld [vmem:[#allocation7 + $0x298] sm:$0xff]
    %v940 = vld [vmem:[#allocation7 + $0x2a0] sm:$0xff]
    %v941 = vld [vmem:[#allocation7 + $0x2a8] sm:$0xff]
    %v942 = vld [vmem:[#allocation7 + $0x2b0] sm:$0xff]
    %v943 = vld [vmem:[#allocation7 + $0x2b8] sm:$0xff]
    %v944 = vld [vmem:[#allocation7 + $0x2c0] sm:$0xff]
    %v945 = vld [vmem:[#allocation7 + $0x2c8] sm:$0xff]
    %v946 = vld [vmem:[#allocation7 + $0x2d0] sm:$0xff]
    %v947 = vld [vmem:[#allocation7 + $0x2d8] sm:$0xff]
    %v948 = vld [vmem:[#allocation7 + $0x2e0] sm:$0xff]
    %v949 = vld [vmem:[#allocation7 + $0x2e8] sm:$0xff]
    %v950 = vld [vmem:[#allocation7 + $0x2f0] sm:$0xff]
    %v951 = vld [vmem:[#allocation7 + $0x2f8] sm:$0xff]
    %v952 = vld [vmem:[#allocation8] sm:$0x3f]
    %v953 = vld [vmem:[#allocation2] sm:$0xff]
    %v954 = vld [vmem:[#allocation2 + $0x8] sm:$0xff]
    %v955 = vpack.c.bf16 %v953, %v953
    %v956 = vpack.c.bf16 %v954, %v954
    %v958 = vlaneseq
    %v959 = vshrl.u32 %v958, 7
    %v960 = vsub.s32 0, %v959
    %v961 = vrot.slane %v952, %v960
    %v962 = vlaneseq
    %v963 = vshrl.u32 %v962, 7
    %v964 = vsub.s32 1, %v963
    %v965 = vrot.slane %v952, %v964
    %v966 = vlaneseq
    %v967 = vshrl.u32 %v966, 7
    %v968 = vsub.s32 2, %v967
    %v969 = vrot.slane %v952, %v968
    %v970 = vlaneseq
    %v971 = vshrl.u32 %v970, 7
    %v972 = vsub.s32 3, %v971
    %v973 = vrot.slane %v952, %v972
    %v974 = vlaneseq
    %v975 = vshrl.u32 %v974, 7
    %v976 = vsub.s32 4, %v975
    %v977 = vrot.slane %v952, %v976
    %v978 = vlaneseq
    %v979 = vshrl.u32 %v978, 7
    %v980 = vsub.s32 5, %v979
    %v981 = vrot.slane %v952, %v980
    %v1084 = vunpack.c.l.b16 %v856
    %v1085 = vunpack.c.h.b16 %v856
    %v1086 = vunpack.c.l.b16 %v857
    %v1087 = vunpack.c.h.b16 %v857
    %v1088 = vunpack.c.l.b16 %v858
    %v1089 = vunpack.c.h.b16 %v858
    %v1090 = vunpack.c.l.b16 %v859
    %v1091 = vunpack.c.h.b16 %v859
    %v1092 = vunpack.c.l.b16 %v860
    %v1093 = vunpack.c.h.b16 %v860
    %v1094 = vunpack.c.l.b16 %v861
    %v1095 = vunpack.c.h.b16 %v861
    %v1096 = vunpack.c.l.b16 %v862
    %v1097 = vunpack.c.h.b16 %v862
    %v1098 = vunpack.c.l.b16 %v863
    %v1099 = vunpack.c.h.b16 %v863
    %v1100 = vunpack.c.l.b16 %v864
    %v1101 = vunpack.c.h.b16 %v864
    %v1102 = vunpack.c.l.b16 %v865
    %v1103 = vunpack.c.h.b16 %v865
    %v1104 = vunpack.c.l.b16 %v866
    %v1105 = vunpack.c.h.b16 %v866
    %v1106 = vunpack.c.l.b16 %v867
    %v1107 = vunpack.c.h.b16 %v867
    %v1108 = vunpack.c.l.b16 %v868
    %v1109 = vunpack.c.h.b16 %v868
    %v1110 = vunpack.c.l.b16 %v869
    %v1111 = vunpack.c.h.b16 %v869
    %v1112 = vunpack.c.l.b16 %v870
    %v1113 = vunpack.c.h.b16 %v870
    %v1114 = vunpack.c.l.b16 %v871
    %v1115 = vunpack.c.h.b16 %v871
    %v1116 = vunpack.c.l.b16 %v872
    %v1117 = vunpack.c.h.b16 %v872
    %v1118 = vunpack.c.l.b16 %v873
    %v1119 = vunpack.c.h.b16 %v873
    %v1120 = vunpack.c.l.b16 %v874
    %v1121 = vunpack.c.h.b16 %v874
    %v1122 = vunpack.c.l.b16 %v875
    %v1123 = vunpack.c.h.b16 %v875
    %v1124 = vunpack.c.l.b16 %v876
    %v1125 = vunpack.c.h.b16 %v876
    %v1126 = vunpack.c.l.b16 %v877
    %v1127 = vunpack.c.h.b16 %v877
    %v1128 = vunpack.c.l.b16 %v878
    %v1129 = vunpack.c.h.b16 %v878
    %v1130 = vunpack.c.l.b16 %v879
    %v1131 = vunpack.c.h.b16 %v879
    %v1132 = vunpack.c.l.b16 %v880
    %v1133 = vunpack.c.h.b16 %v880
    %v1134 = vunpack.c.l.b16 %v881
    %v1135 = vunpack.c.h.b16 %v881
    %v1136 = vunpack.c.l.b16 %v882
    %v1137 = vunpack.c.h.b16 %v882
    %v1138 = vunpack.c.l.b16 %v883
    %v1139 = vunpack.c.h.b16 %v883
    %v1140 = vunpack.c.l.b16 %v884
    %v1141 = vunpack.c.h.b16 %v884
    %v1142 = vunpack.c.l.b16 %v885
    %v1143 = vunpack.c.h.b16 %v885
    %v1144 = vunpack.c.l.b16 %v886
    %v1145 = vunpack.c.h.b16 %v886
    %v1146 = vunpack.c.l.b16 %v887
    %v1147 = vunpack.c.h.b16 %v887
    %v1148 = vunpack.c.l.b16 %v888
    %v1149 = vunpack.c.h.b16 %v888
    %v1150 = vunpack.c.l.b16 %v889
    %v1151 = vunpack.c.h.b16 %v889
    %v1152 = vunpack.c.l.b16 %v890
    %v1153 = vunpack.c.h.b16 %v890
    %v1154 = vunpack.c.l.b16 %v891
    %v1155 = vunpack.c.h.b16 %v891
    %v1156 = vunpack.c.l.b16 %v892
    %v1157 = vunpack.c.h.b16 %v892
    %v1158 = vunpack.c.l.b16 %v893
    %v1159 = vunpack.c.h.b16 %v893
    %v1160 = vunpack.c.l.b16 %v894
    %v1161 = vunpack.c.h.b16 %v894
    %v1162 = vunpack.c.l.b16 %v895
    %v1163 = vunpack.c.h.b16 %v895
    %v1164 = vunpack.c.l.b16 %v896
    %v1165 = vunpack.c.h.b16 %v896
    %v1166 = vunpack.c.l.b16 %v897
    %v1167 = vunpack.c.h.b16 %v897
    %v1168 = vunpack.c.l.b16 %v898
    %v1169 = vunpack.c.h.b16 %v898
    %v1170 = vunpack.c.l.b16 %v899
    %v1171 = vunpack.c.h.b16 %v899
    %v1172 = vunpack.c.l.b16 %v900
    %v1173 = vunpack.c.h.b16 %v900
    %v1174 = vunpack.c.l.b16 %v901
    %v1175 = vunpack.c.h.b16 %v901
    %v1176 = vunpack.c.l.b16 %v902
    %v1177 = vunpack.c.h.b16 %v902
    %v1178 = vunpack.c.l.b16 %v903
    %v1179 = vunpack.c.h.b16 %v903
    %v1180 = vunpack.c.l.b16 %v904
    %v1181 = vunpack.c.h.b16 %v904
    %v1182 = vunpack.c.l.b16 %v905
    %v1183 = vunpack.c.h.b16 %v905
    %v1184 = vunpack.c.l.b16 %v906
    %v1185 = vunpack.c.h.b16 %v906
    %v1186 = vunpack.c.l.b16 %v907
    %v1187 = vunpack.c.h.b16 %v907
    %v1188 = vunpack.c.l.b16 %v908
    %v1189 = vunpack.c.h.b16 %v908
    %v1190 = vunpack.c.l.b16 %v909
    %v1191 = vunpack.c.h.b16 %v909
    %v1192 = vunpack.c.l.b16 %v910
    %v1193 = vunpack.c.h.b16 %v910
    %v1194 = vunpack.c.l.b16 %v911
    %v1195 = vunpack.c.h.b16 %v911
    %v1196 = vunpack.c.l.b16 %v912
    %v1197 = vunpack.c.h.b16 %v912
    %v1198 = vunpack.c.l.b16 %v913
    %v1199 = vunpack.c.h.b16 %v913
    %v1200 = vunpack.c.l.b16 %v914
    %v1201 = vunpack.c.h.b16 %v914
    %v1202 = vunpack.c.l.b16 %v915
    %v1203 = vunpack.c.h.b16 %v915
    %v1204 = vunpack.c.l.b16 %v916
    %v1205 = vunpack.c.h.b16 %v916
    %v1206 = vunpack.c.l.b16 %v917
    %v1207 = vunpack.c.h.b16 %v917
    %v1208 = vunpack.c.l.b16 %v918
    %v1209 = vunpack.c.h.b16 %v918
    %v1210 = vunpack.c.l.b16 %v919
    %v1211 = vunpack.c.h.b16 %v919
    %v1212 = vunpack.c.l.b16 %v920
    %v1213 = vunpack.c.h.b16 %v920
    %v1214 = vunpack.c.l.b16 %v921
    %v1215 = vunpack.c.h.b16 %v921
    %v1216 = vunpack.c.l.b16 %v922
    %v1217 = vunpack.c.h.b16 %v922
    %v1218 = vunpack.c.l.b16 %v923
    %v1219 = vunpack.c.h.b16 %v923
    %v1220 = vunpack.c.l.b16 %v924
    %v1221 = vunpack.c.h.b16 %v924
    %v1222 = vunpack.c.l.b16 %v925
    %v1223 = vunpack.c.h.b16 %v925
    %v1224 = vunpack.c.l.b16 %v926
    %v1225 = vunpack.c.h.b16 %v926
    %v1226 = vunpack.c.l.b16 %v927
    %v1227 = vunpack.c.h.b16 %v927
    %v1228 = vunpack.c.l.b16 %v928
    %v1229 = vunpack.c.h.b16 %v928
    %v1230 = vunpack.c.l.b16 %v929
    %v1231 = vunpack.c.h.b16 %v929
    %v1232 = vunpack.c.l.b16 %v930
    %v1233 = vunpack.c.h.b16 %v930
    %v1234 = vunpack.c.l.b16 %v931
    %v1235 = vunpack.c.h.b16 %v931
    %v1236 = vunpack.c.l.b16 %v932
    %v1237 = vunpack.c.h.b16 %v932
    %v1238 = vunpack.c.l.b16 %v933
    %v1239 = vunpack.c.h.b16 %v933
    %v1240 = vunpack.c.l.b16 %v934
    %v1241 = vunpack.c.h.b16 %v934
    %v1242 = vunpack.c.l.b16 %v935
    %v1243 = vunpack.c.h.b16 %v935
    %v1244 = vunpack.c.l.b16 %v936
    %v1245 = vunpack.c.h.b16 %v936
    %v1246 = vunpack.c.l.b16 %v937
    %v1247 = vunpack.c.h.b16 %v937
    %v1248 = vunpack.c.l.b16 %v938
    %v1249 = vunpack.c.h.b16 %v938
    %v1250 = vunpack.c.l.b16 %v939
    %v1251 = vunpack.c.h.b16 %v939
    %v1252 = vunpack.c.l.b16 %v940
    %v1253 = vunpack.c.h.b16 %v940
    %v1254 = vunpack.c.l.b16 %v941
    %v1255 = vunpack.c.h.b16 %v941
    %v1256 = vunpack.c.l.b16 %v942
    %v1257 = vunpack.c.h.b16 %v942
    %v1258 = vunpack.c.l.b16 %v943
    %v1259 = vunpack.c.h.b16 %v943
    %v1260 = vunpack.c.l.b16 %v944
    %v1261 = vunpack.c.h.b16 %v944
    %v1262 = vunpack.c.l.b16 %v945
    %v1263 = vunpack.c.h.b16 %v945
    %v1264 = vunpack.c.l.b16 %v946
    %v1265 = vunpack.c.h.b16 %v946
    %v1266 = vunpack.c.l.b16 %v947
    %v1267 = vunpack.c.h.b16 %v947
    %v1268 = vunpack.c.l.b16 %v948
    %v1269 = vunpack.c.h.b16 %v948
    %v1270 = vunpack.c.l.b16 %v949
    %v1271 = vunpack.c.h.b16 %v949
    %v1272 = vunpack.c.l.b16 %v950
    %v1273 = vunpack.c.h.b16 %v950
    %v1274 = vunpack.c.l.b16 %v951
    %v1275 = vunpack.c.h.b16 %v951
    %v1276 = vpack.c.b16 %v1090, %v1084
    %v1277 = vpack.c.b16 %v1091, %v1085
    %v1278 = vpack.c.b16 %v1092, %v1086
    %v1279 = vpack.c.b16 %v1093, %v1087
    %v1280 = vpack.c.b16 %v1094, %v1088
    %v1281 = vpack.c.b16 %v1095, %v1089
    %v1282 = vpack.c.b16 %v1102, %v1096
    %v1283 = vpack.c.b16 %v1103, %v1097
    %v1284 = vpack.c.b16 %v1104, %v1098
    %v1285 = vpack.c.b16 %v1105, %v1099
    %v1286 = vpack.c.b16 %v1106, %v1100
    %v1287 = vpack.c.b16 %v1107, %v1101
    %v1288 = vpack.c.b16 %v1114, %v1108
    %v1289 = vpack.c.b16 %v1115, %v1109
    %v1290 = vpack.c.b16 %v1116, %v1110
    %v1291 = vpack.c.b16 %v1117, %v1111
    %v1292 = vpack.c.b16 %v1118, %v1112
    %v1293 = vpack.c.b16 %v1119, %v1113
    %v1294 = vpack.c.b16 %v1126, %v1120
    %v1295 = vpack.c.b16 %v1127, %v1121
    %v1296 = vpack.c.b16 %v1128, %v1122
    %v1297 = vpack.c.b16 %v1129, %v1123
    %v1298 = vpack.c.b16 %v1130, %v1124
    %v1299 = vpack.c.b16 %v1131, %v1125
    %v1300 = vpack.c.b16 %v1138, %v1132
    %v1301 = vpack.c.b16 %v1139, %v1133
    %v1302 = vpack.c.b16 %v1140, %v1134
    %v1303 = vpack.c.b16 %v1141, %v1135
    %v1304 = vpack.c.b16 %v1142, %v1136
    %v1305 = vpack.c.b16 %v1143, %v1137
    %v1306 = vpack.c.b16 %v1150, %v1144
    %v1307 = vpack.c.b16 %v1151, %v1145
    %v1308 = vpack.c.b16 %v1152, %v1146
    %v1309 = vpack.c.b16 %v1153, %v1147
    %v1310 = vpack.c.b16 %v1154, %v1148
    %v1311 = vpack.c.b16 %v1155, %v1149
    %v1312 = vpack.c.b16 %v1162, %v1156
    %v1313 = vpack.c.b16 %v1163, %v1157
    %v1314 = vpack.c.b16 %v1164, %v1158
    %v1315 = vpack.c.b16 %v1165, %v1159
    %v1316 = vpack.c.b16 %v1166, %v1160
    %v1317 = vpack.c.b16 %v1167, %v1161
    %v1318 = vpack.c.b16 %v1174, %v1168
    %v1319 = vpack.c.b16 %v1175, %v1169
    %v1320 = vpack.c.b16 %v1176, %v1170
    %v1321 = vpack.c.b16 %v1177, %v1171
    %v1322 = vpack.c.b16 %v1178, %v1172
    %v1323 = vpack.c.b16 %v1179, %v1173
    %v1324 = vpack.c.b16 %v1186, %v1180
    %v1325 = vpack.c.b16 %v1187, %v1181
    %v1326 = vpack.c.b16 %v1188, %v1182
    %v1327 = vpack.c.b16 %v1189, %v1183
    %v1328 = vpack.c.b16 %v1190, %v1184
    %v1329 = vpack.c.b16 %v1191, %v1185
    %v1330 = vpack.c.b16 %v1198, %v1192
    %v1331 = vpack.c.b16 %v1199, %v1193
    %v1332 = vpack.c.b16 %v1200, %v1194
    %v1333 = vpack.c.b16 %v1201, %v1195
    %v1334 = vpack.c.b16 %v1202, %v1196
    %v1335 = vpack.c.b16 %v1203, %v1197
    %v1336 = vpack.c.b16 %v1210, %v1204
    %v1337 = vpack.c.b16 %v1211, %v1205
    %v1338 = vpack.c.b16 %v1212, %v1206
    %v1339 = vpack.c.b16 %v1213, %v1207
    %v1340 = vpack.c.b16 %v1214, %v1208
    %v1341 = vpack.c.b16 %v1215, %v1209
    %v1342 = vpack.c.b16 %v1222, %v1216
    %v1343 = vpack.c.b16 %v1223, %v1217
    %v1344 = vpack.c.b16 %v1224, %v1218
    %v1345 = vpack.c.b16 %v1225, %v1219
    %v1346 = vpack.c.b16 %v1226, %v1220
    %v1347 = vpack.c.b16 %v1227, %v1221
    %v1348 = vpack.c.b16 %v1234, %v1228
    %v1349 = vpack.c.b16 %v1235, %v1229
    %v1350 = vpack.c.b16 %v1236, %v1230
    %v1351 = vpack.c.b16 %v1237, %v1231
    %v1352 = vpack.c.b16 %v1238, %v1232
    %v1353 = vpack.c.b16 %v1239, %v1233
    %v1354 = vpack.c.b16 %v1246, %v1240
    %v1355 = vpack.c.b16 %v1247, %v1241
    %v1356 = vpack.c.b16 %v1248, %v1242
    %v1357 = vpack.c.b16 %v1249, %v1243
    %v1358 = vpack.c.b16 %v1250, %v1244
    %v1359 = vpack.c.b16 %v1251, %v1245
    %v1360 = vpack.c.b16 %v1258, %v1252
    %v1361 = vpack.c.b16 %v1259, %v1253
    %v1362 = vpack.c.b16 %v1260, %v1254
    %v1363 = vpack.c.b16 %v1261, %v1255
    %v1364 = vpack.c.b16 %v1262, %v1256
    %v1365 = vpack.c.b16 %v1263, %v1257
    %v1366 = vpack.c.b16 %v1270, %v1264
    %v1367 = vpack.c.b16 %v1271, %v1265
    %v1368 = vpack.c.b16 %v1272, %v1266
    %v1369 = vpack.c.b16 %v1273, %v1267
    %v1370 = vpack.c.b16 %v1274, %v1268
    %v1371 = vpack.c.b16 %v1275, %v1269
    %1468 = vmatprep.subr.bf16.mxu0 %v1277
    %1469 = vmatpush1.bf16.msra.mxu0 %v1276
    %1470 = vmatprep.subr.bf16.mxu0 %v1283
    %1471 = vmatpush1.bf16.msra.mxu0 %v1282
    %1472 = vmatprep.subr.bf16.mxu0 %v1289
    %1473 = vmatpush1.bf16.msra.mxu0 %v1288
    %1474 = vmatprep.subr.bf16.mxu0 %v1295
    %1475 = vmatpush1.bf16.msra.mxu0 %v1294
    %1476 = vmatprep.subr.bf16.mxu0 %v1301
    %1477 = vmatpush1.bf16.msra.mxu0 %v1300
    %1478 = vmatprep.subr.bf16.mxu0 %v1307
    %1479 = vmatpush1.bf16.msra.mxu0 %v1306
    %1480 = vmatprep.subr.bf16.mxu0 %v1313
    %1481 = vmatpush1.bf16.msra.mxu0 %v1312
    %1482 = vmatprep.subr.bf16.mxu0 %v1319
    %1483 = vmatpush1.bf16.msra.mxu0 %v1318
    %1484 = vmatprep.subr.bf16.mxu0 %v1325
    %1485 = vmatpush1.bf16.msra.mxu0 %v1324
    %1486 = vmatprep.subr.bf16.mxu0 %v1331
    %1487 = vmatpush1.bf16.msra.mxu0 %v1330
    %1488 = vmatprep.subr.bf16.mxu0 %v1337
    %1489 = vmatpush1.bf16.msra.mxu0 %v1336
    %1490 = vmatprep.subr.bf16.mxu0 %v1343
    %1491 = vmatpush1.bf16.msra.mxu0 %v1342
    %1492 = vmatprep.subr.bf16.mxu0 %v1349
    %1493 = vmatpush1.bf16.msra.mxu0 %v1348
    %1494 = vmatprep.subr.bf16.mxu0 %v1355
    %1495 = vmatpush1.bf16.msra.mxu0 %v1354
    %1496 = vmatprep.subr.bf16.mxu0 %v1361
    %1497 = vmatpush1.bf16.msra.mxu0 %v1360
    %1498 = vmatprep.subr.bf16.mxu0 %v1367
    %1499 = vmatpush1.bf16.msra.mxu0 %v1366
    %1500 = vmatprep.mubr.bf16.mxu0 %v956
    %1501 = vmatmul.mubr.bf16.gmra.mrb[0].mxu0 %v955
    %v1502 = vpop.f32.mrb[0].mxu0
    %v1503 = vadd.f32 %v961, %v1502
    %v1504 = vpop.f32.mrb[0].mxu0
    %v1505 = vadd.f32 %v965, %v1504
    %v1506 = vpop.f32.mrb[0].mxu0
    %v1507 = vpop.f32.mrb[0].mxu0
    %1508 = vdwg.mxu0
    %1509 = vmatprep.subr.bf16.mxu0 %v1279
    %1510 = vmatpush1.bf16.msra.mxu0 %v1278
    %1511 = vmatprep.subr.bf16.mxu0 %v1285
    %1512 = vmatpush1.bf16.msra.mxu0 %v1284
    %1513 = vmatprep.subr.bf16.mxu0 %v1291
    %1514 = vmatpush1.bf16.msra.mxu0 %v1290
    %1515 = vmatprep.subr.bf16.mxu0 %v1297
    %1516 = vmatpush1.bf16.msra.mxu0 %v1296
    %1517 = vmatprep.subr.bf16.mxu0 %v1303
    %1518 = vmatpush1.bf16.msra.mxu0 %v1302
    %1519 = vmatprep.subr.bf16.mxu0 %v1309
    %1520 = vmatpush1.bf16.msra.mxu0 %v1308
    %1521 = vmatprep.subr.bf16.mxu0 %v1315
    %1522 = vmatpush1.bf16.msra.mxu0 %v1314
    %1523 = vmatprep.subr.bf16.mxu0 %v1321
    %1524 = vmatpush1.bf16.msra.mxu0 %v1320
    %1525 = vmatprep.subr.bf16.mxu0 %v1327
    %1526 = vmatpush1.bf16.msra.mxu0 %v1326
    %1527 = vmatprep.subr.bf16.mxu0 %v1333
    %1528 = vmatpush1.bf16.msra.mxu0 %v1332
    %1529 = vmatprep.subr.bf16.mxu0 %v1339
    %1530 = vmatpush1.bf16.msra.mxu0 %v1338
    %1531 = vmatprep.subr.bf16.mxu0 %v1345
    %1532 = vmatpush1.bf16.msra.mxu0 %v1344
    %1533 = vmatprep.subr.bf16.mxu0 %v1351
    %1534 = vmatpush1.bf16.msra.mxu0 %v1350
    %1535 = vmatprep.subr.bf16.mxu0 %v1357
    %1536 = vmatpush1.bf16.msra.mxu0 %v1356
    %1537 = vmatprep.subr.bf16.mxu0 %v1363
    %1538 = vmatpush1.bf16.msra.mxu0 %v1362
    %1539 = vmatprep.subr.bf16.mxu0 %v1369
    %1540 = vmatpush1.bf16.msra.mxu0 %v1368
    %1541 = vmatprep.mubr.bf16.mxu0 %v956
    %1542 = vmatmul.mubr.bf16.gmra.mrb[0].mxu0 %v955
    %v1543 = vpop.f32.mrb[0].mxu0
    %v1544 = vadd.f32 %v969, %v1543
    %v1545 = vpop.f32.mrb[0].mxu0
    %v1546 = vadd.f32 %v973, %v1545
    %v1547 = vpop.f32.mrb[0].mxu0
    %v1548 = vpop.f32.mrb[0].mxu0
    %1549 = vdwg.mxu0
    %1550 = vmatprep.subr.bf16.mxu0 %v1281
    %1551 = vmatpush1.bf16.msra.mxu0 %v1280
    %1552 = vmatprep.subr.bf16.mxu0 %v1287
    %1553 = vmatpush1.bf16.msra.mxu0 %v1286
    %1554 = vmatprep.subr.bf16.mxu0 %v1293
    %1555 = vmatpush1.bf16.msra.mxu0 %v1292
    %1556 = vmatprep.subr.bf16.mxu0 %v1299
    %1557 = vmatpush1.bf16.msra.mxu0 %v1298
    %1558 = vmatprep.subr.bf16.mxu0 %v1305
    %1559 = vmatpush1.bf16.msra.mxu0 %v1304
    %1560 = vmatprep.subr.bf16.mxu0 %v1311
    %1561 = vmatpush1.bf16.msra.mxu0 %v1310
    %1562 = vmatprep.subr.bf16.mxu0 %v1317
    %1563 = vmatpush1.bf16.msra.mxu0 %v1316
    %1564 = vmatprep.subr.bf16.mxu0 %v1323
    %1565 = vmatpush1.bf16.msra.mxu0 %v1322
    %1566 = vmatprep.subr.bf16.mxu0 %v1329
    %1567 = vmatpush1.bf16.msra.mxu0 %v1328
    %1568 = vmatprep.subr.bf16.mxu0 %v1335
    %1569 = vmatpush1.bf16.msra.mxu0 %v1334
    %1570 = vmatprep.subr.bf16.mxu0 %v1341
    %1571 = vmatpush1.bf16.msra.mxu0 %v1340
    %1572 = vmatprep.subr.bf16.mxu0 %v1347
    %1573 = vmatpush1.bf16.msra.mxu0 %v1346
    %1574 = vmatprep.subr.bf16.mxu0 %v1353
    %1575 = vmatpush1.bf16.msra.mxu0 %v1352
    %1576 = vmatprep.subr.bf16.mxu0 %v1359
    %1577 = vmatpush1.bf16.msra.mxu0 %v1358
    %1578 = vmatprep.subr.bf16.mxu0 %v1365
    %1579 = vmatpush1.bf16.msra.mxu0 %v1364
    %1580 = vmatprep.subr.bf16.mxu0 %v1371
    %1581 = vmatpush1.bf16.msra.mxu0 %v1370
    %1582 = vmatprep.mubr.bf16.mxu0 %v956
    %1583 = vmatmul.mubr.bf16.gmra.mrb[0].mxu0 %v955
    %v1584 = vpop.f32.mrb[0].mxu0
    %v1585 = vadd.f32 %v977, %v1584
    %v1586 = vpop.f32.mrb[0].mxu0
    %v1587 = vadd.f32 %v981, %v1586
    %v1588 = vpop.f32.mrb[0].mxu0
    %v1589 = vpop.f32.mrb[0].mxu0
    %1590 = vdwg.mxu0
    %v1591 = vadd.f32 %v732, %v1503
    %v1592 = vadd.f32 %v734, %v1505
    %v1593 = vxor.u32 %v1591, 2147483648
    %v1594 = vxor.u32 %v1592, 2147483648
    %v1595 = vmul.f32 %v1593, 1.442695
    %v1596 = vpow.pop %v1595
    %v1597 = vmul.f32 %v1594, 1.442695
    %v1598 = vpow.pop %v1597
    %v1599 = vadd.f32 %v1596, 1.0
    %v1600 = vadd.f32 %v1598, 1.0
    %v1601 = vrcp.pop %v1599
    %v1602 = vmul.f32 1.0, %v1601
    %v1603 = vrcp.pop %v1600
    %v1604 = vmul.f32 1.0, %v1603
    %v1605 = vadd.f32 %v785, %v1544
    %v1606 = vadd.f32 %v787, %v1546
    %v1607 = vxor.u32 %v1605, 2147483648
    %v1608 = vxor.u32 %v1606, 2147483648
    %v1609 = vmul.f32 %v1607, 1.442695
    %v1610 = vpow.pop %v1609
    %v1611 = vmul.f32 %v1608, 1.442695
    %v1612 = vpow.pop %v1611
    %v1613 = vadd.f32 %v1610, 1.0
    %v1614 = vadd.f32 %v1612, 1.0
    %v1615 = vrcp.pop %v1613
    %v1616 = vmul.f32 1.0, %v1615
    %v1617 = vrcp.pop %v1614
    %v1618 = vmul.f32 1.0, %v1617
    %v1619 = vmul.f32 %v1602, %v1585
    %v1620 = vmul.f32 %v1604, %v1587
    %v1621 = vadd.f32 %v838, %v1619
    %v1622 = vadd.f32 %v840, %v1620
    %v1623 = vtanh.pop %v1621
    %v1624 = vtanh.pop %v1622
    %v1625 = vsub.f32 1.0, %v1616
    %v1626 = vsub.f32 1.0, %v1618
    %v1627 = vmul.f32 %v1625, %v1623
    %v1628 = vmul.f32 %v1626, %v1624
    %v1629 = vmul.f32 %v1616, %v953
    %v1630 = vmul.f32 %v1618, %v954
    %v1631 = vadd.f32 %v1627, %v1629
    %v1632 = vadd.f32 %v1628, %v1630
    %1633 = vst [vmem:[%s5] sm:$0xff] %v1631
    %1634 = vst [vmem:[%s5 + $0x8] sm:$0xff] %v1632
    %v1635 = vpack.c.bf16 %v1631, %v1631
    %v1636 = vpack.c.bf16 %v1632, %v1632
    %1637 = vmatprep.subr.bf16.mxu0 %v1277
    %1638 = vmatpush1.bf16.msra.mxu0 %v1276
    %1639 = vmatprep.subr.bf16.mxu0 %v1283
    %1640 = vmatpush1.bf16.msra.mxu0 %v1282
    %1641 = vmatprep.subr.bf16.mxu0 %v1289
    %1642 = vmatpush1.bf16.msra.mxu0 %v1288
    %1643 = vmatprep.subr.bf16.mxu0 %v1295
    %1644 = vmatpush1.bf16.msra.mxu0 %v1294
    %1645 = vmatprep.subr.bf16.mxu0 %v1301
    %1646 = vmatpush1.bf16.msra.mxu0 %v1300
    %1647 = vmatprep.subr.bf16.mxu0 %v1307
    %1648 = vmatpush1.bf16.msra.mxu0 %v1306
    %1649 = vmatprep.subr.bf16.mxu0 %v1313
    %1650 = vmatpush1.bf16.msra.mxu0 %v1312
    %1651 = vmatprep.subr.bf16.mxu0 %v1319
    %1652 = vmatpush1.bf16.msra.mxu0 %v1318
    %1653 = vmatprep.subr.bf16.mxu0 %v1325
    %1654 = vmatpush1.bf16.msra.mxu0 %v1324
    %1655 = vmatprep.subr.bf16.mxu0 %v1331
    %1656 = vmatpush1.bf16.msra.mxu0 %v1330
    %1657 = vmatprep.subr.bf16.mxu0 %v1337
    %1658 = vmatpush1.bf16.msra.mxu0 %v1336
    %1659 = vmatprep.subr.bf16.mxu0 %v1343
    %1660 = vmatpush1.bf16.msra.mxu0 %v1342
    %1661 = vmatprep.subr.bf16.mxu0 %v1349
    %1662 = vmatpush1.bf16.msra.mxu0 %v1348
    %1663 = vmatprep.subr.bf16.mxu0 %v1355
    %1664 = vmatpush1.bf16.msra.mxu0 %v1354
    %1665 = vmatprep.subr.bf16.mxu0 %v1361
    %1666 = vmatpush1.bf16.msra.mxu0 %v1360
    %1667 = vmatprep.subr.bf16.mxu0 %v1367
    %1668 = vmatpush1.bf16.msra.mxu0 %v1366
    %1669 = vmatprep.mubr.bf16.mxu0 %v1636
    %1670 = vmatmul.mubr.bf16.gmra.mrb[0].mxu0 %v1635
    %v1671 = vpop.f32.mrb[0].mxu0
    %v1672 = vadd.f32 %v961, %v1671
    %v1673 = vpop.f32.mrb[0].mxu0
    %v1674 = vadd.f32 %v965, %v1673
    %v1675 = vpop.f32.mrb[0].mxu0
    %v1676 = vpop.f32.mrb[0].mxu0
    %1677 = vdwg.mxu0
    %1678 = vmatprep.subr.bf16.mxu0 %v1279
    %1679 = vmatpush1.bf16.msra.mxu0 %v1278
    %1680 = vmatprep.subr.bf16.mxu0 %v1285
    %1681 = vmatpush1.bf16.msra.mxu0 %v1284
    %1682 = vmatprep.subr.bf16.mxu0 %v1291
    %1683 = vmatpush1.bf16.msra.mxu0 %v1290
    %1684 = vmatprep.subr.bf16.mxu0 %v1297
    %1685 = vmatpush1.bf16.msra.mxu0 %v1296
    %1686 = vmatprep.subr.bf16.mxu0 %v1303
    %1687 = vmatpush1.bf16.msra.mxu0 %v1302
    %1688 = vmatprep.subr.bf16.mxu0 %v1309
    %1689 = vmatpush1.bf16.msra.mxu0 %v1308
    %1690 = vmatprep.subr.bf16.mxu0 %v1315
    %1691 = vmatpush1.bf16.msra.mxu0 %v1314
    %1692 = vmatprep.subr.bf16.mxu0 %v1321
    %1693 = vmatpush1.bf16.msra.mxu0 %v1320
    %1694 = vmatprep.subr.bf16.mxu0 %v1327
    %1695 = vmatpush1.bf16.msra.mxu0 %v1326
    %1696 = vmatprep.subr.bf16.mxu0 %v1333
    %1697 = vmatpush1.bf16.msra.mxu0 %v1332
    %1698 = vmatprep.subr.bf16.mxu0 %v1339
    %1699 = vmatpush1.bf16.msra.mxu0 %v1338
    %1700 = vmatprep.subr.bf16.mxu0 %v1345
    %1701 = vmatpush1.bf16.msra.mxu0 %v1344
    %1702 = vmatprep.subr.bf16.mxu0 %v1351
    %1703 = vmatpush1.bf16.msra.mxu0 %v1350
    %1704 = vmatprep.subr.bf16.mxu0 %v1357
    %1705 = vmatpush1.bf16.msra.mxu0 %v1356
    %1706 = vmatprep.subr.bf16.mxu0 %v1363
    %1707 = vmatpush1.bf16.msra.mxu0 %v1362
    %1708 = vmatprep.subr.bf16.mxu0 %v1369
    %1709 = vmatpush1.bf16.msra.mxu0 %v1368
    %1710 = vmatprep.mubr.bf16.mxu0 %v1636
    %1711 = vmatmul.mubr.bf16.gmra.mrb[0].mxu0 %v1635
    %v1712 = vpop.f32.mrb[0].mxu0
    %v1713 = vadd.f32 %v969, %v1712
    %v1714 = vpop.f32.mrb[0].mxu0
    %v1715 = vadd.f32 %v973, %v1714
    %v1716 = vpop.f32.mrb[0].mxu0
    %v1717 = vpop.f32.mrb[0].mxu0
    %1718 = vdwg.mxu0
    %1719 = vmatprep.subr.bf16.mxu0 %v1281
    %1720 = vmatpush1.bf16.msra.mxu0 %v1280
    %1721 = vmatprep.subr.bf16.mxu0 %v1287
    %1722 = vmatpush1.bf16.msra.mxu0 %v1286
    %1723 = vmatprep.subr.bf16.mxu0 %v1293
    %1724 = vmatpush1.bf16.msra.mxu0 %v1292
    %1725 = vmatprep.subr.bf16.mxu0 %v1299
    %1726 = vmatpush1.bf16.msra.mxu0 %v1298
    %1727 = vmatprep.subr.bf16.mxu0 %v1305
    %1728 = vmatpush1.bf16.msra.mxu0 %v1304
    %1729 = vmatprep.subr.bf16.mxu0 %v1311
    %1730 = vmatpush1.bf16.msra.mxu0 %v1310
    %1731 = vmatprep.subr.bf16.mxu0 %v1317
    %1732 = vmatpush1.bf16.msra.mxu0 %v1316
    %1733 = vmatprep.subr.bf16.mxu0 %v1323
    %1734 = vmatpush1.bf16.msra.mxu0 %v1322
    %1735 = vmatprep.subr.bf16.mxu0 %v1329
    %1736 = vmatpush1.bf16.msra.mxu0 %v1328
    %1737 = vmatprep.subr.bf16.mxu0 %v1335
    %1738 = vmatpush1.bf16.msra.mxu0 %v1334
    %1739 = vmatprep.subr.bf16.mxu0 %v1341
    %1740 = vmatpush1.bf16.msra.mxu0 %v1340
    %1741 = vmatprep.subr.bf16.mxu0 %v1347
    %1742 = vmatpush1.bf16.msra.mxu0 %v1346
    %1743 = vmatprep.subr.bf16.mxu0 %v1353
    %1744 = vmatpush1.bf16.msra.mxu0 %v1352
    %1745 = vmatprep.subr.bf16.mxu0 %v1359
    %1746 = vmatpush1.bf16.msra.mxu0 %v1358
    %1747 = vmatprep.subr.bf16.mxu0 %v1365
    %1748 = vmatpush1.bf16.msra.mxu0 %v1364
    %1749 = vmatprep.subr.bf16.mxu0 %v1371
    %1750 = vmatpush1.bf16.msra.mxu0 %v1370
    %1751 = vmatprep.mubr.bf16.mxu0 %v1636
    %1752 = vmatmul.mubr.bf16.gmra.mrb[0].mxu0 %v1635
    %v1753 = vpop.f32.mrb[0].mxu0
    %v1754 = vadd.f32 %v977, %v1753
    %v1755 = vpop.f32.mrb[0].mxu0
    %v1756 = vadd.f32 %v981, %v1755
    %v1757 = vpop.f32.mrb[0].mxu0
    %v1758 = vpop.f32.mrb[0].mxu0
    %1759 = vdwg.mxu0
    %v1760 = vadd.f32 %v736, %v1672
    %v1761 = vadd.f32 %v738, %v1674
    %v1762 = vxor.u32 %v1760, 2147483648
    %v1763 = vxor.u32 %v1761, 2147483648
    %v1764 = vmul.f32 %v1762, 1.442695
    %v1765 = vpow.pop %v1764
    %v1766 = vmul.f32 %v1763, 1.442695
    %v1767 = vpow.pop %v1766
    %v1768 = vadd.f32 %v1765, 1.0
    %v1769 = vadd.f32 %v1767, 1.0
    %v1770 = vrcp.pop %v1768
    %v1771 = vmul.f32 1.0, %v1770
    %v1772 = vrcp.pop %v1769
    %v1773 = vmul.f32 1.0, %v1772
    %v1774 = vadd.f32 %v789, %v1713
    %v1775 = vadd.f32 %v791, %v1715
    %v1776 = vxor.u32 %v1774, 2147483648
    %v1777 = vxor.u32 %v1775, 2147483648
    %v1778 = vmul.f32 %v1776, 1.442695
    %v1779 = vpow.pop %v1778
    %v1780 = vmul.f32 %v1777, 1.442695
    %v1781 = vpow.pop %v1780
    %v1782 = vadd.f32 %v1779, 1.0
    %v1783 = vadd.f32 %v1781, 1.0
    %v1784 = vrcp.pop %v1782
    %v1785 = vmul.f32 1.0, %v1784
    %v1786 = vrcp.pop %v1783
    %v1787 = vmul.f32 1.0, %v1786
    %v1788 = vmul.f32 %v1771, %v1754
    %v1789 = vmul.f32 %v1773, %v1756
    %v1790 = vadd.f32 %v842, %v1788
    %v1791 = vadd.f32 %v844, %v1789
    %v1792 = vtanh.pop %v1790
    %v1793 = vtanh.pop %v1791
    %v1794 = vsub.f32 1.0, %v1785
    %v1795 = vsub.f32 1.0, %v1787
    %v1796 = vmul.f32 %v1794, %v1792
    %v1797 = vmul.f32 %v1795, %v1793
    %v1798 = vmul.f32 %v1785, %v1631
    %v1799 = vmul.f32 %v1787, %v1632
    %v1800 = vadd.f32 %v1796, %v1798
    %v1801 = vadd.f32 %v1797, %v1799
    %s1802 = scalar_lea.vmem %s5, 16
    %1803 = vst [vmem:[%s1802] sm:$0xff] %v1800
    %1804 = vst [vmem:[%s1802 + $0x8] sm:$0xff] %v1801
    %v1805 = vpack.c.bf16 %v1800, %v1800
    %v1806 = vpack.c.bf16 %v1801, %v1801
    %1807 = vmatprep.subr.bf16.mxu0 %v1277
    %1808 = vmatpush1.bf16.msra.mxu0 %v1276
    %1809 = vmatprep.subr.bf16.mxu0 %v1283
    %1810 = vmatpush1.bf16.msra.mxu0 %v1282
    %1811 = vmatprep.subr.bf16.mxu0 %v1289
    %1812 = vmatpush1.bf16.msra.mxu0 %v1288
    %1813 = vmatprep.subr.bf16.mxu0 %v1295
    %1814 = vmatpush1.bf16.msra.mxu0 %v1294
    %1815 = vmatprep.subr.bf16.mxu0 %v1301
    %1816 = vmatpush1.bf16.msra.mxu0 %v1300
    %1817 = vmatprep.subr.bf16.mxu0 %v1307
    %1818 = vmatpush1.bf16.msra.mxu0 %v1306
    %1819 = vmatprep.subr.bf16.mxu0 %v1313
    %1820 = vmatpush1.bf16.msra.mxu0 %v1312
    %1821 = vmatprep.subr.bf16.mxu0 %v1319
    %1822 = vmatpush1.bf16.msra.mxu0 %v1318
    %1823 = vmatprep.subr.bf16.mxu0 %v1325
    %1824 = vmatpush1.bf16.msra.mxu0 %v1324
    %1825 = vmatprep.subr.bf16.mxu0 %v1331
    %1826 = vmatpush1.bf16.msra.mxu0 %v1330
    %1827 = vmatprep.subr.bf16.mxu0 %v1337
    %1828 = vmatpush1.bf16.msra.mxu0 %v1336
    %1829 = vmatprep.subr.bf16.mxu0 %v1343
    %1830 = vmatpush1.bf16.msra.mxu0 %v1342
    %1831 = vmatprep.subr.bf16.mxu0 %v1349
    %1832 = vmatpush1.bf16.msra.mxu0 %v1348
    %1833 = vmatprep.subr.bf16.mxu0 %v1355
    %1834 = vmatpush1.bf16.msra.mxu0 %v1354
    %1835 = vmatprep.subr.bf16.mxu0 %v1361
    %1836 = vmatpush1.bf16.msra.mxu0 %v1360
    %1837 = vmatprep.subr.bf16.mxu0 %v1367
    %1838 = vmatpush1.bf16.msra.mxu0 %v1366
    %1839 = vmatprep.mubr.bf16.mxu0 %v1806
    %1840 = vmatmul.mubr.bf16.gmra.mrb[0].mxu0 %v1805
    %v1841 = vpop.f32.mrb[0].mxu0
    %v1842 = vadd.f32 %v961, %v1841
    %v1843 = vpop.f32.mrb[0].mxu0
    %v1844 = vadd.f32 %v965, %v1843
    %v1845 = vpop.f32.mrb[0].mxu0
    %v1846 = vpop.f32.mrb[0].mxu0
    %1847 = vdwg.mxu0
    %1848 = vmatprep.subr.bf16.mxu0 %v1279
    %1849 = vmatpush1.bf16.msra.mxu0 %v1278
    %1850 = vmatprep.subr.bf16.mxu0 %v1285
    %1851 = vmatpush1.bf16.msra.mxu0 %v1284
    %1852 = vmatprep.subr.bf16.mxu0 %v1291
    %1853 = vmatpush1.bf16.msra.mxu0 %v1290
    %1854 = vmatprep.subr.bf16.mxu0 %v1297
    %1855 = vmatpush1.bf16.msra.mxu0 %v1296
    %1856 = vmatprep.subr.bf16.mxu0 %v1303
    %1857 = vmatpush1.bf16.msra.mxu0 %v1302
    %1858 = vmatprep.subr.bf16.mxu0 %v1309
    %1859 = vmatpush1.bf16.msra.mxu0 %v1308
    %1860 = vmatprep.subr.bf16.mxu0 %v1315
    %1861 = vmatpush1.bf16.msra.mxu0 %v1314
    %1862 = vmatprep.subr.bf16.mxu0 %v1321
    %1863 = vmatpush1.bf16.msra.mxu0 %v1320
    %1864 = vmatprep.subr.bf16.mxu0 %v1327
    %1865 = vmatpush1.bf16.msra.mxu0 %v1326
    %1866 = vmatprep.subr.bf16.mxu0 %v1333
    %1867 = vmatpush1.bf16.msra.mxu0 %v1332
    %1868 = vmatprep.subr.bf16.mxu0 %v1339
    %1869 = vmatpush1.bf16.msra.mxu0 %v1338
    %1870 = vmatprep.subr.bf16.mxu0 %v1345
    %1871 = vmatpush1.bf16.msra.mxu0 %v1344
    %1872 = vmatprep.subr.bf16.mxu0 %v1351
    %1873 = vmatpush1.bf16.msra.mxu0 %v1350
    %1874 = vmatprep.subr.bf16.mxu0 %v1357
    %1875 = vmatpush1.bf16.msra.mxu0 %v1356
    %1876 = vmatprep.subr.bf16.mxu0 %v1363
    %1877 = vmatpush1.bf16.msra.mxu0 %v1362
    %1878 = vmatprep.subr.bf16.mxu0 %v1369
    %1879 = vmatpush1.bf16.msra.mxu0 %v1368
    %1880 = vmatprep.mubr.bf16.mxu0 %v1806
    %1881 = vmatmul.mubr.bf16.gmra.mrb[0].mxu0 %v1805
    %v1882 = vpop.f32.mrb[0].mxu0
    %v1883 = vadd.f32 %v969, %v1882
    %v1884 = vpop.f32.mrb[0].mxu0
    %v1885 = vadd.f32 %v973, %v1884
    %v1886 = vpop.f32.mrb[0].mxu0
    %v1887 = vpop.f32.mrb[0].mxu0
    %1888 = vdwg.mxu0
    %1889 = vmatprep.subr.bf16.mxu0 %v1281
    %1890 = vmatpush1.bf16.msra.mxu0 %v1280
    %1891 = vmatprep.subr.bf16.mxu0 %v1287
    %1892 = vmatpush1.bf16.msra.mxu0 %v1286
    %1893 = vmatprep.subr.bf16.mxu0 %v1293
    %1894 = vmatpush1.bf16.msra.mxu0 %v1292
    %1895 = vmatprep.subr.bf16.mxu0 %v1299
    %1896 = vmatpush1.bf16.msra.mxu0 %v1298
    %1897 = vmatprep.subr.bf16.mxu0 %v1305
    %1898 = vmatpush1.bf16.msra.mxu0 %v1304
    %1899 = vmatprep.subr.bf16.mxu0 %v1311
    %1900 = vmatpush1.bf16.msra.mxu0 %v1310
    %1901 = vmatprep.subr.bf16.mxu0 %v1317
    %1902 = vmatpush1.bf16.msra.mxu0 %v1316
    %1903 = vmatprep.subr.bf16.mxu0 %v1323
    %1904 = vmatpush1.bf16.msra.mxu0 %v1322
    %1905 = vmatprep.subr.bf16.mxu0 %v1329
    %1906 = vmatpush1.bf16.msra.mxu0 %v1328
    %1907 = vmatprep.subr.bf16.mxu0 %v1335
    %1908 = vmatpush1.bf16.msra.mxu0 %v1334
    %1909 = vmatprep.subr.bf16.mxu0 %v1341
    %1910 = vmatpush1.bf16.msra.mxu0 %v1340
    %1911 = vmatprep.subr.bf16.mxu0 %v1347
    %1912 = vmatpush1.bf16.msra.mxu0 %v1346
    %1913 = vmatprep.subr.bf16.mxu0 %v1353
    %1914 = vmatpush1.bf16.msra.mxu0 %v1352
    %1915 = vmatprep.subr.bf16.mxu0 %v1359
    %1916 = vmatpush1.bf16.msra.mxu0 %v1358
    %1917 = vmatprep.subr.bf16.mxu0 %v1365
    %1918 = vmatpush1.bf16.msra.mxu0 %v1364
    %1919 = vmatprep.subr.bf16.mxu0 %v1371
    %1920 = vmatpush1.bf16.msra.mxu0 %v1370
    %1921 = vmatprep.mubr.bf16.mxu0 %v1806
    %1922 = vmatmul.mubr.bf16.gmra.mrb[0].mxu0 %v1805
    %v1923 = vpop.f32.mrb[0].mxu0
    %v1924 = vadd.f32 %v977, %v1923
    %v1925 = vpop.f32.mrb[0].mxu0
    %v1926 = vadd.f32 %v981, %v1925
    %v1927 = vpop.f32.mrb[0].mxu0
    %v1928 = vpop.f32.mrb[0].mxu0
    %1929 = vdwg.mxu0
    %v1930 = vadd.f32 %v742, %v1842
    %v1931 = vadd.f32 %v744, %v1844
    %v1932 = vxor.u32 %v1930, 2147483648
    %v1933 = vxor.u32 %v1931, 2147483648
    %v1934 = vmul.f32 %v1932, 1.442695
    %v1935 = vpow.pop %v1934
    %v1936 = vmul.f32 %v1933, 1.442695
    %v1937 = vpow.pop %v1936
    %v1938 = vadd.f32 %v1935, 1.0
    %v1939 = vadd.f32 %v1937, 1.0
    %v1940 = vrcp.pop %v1938
    %v1941 = vmul.f32 1.0, %v1940
    %v1942 = vrcp.pop %v1939
    %v1943 = vmul.f32 1.0, %v1942
    %v1944 = vadd.f32 %v795, %v1883
    %v1945 = vadd.f32 %v797, %v1885
    %v1946 = vxor.u32 %v1944, 2147483648
    %v1947 = vxor.u32 %v1945, 2147483648
    %v1948 = vmul.f32 %v1946, 1.442695
    %v1949 = vpow.pop %v1948
    %v1950 = vmul.f32 %v1947, 1.442695
    %v1951 = vpow.pop %v1950
    %v1952 = vadd.f32 %v1949, 1.0
    %v1953 = vadd.f32 %v1951, 1.0
    %v1954 = vrcp.pop %v1952
    %v1955 = vmul.f32 1.0, %v1954
    %v1956 = vrcp.pop %v1953
    %v1957 = vmul.f32 1.0, %v1956
    %v1958 = vmul.f32 %v1941, %v1924
    %v1959 = vmul.f32 %v1943, %v1926
    %v1960 = vadd.f32 %v848, %v1958
    %v1961 = vadd.f32 %v850, %v1959
    %v1962 = vtanh.pop %v1960
    %v1963 = vtanh.pop %v1961
    %v1964 = vsub.f32 1.0, %v1955
    %v1965 = vsub.f32 1.0, %v1957
    %v1966 = vmul.f32 %v1964, %v1962
    %v1967 = vmul.f32 %v1965, %v1963
    %v1968 = vmul.f32 %v1955, %v1800
    %v1969 = vmul.f32 %v1957, %v1801
    %v1970 = vadd.f32 %v1966, %v1968
    %v1971 = vadd.f32 %v1967, %v1969
    %s1972 = scalar_lea.vmem %s5, 32
    %1973 = vst [vmem:[%s1972] sm:$0xff] %v1970
    %1974 = vst [vmem:[%s1972 + $0x8] sm:$0xff] %v1971
    %v1975 = vpack.c.bf16 %v1970, %v1970
    %v1976 = vpack.c.bf16 %v1971, %v1971
    %1977 = vmatprep.subr.bf16.mxu0 %v1277
    %1978 = vmatpush1.bf16.msra.mxu0 %v1276
    %1979 = vmatprep.subr.bf16.mxu0 %v1283
    %1980 = vmatpush1.bf16.msra.mxu0 %v1282
    %1981 = vmatprep.subr.bf16.mxu0 %v1289
    %1982 = vmatpush1.bf16.msra.mxu0 %v1288
    %1983 = vmatprep.subr.bf16.mxu0 %v1295
    %1984 = vmatpush1.bf16.msra.mxu0 %v1294
    %1985 = vmatprep.subr.bf16.mxu0 %v1301
    %1986 = vmatpush1.bf16.msra.mxu0 %v1300
    %1987 = vmatprep.subr.bf16.mxu0 %v1307
    %1988 = vmatpush1.bf16.msra.mxu0 %v1306
    %1989 = vmatprep.subr.bf16.mxu0 %v1313
    %1990 = vmatpush1.bf16.msra.mxu0 %v1312
    %1991 = vmatprep.subr.bf16.mxu0 %v1319
    %1992 = vmatpush1.bf16.msra.mxu0 %v1318
    %1993 = vmatprep.subr.bf16.mxu0 %v1325
    %1994 = vmatpush1.bf16.msra.mxu0 %v1324
    %1995 = vmatprep.subr.bf16.mxu0 %v1331
    %1996 = vmatpush1.bf16.msra.mxu0 %v1330
    %1997 = vmatprep.subr.bf16.mxu0 %v1337
    %1998 = vmatpush1.bf16.msra.mxu0 %v1336
    %1999 = vmatprep.subr.bf16.mxu0 %v1343
    %2000 = vmatpush1.bf16.msra.mxu0 %v1342
    %2001 = vmatprep.subr.bf16.mxu0 %v1349
    %2002 = vmatpush1.bf16.msra.mxu0 %v1348
    %2003 = vmatprep.subr.bf16.mxu0 %v1355
    %2004 = vmatpush1.bf16.msra.mxu0 %v1354
    %2005 = vmatprep.subr.bf16.mxu0 %v1361
    %2006 = vmatpush1.bf16.msra.mxu0 %v1360
    %2007 = vmatprep.subr.bf16.mxu0 %v1367
    %2008 = vmatpush1.bf16.msra.mxu0 %v1366
    %2009 = vmatprep.mubr.bf16.mxu0 %v1976
    %2010 = vmatmul.mubr.bf16.gmra.mrb[0].mxu0 %v1975
    %v2011 = vpop.f32.mrb[0].mxu0
    %v2012 = vadd.f32 %v961, %v2011
    %v2013 = vpop.f32.mrb[0].mxu0
    %v2014 = vadd.f32 %v965, %v2013
    %v2015 = vpop.f32.mrb[0].mxu0
    %v2016 = vpop.f32.mrb[0].mxu0
    %2017 = vdwg.mxu0
    %2018 = vmatprep.subr.bf16.mxu0 %v1279
    %2019 = vmatpush1.bf16.msra.mxu0 %v1278
    %2020 = vmatprep.subr.bf16.mxu0 %v1285
    %2021 = vmatpush1.bf16.msra.mxu0 %v1284
    %2022 = vmatprep.subr.bf16.mxu0 %v1291
    %2023 = vmatpush1.bf16.msra.mxu0 %v1290
    %2024 = vmatprep.subr.bf16.mxu0 %v1297
    %2025 = vmatpush1.bf16.msra.mxu0 %v1296
    %2026 = vmatprep.subr.bf16.mxu0 %v1303
    %2027 = vmatpush1.bf16.msra.mxu0 %v1302
    %2028 = vmatprep.subr.bf16.mxu0 %v1309
    %2029 = vmatpush1.bf16.msra.mxu0 %v1308
    %2030 = vmatprep.subr.bf16.mxu0 %v1315
    %2031 = vmatpush1.bf16.msra.mxu0 %v1314
    %2032 = vmatprep.subr.bf16.mxu0 %v1321
    %2033 = vmatpush1.bf16.msra.mxu0 %v1320
    %2034 = vmatprep.subr.bf16.mxu0 %v1327
    %2035 = vmatpush1.bf16.msra.mxu0 %v1326
    %2036 = vmatprep.subr.bf16.mxu0 %v1333
    %2037 = vmatpush1.bf16.msra.mxu0 %v1332
    %2038 = vmatprep.subr.bf16.mxu0 %v1339
    %2039 = vmatpush1.bf16.msra.mxu0 %v1338
    %2040 = vmatprep.subr.bf16.mxu0 %v1345
    %2041 = vmatpush1.bf16.msra.mxu0 %v1344
    %2042 = vmatprep.subr.bf16.mxu0 %v1351
    %2043 = vmatpush1.bf16.msra.mxu0 %v1350
    %2044 = vmatprep.subr.bf16.mxu0 %v1357
    %2045 = vmatpush1.bf16.msra.mxu0 %v1356
    %2046 = vmatprep.subr.bf16.mxu0 %v1363
    %2047 = vmatpush1.bf16.msra.mxu0 %v1362
    %2048 = vmatprep.subr.bf16.mxu0 %v1369
    %2049 = vmatpush1.bf16.msra.mxu0 %v1368
    %2050 = vmatprep.mubr.bf16.mxu0 %v1976
    %2051 = vmatmul.mubr.bf16.gmra.mrb[0].mxu0 %v1975
    %v2052 = vpop.f32.mrb[0].mxu0
    %v2053 = vadd.f32 %v969, %v2052
    %v2054 = vpop.f32.mrb[0].mxu0
    %v2055 = vadd.f32 %v973, %v2054
    %v2056 = vpop.f32.mrb[0].mxu0
    %v2057 = vpop.f32.mrb[0].mxu0
    %2058 = vdwg.mxu0
    %2059 = vmatprep.subr.bf16.mxu0 %v1281
    %2060 = vmatpush1.bf16.msra.mxu0 %v1280
    %2061 = vmatprep.subr.bf16.mxu0 %v1287
    %2062 = vmatpush1.bf16.msra.mxu0 %v1286
    %2063 = vmatprep.subr.bf16.mxu0 %v1293
    %2064 = vmatpush1.bf16.msra.mxu0 %v1292
    %2065 = vmatprep.subr.bf16.mxu0 %v1299
    %2066 = vmatpush1.bf16.msra.mxu0 %v1298
    %2067 = vmatprep.subr.bf16.mxu0 %v1305
    %2068 = vmatpush1.bf16.msra.mxu0 %v1304
    %2069 = vmatprep.subr.bf16.mxu0 %v1311
    %2070 = vmatpush1.bf16.msra.mxu0 %v1310
    %2071 = vmatprep.subr.bf16.mxu0 %v1317
    %2072 = vmatpush1.bf16.msra.mxu0 %v1316
    %2073 = vmatprep.subr.bf16.mxu0 %v1323
    %2074 = vmatpush1.bf16.msra.mxu0 %v1322
    %2075 = vmatprep.subr.bf16.mxu0 %v1329
    %2076 = vmatpush1.bf16.msra.mxu0 %v1328
    %2077 = vmatprep.subr.bf16.mxu0 %v1335
    %2078 = vmatpush1.bf16.msra.mxu0 %v1334
    %2079 = vmatprep.subr.bf16.mxu0 %v1341
    %2080 = vmatpush1.bf16.msra.mxu0 %v1340
    %2081 = vmatprep.subr.bf16.mxu0 %v1347
    %2082 = vmatpush1.bf16.msra.mxu0 %v1346
    %2083 = vmatprep.subr.bf16.mxu0 %v1353
    %2084 = vmatpush1.bf16.msra.mxu0 %v1352
    %2085 = vmatprep.subr.bf16.mxu0 %v1359
    %2086 = vmatpush1.bf16.msra.mxu0 %v1358
    %2087 = vmatprep.subr.bf16.mxu0 %v1365
    %2088 = vmatpush1.bf16.msra.mxu0 %v1364
    %2089 = vmatprep.subr.bf16.mxu0 %v1371
    %2090 = vmatpush1.bf16.msra.mxu0 %v1370
    %2091 = vmatprep.mubr.bf16.mxu0 %v1976
    %2092 = vmatmul.mubr.bf16.gmra.mrb[0].mxu0 %v1975
    %v2093 = vpop.f32.mrb[0].mxu0
    %v2094 = vadd.f32 %v977, %v2093
    %v2095 = vpop.f32.mrb[0].mxu0
    %v2096 = vadd.f32 %v981, %v2095
    %v2097 = vpop.f32.mrb[0].mxu0
    %v2098 = vpop.f32.mrb[0].mxu0
    %2099 = vdwg.mxu0
    %v2100 = vadd.f32 %v746, %v2012
    %v2101 = vadd.f32 %v748, %v2014
    %v2102 = vxor.u32 %v2100, 2147483648
    %v2103 = vxor.u32 %v2101, 2147483648
    %v2104 = vmul.f32 %v2102, 1.442695
    %v2105 = vpow.pop %v2104
    %v2106 = vmul.f32 %v2103, 1.442695
    %v2107 = vpow.pop %v2106
    %v2108 = vadd.f32 %v2105, 1.0
    %v2109 = vadd.f32 %v2107, 1.0
    %v2110 = vrcp.pop %v2108
    %v2111 = vmul.f32 1.0, %v2110
    %v2112 = vrcp.pop %v2109
    %v2113 = vmul.f32 1.0, %v2112
    %v2114 = vadd.f32 %v799, %v2053
    %v2115 = vadd.f32 %v801, %v2055
    %v2116 = vxor.u32 %v2114, 2147483648
    %v2117 = vxor.u32 %v2115, 2147483648
    %v2118 = vmul.f32 %v2116, 1.442695
    %v2119 = vpow.pop %v2118
    %v2120 = vmul.f32 %v2117, 1.442695
    %v2121 = vpow.pop %v2120
    %v2122 = vadd.f32 %v2119, 1.0
    %v2123 = vadd.f32 %v2121, 1.0
    %v2124 = vrcp.pop %v2122
    %v2125 = vmul.f32 1.0, %v2124
    %v2126 = vrcp.pop %v2123
    %v2127 = vmul.f32 1.0, %v2126
    %v2128 = vmul.f32 %v2111, %v2094
    %v2129 = vmul.f32 %v2113, %v2096
    %v2130 = vadd.f32 %v852, %v2128
    %v2131 = vadd.f32 %v854, %v2129
    %v2132 = vtanh.pop %v2130
    %v2133 = vtanh.pop %v2131
    %v2134 = vsub.f32 1.0, %v2125
    %v2135 = vsub.f32 1.0, %v2127
    %v2136 = vmul.f32 %v2134, %v2132
    %v2137 = vmul.f32 %v2135, %v2133
    %v2138 = vmul.f32 %v2125, %v1970
    %v2139 = vmul.f32 %v2127, %v1971
    %v2140 = vadd.f32 %v2136, %v2138
    %v2141 = vadd.f32 %v2137, %v2139
    %s2142 = scalar_lea.vmem %s5, 48
    %2143 = vst [vmem:[%s2142] sm:$0xff] %v2140
    %2144 = vst [vmem:[%s2142 + $0x8] sm:$0xff] %v2141
    %2145 = vst [vmem:[#allocation2] sm:$0xff] %v2140
    %2146 = vst [vmem:[#allocation2 + $0x8] sm:$0xff] %v2141
    // Predicated region
    $region42: #{forward_pretrain_supervised.5} parent=1 // pred_check
      _
    $region43: #{forward_pretrain_supervised.5} parent=1 // pred_check_branch
      %2148 = sbr.rel (0) target = $region45
    $region44: #{forward_pretrain_supervised.5} parent=1 // pred_region
      _
    $region45: #{forward_pretrain_supervised.5} parent=1 // pred_fallthru
      _
    // Predicated region
    $region46: #{forward_pretrain_supervised.5} parent=1 // pred_check
      _
    $region47: #{forward_pretrain_supervised.5} parent=1 // pred_check_branch
      %2150 = sbr.rel (0) target = $region49
    $region48: #{forward_pretrain_supervised.5} parent=1 // pred_region
      _
    $region49: #{forward_pretrain_supervised.5} parent=1 // pred_fallthru
      _
    %2151 = vsyncpa [#allocation4], 1
    %2152 = vsyncpa [#allocation6], 1
    %2153 = vsyncpa [#allocation9], 1

</llo_original>
